<compile_context>
chip_gen: v7x
topology: tpu7x:2x2x1
jax: 0.10.0
libtpu: 0.0.40
codegen_flags: <defaults>
</compile_context>

<pallas_src>
import functools

import jax
import jax.numpy as jnp
from jax import lax
from jax.experimental import pallas as pl
from jax.experimental.pallas import tpu as pltpu

_X0 = 8  # sublane-aligned start of the interior along the W (sublane) axis


def basic_block_kernel(x_ref, w1_ref, w2_ref, b1_ref, b2_ref, out_ref, pad_ref):
    """Fused BasicBlock forward for one batch block.

    x_ref  : (Bt, H, W, Cp)       bf16 input block (channels zero-padded to Cp)
    w*_ref : (9*Cp, Cp)           bf16 conv weights (rows = tap*Cp + cin), BN scale folded
    b*_ref : (1, Cp)              f32 folded BN bias
    out_ref: (Bt, H, W, Cp)       bf16 output block
    pad_ref: (Bt, H+2, Wp, Cp)    bf16 VMEM staging scratch; interior at [1:1+H, 8:8+W]
    """
    Bt, H, W, Cp = out_ref.shape
    Hp = H + 2
    Wp = pad_ref.shape[2]
    M = Bt * H * W
    cdt = pad_ref.dtype

    # Re-zero the halo every step (megacore-safe: no reliance on cross-step scratch
    # state).  All strips are lane-full and start/width-aligned on the sublane axis
    # for the demo shape, so these are unmasked stores.
    pad_ref[:, 0:1, :, :] = jnp.zeros((Bt, 1, Wp, Cp), cdt)              # top halo row
    pad_ref[:, H + 1:H + 2, :, :] = jnp.zeros((Bt, 1, Wp, Cp), cdt)      # bottom halo row
    pad_ref[:, :, 0:_X0, :] = jnp.zeros((Bt, Hp, _X0, Cp), cdt)          # left (incl. col 7)
    pad_ref[:, :, _X0 + W:Wp, :] = jnp.zeros((Bt, Hp, Wp - _X0 - W, Cp), cdt)  # right

    def conv3x3(w_ref, b_ref):
        # Nine per-tap MXU dots accumulated straight from shifted pad_ref windows.
        # The shifted loads (kx = +/-1) are sublane-misaligned but go through the
        # vld slots; no im2col slab is stored or reloaded.  The fully unrolled loop
        # lets the LLO scheduler overlap the next tap's window load with the
        # current tap's vmatmul push.
        acc = None
        for ky in range(3):
            for kx in range(3):
                tap = ky * 3 + kx
                win = pad_ref[:, ky:ky + H, _X0 - 1 + kx:_X0 - 1 + kx + W, :]
                d = jnp.dot(win.reshape(M, Cp),
                            w_ref[tap * Cp:(tap + 1) * Cp, :],
                            preferred_element_type=jnp.float32)
                acc = d if acc is None else acc + d
        return acc + b_ref[...]            # (M, Cp) f32 + (1, Cp) f32 broadcast

    # ---- conv1 (BN1 scale pre-folded into w1) -> bias -> ReLU ----
    pad_ref[:, 1:1 + H, _X0:_X0 + W, :] = x_ref[...]        # aligned interior write
    h = jnp.maximum(conv3x3(w1_ref, b1_ref), 0.0)

    # ---- conv2 (BN2 scale pre-folded into w2) -> bias -> residual -> ReLU ----
    pad_ref[:, 1:1 + H, _X0:_X0 + W, :] = h.reshape(Bt, H, W, Cp).astype(cdt)
    acc2 = conv3x3(w2_ref, b2_ref)

    resid = x_ref[...].astype(jnp.float32).reshape(M, Cp)
    out = jnp.maximum(acc2 + resid, 0.0)
    out_ref[...] = out.reshape(Bt, H, W, Cp).astype(out_ref.dtype)


@functools.partial(jax.jit, static_argnames=("block_b",))
def basic_block(x, w1, w2, scale1, bias1, scale2, bias2, *, block_b=1):
    """x: (B, H, W, C) f32 NHWC.  w*: (9, Cin, Cout) (tap = ky*3+kx).  scale/bias: (C,)
    eval-mode BN folded parameters.  Returns bf16 (B, H, W, C)."""
    B, H, W, C = x.shape
    assert B % block_b == 0, "batch must be divisible by block_b"
    Cp = ((C + 127) // 128) * 128                   # lane-dense channel dimension
    Wp = _X0 + ((W + 1 + 7) // 8) * 8               # aligned interior + halo + round-up

    # Host-side prep: fold BN scale into conv output channels, zero-pad channels to
    # Cp (padded lanes stay exactly zero through the whole block), lay weights out
    # as (tap*Cp + cin, cout), cast matmul operands to bf16.
    xp = jnp.pad(x, ((0, 0), (0, 0), (0, 0), (0, Cp - C))).astype(jnp.bfloat16)

    def prep_w(w, scale):
        wf = w * scale[None, None, :]                        # fold BN scale over Cout
        wf = jnp.pad(wf, ((0, 0), (0, Cp - C), (0, Cp - C)))
        return wf.reshape(9 * Cp, Cp).astype(jnp.bfloat16)

    w1p = prep_w(w1, scale1)
    w2p = prep_w(w2, scale2)
    b1p = jnp.pad(bias1, (0, Cp - C)).reshape(1, Cp).astype(jnp.float32)
    b2p = jnp.pad(bias2, (0, Cp - C)).reshape(1, Cp).astype(jnp.float32)

    # Scoped-VMEM budget (the binding limit is the scoped default: 16 MiB v5e,
    # 32 MiB v6e/v7x): double-buffered bf16 in/out blocks + single-buffered weights
    # + halo scratch + f32 accumulator/window temps, with 2x headroom.
    blk_act = block_b * H * W * Cp * 2                       # one bf16 activation block
    pad_sz = block_b * (H + 2) * Wp * Cp * 2
    w_sz = 2 * 9 * Cp * Cp * 2 + 2 * Cp * 4
    acc_sz = 2 * block_b * H * W * Cp * 4
    est = 2 * blk_act + 2 * blk_act + pad_sz + w_sz + acc_sz
    vmem_limit = int(min(max(2 * est, 32 * 1024 * 1024), 64 * 1024 * 1024))

    def const_spec(shape):
        ndim = len(shape)
        index_map = lambda b, _nd=ndim: (0,) * _nd
        try:
            # Constant index_map -> single-buffer the operand (saves a full extra
            # copy of each weight slab in VMEM).
            return pl.BlockSpec(shape, index_map, pipeline_mode=pl.Buffered(1))
        except Exception:  # older builds without pipeline_mode / Buffered
            return pl.BlockSpec(shape, index_map)

    out = pl.pallas_call(
        basic_block_kernel,
        out_shape=jax.ShapeDtypeStruct((B, H, W, Cp), jnp.bfloat16),
        grid_spec=pltpu.PrefetchScalarGridSpec(
            num_scalar_prefetch=0,
            grid=(B // block_b,),
            in_specs=[
                pl.BlockSpec((block_b, H, W, Cp), lambda b: (b, 0, 0, 0)),
                const_spec((9 * Cp, Cp)),
                const_spec((9 * Cp, Cp)),
                const_spec((1, Cp)),
                const_spec((1, Cp)),
            ],
            out_specs=pl.BlockSpec((block_b, H, W, Cp), lambda b: (b, 0, 0, 0)),
            scratch_shapes=[
                pltpu.VMEM((block_b, H + 2, Wp, Cp), jnp.bfloat16),
            ]),
        compiler_params=pltpu.CompilerParams(
            dimension_semantics=("parallel",),
            vmem_limit_bytes=vmem_limit),
    )(xp, w1p, w2p, b1p, b2p)

    # Standalone use: slice the padded channels off.  When chaining BasicBlocks,
    # keep the Cp-padded bf16 layout between layers and skip this slice.
    return out[..., :C]


def reference_basic_block(x, w1, w2, scale1, bias1, scale2, bias2):
    """Pure-JAX reference (NHWC / HWIO) for the module forward with the same
    precision policy as the kernel: bf16 conv operands, f32 accumulation, f32
    epilogue, eval-mode BN (scale folded into weights, bias added after)."""
    C = x.shape[-1]
    w1f = (w1 * scale1[None, None, :]).reshape(3, 3, C, C)
    w2f = (w2 * scale2[None, None, :]).reshape(3, 3, C, C)

    def conv(h, w):
        return lax.conv_general_dilated(
            h.astype(jnp.bfloat16), w.astype(jnp.bfloat16),
            window_strides=(1, 1), padding="SAME",
            dimension_numbers=("NHWC", "HWIO", "NHWC"),
            preferred_element_type=jnp.float32)

    x_bf = x.astype(jnp.bfloat16)
    h = jnp.maximum(conv(x_bf, w1f) + bias1, 0.0)
    o = conv(h, w2f) + bias2 + x_bf.astype(jnp.float32)
    return jnp.maximum(o, 0.0)


if __name__ == "__main__":
    # Small demo shapes: batch=2, channels=8 (inplanes == planes, stride=1,
    # no downsample), spatial 16x16.  (Kernel layout is intended for C >= 64
    # layers; small C is only padded here for the demo.)
    B, H, W, C = 2, 16, 16, 8
    key = jax.random.PRNGKey(0)
    kx, kw1, kw2, kg1, kb1, km1, kv1, kg2, kb2, km2, kv2 = jax.random.split(key, 11)

    x = jax.random.normal(kx, (B, H, W, C), dtype=jnp.float32)

    # conv weights: (9, Cin, Cout) == HWIO flattened over the 3x3 taps (tap = ky*3+kx)
    w1 = jax.random.normal(kw1, (9, C, C), dtype=jnp.float32) * 0.1
    w2 = jax.random.normal(kw2, (9, C, C), dtype=jnp.float32) * 0.1

    # BatchNorm (eval mode) parameters, folded into per-channel scale/bias.
    eps = 1e-5
    gamma1 = 1.0 + 0.1 * jax.random.normal(kg1, (C,), dtype=jnp.float32)
    beta1 = 0.1 * jax.random.normal(kb1, (C,), dtype=jnp.float32)
    mean1 = 0.1 * jax.random.normal(km1, (C,), dtype=jnp.float32)
    var1 = jnp.abs(1.0 + 0.1 * jax.random.normal(kv1, (C,), dtype=jnp.float32))
    gamma2 = 1.0 + 0.1 * jax.random.normal(kg2, (C,), dtype=jnp.float32)
    beta2 = 0.1 * jax.random.normal(kb2, (C,), dtype=jnp.float32)
    mean2 = 0.1 * jax.random.normal(km2, (C,), dtype=jnp.float32)
    var2 = jnp.abs(1.0 + 0.1 * jax.random.normal(kv2, (C,), dtype=jnp.float32))

    scale1 = gamma1 / jnp.sqrt(var1 + eps)
    bias1 = beta1 - mean1 * scale1
    scale2 = gamma2 / jnp.sqrt(var2 + eps)
    bias2 = beta2 - mean2 * scale2

    out = basic_block(x, w1, w2, scale1, bias1, scale2, bias2, block_b=1)
    out = jax.block_until_ready(out)

    ref = reference_basic_block(x, w1, w2, scale1, bias1, scale2, bias2)
    assert out.shape == (B, H, W, C)
    assert jnp.allclose(out.astype(jnp.float32), ref, atol=3e-2, rtol=3e-2), \
        "mismatch vs reference"

    print("KERNEL_OK")
</pallas_src>

<mosaic_0001>
module attributes {stable_mosaic.version = 11 : i64} {
  func.func @basic_block_kernel(%arg0: i32, %arg1: memref<1x16x16x128xbf16, #tpu.memory_space<vmem>>, %arg2: memref<1152x128xbf16, #tpu.memory_space<vmem>>, %arg3: memref<1152x128xbf16, #tpu.memory_space<vmem>>, %arg4: memref<1x128xf32, #tpu.memory_space<vmem>>, %arg5: memref<1x128xf32, #tpu.memory_space<vmem>>, %arg6: memref<1x16x16x128xbf16, #tpu.memory_space<vmem>>, %arg7: memref<1x18x32x128xbf16, #tpu.memory_space<vmem>>) attributes {dimension_semantics = [#tpu.dimension_semantics<parallel>], iteration_bounds = array<i64: 2>, scalar_prefetch = 0 : i64, scratch_operands = 1 : i64, tpu.core_type = #tpu.core_type<tc>, window_params = [{transform_indices = @transform_0, window_bounds = array<i64: 1, 16, 16, 128>}, {pipeline_mode = #tpu.pipeline_mode<synchronous>, transform_indices = @transform_1, window_bounds = array<i64: 1152, 128>}, {pipeline_mode = #tpu.pipeline_mode<synchronous>, transform_indices = @transform_2, window_bounds = array<i64: 1152, 128>}, {pipeline_mode = #tpu.pipeline_mode<synchronous>, transform_indices = @transform_3, window_bounds = array<i64: 1, 128>}, {pipeline_mode = #tpu.pipeline_mode<synchronous>, transform_indices = @transform_4, window_bounds = array<i64: 1, 128>}, {transform_indices = @transform_5, window_bounds = array<i64: 1, 16, 16, 128>}]} {
    %cst = arith.constant 0.000000e+00 : bf16
    %0 = vector.broadcast %cst : bf16 to vector<1x1x32x128xbf16>
    %c0 = arith.constant 0 : index
    %c0_0 = arith.constant 0 : index
    %c0_1 = arith.constant 0 : index
    %c0_2 = arith.constant 0 : index
    %1 = vector.load %arg7[%c0, %c0_0, %c0_1, %c0_2] : memref<1x18x32x128xbf16, #tpu.memory_space<vmem>>, vector<1x1x32x128xbf16>
    tpu.vector_store %arg7[%c0, %c0_0, %c0_1, %c0_2], %0 {strides = array<i32>} : memref<1x18x32x128xbf16, #tpu.memory_space<vmem>>, vector<1x1x32x128xbf16>,
    %cst_3 = arith.constant 0.000000e+00 : bf16
    %2 = vector.broadcast %cst_3 : bf16 to vector<1x1x32x128xbf16>
    %c0_4 = arith.constant 0 : index
    %c17 = arith.constant 17 : index
    %c0_5 = arith.constant 0 : index
    %c0_6 = arith.constant 0 : index
    %3 = vector.load %arg7[%c0_4, %c17, %c0_5, %c0_6] : memref<1x18x32x128xbf16, #tpu.memory_space<vmem>>, vector<1x1x32x128xbf16>
    tpu.vector_store %arg7[%c0_4, %c17, %c0_5, %c0_6], %2 {strides = array<i32>} : memref<1x18x32x128xbf16, #tpu.memory_space<vmem>>, vector<1x1x32x128xbf16>,
    %cst_7 = arith.constant 0.000000e+00 : bf16
    %4 = vector.broadcast %cst_7 : bf16 to vector<1x18x8x128xbf16>
    %c0_8 = arith.constant 0 : index
    %c0_9 = arith.constant 0 : index
    %c0_10 = arith.constant 0 : index
    %c0_11 = arith.constant 0 : index
    %5 = vector.load %arg7[%c0_8, %c0_9, %c0_10, %c0_11] : memref<1x18x32x128xbf16, #tpu.memory_space<vmem>>, vector<1x18x8x128xbf16>
    tpu.vector_store %arg7[%c0_8, %c0_9, %c0_10, %c0_11], %4 {strides = array<i32>} : memref<1x18x32x128xbf16, #tpu.memory_space<vmem>>, vector<1x18x8x128xbf16>,
    %cst_12 = arith.constant 0.000000e+00 : bf16
    %6 = vector.broadcast %cst_12 : bf16 to vector<1x18x8x128xbf16>
    %c0_13 = arith.constant 0 : index
    %c0_14 = arith.constant 0 : index
    %c24 = arith.constant 24 : index
    %c0_15 = arith.constant 0 : index
    %7 = vector.load %arg7[%c0_13, %c0_14, %c24, %c0_15] : memref<1x18x32x128xbf16, #tpu.memory_space<vmem>>, vector<1x18x8x128xbf16>
    tpu.vector_store %arg7[%c0_13, %c0_14, %c24, %c0_15], %6 {strides = array<i32>} : memref<1x18x32x128xbf16, #tpu.memory_space<vmem>>, vector<1x18x8x128xbf16>,
    %c0_16 = arith.constant 0 : index
    %c0_17 = arith.constant 0 : index
    %c0_18 = arith.constant 0 : index
    %c0_19 = arith.constant 0 : index
    %8 = vector.load %arg1[%c0_16, %c0_17, %c0_18, %c0_19] : memref<1x16x16x128xbf16, #tpu.memory_space<vmem>>, vector<1x16x16x128xbf16>
    %c0_20 = arith.constant 0 : index
    %c1 = arith.constant 1 : index
    %c8 = arith.constant 8 : index
    %c0_21 = arith.constant 0 : index
    %9 = vector.load %arg7[%c0_20, %c1, %c8, %c0_21] : memref<1x18x32x128xbf16, #tpu.memory_space<vmem>>, vector<1x16x16x128xbf16>
    tpu.vector_store %arg7[%c0_20, %c1, %c8, %c0_21], %8 {strides = array<i32>} : memref<1x18x32x128xbf16, #tpu.memory_space<vmem>>, vector<1x16x16x128xbf16>,
    %c0_22 = arith.constant 0 : index
    %c0_23 = arith.constant 0 : index
    %c7 = arith.constant 7 : index
    %c0_24 = arith.constant 0 : index
    %10 = vector.load %arg7[%c0_22, %c0_23, %c7, %c0_24] : memref<1x18x32x128xbf16, #tpu.memory_space<vmem>>, vector<1x16x16x128xbf16>
    %11 = vector.shape_cast %10 : vector<1x16x16x128xbf16> to vector<256x128xbf16>
    %c0_25 = arith.constant 0 : index
    %c0_26 = arith.constant 0 : index
    %12 = vector.load %arg2[%c0_25, %c0_26] : memref<1152x128xbf16, #tpu.memory_space<vmem>>, vector<128x128xbf16>
    %cst_27 = arith.constant dense<0.000000e+00> : vector<256x128xf32>
    %13 = tpu.matmul %11, %12, %cst_27 {dimension_numbers = #tpu.dot_dimension_numbers<[1], [0], [0], [1], [0, 0, 1, 1], [], []>} : vector<256x128xbf16>, vector<128x128xbf16>, vector<256x128xf32> -> vector<256x128xf32>
    %c0_28 = arith.constant 0 : index
    %c0_29 = arith.constant 0 : index
    %c8_30 = arith.constant 8 : index
    %c0_31 = arith.constant 0 : index
    %14 = vector.load %arg7[%c0_28, %c0_29, %c8_30, %c0_31] : memref<1x18x32x128xbf16, #tpu.memory_space<vmem>>, vector<1x16x16x128xbf16>
    %15 = vector.shape_cast %14 : vector<1x16x16x128xbf16> to vector<256x128xbf16>
    %c128 = arith.constant 128 : index
    %c0_32 = arith.constant 0 : index
    %16 = vector.load %arg2[%c128, %c0_32] : memref<1152x128xbf16, #tpu.memory_space<vmem>>, vector<128x128xbf16>
    %cst_33 = arith.constant dense<0.000000e+00> : vector<256x128xf32>
    %17 = tpu.matmul %15, %16, %cst_33 {dimension_numbers = #tpu.dot_dimension_numbers<[1], [0], [0], [1], [0, 0, 1, 1], [], []>} : vector<256x128xbf16>, vector<128x128xbf16>, vector<256x128xf32> -> vector<256x128xf32>
    %18 = arith.addf %13, %17 : vector<256x128xf32>
    %c0_34 = arith.constant 0 : index
    %c0_35 = arith.constant 0 : index
    %c9 = arith.constant 9 : index
    %c0_36 = arith.constant 0 : index
    %19 = vector.load %arg7[%c0_34, %c0_35, %c9, %c0_36] : memref<1x18x32x128xbf16, #tpu.memory_space<vmem>>, vector<1x16x16x128xbf16>
    %20 = vector.shape_cast %19 : vector<1x16x16x128xbf16> to vector<256x128xbf16>
    %c256 = arith.constant 256 : index
    %c0_37 = arith.constant 0 : index
    %21 = vector.load %arg2[%c256, %c0_37] : memref<1152x128xbf16, #tpu.memory_space<vmem>>, vector<128x128xbf16>
    %cst_38 = arith.constant dense<0.000000e+00> : vector<256x128xf32>
    %22 = tpu.matmul %20, %21, %cst_38 {dimension_numbers = #tpu.dot_dimension_numbers<[1], [0], [0], [1], [0, 0, 1, 1], [], []>} : vector<256x128xbf16>, vector<128x128xbf16>, vector<256x128xf32> -> vector<256x128xf32>
    %23 = arith.addf %18, %22 : vector<256x128xf32>
    %c0_39 = arith.constant 0 : index
    %c1_40 = arith.constant 1 : index
    %c7_41 = arith.constant 7 : index
    %c0_42 = arith.constant 0 : index
    %24 = vector.load %arg7[%c0_39, %c1_40, %c7_41, %c0_42] : memref<1x18x32x128xbf16, #tpu.memory_space<vmem>>, vector<1x16x16x128xbf16>
    %25 = vector.shape_cast %24 : vector<1x16x16x128xbf16> to vector<256x128xbf16>
    %c384 = arith.constant 384 : index
    %c0_43 = arith.constant 0 : index
    %26 = vector.load %arg2[%c384, %c0_43] : memref<1152x128xbf16, #tpu.memory_space<vmem>>, vector<128x128xbf16>
    %cst_44 = arith.constant dense<0.000000e+00> : vector<256x128xf32>
    %27 = tpu.matmul %25, %26, %cst_44 {dimension_numbers = #tpu.dot_dimension_numbers<[1], [0], [0], [1], [0, 0, 1, 1], [], []>} : vector<256x128xbf16>, vector<128x128xbf16>, vector<256x128xf32> -> vector<256x128xf32>
    %28 = arith.addf %23, %27 : vector<256x128xf32>
    %c0_45 = arith.constant 0 : index
    %c1_46 = arith.constant 1 : index
    %c8_47 = arith.constant 8 : index
    %c0_48 = arith.constant 0 : index
    %29 = vector.load %arg7[%c0_45, %c1_46, %c8_47, %c0_48] : memref<1x18x32x128xbf16, #tpu.memory_space<vmem>>, vector<1x16x16x128xbf16>
    %30 = vector.shape_cast %29 : vector<1x16x16x128xbf16> to vector<256x128xbf16>
    %c512 = arith.constant 512 : index
    %c0_49 = arith.constant 0 : index
    %31 = vector.load %arg2[%c512, %c0_49] : memref<1152x128xbf16, #tpu.memory_space<vmem>>, vector<128x128xbf16>
    %cst_50 = arith.constant dense<0.000000e+00> : vector<256x128xf32>
    %32 = tpu.matmul %30, %31, %cst_50 {dimension_numbers = #tpu.dot_dimension_numbers<[1], [0], [0], [1], [0, 0, 1, 1], [], []>} : vector<256x128xbf16>, vector<128x128xbf16>, vector<256x128xf32> -> vector<256x128xf32>
    %33 = arith.addf %28, %32 : vector<256x128xf32>
    %c0_51 = arith.constant 0 : index
    %c1_52 = arith.constant 1 : index
    %c9_53 = arith.constant 9 : index
    %c0_54 = arith.constant 0 : index
    %34 = vector.load %arg7[%c0_51, %c1_52, %c9_53, %c0_54] : memref<1x18x32x128xbf16, #tpu.memory_space<vmem>>, vector<1x16x16x128xbf16>
    %35 = vector.shape_cast %34 : vector<1x16x16x128xbf16> to vector<256x128xbf16>
    %c640 = arith.constant 640 : index
    %c0_55 = arith.constant 0 : index
    %36 = vector.load %arg2[%c640, %c0_55] : memref<1152x128xbf16, #tpu.memory_space<vmem>>, vector<128x128xbf16>
    %cst_56 = arith.constant dense<0.000000e+00> : vector<256x128xf32>
    %37 = tpu.matmul %35, %36, %cst_56 {dimension_numbers = #tpu.dot_dimension_numbers<[1], [0], [0], [1], [0, 0, 1, 1], [], []>} : vector<256x128xbf16>, vector<128x128xbf16>, vector<256x128xf32> -> vector<256x128xf32>
    %38 = arith.addf %33, %37 : vector<256x128xf32>
    %c0_57 = arith.constant 0 : index
    %c2 = arith.constant 2 : index
    %c7_58 = arith.constant 7 : index
    %c0_59 = arith.constant 0 : index
    %39 = vector.load %arg7[%c0_57, %c2, %c7_58, %c0_59] : memref<1x18x32x128xbf16, #tpu.memory_space<vmem>>, vector<1x16x16x128xbf16>
    %40 = vector.shape_cast %39 : vector<1x16x16x128xbf16> to vector<256x128xbf16>
    %c768 = arith.constant 768 : index
    %c0_60 = arith.constant 0 : index
    %41 = vector.load %arg2[%c768, %c0_60] : memref<1152x128xbf16, #tpu.memory_space<vmem>>, vector<128x128xbf16>
    %cst_61 = arith.constant dense<0.000000e+00> : vector<256x128xf32>
    %42 = tpu.matmul %40, %41, %cst_61 {dimension_numbers = #tpu.dot_dimension_numbers<[1], [0], [0], [1], [0, 0, 1, 1], [], []>} : vector<256x128xbf16>, vector<128x128xbf16>, vector<256x128xf32> -> vector<256x128xf32>
    %43 = arith.addf %38, %42 : vector<256x128xf32>
    %c0_62 = arith.constant 0 : index
    %c2_63 = arith.constant 2 : index
    %c8_64 = arith.constant 8 : index
    %c0_65 = arith.constant 0 : index
    %44 = vector.load %arg7[%c0_62, %c2_63, %c8_64, %c0_65] : memref<1x18x32x128xbf16, #tpu.memory_space<vmem>>, vector<1x16x16x128xbf16>
    %45 = vector.shape_cast %44 : vector<1x16x16x128xbf16> to vector<256x128xbf16>
    %c896 = arith.constant 896 : index
    %c0_66 = arith.constant 0 : index
    %46 = vector.load %arg2[%c896, %c0_66] : memref<1152x128xbf16, #tpu.memory_space<vmem>>, vector<128x128xbf16>
    %cst_67 = arith.constant dense<0.000000e+00> : vector<256x128xf32>
    %47 = tpu.matmul %45, %46, %cst_67 {dimension_numbers = #tpu.dot_dimension_numbers<[1], [0], [0], [1], [0, 0, 1, 1], [], []>} : vector<256x128xbf16>, vector<128x128xbf16>, vector<256x128xf32> -> vector<256x128xf32>
    %48 = arith.addf %43, %47 : vector<256x128xf32>
    %c0_68 = arith.constant 0 : index
    %c2_69 = arith.constant 2 : index
    %c9_70 = arith.constant 9 : index
    %c0_71 = arith.constant 0 : index
    %49 = vector.load %arg7[%c0_68, %c2_69, %c9_70, %c0_71] : memref<1x18x32x128xbf16, #tpu.memory_space<vmem>>, vector<1x16x16x128xbf16>
    %50 = vector.shape_cast %49 : vector<1x16x16x128xbf16> to vector<256x128xbf16>
    %c1024 = arith.constant 1024 : index
    %c0_72 = arith.constant 0 : index
    %51 = vector.load %arg2[%c1024, %c0_72] : memref<1152x128xbf16, #tpu.memory_space<vmem>>, vector<128x128xbf16>
    %cst_73 = arith.constant dense<0.000000e+00> : vector<256x128xf32>
    %52 = tpu.matmul %50, %51, %cst_73 {dimension_numbers = #tpu.dot_dimension_numbers<[1], [0], [0], [1], [0, 0, 1, 1], [], []>} : vector<256x128xbf16>, vector<128x128xbf16>, vector<256x128xf32> -> vector<256x128xf32>
    %53 = arith.addf %48, %52 : vector<256x128xf32>
    %c0_74 = arith.constant 0 : index
    %c0_75 = arith.constant 0 : index
    %54 = vector.load %arg4[%c0_74, %c0_75] : memref<1x128xf32, #tpu.memory_space<vmem>>, vector<1x128xf32>
    %55 = vector.broadcast %54 : vector<1x128xf32> to vector<256x128xf32>
    %56 = arith.addf %53, %55 : vector<256x128xf32>
    %cst_76 = arith.constant 0.000000e+00 : f32
    %57 = vector.broadcast %cst_76 : f32 to vector<256x128xf32>
    %58 = arith.maximumf %56, %57 : vector<256x128xf32>
    %59 = vector.shape_cast %58 : vector<256x128xf32> to vector<1x16x16x128xf32>
    %60 = arith.truncf %59 : vector<1x16x16x128xf32> to vector<1x16x16x128xbf16>
    %c0_77 = arith.constant 0 : index
    %c1_78 = arith.constant 1 : index
    %c8_79 = arith.constant 8 : index
    %c0_80 = arith.constant 0 : index
    %61 = vector.load %arg7[%c0_77, %c1_78, %c8_79, %c0_80] : memref<1x18x32x128xbf16, #tpu.memory_space<vmem>>, vector<1x16x16x128xbf16>
    tpu.vector_store %arg7[%c0_77, %c1_78, %c8_79, %c0_80], %60 {strides = array<i32>} : memref<1x18x32x128xbf16, #tpu.memory_space<vmem>>, vector<1x16x16x128xbf16>,
    %c0_81 = arith.constant 0 : index
    %c0_82 = arith.constant 0 : index
    %c7_83 = arith.constant 7 : index
    %c0_84 = arith.constant 0 : index
    %62 = vector.load %arg7[%c0_81, %c0_82, %c7_83, %c0_84] : memref<1x18x32x128xbf16, #tpu.memory_space<vmem>>, vector<1x16x16x128xbf16>
    %63 = vector.shape_cast %62 : vector<1x16x16x128xbf16> to vector<256x128xbf16>
    %c0_85 = arith.constant 0 : index
    %c0_86 = arith.constant 0 : index
    %64 = vector.load %arg3[%c0_85, %c0_86] : memref<1152x128xbf16, #tpu.memory_space<vmem>>, vector<128x128xbf16>
    %cst_87 = arith.constant dense<0.000000e+00> : vector<256x128xf32>
    %65 = tpu.matmul %63, %64, %cst_87 {dimension_numbers = #tpu.dot_dimension_numbers<[1], [0], [0], [1], [0, 0, 1, 1], [], []>} : vector<256x128xbf16>, vector<128x128xbf16>, vector<256x128xf32> -> vector<256x128xf32>
    %c0_88 = arith.constant 0 : index
    %c0_89 = arith.constant 0 : index
    %c8_90 = arith.constant 8 : index
    %c0_91 = arith.constant 0 : index
    %66 = vector.load %arg7[%c0_88, %c0_89, %c8_90, %c0_91] : memref<1x18x32x128xbf16, #tpu.memory_space<vmem>>, vector<1x16x16x128xbf16>
    %67 = vector.shape_cast %66 : vector<1x16x16x128xbf16> to vector<256x128xbf16>
    %c128_92 = arith.constant 128 : index
    %c0_93 = arith.constant 0 : index
    %68 = vector.load %arg3[%c128_92, %c0_93] : memref<1152x128xbf16, #tpu.memory_space<vmem>>, vector<128x128xbf16>
    %cst_94 = arith.constant dense<0.000000e+00> : vector<256x128xf32>
    %69 = tpu.matmul %67, %68, %cst_94 {dimension_numbers = #tpu.dot_dimension_numbers<[1], [0], [0], [1], [0, 0, 1, 1], [], []>} : vector<256x128xbf16>, vector<128x128xbf16>, vector<256x128xf32> -> vector<256x128xf32>
    %70 = arith.addf %65, %69 : vector<256x128xf32>
    %c0_95 = arith.constant 0 : index
    %c0_96 = arith.constant 0 : index
    %c9_97 = arith.constant 9 : index
    %c0_98 = arith.constant 0 : index
    %71 = vector.load %arg7[%c0_95, %c0_96, %c9_97, %c0_98] : memref<1x18x32x128xbf16, #tpu.memory_space<vmem>>, vector<1x16x16x128xbf16>
    %72 = vector.shape_cast %71 : vector<1x16x16x128xbf16> to vector<256x128xbf16>
    %c256_99 = arith.constant 256 : index
    %c0_100 = arith.constant 0 : index
    %73 = vector.load %arg3[%c256_99, %c0_100] : memref<1152x128xbf16, #tpu.memory_space<vmem>>, vector<128x128xbf16>
    %cst_101 = arith.constant dense<0.000000e+00> : vector<256x128xf32>
    %74 = tpu.matmul %72, %73, %cst_101 {dimension_numbers = #tpu.dot_dimension_numbers<[1], [0], [0], [1], [0, 0, 1, 1], [], []>} : vector<256x128xbf16>, vector<128x128xbf16>, vector<256x128xf32> -> vector<256x128xf32>
    %75 = arith.addf %70, %74 : vector<256x128xf32>
    %c0_102 = arith.constant 0 : index
    %c1_103 = arith.constant 1 : index
    %c7_104 = arith.constant 7 : index
    %c0_105 = arith.constant 0 : index
    %76 = vector.load %arg7[%c0_102, %c1_103, %c7_104, %c0_105] : memref<1x18x32x128xbf16, #tpu.memory_space<vmem>>, vector<1x16x16x128xbf16>
    %77 = vector.shape_cast %76 : vector<1x16x16x128xbf16> to vector<256x128xbf16>
    %c384_106 = arith.constant 384 : index
    %c0_107 = arith.constant 0 : index
    %78 = vector.load %arg3[%c384_106, %c0_107] : memref<1152x128xbf16, #tpu.memory_space<vmem>>, vector<128x128xbf16>
    %cst_108 = arith.constant dense<0.000000e+00> : vector<256x128xf32>
    %79 = tpu.matmul %77, %78, %cst_108 {dimension_numbers = #tpu.dot_dimension_numbers<[1], [0], [0], [1], [0, 0, 1, 1], [], []>} : vector<256x128xbf16>, vector<128x128xbf16>, vector<256x128xf32> -> vector<256x128xf32>
    %80 = arith.addf %75, %79 : vector<256x128xf32>
    %c0_109 = arith.constant 0 : index
    %c1_110 = arith.constant 1 : index
    %c8_111 = arith.constant 8 : index
    %c0_112 = arith.constant 0 : index
    %81 = vector.load %arg7[%c0_109, %c1_110, %c8_111, %c0_112] : memref<1x18x32x128xbf16, #tpu.memory_space<vmem>>, vector<1x16x16x128xbf16>
    %82 = vector.shape_cast %81 : vector<1x16x16x128xbf16> to vector<256x128xbf16>
    %c512_113 = arith.constant 512 : index
    %c0_114 = arith.constant 0 : index
    %83 = vector.load %arg3[%c512_113, %c0_114] : memref<1152x128xbf16, #tpu.memory_space<vmem>>, vector<128x128xbf16>
    %cst_115 = arith.constant dense<0.000000e+00> : vector<256x128xf32>
    %84 = tpu.matmul %82, %83, %cst_115 {dimension_numbers = #tpu.dot_dimension_numbers<[1], [0], [0], [1], [0, 0, 1, 1], [], []>} : vector<256x128xbf16>, vector<128x128xbf16>, vector<256x128xf32> -> vector<256x128xf32>
    %85 = arith.addf %80, %84 : vector<256x128xf32>
    %c0_116 = arith.constant 0 : index
    %c1_117 = arith.constant 1 : index
    %c9_118 = arith.constant 9 : index
    %c0_119 = arith.constant 0 : index
    %86 = vector.load %arg7[%c0_116, %c1_117, %c9_118, %c0_119] : memref<1x18x32x128xbf16, #tpu.memory_space<vmem>>, vector<1x16x16x128xbf16>
    %87 = vector.shape_cast %86 : vector<1x16x16x128xbf16> to vector<256x128xbf16>
    %c640_120 = arith.constant 640 : index
    %c0_121 = arith.constant 0 : index
    %88 = vector.load %arg3[%c640_120, %c0_121] : memref<1152x128xbf16, #tpu.memory_space<vmem>>, vector<128x128xbf16>
    %cst_122 = arith.constant dense<0.000000e+00> : vector<256x128xf32>
    %89 = tpu.matmul %87, %88, %cst_122 {dimension_numbers = #tpu.dot_dimension_numbers<[1], [0], [0], [1], [0, 0, 1, 1], [], []>} : vector<256x128xbf16>, vector<128x128xbf16>, vector<256x128xf32> -> vector<256x128xf32>
    %90 = arith.addf %85, %89 : vector<256x128xf32>
    %c0_123 = arith.constant 0 : index
    %c2_124 = arith.constant 2 : index
    %c7_125 = arith.constant 7 : index
    %c0_126 = arith.constant 0 : index
    %91 = vector.load %arg7[%c0_123, %c2_124, %c7_125, %c0_126] : memref<1x18x32x128xbf16, #tpu.memory_space<vmem>>, vector<1x16x16x128xbf16>
    %92 = vector.shape_cast %91 : vector<1x16x16x128xbf16> to vector<256x128xbf16>
    %c768_127 = arith.constant 768 : index
    %c0_128 = arith.constant 0 : index
    %93 = vector.load %arg3[%c768_127, %c0_128] : memref<1152x128xbf16, #tpu.memory_space<vmem>>, vector<128x128xbf16>
    %cst_129 = arith.constant dense<0.000000e+00> : vector<256x128xf32>
    %94 = tpu.matmul %92, %93, %cst_129 {dimension_numbers = #tpu.dot_dimension_numbers<[1], [0], [0], [1], [0, 0, 1, 1], [], []>} : vector<256x128xbf16>, vector<128x128xbf16>, vector<256x128xf32> -> vector<256x128xf32>
    %95 = arith.addf %90, %94 : vector<256x128xf32>
    %c0_130 = arith.constant 0 : index
    %c2_131 = arith.constant 2 : index
    %c8_132 = arith.constant 8 : index
    %c0_133 = arith.constant 0 : index
    %96 = vector.load %arg7[%c0_130, %c2_131, %c8_132, %c0_133] : memref<1x18x32x128xbf16, #tpu.memory_space<vmem>>, vector<1x16x16x128xbf16>
    %97 = vector.shape_cast %96 : vector<1x16x16x128xbf16> to vector<256x128xbf16>
    %c896_134 = arith.constant 896 : index
    %c0_135 = arith.constant 0 : index
    %98 = vector.load %arg3[%c896_134, %c0_135] : memref<1152x128xbf16, #tpu.memory_space<vmem>>, vector<128x128xbf16>
    %cst_136 = arith.constant dense<0.000000e+00> : vector<256x128xf32>
    %99 = tpu.matmul %97, %98, %cst_136 {dimension_numbers = #tpu.dot_dimension_numbers<[1], [0], [0], [1], [0, 0, 1, 1], [], []>} : vector<256x128xbf16>, vector<128x128xbf16>, vector<256x128xf32> -> vector<256x128xf32>
    %100 = arith.addf %95, %99 : vector<256x128xf32>
    %c0_137 = arith.constant 0 : index
    %c2_138 = arith.constant 2 : index
    %c9_139 = arith.constant 9 : index
    %c0_140 = arith.constant 0 : index
    %101 = vector.load %arg7[%c0_137, %c2_138, %c9_139, %c0_140] : memref<1x18x32x128xbf16, #tpu.memory_space<vmem>>, vector<1x16x16x128xbf16>
    %102 = vector.shape_cast %101 : vector<1x16x16x128xbf16> to vector<256x128xbf16>
    %c1024_141 = arith.constant 1024 : index
    %c0_142 = arith.constant 0 : index
    %103 = vector.load %arg3[%c1024_141, %c0_142] : memref<1152x128xbf16, #tpu.memory_space<vmem>>, vector<128x128xbf16>
    %cst_143 = arith.constant dense<0.000000e+00> : vector<256x128xf32>
    %104 = tpu.matmul %102, %103, %cst_143 {dimension_numbers = #tpu.dot_dimension_numbers<[1], [0], [0], [1], [0, 0, 1, 1], [], []>} : vector<256x128xbf16>, vector<128x128xbf16>, vector<256x128xf32> -> vector<256x128xf32>
    %105 = arith.addf %100, %104 : vector<256x128xf32>
    %c0_144 = arith.constant 0 : index
    %c0_145 = arith.constant 0 : index
    %106 = vector.load %arg5[%c0_144, %c0_145] : memref<1x128xf32, #tpu.memory_space<vmem>>, vector<1x128xf32>
    %107 = vector.broadcast %106 : vector<1x128xf32> to vector<256x128xf32>
    %108 = arith.addf %105, %107 : vector<256x128xf32>
    %c0_146 = arith.constant 0 : index
    %c0_147 = arith.constant 0 : index
    %c0_148 = arith.constant 0 : index
    %c0_149 = arith.constant 0 : index
    %109 = vector.load %arg1[%c0_146, %c0_147, %c0_148, %c0_149] : memref<1x16x16x128xbf16, #tpu.memory_space<vmem>>, vector<1x16x16x128xbf16>
    %110 = arith.extf %109 : vector<1x16x16x128xbf16> to vector<1x16x16x128xf32>
    %111 = vector.shape_cast %110 : vector<1x16x16x128xf32> to vector<256x128xf32>
    %112 = arith.addf %108, %111 : vector<256x128xf32>
    %cst_150 = arith.constant 0.000000e+00 : f32
    %113 = vector.broadcast %cst_150 : f32 to vector<256x128xf32>
    %114 = arith.maximumf %112, %113 : vector<256x128xf32>
    %115 = vector.shape_cast %114 : vector<256x128xf32> to vector<1x16x16x128xf32>
    %116 = arith.truncf %115 : vector<1x16x16x128xf32> to vector<1x16x16x128xbf16>
    %c0_151 = arith.constant 0 : index
    %c0_152 = arith.constant 0 : index
    %c0_153 = arith.constant 0 : index
    %c0_154 = arith.constant 0 : index
    %117 = vector.load %arg6[%c0_151, %c0_152, %c0_153, %c0_154] : memref<1x16x16x128xbf16, #tpu.memory_space<vmem>>, vector<1x16x16x128xbf16>
    tpu.vector_store %arg6[%c0_151, %c0_152, %c0_153, %c0_154], %116 {strides = array<i32>} : memref<1x16x16x128xbf16, #tpu.memory_space<vmem>>, vector<1x16x16x128xbf16>,
    return
  }
  func.func @transform_0(%arg0: i32) -> (i32, i32, i32, i32) {
    %c0_i32 = arith.constant 0 : i32
    %c0_i32_0 = arith.constant 0 : i32
    %c0_i32_1 = arith.constant 0 : i32
    %c0_i32_2 = arith.constant 0 : i32
    return %arg0, %c0_i32, %c0_i32_0, %c0_i32_1 : i32, i32, i32, i32
  }
  func.func @transform_1(%arg0: i32) -> (i32, i32) {
    %c0_i32 = arith.constant 0 : i32
    %c0_i32_0 = arith.constant 0 : i32
    %c0_i32_1 = arith.constant 0 : i32
    return %c0_i32, %c0_i32_0 : i32, i32
  }
  func.func @transform_2(%arg0: i32) -> (i32, i32) {
    %c0_i32 = arith.constant 0 : i32
    %c0_i32_0 = arith.constant 0 : i32
    %c0_i32_1 = arith.constant 0 : i32
    return %c0_i32, %c0_i32_0 : i32, i32
  }
  func.func @transform_3(%arg0: i32) -> (i32, i32) {
    %c0_i32 = arith.constant 0 : i32
    %c0_i32_0 = arith.constant 0 : i32
    %c0_i32_1 = arith.constant 0 : i32
    return %c0_i32, %c0_i32_0 : i32, i32
  }
  func.func @transform_4(%arg0: i32) -> (i32, i32) {
    %c0_i32 = arith.constant 0 : i32
    %c0_i32_0 = arith.constant 0 : i32
    %c0_i32_1 = arith.constant 0 : i32
    return %c0_i32, %c0_i32_0 : i32, i32
  }
  func.func @transform_5(%arg0: i32) -> (i32, i32, i32, i32) {
    %c0_i32 = arith.constant 0 : i32
    %c0_i32_0 = arith.constant 0 : i32
    %c0_i32_1 = arith.constant 0 : i32
    %c0_i32_2 = arith.constant 0 : i32
    return %arg0, %c0_i32, %c0_i32_0, %c0_i32_1 : i32, i32, i32, i32
  }
}

</mosaic_0001>

<llo_original>
// kernel: basic_block.1
$region0: #{basic_block.1}
  #allocation0 [shape = 'u32[]', space=smem, size = 0x4, offset = 0x4, fixed_abs, tag = 'smem constant byte address 0x4 - core index']
  #allocation1 [shape = 'u32[144,128]{1,0:T(1,128)}', space=vmem, size = 0x12000, scoped, tag = 'internal scratch']
  #allocation2 [shape = 'bf16[1,18,32,128]{3,2,1,0:T(16,128)(2,1)}', space=vmem, size = 0x24000, scoped, tag = 'scratch operand']
  %s0 = inlined_call_operand.vmem [shape: bf16[2,16,16,128], index: 0, kind: input, shape index: {}]
  %s1 = inlined_call_operand.vmem [shape: bf16[1152,128], index: 1, kind: input, shape index: {}]
  %s2 = inlined_call_operand.vmem [shape: bf16[1152,128], index: 2, kind: input, shape index: {}]
  %s3 = inlined_call_operand.vmem [shape: f32[1,128], index: 3, kind: input, shape index: {}]
  %s4 = inlined_call_operand.vmem [shape: f32[1,128], index: 4, kind: input, shape index: {}]
  %s5 = inlined_call_operand.vmem [shape: bf16[2,16,16,128], index: 5, kind: output, shape index: {}]
  %s6 = sld [smem:[#allocation0]]
  $region53: #{basic_block.1} parent=0
    _
  %s8 = ssub.s32 1, %s6
  %s9 = scalar_select 0, %s8, %s6
  loop: start=0, step=1, limit=4
  $region2: #{basic_block.1} parent=0 // loop_pre_header
    _
  $region3: #{basic_block.1} parent=0 // loop_header
    %s11 = sphi 0, %s15
    %p12 = scmp.ge.s32.totalorder %s11, 4
    %s21 = sphi 0, %s23
    %s24 = sphi 0, %s21
    %s25 = sphi 0, %s24
    %s41 = sphi 0, %s25
    %s45 = sphi 0, %s45
    %s47 = sphi 0, %s45
    %s48 = sphi 0, %s47
    %s62 = sphi 0, %s48
    %s66 = sphi 0, %s66
    %s68 = sphi 0, %s66
    %s69 = sphi 0, %s68
    %s83 = sphi 0, %s69
    %s87 = sphi 0, %s87
    %s89 = sphi 0, %s87
    %s90 = sphi 0, %s89
    %s104 = sphi 0, %s90
    %s108 = sphi 0, %s108
    %s110 = sphi 0, %s108
    %s111 = sphi 0, %s110
    %s125 = sphi 0, %s111
    %s131 = sphi 0, %s133
    %s134 = sphi 0, %s131
    %s135 = sphi 0, %s134
    %s151 = sphi 0, %s135
  $region4: #{basic_block.1} parent=0 // loop_header_branch
    %14 = sbr.rel (%p12) target = $region8
  $region5: #{basic_block.1} parent=0 // loop_body
    %s16 = ssub.s32 %s11, 1
    %s17 = ssub.s32 %s11, 2
    %s18 = sadd.s32 %s11, 1
    %s19 = ssub.s32 %s11, %s18
    %p20 = scmp.eq.s32.totalorder %s19, 0
    %s22 = sadd.s32 %s21, 1
    %s23 = scalar_select %p20, %s21, %s22
    %p26 = pneg %p20
    %p27 = scmp.eq.s32.totalorder %s11, 1
    %p28 = por %p26, %p27
    %p29 = scmp.ne.s32.totalorder %s21, %s24
    %p30 = scmp.eq.s32.totalorder %s11, 0
    %p31 = por %p29, %p30
    %p32 = scmp.ne.s32.totalorder %s21, %s24
    %p33 = scmp.eq.s32.totalorder %s16, 1
    %p34 = por %p32, %p33
    %p35 = scmp.ne.s32.totalorder %s24, %s25
    %p36 = scmp.eq.s32.totalorder %s16, 0
    %p37 = por %p35, %p36
    %p38 = scmp.ne.s32.totalorder %s24, %s25
    %p39 = scmp.eq.s32.totalorder %s17, 1
    %p40 = por %p38, %p39
    %p42 = scmp.ne.s32.totalorder %s25, %s41
    %p43 = scmp.eq.s32.totalorder %s17, 0
    %p44 = por %p42, %p43
    %s46 = sadd.s32 %s45, 1
    %p49 = scmp.eq.s32.totalorder %s11, 1
    %p50 = scmp.ne.s32.totalorder %s45, %s47
    %p51 = scmp.eq.s32.totalorder %s11, 0
    %p52 = por %p50, %p51
    %p53 = scmp.ne.s32.totalorder %s45, %s47
    %p54 = scmp.eq.s32.totalorder %s16, 1
    %p55 = por %p53, %p54
    %p56 = scmp.ne.s32.totalorder %s47, %s48
    %p57 = scmp.eq.s32.totalorder %s16, 0
    %p58 = por %p56, %p57
    %p59 = scmp.ne.s32.totalorder %s47, %s48
    %p60 = scmp.eq.s32.totalorder %s17, 1
    %p61 = por %p59, %p60
    %p63 = scmp.ne.s32.totalorder %s48, %s62
    %p64 = scmp.eq.s32.totalorder %s17, 0
    %p65 = por %p63, %p64
    %s67 = sadd.s32 %s66, 1
    %p70 = scmp.eq.s32.totalorder %s11, 1
    %p71 = scmp.ne.s32.totalorder %s66, %s68
    %p72 = scmp.eq.s32.totalorder %s11, 0
    %p73 = por %p71, %p72
    %p74 = scmp.ne.s32.totalorder %s66, %s68
    %p75 = scmp.eq.s32.totalorder %s16, 1
    %p76 = por %p74, %p75
    %p77 = scmp.ne.s32.totalorder %s68, %s69
    %p78 = scmp.eq.s32.totalorder %s16, 0
    %p79 = por %p77, %p78
    %p80 = scmp.ne.s32.totalorder %s68, %s69
    %p81 = scmp.eq.s32.totalorder %s17, 1
    %p82 = por %p80, %p81
    %p84 = scmp.ne.s32.totalorder %s69, %s83
    %p85 = scmp.eq.s32.totalorder %s17, 0
    %p86 = por %p84, %p85
    %s88 = sadd.s32 %s87, 1
    %p91 = scmp.eq.s32.totalorder %s11, 1
    %p92 = scmp.ne.s32.totalorder %s87, %s89
    %p93 = scmp.eq.s32.totalorder %s11, 0
    %p94 = por %p92, %p93
    %p95 = scmp.ne.s32.totalorder %s87, %s89
    %p96 = scmp.eq.s32.totalorder %s16, 1
    %p97 = por %p95, %p96
    %p98 = scmp.ne.s32.totalorder %s89, %s90
    %p99 = scmp.eq.s32.totalorder %s16, 0
    %p100 = por %p98, %p99
    %p101 = scmp.ne.s32.totalorder %s89, %s90
    %p102 = scmp.eq.s32.totalorder %s17, 1
    %p103 = por %p101, %p102
    %p105 = scmp.ne.s32.totalorder %s90, %s104
    %p106 = scmp.eq.s32.totalorder %s17, 0
    %p107 = por %p105, %p106
    %s109 = sadd.s32 %s108, 1
    %p112 = scmp.eq.s32.totalorder %s11, 1
    %p113 = scmp.ne.s32.totalorder %s108, %s110
    %p114 = scmp.eq.s32.totalorder %s11, 0
    %p115 = por %p113, %p114
    %p116 = scmp.ne.s32.totalorder %s108, %s110
    %p117 = scmp.eq.s32.totalorder %s16, 1
    %p118 = por %p116, %p117
    %p119 = scmp.ne.s32.totalorder %s110, %s111
    %p120 = scmp.eq.s32.totalorder %s16, 0
    %p121 = por %p119, %p120
    %p122 = scmp.ne.s32.totalorder %s110, %s111
    %p123 = scmp.eq.s32.totalorder %s17, 1
    %p124 = por %p122, %p123
    %p126 = scmp.ne.s32.totalorder %s111, %s125
    %p127 = scmp.eq.s32.totalorder %s17, 0
    %p128 = por %p126, %p127
    %s129 = ssub.s32 %s11, %s18
    %p130 = scmp.eq.s32.totalorder %s129, 0
    %s132 = sadd.s32 %s131, 1
    %s133 = scalar_select %p130, %s131, %s132
    %p136 = pneg %p130
    %p137 = scmp.eq.s32.totalorder %s11, 1
    %p138 = por %p136, %p137
    %p139 = scmp.ne.s32.totalorder %s131, %s134
    %p140 = scmp.eq.s32.totalorder %s11, 0
    %p141 = por %p139, %p140
    %p142 = scmp.ne.s32.totalorder %s131, %s134
    %p143 = scmp.eq.s32.totalorder %s16, 1
    %p144 = por %p142, %p143
    %p145 = scmp.ne.s32.totalorder %s134, %s135
    %p146 = scmp.eq.s32.totalorder %s16, 0
    %p147 = por %p145, %p146
    %p148 = scmp.ne.s32.totalorder %s134, %s135
    %p149 = scmp.eq.s32.totalorder %s17, 1
    %p150 = por %p148, %p149
    %p152 = scmp.ne.s32.totalorder %s135, %s151
    %p153 = scmp.eq.s32.totalorder %s17, 0
    %p154 = por %p152, %p153
    %p155 = scmp.le.s32.totalorder 1, %s11
    %p156 = scmp.lt.s32.totalorder %s11, 3
    %p157 = pnand %p155, %p156
    %p158 = pneg %p157
    // Predicated region
    $region9: #{basic_block.1} parent=5 // pred_check
      _
    $region10: #{basic_block.1} parent=5 // pred_check_branch
      %160 = sbr.rel (%p157) target = $region12
    $region11: #{basic_block.1} parent=5 // pred_region
      %s161 = ssub.s32 %s11, 1
      // Predicated region
      $region13: #{basic_block.1} parent=11 // pred_check
        %p162 = pneg %p58
      $region14: #{basic_block.1} parent=11 // pred_check_branch
        %164 = sbr.rel (%p162) target = $region16
      $region15: #{basic_block.1} parent=11 // pred_region
        _
      $region16: #{basic_block.1} parent=11 // pred_fallthru
        _
      // Predicated region
      $region17: #{basic_block.1} parent=11 // pred_check
        %p165 = pneg %p79
      $region18: #{basic_block.1} parent=11 // pred_check_branch
        %167 = sbr.rel (%p165) target = $region20
      $region19: #{basic_block.1} parent=11 // pred_region
        _
      $region20: #{basic_block.1} parent=11 // pred_fallthru
        _
      // Predicated region
      $region21: #{basic_block.1} parent=11 // pred_check
        %p168 = pneg %p100
      $region22: #{basic_block.1} parent=11 // pred_check_branch
        %170 = sbr.rel (%p168) target = $region24
      $region23: #{basic_block.1} parent=11 // pred_region
        _
      $region24: #{basic_block.1} parent=11 // pred_fallthru
        _
      // Predicated region
      $region25: #{basic_block.1} parent=11 // pred_check
        %p171 = pneg %p121
      $region26: #{basic_block.1} parent=11 // pred_check_branch
        %173 = sbr.rel (%p171) target = $region28
      $region27: #{basic_block.1} parent=11 // pred_region
        _
      $region28: #{basic_block.1} parent=11 // pred_fallthru
        _
    $region12: #{basic_block.1} parent=5 // pred_fallthru
      _
    %p174 = scmp.lt.s32.totalorder %s11, 2
    // Predicated region
    $region29: #{basic_block.1} parent=5 // pred_check
      %p175 = pneg %p174
    $region30: #{basic_block.1} parent=5 // pred_check_branch
      %177 = sbr.rel (%p175) target = $region32
    $region31: #{basic_block.1} parent=5 // pred_region
      // Predicated region
      $region33: #{basic_block.1} parent=31 // pred_check
        %p178 = pneg %p31
      $region34: #{basic_block.1} parent=31 // pred_check_branch
        %180 = sbr.rel (%p178) target = $region36
      $region35: #{basic_block.1} parent=31 // pred_region
        %p181 = scmp.lt.s32.totalorder %s11, 1
        %s182 = scalar_select %p181, %s11, 1
        %s183 = smul.addr %s182, 32
        %s184 = smul.addr %s183, 4
        %s185 = scalar_lea.vmem %s0, %s184
      $region36: #{basic_block.1} parent=31 // pred_fallthru
        _
    $region32: #{basic_block.1} parent=5 // pred_fallthru
      _
    %p186 = scmp.le.s32.totalorder 1, %s11
    %p187 = scmp.lt.s32.totalorder %s11, 3
    %p188 = pnand %p186, %p187
    %p189 = pneg %p188
    // Predicated region
    $region37: #{basic_block.1} parent=5 // pred_check
      _
    $region38: #{basic_block.1} parent=5 // pred_check_branch
      %191 = sbr.rel (%p188) target = $region40
    $region39: #{basic_block.1} parent=5 // pred_region
      %s192 = ssub.s32 %s11, 1
      %p193 = scmp.lt.s32.totalorder %s16, 1
      %s194 = scalar_select %p193, %s16, 1
      %s195 = smul.addr %s194, 32
      %s196 = smul.addr %s195, 4
      %s197 = scalar_lea.vmem %s0, %s196
      %p198 = pneg %p37
      %p199 = pneg %p34
      %p200 = pneg %p58
      %p201 = pneg %p55
      %p202 = pneg %p79
      %p203 = pneg %p76
      %p204 = pneg %p100
      %p205 = pneg %p97
      %p206 = pneg %p121
      %p207 = pneg %p118
      %p208 = pneg %p147
      %p209 = pneg %p144
      %p210 = scmp.lt.s32.totalorder %s16, 1
      %s211 = scalar_select %p210, %s16, 1
      %s212 = smul.addr %s211, 32
      %s213 = smul.addr %s212, 4
      %s214 = scalar_lea.vmem %s5, %s213
      %p215 = scmp.lt.s32.totalorder %s16, 1
      %s216 = scalar_select %p215, %s16, 1
      %s217 = smul.addr %s216, 32
      %s218 = smul.addr %s217, 4
      %s219 = scalar_lea.vmem %s0, %s218
      %p220 = scmp.lt.s32.totalorder %s16, 1
      %s221 = scalar_select %p220, %s16, 1
      %s222 = smul.addr %s221, 32
      %s223 = smul.addr %s222, 4
      %s224 = scalar_lea.vmem %s5, %s223
      %226 = vst [vmem:[#allocation2] sm:$0xff] 0
      %227 = vst [vmem:[#allocation2 + $0x8] sm:$0xff] 0
      %s228 = scalar_lea.vmem [#allocation2], 272
      %229 = vst [vmem:[%s228] sm:$0xff] 0
      %230 = vst [vmem:[%s228 + $0x8] sm:$0xff] 0
      %231 = vst [vmem:[#allocation2] sm:$0xf] 0
      %232 = vst [vmem:[#allocation2 + $0x10] sm:$0xf] 0
      %233 = vst [vmem:[#allocation2 + $0x20] sm:$0xf] 0
      %234 = vst [vmem:[#allocation2 + $0x30] sm:$0xf] 0
      %235 = vst [vmem:[#allocation2 + $0x40] sm:$0xf] 0
      %236 = vst [vmem:[#allocation2 + $0x50] sm:$0xf] 0
      %237 = vst [vmem:[#allocation2 + $0x60] sm:$0xf] 0
      %238 = vst [vmem:[#allocation2 + $0x70] sm:$0xf] 0
      %239 = vst [vmem:[#allocation2 + $0x80] sm:$0xf] 0
      %240 = vst [vmem:[#allocation2 + $0x90] sm:$0xf] 0
      %241 = vst [vmem:[#allocation2 + $0xa0] sm:$0xf] 0
      %242 = vst [vmem:[#allocation2 + $0xb0] sm:$0xf] 0
      %243 = vst [vmem:[#allocation2 + $0xc0] sm:$0xf] 0
      %244 = vst [vmem:[#allocation2 + $0xd0] sm:$0xf] 0
      %245 = vst [vmem:[#allocation2 + $0xe0] sm:$0xf] 0
      %246 = vst [vmem:[#allocation2 + $0xf0] sm:$0xf] 0
      %247 = vst [vmem:[#allocation2 + $0x100] sm:$0xf] 0
      %248 = vst [vmem:[#allocation2 + $0x110] sm:$0xf] 0
      %249 = vst [vmem:[#allocation2 + $0x8] sm:$0xf0] 0
      %250 = vst [vmem:[#allocation2 + $0x18] sm:$0xf0] 0
      %251 = vst [vmem:[#allocation2 + $0x28] sm:$0xf0] 0
      %252 = vst [vmem:[#allocation2 + $0x38] sm:$0xf0] 0
      %253 = vst [vmem:[#allocation2 + $0x48] sm:$0xf0] 0
      %254 = vst [vmem:[#allocation2 + $0x58] sm:$0xf0] 0
      %255 = vst [vmem:[#allocation2 + $0x68] sm:$0xf0] 0
      %256 = vst [vmem:[#allocation2 + $0x78] sm:$0xf0] 0
      %257 = vst [vmem:[#allocation2 + $0x88] sm:$0xf0] 0
      %258 = vst [vmem:[#allocation2 + $0x98] sm:$0xf0] 0
      %259 = vst [vmem:[#allocation2 + $0xa8] sm:$0xf0] 0
      %260 = vst [vmem:[#allocation2 + $0xb8] sm:$0xf0] 0
      %261 = vst [vmem:[#allocation2 + $0xc8] sm:$0xf0] 0
      %262 = vst [vmem:[#allocation2 + $0xd8] sm:$0xf0] 0
      %263 = vst [vmem:[#allocation2 + $0xe8] sm:$0xf0] 0
      %264 = vst [vmem:[#allocation2 + $0xf8] sm:$0xf0] 0
      %265 = vst [vmem:[#allocation2 + $0x108] sm:$0xf0] 0
      %266 = vst [vmem:[#allocation2 + $0x118] sm:$0xf0] 0
      %v267 = vld [vmem:[%s219] sm:$0xf]
      %v268 = vld [vmem:[%s219 + $0x4] sm:$0xf]
      %v269 = vld [vmem:[%s219 + $0x8] sm:$0xf]
      %v270 = vld [vmem:[%s219 + $0xc] sm:$0xf]
      %v271 = vld [vmem:[%s219 + $0x10] sm:$0xf]
      %v272 = vld [vmem:[%s219 + $0x14] sm:$0xf]
      %v273 = vld [vmem:[%s219 + $0x18] sm:$0xf]
      %v274 = vld [vmem:[%s219 + $0x1c] sm:$0xf]
      %v275 = vld [vmem:[%s219 + $0x20] sm:$0xf]
      %v276 = vld [vmem:[%s219 + $0x24] sm:$0xf]
      %v277 = vld [vmem:[%s219 + $0x28] sm:$0xf]
      %v278 = vld [vmem:[%s219 + $0x2c] sm:$0xf]
      %v279 = vld [vmem:[%s219 + $0x30] sm:$0xf]
      %v280 = vld [vmem:[%s219 + $0x34] sm:$0xf]
      %v281 = vld [vmem:[%s219 + $0x38] sm:$0xf]
      %v282 = vld [vmem:[%s219 + $0x3c] sm:$0xf]
      %v283 = vld [vmem:[%s219 + $0x40] sm:$0xf]
      %v284 = vld [vmem:[%s219 + $0x44] sm:$0xf]
      %v285 = vld [vmem:[%s219 + $0x48] sm:$0xf]
      %v286 = vld [vmem:[%s219 + $0x4c] sm:$0xf]
      %v287 = vld [vmem:[%s219 + $0x50] sm:$0xf]
      %v288 = vld [vmem:[%s219 + $0x54] sm:$0xf]
      %v289 = vld [vmem:[%s219 + $0x58] sm:$0xf]
      %v290 = vld [vmem:[%s219 + $0x5c] sm:$0xf]
      %v291 = vld [vmem:[%s219 + $0x60] sm:$0xf]
      %v292 = vld [vmem:[%s219 + $0x64] sm:$0xf]
      %v293 = vld [vmem:[%s219 + $0x68] sm:$0xf]
      %v294 = vld [vmem:[%s219 + $0x6c] sm:$0xf]
      %v295 = vld [vmem:[%s219 + $0x70] sm:$0xf]
      %v296 = vld [vmem:[%s219 + $0x74] sm:$0xf]
      %v297 = vld [vmem:[%s219 + $0x78] sm:$0xf]
      %v298 = vld [vmem:[%s219 + $0x7c] sm:$0xf]
      %v331 = vunpack.c.l.b16 %v267
      %v332 = vunpack.c.l.b16 %v268
      %v333 = vunpack.c.l.b16 %v269
      %v334 = vunpack.c.l.b16 %v270
      %v335 = vunpack.c.l.b16 %v271
      %v336 = vunpack.c.l.b16 %v272
      %v337 = vunpack.c.l.b16 %v273
      %v338 = vunpack.c.l.b16 %v274
      %v339 = vunpack.c.l.b16 %v275
      %v340 = vunpack.c.l.b16 %v276
      %v341 = vunpack.c.l.b16 %v277
      %v342 = vunpack.c.l.b16 %v278
      %v343 = vunpack.c.l.b16 %v279
      %v344 = vunpack.c.l.b16 %v280
      %v345 = vunpack.c.l.b16 %v281
      %v346 = vunpack.c.l.b16 %v282
      %v347 = vunpack.c.l.b16 %v283
      %v348 = vunpack.c.l.b16 %v284
      %v349 = vunpack.c.l.b16 %v285
      %v350 = vunpack.c.l.b16 %v286
      %v351 = vunpack.c.l.b16 %v287
      %v352 = vunpack.c.l.b16 %v288
      %v353 = vunpack.c.l.b16 %v289
      %v354 = vunpack.c.l.b16 %v290
      %v355 = vunpack.c.l.b16 %v291
      %v356 = vunpack.c.l.b16 %v292
      %v357 = vunpack.c.l.b16 %v293
      %v358 = vunpack.c.l.b16 %v294
      %v359 = vunpack.c.l.b16 %v295
      %v360 = vunpack.c.l.b16 %v296
      %v361 = vunpack.c.l.b16 %v297
      %v362 = vunpack.c.l.b16 %v298
      %v363 = vpack.c.b16 %v331, %v331
      %v364 = vpack.c.b16 %v332, %v332
      %v365 = vpack.c.b16 %v333, %v333
      %v366 = vpack.c.b16 %v334, %v334
      %v367 = vpack.c.b16 %v335, %v335
      %v368 = vpack.c.b16 %v336, %v336
      %v369 = vpack.c.b16 %v337, %v337
      %v370 = vpack.c.b16 %v338, %v338
      %v371 = vpack.c.b16 %v339, %v339
      %v372 = vpack.c.b16 %v340, %v340
      %v373 = vpack.c.b16 %v341, %v341
      %v374 = vpack.c.b16 %v342, %v342
      %v375 = vpack.c.b16 %v343, %v343
      %v376 = vpack.c.b16 %v344, %v344
      %v377 = vpack.c.b16 %v345, %v345
      %v378 = vpack.c.b16 %v346, %v346
      %v379 = vpack.c.b16 %v347, %v347
      %v380 = vpack.c.b16 %v348, %v348
      %v381 = vpack.c.b16 %v349, %v349
      %v382 = vpack.c.b16 %v350, %v350
      %v383 = vpack.c.b16 %v351, %v351
      %v384 = vpack.c.b16 %v352, %v352
      %v385 = vpack.c.b16 %v353, %v353
      %v386 = vpack.c.b16 %v354, %v354
      %v387 = vpack.c.b16 %v355, %v355
      %v388 = vpack.c.b16 %v356, %v356
      %v389 = vpack.c.b16 %v357, %v357
      %v390 = vpack.c.b16 %v358, %v358
      %v391 = vpack.c.b16 %v359, %v359
      %v392 = vpack.c.b16 %v360, %v360
      %v393 = vpack.c.b16 %v361, %v361
      %v394 = vpack.c.b16 %v362, %v362
      %s427 = scalar_lea.vmem [#allocation2], 16
      %428 = vst [vmem:[%s427] sm:$0xf0] %v363
      %429 = vst [vmem:[%s427 + $0x8] sm:$0xf] %v364
      %430 = vst [vmem:[%s427 + $0x10] sm:$0xf0] %v365
      %431 = vst [vmem:[%s427 + $0x18] sm:$0xf] %v366
      %432 = vst [vmem:[%s427 + $0x20] sm:$0xf0] %v367
      %433 = vst [vmem:[%s427 + $0x28] sm:$0xf] %v368
      %434 = vst [vmem:[%s427 + $0x30] sm:$0xf0] %v369
      %435 = vst [vmem:[%s427 + $0x38] sm:$0xf] %v370
      %436 = vst [vmem:[%s427 + $0x40] sm:$0xf0] %v371
      %437 = vst [vmem:[%s427 + $0x48] sm:$0xf] %v372
      %438 = vst [vmem:[%s427 + $0x50] sm:$0xf0] %v373
      %439 = vst [vmem:[%s427 + $0x58] sm:$0xf] %v374
      %440 = vst [vmem:[%s427 + $0x60] sm:$0xf0] %v375
      %441 = vst [vmem:[%s427 + $0x68] sm:$0xf] %v376
      %442 = vst [vmem:[%s427 + $0x70] sm:$0xf0] %v377
      %443 = vst [vmem:[%s427 + $0x78] sm:$0xf] %v378
      %444 = vst [vmem:[%s427 + $0x80] sm:$0xf0] %v379
      %445 = vst [vmem:[%s427 + $0x88] sm:$0xf] %v380
      %446 = vst [vmem:[%s427 + $0x90] sm:$0xf0] %v381
      %447 = vst [vmem:[%s427 + $0x98] sm:$0xf] %v382
      %448 = vst [vmem:[%s427 + $0xa0] sm:$0xf0] %v383
      %449 = vst [vmem:[%s427 + $0xa8] sm:$0xf] %v384
      %450 = vst [vmem:[%s427 + $0xb0] sm:$0xf0] %v385
      %451 = vst [vmem:[%s427 + $0xb8] sm:$0xf] %v386
      %452 = vst [vmem:[%s427 + $0xc0] sm:$0xf0] %v387
      %453 = vst [vmem:[%s427 + $0xc8] sm:$0xf] %v388
      %454 = vst [vmem:[%s427 + $0xd0] sm:$0xf0] %v389
      %455 = vst [vmem:[%s427 + $0xd8] sm:$0xf] %v390
      %456 = vst [vmem:[%s427 + $0xe0] sm:$0xf0] %v391
      %457 = vst [vmem:[%s427 + $0xe8] sm:$0xf] %v392
      %458 = vst [vmem:[%s427 + $0xf0] sm:$0xf0] %v393
      %459 = vst [vmem:[%s427 + $0xf8] sm:$0xf] %v394
      %v460 = vld [vmem:[#allocation2] sm:$0xf8]
      %v461 = vld [vmem:[#allocation2 + $0x8] sm:$0xf]
      %v462 = vld [vmem:[#allocation2 + $0x10] sm:$0xf8]
      %v463 = vld [vmem:[#allocation2 + $0x18] sm:$0xf]
      %v464 = vld [vmem:[#allocation2 + $0x20] sm:$0xf8]
      %v465 = vld [vmem:[#allocation2 + $0x28] sm:$0xf]
      %v466 = vld [vmem:[#allocation2 + $0x30] sm:$0xf8]
      %v467 = vld [vmem:[#allocation2 + $0x38] sm:$0xf]
      %v468 = vld [vmem:[#allocation2 + $0x40] sm:$0xf8]
      %v469 = vld [vmem:[#allocation2 + $0x48] sm:$0xf]
      %v470 = vld [vmem:[#allocation2 + $0x50] sm:$0xf8]
      %v471 = vld [vmem:[#allocation2 + $0x58] sm:$0xf]
      %v472 = vld [vmem:[#allocation2 + $0x60] sm:$0xf8]
      %v473 = vld [vmem:[#allocation2 + $0x68] sm:$0xf]
      %v474 = vld [vmem:[#allocation2 + $0x70] sm:$0xf8]
      %v475 = vld [vmem:[#allocation2 + $0x78] sm:$0xf]
      %v476 = vld [vmem:[#allocation2 + $0x80] sm:$0xf8]
      %v477 = vld [vmem:[#allocation2 + $0x88] sm:$0xf]
      %v478 = vld [vmem:[#allocation2 + $0x90] sm:$0xf8]
      %v479 = vld [vmem:[#allocation2 + $0x98] sm:$0xf]
      %v480 = vld [vmem:[#allocation2 + $0xa0] sm:$0xf8]
      %v481 = vld [vmem:[#allocation2 + $0xa8] sm:$0xf]
      %v482 = vld [vmem:[#allocation2 + $0xb0] sm:$0xf8]
      %v483 = vld [vmem:[#allocation2 + $0xb8] sm:$0xf]
      %v484 = vld [vmem:[#allocation2 + $0xc0] sm:$0xf8]
      %v485 = vld [vmem:[#allocation2 + $0xc8] sm:$0xf]
      %v486 = vld [vmem:[#allocation2 + $0xd0] sm:$0xf8]
      %v487 = vld [vmem:[#allocation2 + $0xd8] sm:$0xf]
      %v488 = vld [vmem:[#allocation2 + $0xe0] sm:$0xf8]
      %v489 = vld [vmem:[#allocation2 + $0xe8] sm:$0xf]
      %v490 = vld [vmem:[#allocation2 + $0xf0] sm:$0xf8]
      %v491 = vld [vmem:[#allocation2 + $0xf8] sm:$0xf]
      %vm492 = vsmask.f32 4352
      %v494 = vshrl.u32 %v460, 16
      %v496 = vrot.slane %v494, 3
      %v497 = vshll.u32 %v460, 16
      %v499 = vrot.slane %v497, 4
      %v500 = vor.u32 %v496, %v499
      %v502 = vshrl.u32 %v461, 16
      %v504 = vrot.slane %v502, 3
      %v505 = vshll.u32 %v461, 16
      %v507 = vrot.slane %v505, 4
      %v508 = vor.u32 %v504, %v507
      %v509 = vsel %vm492, %v500, %v508
      %v511 = vshrl.u32 %v462, 16
      %v513 = vrot.slane %v511, 3
      %v514 = vshll.u32 %v462, 16
      %v516 = vrot.slane %v514, 4
      %v517 = vor.u32 %v513, %v516
      %v519 = vshrl.u32 %v463, 16
      %v521 = vrot.slane %v519, 3
      %v522 = vshll.u32 %v463, 16
      %v524 = vrot.slane %v522, 4
      %v525 = vor.u32 %v521, %v524
      %v526 = vsel %vm492, %v517, %v525
      %v528 = vshrl.u32 %v464, 16
      %v530 = vrot.slane %v528, 3
      %v531 = vshll.u32 %v464, 16
      %v533 = vrot.slane %v531, 4
      %v534 = vor.u32 %v530, %v533
      %v536 = vshrl.u32 %v465, 16
      %v538 = vrot.slane %v536, 3
      %v539 = vshll.u32 %v465, 16
      %v541 = vrot.slane %v539, 4
      %v542 = vor.u32 %v538, %v541
      %v543 = vsel %vm492, %v534, %v542
      %v545 = vshrl.u32 %v466, 16
      %v547 = vrot.slane %v545, 3
      %v548 = vshll.u32 %v466, 16
      %v550 = vrot.slane %v548, 4
      %v551 = vor.u32 %v547, %v550
      %v553 = vshrl.u32 %v467, 16
      %v555 = vrot.slane %v553, 3
      %v556 = vshll.u32 %v467, 16
      %v558 = vrot.slane %v556, 4
      %v559 = vor.u32 %v555, %v558
      %v560 = vsel %vm492, %v551, %v559
      %v562 = vshrl.u32 %v468, 16
      %v564 = vrot.slane %v562, 3
      %v565 = vshll.u32 %v468, 16
      %v567 = vrot.slane %v565, 4
      %v568 = vor.u32 %v564, %v567
      %v570 = vshrl.u32 %v469, 16
      %v572 = vrot.slane %v570, 3
      %v573 = vshll.u32 %v469, 16
      %v575 = vrot.slane %v573, 4
      %v576 = vor.u32 %v572, %v575
      %v577 = vsel %vm492, %v568, %v576
      %v579 = vshrl.u32 %v470, 16
      %v581 = vrot.slane %v579, 3
      %v582 = vshll.u32 %v470, 16
      %v584 = vrot.slane %v582, 4
      %v585 = vor.u32 %v581, %v584
      %v587 = vshrl.u32 %v471, 16
      %v589 = vrot.slane %v587, 3
      %v590 = vshll.u32 %v471, 16
      %v592 = vrot.slane %v590, 4
      %v593 = vor.u32 %v589, %v592
      %v594 = vsel %vm492, %v585, %v593
      %v596 = vshrl.u32 %v472, 16
      %v598 = vrot.slane %v596, 3
      %v599 = vshll.u32 %v472, 16
      %v601 = vrot.slane %v599, 4
      %v602 = vor.u32 %v598, %v601
      %v604 = vshrl.u32 %v473, 16
      %v606 = vrot.slane %v604, 3
      %v607 = vshll.u32 %v473, 16
      %v609 = vrot.slane %v607, 4
      %v610 = vor.u32 %v606, %v609
      %v611 = vsel %vm492, %v602, %v610
      %v613 = vshrl.u32 %v474, 16
      %v615 = vrot.slane %v613, 3
      %v616 = vshll.u32 %v474, 16
      %v618 = vrot.slane %v616, 4
      %v619 = vor.u32 %v615, %v618
      %v621 = vshrl.u32 %v475, 16
      %v623 = vrot.slane %v621, 3
      %v624 = vshll.u32 %v475, 16
      %v626 = vrot.slane %v624, 4
      %v627 = vor.u32 %v623, %v626
      %v628 = vsel %vm492, %v619, %v627
      %v630 = vshrl.u32 %v476, 16
      %v632 = vrot.slane %v630, 3
      %v633 = vshll.u32 %v476, 16
      %v635 = vrot.slane %v633, 4
      %v636 = vor.u32 %v632, %v635
      %v638 = vshrl.u32 %v477, 16
      %v640 = vrot.slane %v638, 3
      %v641 = vshll.u32 %v477, 16
      %v643 = vrot.slane %v641, 4
      %v644 = vor.u32 %v640, %v643
      %v645 = vsel %vm492, %v636, %v644
      %v647 = vshrl.u32 %v478, 16
      %v649 = vrot.slane %v647, 3
      %v650 = vshll.u32 %v478, 16
      %v652 = vrot.slane %v650, 4
      %v653 = vor.u32 %v649, %v652
      %v655 = vshrl.u32 %v479, 16
      %v657 = vrot.slane %v655, 3
      %v658 = vshll.u32 %v479, 16
      %v660 = vrot.slane %v658, 4
      %v661 = vor.u32 %v657, %v660
      %v662 = vsel %vm492, %v653, %v661
      %v664 = vshrl.u32 %v480, 16
      %v666 = vrot.slane %v664, 3
      %v667 = vshll.u32 %v480, 16
      %v669 = vrot.slane %v667, 4
      %v670 = vor.u32 %v666, %v669
      %v672 = vshrl.u32 %v481, 16
      %v674 = vrot.slane %v672, 3
      %v675 = vshll.u32 %v481, 16
      %v677 = vrot.slane %v675, 4
      %v678 = vor.u32 %v674, %v677
      %v679 = vsel %vm492, %v670, %v678
      %v681 = vshrl.u32 %v482, 16
      %v683 = vrot.slane %v681, 3
      %v684 = vshll.u32 %v482, 16
      %v686 = vrot.slane %v684, 4
      %v687 = vor.u32 %v683, %v686
      %v689 = vshrl.u32 %v483, 16
      %v691 = vrot.slane %v689, 3
      %v692 = vshll.u32 %v483, 16
      %v694 = vrot.slane %v692, 4
      %v695 = vor.u32 %v691, %v694
      %v696 = vsel %vm492, %v687, %v695
      %v698 = vshrl.u32 %v484, 16
      %v700 = vrot.slane %v698, 3
      %v701 = vshll.u32 %v484, 16
      %v703 = vrot.slane %v701, 4
      %v704 = vor.u32 %v700, %v703
      %v706 = vshrl.u32 %v485, 16
      %v708 = vrot.slane %v706, 3
      %v709 = vshll.u32 %v485, 16
      %v711 = vrot.slane %v709, 4
      %v712 = vor.u32 %v708, %v711
      %v713 = vsel %vm492, %v704, %v712
      %v715 = vshrl.u32 %v486, 16
      %v717 = vrot.slane %v715, 3
      %v718 = vshll.u32 %v486, 16
      %v720 = vrot.slane %v718, 4
      %v721 = vor.u32 %v717, %v720
      %v723 = vshrl.u32 %v487, 16
      %v725 = vrot.slane %v723, 3
      %v726 = vshll.u32 %v487, 16
      %v728 = vrot.slane %v726, 4
      %v729 = vor.u32 %v725, %v728
      %v730 = vsel %vm492, %v721, %v729
      %v732 = vshrl.u32 %v488, 16
      %v734 = vrot.slane %v732, 3
      %v735 = vshll.u32 %v488, 16
      %v737 = vrot.slane %v735, 4
      %v738 = vor.u32 %v734, %v737
      %v740 = vshrl.u32 %v489, 16
      %v742 = vrot.slane %v740, 3
      %v743 = vshll.u32 %v489, 16
      %v745 = vrot.slane %v743, 4
      %v746 = vor.u32 %v742, %v745
      %v747 = vsel %vm492, %v738, %v746
      %v749 = vshrl.u32 %v490, 16
      %v751 = vrot.slane %v749, 3
      %v752 = vshll.u32 %v490, 16
      %v754 = vrot.slane %v752, 4
      %v755 = vor.u32 %v751, %v754
      %v757 = vshrl.u32 %v491, 16
      %v759 = vrot.slane %v757, 3
      %v760 = vshll.u32 %v491, 16
      %v762 = vrot.slane %v760, 4
      %v763 = vor.u32 %v759, %v762
      %v764 = vsel %vm492, %v755, %v763
      %v781 = vld [vmem:[%s1] sm:$0xf]
      %v782 = vld [vmem:[%s1 + $0x4] sm:$0xf]
      %v783 = vld [vmem:[%s1 + $0x8] sm:$0xf]
      %v784 = vld [vmem:[%s1 + $0xc] sm:$0xf]
      %v785 = vld [vmem:[%s1 + $0x10] sm:$0xf]
      %v786 = vld [vmem:[%s1 + $0x14] sm:$0xf]
      %v787 = vld [vmem:[%s1 + $0x18] sm:$0xf]
      %v788 = vld [vmem:[%s1 + $0x1c] sm:$0xf]
      %v789 = vld [vmem:[%s1 + $0x20] sm:$0xf]
      %v790 = vld [vmem:[%s1 + $0x24] sm:$0xf]
      %v791 = vld [vmem:[%s1 + $0x28] sm:$0xf]
      %v792 = vld [vmem:[%s1 + $0x2c] sm:$0xf]
      %v793 = vld [vmem:[%s1 + $0x30] sm:$0xf]
      %v794 = vld [vmem:[%s1 + $0x34] sm:$0xf]
      %v795 = vld [vmem:[%s1 + $0x38] sm:$0xf]
      %v796 = vld [vmem:[%s1 + $0x3c] sm:$0xf]
      %v797 = vld [vmem:[#allocation2] sm:$0xf0]
      %v798 = vld [vmem:[#allocation2 + $0x10] sm:$0xf0]
      %v799 = vld [vmem:[#allocation2 + $0x20] sm:$0xf0]
      %v800 = vld [vmem:[#allocation2 + $0x30] sm:$0xf0]
      %v801 = vld [vmem:[#allocation2 + $0x40] sm:$0xf0]
      %v802 = vld [vmem:[#allocation2 + $0x50] sm:$0xf0]
      %v803 = vld [vmem:[#allocation2 + $0x60] sm:$0xf0]
      %v804 = vld [vmem:[#allocation2 + $0x70] sm:$0xf0]
      %v805 = vld [vmem:[#allocation2 + $0x80] sm:$0xf0]
      %v806 = vld [vmem:[#allocation2 + $0x90] sm:$0xf0]
      %v807 = vld [vmem:[#allocation2 + $0xa0] sm:$0xf0]
      %v808 = vld [vmem:[#allocation2 + $0xb0] sm:$0xf0]
      %v809 = vld [vmem:[#allocation2 + $0xc0] sm:$0xf0]
      %v810 = vld [vmem:[#allocation2 + $0xd0] sm:$0xf0]
      %v811 = vld [vmem:[#allocation2 + $0xe0] sm:$0xf0]
      %v812 = vld [vmem:[#allocation2 + $0xf0] sm:$0xf0]
      %vm845 = vcmask 1043456
      %v846 = vrot.slane %v797, 4
      %v847 = vrot.slane %v461, 4
      %v848 = vsel %vm845, %v846, %v847
      %v849 = vrot.slane %v798, 4
      %v850 = vrot.slane %v463, 4
      %v851 = vsel %vm845, %v849, %v850
      %v852 = vrot.slane %v799, 4
      %v853 = vrot.slane %v465, 4
      %v854 = vsel %vm845, %v852, %v853
      %v855 = vrot.slane %v800, 4
      %v856 = vrot.slane %v467, 4
      %v857 = vsel %vm845, %v855, %v856
      %v858 = vrot.slane %v801, 4
      %v859 = vrot.slane %v469, 4
      %v860 = vsel %vm845, %v858, %v859
      %v861 = vrot.slane %v802, 4
      %v862 = vrot.slane %v471, 4
      %v863 = vsel %vm845, %v861, %v862
      %v864 = vrot.slane %v803, 4
      %v865 = vrot.slane %v473, 4
      %v866 = vsel %vm845, %v864, %v865
      %v867 = vrot.slane %v804, 4
      %v868 = vrot.slane %v475, 4
      %v869 = vsel %vm845, %v867, %v868
      %v870 = vrot.slane %v805, 4
      %v871 = vrot.slane %v477, 4
      %v872 = vsel %vm845, %v870, %v871
      %v873 = vrot.slane %v806, 4
      %v874 = vrot.slane %v479, 4
      %v875 = vsel %vm845, %v873, %v874
      %v876 = vrot.slane %v807, 4
      %v877 = vrot.slane %v481, 4
      %v878 = vsel %vm845, %v876, %v877
      %v879 = vrot.slane %v808, 4
      %v880 = vrot.slane %v483, 4
      %v881 = vsel %vm845, %v879, %v880
      %v882 = vrot.slane %v809, 4
      %v883 = vrot.slane %v485, 4
      %v884 = vsel %vm845, %v882, %v883
      %v885 = vrot.slane %v810, 4
      %v886 = vrot.slane %v487, 4
      %v887 = vsel %vm845, %v885, %v886
      %v888 = vrot.slane %v811, 4
      %v889 = vrot.slane %v489, 4
      %v890 = vsel %vm845, %v888, %v889
      %v891 = vrot.slane %v812, 4
      %v892 = vrot.slane %v491, 4
      %v893 = vsel %vm845, %v891, %v892
      %v910 = vld [vmem:[%s1 + $0x40] sm:$0xf]
      %v911 = vld [vmem:[%s1 + $0x44] sm:$0xf]
      %v912 = vld [vmem:[%s1 + $0x48] sm:$0xf]
      %v913 = vld [vmem:[%s1 + $0x4c] sm:$0xf]
      %v914 = vld [vmem:[%s1 + $0x50] sm:$0xf]
      %v915 = vld [vmem:[%s1 + $0x54] sm:$0xf]
      %v916 = vld [vmem:[%s1 + $0x58] sm:$0xf]
      %v917 = vld [vmem:[%s1 + $0x5c] sm:$0xf]
      %v918 = vld [vmem:[%s1 + $0x60] sm:$0xf]
      %v919 = vld [vmem:[%s1 + $0x64] sm:$0xf]
      %v920 = vld [vmem:[%s1 + $0x68] sm:$0xf]
      %v921 = vld [vmem:[%s1 + $0x6c] sm:$0xf]
      %v922 = vld [vmem:[%s1 + $0x70] sm:$0xf]
      %v923 = vld [vmem:[%s1 + $0x74] sm:$0xf]
      %v924 = vld [vmem:[%s1 + $0x78] sm:$0xf]
      %v925 = vld [vmem:[%s1 + $0x7c] sm:$0xf]
      %v942 = vunpack.c.l.b16 %v910
      %v943 = vunpack.c.l.b16 %v911
      %v944 = vunpack.c.l.b16 %v912
      %v945 = vunpack.c.l.b16 %v913
      %v946 = vunpack.c.l.b16 %v914
      %v947 = vunpack.c.l.b16 %v915
      %v948 = vunpack.c.l.b16 %v916
      %v949 = vunpack.c.l.b16 %v917
      %v950 = vunpack.c.l.b16 %v918
      %v951 = vunpack.c.l.b16 %v919
      %v952 = vunpack.c.l.b16 %v920
      %v953 = vunpack.c.l.b16 %v921
      %v954 = vunpack.c.l.b16 %v922
      %v955 = vunpack.c.l.b16 %v923
      %v956 = vunpack.c.l.b16 %v924
      %v957 = vunpack.c.l.b16 %v925
      %v958 = vpack.c.b16 %v943, %v942
      %v959 = vpack.c.b16 %v945, %v944
      %v960 = vpack.c.b16 %v947, %v946
      %v961 = vpack.c.b16 %v949, %v948
      %v962 = vpack.c.b16 %v951, %v950
      %v963 = vpack.c.b16 %v953, %v952
      %v964 = vpack.c.b16 %v955, %v954
      %v965 = vpack.c.b16 %v957, %v956
      %974 = vmatprep.subr.bf16.mxu0 0
      %975 = vmatpush1.bf16.msra.mxu0 %v958
      %976 = vmatprep.subr.bf16.mxu0 0
      %977 = vmatpush1.bf16.msra.mxu0 %v959
      %978 = vmatprep.subr.bf16.mxu0 0
      %979 = vmatpush1.bf16.msra.mxu0 %v960
      %980 = vmatprep.subr.bf16.mxu0 0
      %981 = vmatpush1.bf16.msra.mxu0 %v961
      %982 = vmatprep.subr.bf16.mxu0 0
      %983 = vmatpush1.bf16.msra.mxu0 %v962
      %984 = vmatprep.subr.bf16.mxu0 0
      %985 = vmatpush1.bf16.msra.mxu0 %v963
      %986 = vmatprep.subr.bf16.mxu0 0
      %987 = vmatpush1.bf16.msra.mxu0 %v964
      %988 = vmatprep.subr.bf16.mxu0 0
      %989 = vmatpush1.bf16.msra.mxu0 %v965
      %990 = vmatprep.subr.bf16.mxu0 0
      %991 = vmatpush1.bf16.msra.mxu0 0
      %992 = vmatprep.subr.bf16.mxu0 0
      %993 = vmatpush1.bf16.msra.mxu0 0
      %994 = vmatprep.subr.bf16.mxu0 0
      %995 = vmatpush1.bf16.msra.mxu0 0
      %996 = vmatprep.subr.bf16.mxu0 0
      %997 = vmatpush1.bf16.msra.mxu0 0
      %998 = vmatprep.subr.bf16.mxu0 0
      %999 = vmatpush1.bf16.msra.mxu0 0
      %1000 = vmatprep.subr.bf16.mxu0 0
      %1001 = vmatpush1.bf16.msra.mxu0 0
      %1002 = vmatprep.subr.bf16.mxu0 0
      %1003 = vmatpush1.bf16.msra.mxu0 0
      %1004 = vmatprep.subr.bf16.mxu0 0
      %1005 = vmatpush1.bf16.msra.mxu0 0
      %1006 = vmatprep.mubr.bf16.mxu0 0
      %1007 = vmatmul.mubr.bf16.gmra.mrb[0].mxu0 %v848
      %v1008 = vpop.f32.mrb[0].mxu0
      %v1009 = vadd.f32 0.0, %v1008
      %v1010 = vpop.f32.mrb[0].mxu0
      %v1011 = vpop.f32.mrb[0].mxu0
      %v1012 = vadd.f32 0.0, %v1011
      %v1013 = vpop.f32.mrb[0].mxu0
      %1014 = vmatprep.mubr.bf16.mxu0 0
      %1015 = vmatmul.mubr.bf16.gmra.mrb[0].mxu0 %v851
      %v1016 = vpop.f32.mrb[0].mxu0
      %v1017 = vadd.f32 0.0, %v1016
      %v1018 = vpop.f32.mrb[0].mxu0
      %v1019 = vpop.f32.mrb[0].mxu0
      %v1020 = vadd.f32 0.0, %v1019
      %v1021 = vpop.f32.mrb[0].mxu0
      %1022 = vmatprep.mubr.bf16.mxu0 0
      %1023 = vmatmul.mubr.bf16.gmra.mrb[0].mxu0 %v854
      %v1024 = vpop.f32.mrb[0].mxu0
      %v1025 = vadd.f32 0.0, %v1024
      %v1026 = vpop.f32.mrb[0].mxu0
      %v1027 = vpop.f32.mrb[0].mxu0
      %v1028 = vadd.f32 0.0, %v1027
      %v1029 = vpop.f32.mrb[0].mxu0
      %1030 = vmatprep.mubr.bf16.mxu0 0
      %1031 = vmatmul.mubr.bf16.gmra.mrb[0].mxu0 %v857
      %v1032 = vpop.f32.mrb[0].mxu0
      %v1033 = vadd.f32 0.0, %v1032
      %v1034 = vpop.f32.mrb[0].mxu0
      %v1035 = vpop.f32.mrb[0].mxu0
      %v1036 = vadd.f32 0.0, %v1035
      %v1037 = vpop.f32.mrb[0].mxu0
      %1038 = vmatprep.mubr.bf16.mxu0 0
      %1039 = vmatmul.mubr.bf16.gmra.mrb[0].mxu0 %v860
      %v1040 = vpop.f32.mrb[0].mxu0
      %v1041 = vadd.f32 0.0, %v1040
      %v1042 = vpop.f32.mrb[0].mxu0
      %v1043 = vpop.f32.mrb[0].mxu0
      %v1044 = vadd.f32 0.0, %v1043
      %v1045 = vpop.f32.mrb[0].mxu0
      %1046 = vmatprep.mubr.bf16.mxu0 0
      %1047 = vmatmul.mubr.bf16.gmra.mrb[0].mxu0 %v863
      %v1048 = vpop.f32.mrb[0].mxu0
      %v1049 = vadd.f32 0.0, %v1048
      %v1050 = vpop.f32.mrb[0].mxu0
      %v1051 = vpop.f32.mrb[0].mxu0
      %v1052 = vadd.f32 0.0, %v1051
      %v1053 = vpop.f32.mrb[0].mxu0
      %1054 = vmatprep.mubr.bf16.mxu0 0
      %1055 = vmatmul.mubr.bf16.gmra.mrb[0].mxu0 %v866
      %v1056 = vpop.f32.mrb[0].mxu0
      %v1057 = vadd.f32 0.0, %v1056
      %v1058 = vpop.f32.mrb[0].mxu0
      %v1059 = vpop.f32.mrb[0].mxu0
      %v1060 = vadd.f32 0.0, %v1059
      %v1061 = vpop.f32.mrb[0].mxu0
      %1062 = vmatprep.mubr.bf16.mxu0 0
      %1063 = vmatmul.mubr.bf16.gmra.mrb[0].mxu0 %v869
      %v1064 = vpop.f32.mrb[0].mxu0
      %v1065 = vadd.f32 0.0, %v1064
      %v1066 = vpop.f32.mrb[0].mxu0
      %v1067 = vpop.f32.mrb[0].mxu0
      %v1068 = vadd.f32 0.0, %v1067
      %v1069 = vpop.f32.mrb[0].mxu0
      %1070 = vmatprep.mubr.bf16.mxu0 0
      %1071 = vmatmul.mubr.bf16.gmra.mrb[0].mxu0 %v872
      %v1072 = vpop.f32.mrb[0].mxu0
      %v1073 = vadd.f32 0.0, %v1072
      %v1074 = vpop.f32.mrb[0].mxu0
      %v1075 = vpop.f32.mrb[0].mxu0
      %v1076 = vadd.f32 0.0, %v1075
      %v1077 = vpop.f32.mrb[0].mxu0
      %1078 = vmatprep.mubr.bf16.mxu0 0
      %1079 = vmatmul.mubr.bf16.gmra.mrb[0].mxu0 %v875
      %v1080 = vpop.f32.mrb[0].mxu0
      %v1081 = vadd.f32 0.0, %v1080
      %v1082 = vpop.f32.mrb[0].mxu0
      %v1083 = vpop.f32.mrb[0].mxu0
      %v1084 = vadd.f32 0.0, %v1083
      %v1085 = vpop.f32.mrb[0].mxu0
      %1086 = vmatprep.mubr.bf16.mxu0 0
      %1087 = vmatmul.mubr.bf16.gmra.mrb[0].mxu0 %v878
      %v1088 = vpop.f32.mrb[0].mxu0
      %v1089 = vadd.f32 0.0, %v1088
      %v1090 = vpop.f32.mrb[0].mxu0
      %v1091 = vpop.f32.mrb[0].mxu0
      %v1092 = vadd.f32 0.0, %v1091
      %v1093 = vpop.f32.mrb[0].mxu0
      %1094 = vmatprep.mubr.bf16.mxu0 0
      %1095 = vmatmul.mubr.bf16.gmra.mrb[0].mxu0 %v881
      %v1096 = vpop.f32.mrb[0].mxu0
      %v1097 = vadd.f32 0.0, %v1096
      %v1098 = vpop.f32.mrb[0].mxu0
      %v1099 = vpop.f32.mrb[0].mxu0
      %v1100 = vadd.f32 0.0, %v1099
      %v1101 = vpop.f32.mrb[0].mxu0
      %1102 = vmatprep.mubr.bf16.mxu0 0
      %1103 = vmatmul.mubr.bf16.gmra.mrb[0].mxu0 %v884
      %v1104 = vpop.f32.mrb[0].mxu0
      %v1105 = vadd.f32 0.0, %v1104
      %v1106 = vpop.f32.mrb[0].mxu0
      %v1107 = vpop.f32.mrb[0].mxu0
      %v1108 = vadd.f32 0.0, %v1107
      %v1109 = vpop.f32.mrb[0].mxu0
      %1110 = vmatprep.mubr.bf16.mxu0 0
      %1111 = vmatmul.mubr.bf16.gmra.mrb[0].mxu0 %v887
      %v1112 = vpop.f32.mrb[0].mxu0
      %v1113 = vadd.f32 0.0, %v1112
      %v1114 = vpop.f32.mrb[0].mxu0
      %v1115 = vpop.f32.mrb[0].mxu0
      %v1116 = vadd.f32 0.0, %v1115
      %v1117 = vpop.f32.mrb[0].mxu0
      %1118 = vmatprep.mubr.bf16.mxu0 0
      %1119 = vmatmul.mubr.bf16.gmra.mrb[0].mxu0 %v890
      %v1120 = vpop.f32.mrb[0].mxu0
      %v1121 = vadd.f32 0.0, %v1120
      %v1122 = vpop.f32.mrb[0].mxu0
      %v1123 = vpop.f32.mrb[0].mxu0
      %v1124 = vadd.f32 0.0, %v1123
      %v1125 = vpop.f32.mrb[0].mxu0
      %1126 = vmatprep.mubr.bf16.mxu0 0
      %1127 = vmatmul.mubr.bf16.gmra.mrb[0].mxu0 %v893
      %v1128 = vpop.f32.mrb[0].mxu0
      %v1129 = vadd.f32 0.0, %v1128
      %v1130 = vpop.f32.mrb[0].mxu0
      %v1131 = vpop.f32.mrb[0].mxu0
      %v1132 = vadd.f32 0.0, %v1131
      %v1133 = vpop.f32.mrb[0].mxu0
      %1134 = vdwg.mxu0
      %v1151 = vunpack.c.l.b16 %v781
      %v1152 = vunpack.c.l.b16 %v782
      %v1153 = vunpack.c.l.b16 %v783
      %v1154 = vunpack.c.l.b16 %v784
      %v1155 = vunpack.c.l.b16 %v785
      %v1156 = vunpack.c.l.b16 %v786
      %v1157 = vunpack.c.l.b16 %v787
      %v1158 = vunpack.c.l.b16 %v788
      %v1159 = vunpack.c.l.b16 %v789
      %v1160 = vunpack.c.l.b16 %v790
      %v1161 = vunpack.c.l.b16 %v791
      %v1162 = vunpack.c.l.b16 %v792
      %v1163 = vunpack.c.l.b16 %v793
      %v1164 = vunpack.c.l.b16 %v794
      %v1165 = vunpack.c.l.b16 %v795
      %v1166 = vunpack.c.l.b16 %v796
      %v1167 = vpack.c.b16 %v1152, %v1151
      %v1168 = vpack.c.b16 %v1154, %v1153
      %v1169 = vpack.c.b16 %v1156, %v1155
      %v1170 = vpack.c.b16 %v1158, %v1157
      %v1171 = vpack.c.b16 %v1160, %v1159
      %v1172 = vpack.c.b16 %v1162, %v1161
      %v1173 = vpack.c.b16 %v1164, %v1163
      %v1174 = vpack.c.b16 %v1166, %v1165
      %1183 = vmatprep.subr.bf16.mxu0 0
      %1184 = vmatpush1.bf16.msra.mxu0 %v1167
      %1185 = vmatprep.subr.bf16.mxu0 0
      %1186 = vmatpush1.bf16.msra.mxu0 %v1168
      %1187 = vmatprep.subr.bf16.mxu0 0
      %1188 = vmatpush1.bf16.msra.mxu0 %v1169
      %1189 = vmatprep.subr.bf16.mxu0 0
      %1190 = vmatpush1.bf16.msra.mxu0 %v1170
      %1191 = vmatprep.subr.bf16.mxu0 0
      %1192 = vmatpush1.bf16.msra.mxu0 %v1171
      %1193 = vmatprep.subr.bf16.mxu0 0
      %1194 = vmatpush1.bf16.msra.mxu0 %v1172
      %1195 = vmatprep.subr.bf16.mxu0 0
      %1196 = vmatpush1.bf16.msra.mxu0 %v1173
      %1197 = vmatprep.subr.bf16.mxu0 0
      %1198 = vmatpush1.bf16.msra.mxu0 %v1174
      %1199 = vmatprep.subr.bf16.mxu0 0
      %1200 = vmatpush1.bf16.msra.mxu0 0
      %1201 = vmatprep.subr.bf16.mxu0 0
      %1202 = vmatpush1.bf16.msra.mxu0 0
      %1203 = vmatprep.subr.bf16.mxu0 0
      %1204 = vmatpush1.bf16.msra.mxu0 0
      %1205 = vmatprep.subr.bf16.mxu0 0
      %1206 = vmatpush1.bf16.msra.mxu0 0
      %1207 = vmatprep.subr.bf16.mxu0 0
      %1208 = vmatpush1.bf16.msra.mxu0 0
      %1209 = vmatprep.subr.bf16.mxu0 0
      %1210 = vmatpush1.bf16.msra.mxu0 0
      %1211 = vmatprep.subr.bf16.mxu0 0
      %1212 = vmatpush1.bf16.msra.mxu0 0
      %1213 = vmatprep.subr.bf16.mxu0 0
      %1214 = vmatpush1.bf16.msra.mxu0 0
      %1215 = vmatprep.mubr.bf16.mxu0 0
      %1216 = vmatmul.mubr.bf16.gmra.mrb[0].mxu0 %v509
      %v1217 = vpop.f32.mrb[0].mxu0
      %v1218 = vadd.f32 %v1009, %v1217
      %v1219 = vpop.f32.mrb[0].mxu0
      %v1220 = vpop.f32.mrb[0].mxu0
      %v1221 = vadd.f32 %v1012, %v1220
      %v1222 = vpop.f32.mrb[0].mxu0
      %1223 = vmatprep.mubr.bf16.mxu0 0
      %1224 = vmatmul.mubr.bf16.gmra.mrb[0].mxu0 %v526
      %v1225 = vpop.f32.mrb[0].mxu0
      %v1226 = vadd.f32 %v1017, %v1225
      %v1227 = vpop.f32.mrb[0].mxu0
      %v1228 = vpop.f32.mrb[0].mxu0
      %v1229 = vadd.f32 %v1020, %v1228
      %v1230 = vpop.f32.mrb[0].mxu0
      %1231 = vmatprep.mubr.bf16.mxu0 0
      %1232 = vmatmul.mubr.bf16.gmra.mrb[0].mxu0 %v543
      %v1233 = vpop.f32.mrb[0].mxu0
      %v1234 = vadd.f32 %v1025, %v1233
      %v1235 = vpop.f32.mrb[0].mxu0
      %v1236 = vpop.f32.mrb[0].mxu0
      %v1237 = vadd.f32 %v1028, %v1236
      %v1238 = vpop.f32.mrb[0].mxu0
      %1239 = vmatprep.mubr.bf16.mxu0 0
      %1240 = vmatmul.mubr.bf16.gmra.mrb[0].mxu0 %v560
      %v1241 = vpop.f32.mrb[0].mxu0
      %v1242 = vadd.f32 %v1033, %v1241
      %v1243 = vpop.f32.mrb[0].mxu0
      %v1244 = vpop.f32.mrb[0].mxu0
      %v1245 = vadd.f32 %v1036, %v1244
      %v1246 = vpop.f32.mrb[0].mxu0
      %1247 = vmatprep.mubr.bf16.mxu0 0
      %1248 = vmatmul.mubr.bf16.gmra.mrb[0].mxu0 %v577
      %v1249 = vpop.f32.mrb[0].mxu0
      %v1250 = vadd.f32 %v1041, %v1249
      %v1251 = vpop.f32.mrb[0].mxu0
      %v1252 = vpop.f32.mrb[0].mxu0
      %v1253 = vadd.f32 %v1044, %v1252
      %v1254 = vpop.f32.mrb[0].mxu0
      %1255 = vmatprep.mubr.bf16.mxu0 0
      %1256 = vmatmul.mubr.bf16.gmra.mrb[0].mxu0 %v594
      %v1257 = vpop.f32.mrb[0].mxu0
      %v1258 = vadd.f32 %v1049, %v1257
      %v1259 = vpop.f32.mrb[0].mxu0
      %v1260 = vpop.f32.mrb[0].mxu0
      %v1261 = vadd.f32 %v1052, %v1260
      %v1262 = vpop.f32.mrb[0].mxu0
      %1263 = vmatprep.mubr.bf16.mxu0 0
      %1264 = vmatmul.mubr.bf16.gmra.mrb[0].mxu0 %v611
      %v1265 = vpop.f32.mrb[0].mxu0
      %v1266 = vadd.f32 %v1057, %v1265
      %v1267 = vpop.f32.mrb[0].mxu0
      %v1268 = vpop.f32.mrb[0].mxu0
      %v1269 = vadd.f32 %v1060, %v1268
      %v1270 = vpop.f32.mrb[0].mxu0
      %1271 = vmatprep.mubr.bf16.mxu0 0
      %1272 = vmatmul.mubr.bf16.gmra.mrb[0].mxu0 %v628
      %v1273 = vpop.f32.mrb[0].mxu0
      %v1274 = vadd.f32 %v1065, %v1273
      %v1275 = vpop.f32.mrb[0].mxu0
      %v1276 = vpop.f32.mrb[0].mxu0
      %v1277 = vadd.f32 %v1068, %v1276
      %v1278 = vpop.f32.mrb[0].mxu0
      %1279 = vmatprep.mubr.bf16.mxu0 0
      %1280 = vmatmul.mubr.bf16.gmra.mrb[0].mxu0 %v645
      %v1281 = vpop.f32.mrb[0].mxu0
      %v1282 = vadd.f32 %v1073, %v1281
      %v1283 = vpop.f32.mrb[0].mxu0
      %v1284 = vpop.f32.mrb[0].mxu0
      %v1285 = vadd.f32 %v1076, %v1284
      %v1286 = vpop.f32.mrb[0].mxu0
      %1287 = vmatprep.mubr.bf16.mxu0 0
      %1288 = vmatmul.mubr.bf16.gmra.mrb[0].mxu0 %v662
      %v1289 = vpop.f32.mrb[0].mxu0
      %v1290 = vadd.f32 %v1081, %v1289
      %v1291 = vpop.f32.mrb[0].mxu0
      %v1292 = vpop.f32.mrb[0].mxu0
      %v1293 = vadd.f32 %v1084, %v1292
      %v1294 = vpop.f32.mrb[0].mxu0
      %1295 = vmatprep.mubr.bf16.mxu0 0
      %1296 = vmatmul.mubr.bf16.gmra.mrb[0].mxu0 %v679
      %v1297 = vpop.f32.mrb[0].mxu0
      %v1298 = vadd.f32 %v1089, %v1297
      %v1299 = vpop.f32.mrb[0].mxu0
      %v1300 = vpop.f32.mrb[0].mxu0
      %v1301 = vadd.f32 %v1092, %v1300
      %v1302 = vpop.f32.mrb[0].mxu0
      %1303 = vmatprep.mubr.bf16.mxu0 0
      %1304 = vmatmul.mubr.bf16.gmra.mrb[0].mxu0 %v696
      %v1305 = vpop.f32.mrb[0].mxu0
      %v1306 = vadd.f32 %v1097, %v1305
      %v1307 = vpop.f32.mrb[0].mxu0
      %v1308 = vpop.f32.mrb[0].mxu0
      %v1309 = vadd.f32 %v1100, %v1308
      %v1310 = vpop.f32.mrb[0].mxu0
      %1311 = vmatprep.mubr.bf16.mxu0 0
      %1312 = vmatmul.mubr.bf16.gmra.mrb[0].mxu0 %v713
      %v1313 = vpop.f32.mrb[0].mxu0
      %v1314 = vadd.f32 %v1105, %v1313
      %v1315 = vpop.f32.mrb[0].mxu0
      %v1316 = vpop.f32.mrb[0].mxu0
      %v1317 = vadd.f32 %v1108, %v1316
      %v1318 = vpop.f32.mrb[0].mxu0
      %1319 = vmatprep.mubr.bf16.mxu0 0
      %1320 = vmatmul.mubr.bf16.gmra.mrb[0].mxu0 %v730
      %v1321 = vpop.f32.mrb[0].mxu0
      %v1322 = vadd.f32 %v1113, %v1321
      %v1323 = vpop.f32.mrb[0].mxu0
      %v1324 = vpop.f32.mrb[0].mxu0
      %v1325 = vadd.f32 %v1116, %v1324
      %v1326 = vpop.f32.mrb[0].mxu0
      %1327 = vmatprep.mubr.bf16.mxu0 0
      %1328 = vmatmul.mubr.bf16.gmra.mrb[0].mxu0 %v747
      %v1329 = vpop.f32.mrb[0].mxu0
      %v1330 = vadd.f32 %v1121, %v1329
      %v1331 = vpop.f32.mrb[0].mxu0
      %v1332 = vpop.f32.mrb[0].mxu0
      %v1333 = vadd.f32 %v1124, %v1332
      %v1334 = vpop.f32.mrb[0].mxu0
      %1335 = vmatprep.mubr.bf16.mxu0 0
      %1336 = vmatmul.mubr.bf16.gmra.mrb[0].mxu0 %v764
      %v1337 = vpop.f32.mrb[0].mxu0
      %v1338 = vadd.f32 %v1129, %v1337
      %v1339 = vpop.f32.mrb[0].mxu0
      %v1340 = vpop.f32.mrb[0].mxu0
      %v1341 = vadd.f32 %v1132, %v1340
      %v1342 = vpop.f32.mrb[0].mxu0
      %1343 = vdwg.mxu0
      %v1344 = vld [vmem:[#allocation2 + $0x8] sm:$0x1f]
      %v1345 = vld [vmem:[#allocation2 + $0x18] sm:$0x1f]
      %v1346 = vld [vmem:[#allocation2 + $0x28] sm:$0x1f]
      %v1347 = vld [vmem:[#allocation2 + $0x38] sm:$0x1f]
      %v1348 = vld [vmem:[#allocation2 + $0x48] sm:$0x1f]
      %v1349 = vld [vmem:[#allocation2 + $0x58] sm:$0x1f]
      %v1350 = vld [vmem:[#allocation2 + $0x68] sm:$0x1f]
      %v1351 = vld [vmem:[#allocation2 + $0x78] sm:$0x1f]
      %v1352 = vld [vmem:[#allocation2 + $0x88] sm:$0x1f]
      %v1353 = vld [vmem:[#allocation2 + $0x98] sm:$0x1f]
      %v1354 = vld [vmem:[#allocation2 + $0xa8] sm:$0x1f]
      %v1355 = vld [vmem:[#allocation2 + $0xb8] sm:$0x1f]
      %v1356 = vld [vmem:[#allocation2 + $0xc8] sm:$0x1f]
      %v1357 = vld [vmem:[#allocation2 + $0xd8] sm:$0x1f]
      %v1358 = vld [vmem:[#allocation2 + $0xe8] sm:$0x1f]
      %v1359 = vld [vmem:[#allocation2 + $0xf8] sm:$0x1f]
      %vm1360 = vsmask.f32 3328
      %v1362 = vshrl.u32 %v797, 16
      %v1364 = vrot.slane %v1362, 4
      %v1365 = vshll.u32 %v797, 16
      %v1367 = vrot.slane %v1365, 5
      %v1368 = vor.u32 %v1364, %v1367
      %v1370 = vshrl.u32 %v1344, 16
      %v1372 = vrot.slane %v1370, 4
      %v1373 = vshll.u32 %v1344, 16
      %v1375 = vrot.slane %v1373, 5
      %v1376 = vor.u32 %v1372, %v1375
      %v1377 = vsel %vm1360, %v1368, %v1376
      %v1379 = vshrl.u32 %v798, 16
      %v1381 = vrot.slane %v1379, 4
      %v1382 = vshll.u32 %v798, 16
      %v1384 = vrot.slane %v1382, 5
      %v1385 = vor.u32 %v1381, %v1384
      %v1387 = vshrl.u32 %v1345, 16
      %v1389 = vrot.slane %v1387, 4
      %v1390 = vshll.u32 %v1345, 16
      %v1392 = vrot.slane %v1390, 5
      %v1393 = vor.u32 %v1389, %v1392
      %v1394 = vsel %vm1360, %v1385, %v1393
      %v1396 = vshrl.u32 %v799, 16
      %v1398 = vrot.slane %v1396, 4
      %v1399 = vshll.u32 %v799, 16
      %v1401 = vrot.slane %v1399, 5
      %v1402 = vor.u32 %v1398, %v1401
      %v1404 = vshrl.u32 %v1346, 16
      %v1406 = vrot.slane %v1404, 4
      %v1407 = vshll.u32 %v1346, 16
      %v1409 = vrot.slane %v1407, 5
      %v1410 = vor.u32 %v1406, %v1409
      %v1411 = vsel %vm1360, %v1402, %v1410
      %v1413 = vshrl.u32 %v800, 16
      %v1415 = vrot.slane %v1413, 4
      %v1416 = vshll.u32 %v800, 16
      %v1418 = vrot.slane %v1416, 5
      %v1419 = vor.u32 %v1415, %v1418
      %v1421 = vshrl.u32 %v1347, 16
      %v1423 = vrot.slane %v1421, 4
      %v1424 = vshll.u32 %v1347, 16
      %v1426 = vrot.slane %v1424, 5
      %v1427 = vor.u32 %v1423, %v1426
      %v1428 = vsel %vm1360, %v1419, %v1427
      %v1430 = vshrl.u32 %v801, 16
      %v1432 = vrot.slane %v1430, 4
      %v1433 = vshll.u32 %v801, 16
      %v1435 = vrot.slane %v1433, 5
      %v1436 = vor.u32 %v1432, %v1435
      %v1438 = vshrl.u32 %v1348, 16
      %v1440 = vrot.slane %v1438, 4
      %v1441 = vshll.u32 %v1348, 16
      %v1443 = vrot.slane %v1441, 5
      %v1444 = vor.u32 %v1440, %v1443
      %v1445 = vsel %vm1360, %v1436, %v1444
      %v1447 = vshrl.u32 %v802, 16
      %v1449 = vrot.slane %v1447, 4
      %v1450 = vshll.u32 %v802, 16
      %v1452 = vrot.slane %v1450, 5
      %v1453 = vor.u32 %v1449, %v1452
      %v1455 = vshrl.u32 %v1349, 16
      %v1457 = vrot.slane %v1455, 4
      %v1458 = vshll.u32 %v1349, 16
      %v1460 = vrot.slane %v1458, 5
      %v1461 = vor.u32 %v1457, %v1460
      %v1462 = vsel %vm1360, %v1453, %v1461
      %v1464 = vshrl.u32 %v803, 16
      %v1466 = vrot.slane %v1464, 4
      %v1467 = vshll.u32 %v803, 16
      %v1469 = vrot.slane %v1467, 5
      %v1470 = vor.u32 %v1466, %v1469
      %v1472 = vshrl.u32 %v1350, 16
      %v1474 = vrot.slane %v1472, 4
      %v1475 = vshll.u32 %v1350, 16
      %v1477 = vrot.slane %v1475, 5
      %v1478 = vor.u32 %v1474, %v1477
      %v1479 = vsel %vm1360, %v1470, %v1478
      %v1481 = vshrl.u32 %v804, 16
      %v1483 = vrot.slane %v1481, 4
      %v1484 = vshll.u32 %v804, 16
      %v1486 = vrot.slane %v1484, 5
      %v1487 = vor.u32 %v1483, %v1486
      %v1489 = vshrl.u32 %v1351, 16
      %v1491 = vrot.slane %v1489, 4
      %v1492 = vshll.u32 %v1351, 16
      %v1494 = vrot.slane %v1492, 5
      %v1495 = vor.u32 %v1491, %v1494
      %v1496 = vsel %vm1360, %v1487, %v1495
      %v1498 = vshrl.u32 %v805, 16
      %v1500 = vrot.slane %v1498, 4
      %v1501 = vshll.u32 %v805, 16
      %v1503 = vrot.slane %v1501, 5
      %v1504 = vor.u32 %v1500, %v1503
      %v1506 = vshrl.u32 %v1352, 16
      %v1508 = vrot.slane %v1506, 4
      %v1509 = vshll.u32 %v1352, 16
      %v1511 = vrot.slane %v1509, 5
      %v1512 = vor.u32 %v1508, %v1511
      %v1513 = vsel %vm1360, %v1504, %v1512
      %v1515 = vshrl.u32 %v806, 16
      %v1517 = vrot.slane %v1515, 4
      %v1518 = vshll.u32 %v806, 16
      %v1520 = vrot.slane %v1518, 5
      %v1521 = vor.u32 %v1517, %v1520
      %v1523 = vshrl.u32 %v1353, 16
      %v1525 = vrot.slane %v1523, 4
      %v1526 = vshll.u32 %v1353, 16
      %v1528 = vrot.slane %v1526, 5
      %v1529 = vor.u32 %v1525, %v1528
      %v1530 = vsel %vm1360, %v1521, %v1529
      %v1532 = vshrl.u32 %v807, 16
      %v1534 = vrot.slane %v1532, 4
      %v1535 = vshll.u32 %v807, 16
      %v1537 = vrot.slane %v1535, 5
      %v1538 = vor.u32 %v1534, %v1537
      %v1540 = vshrl.u32 %v1354, 16
      %v1542 = vrot.slane %v1540, 4
      %v1543 = vshll.u32 %v1354, 16
      %v1545 = vrot.slane %v1543, 5
      %v1546 = vor.u32 %v1542, %v1545
      %v1547 = vsel %vm1360, %v1538, %v1546
      %v1549 = vshrl.u32 %v808, 16
      %v1551 = vrot.slane %v1549, 4
      %v1552 = vshll.u32 %v808, 16
      %v1554 = vrot.slane %v1552, 5
      %v1555 = vor.u32 %v1551, %v1554
      %v1557 = vshrl.u32 %v1355, 16
      %v1559 = vrot.slane %v1557, 4
      %v1560 = vshll.u32 %v1355, 16
      %v1562 = vrot.slane %v1560, 5
      %v1563 = vor.u32 %v1559, %v1562
      %v1564 = vsel %vm1360, %v1555, %v1563
      %v1566 = vshrl.u32 %v809, 16
      %v1568 = vrot.slane %v1566, 4
      %v1569 = vshll.u32 %v809, 16
      %v1571 = vrot.slane %v1569, 5
      %v1572 = vor.u32 %v1568, %v1571
      %v1574 = vshrl.u32 %v1356, 16
      %v1576 = vrot.slane %v1574, 4
      %v1577 = vshll.u32 %v1356, 16
      %v1579 = vrot.slane %v1577, 5
      %v1580 = vor.u32 %v1576, %v1579
      %v1581 = vsel %vm1360, %v1572, %v1580
      %v1583 = vshrl.u32 %v810, 16
      %v1585 = vrot.slane %v1583, 4
      %v1586 = vshll.u32 %v810, 16
      %v1588 = vrot.slane %v1586, 5
      %v1589 = vor.u32 %v1585, %v1588
      %v1591 = vshrl.u32 %v1357, 16
      %v1593 = vrot.slane %v1591, 4
      %v1594 = vshll.u32 %v1357, 16
      %v1596 = vrot.slane %v1594, 5
      %v1597 = vor.u32 %v1593, %v1596
      %v1598 = vsel %vm1360, %v1589, %v1597
      %v1600 = vshrl.u32 %v811, 16
      %v1602 = vrot.slane %v1600, 4
      %v1603 = vshll.u32 %v811, 16
      %v1605 = vrot.slane %v1603, 5
      %v1606 = vor.u32 %v1602, %v1605
      %v1608 = vshrl.u32 %v1358, 16
      %v1610 = vrot.slane %v1608, 4
      %v1611 = vshll.u32 %v1358, 16
      %v1613 = vrot.slane %v1611, 5
      %v1614 = vor.u32 %v1610, %v1613
      %v1615 = vsel %vm1360, %v1606, %v1614
      %v1617 = vshrl.u32 %v812, 16
      %v1619 = vrot.slane %v1617, 4
      %v1620 = vshll.u32 %v812, 16
      %v1622 = vrot.slane %v1620, 5
      %v1623 = vor.u32 %v1619, %v1622
      %v1625 = vshrl.u32 %v1359, 16
      %v1627 = vrot.slane %v1625, 4
      %v1628 = vshll.u32 %v1359, 16
      %v1630 = vrot.slane %v1628, 5
      %v1631 = vor.u32 %v1627, %v1630
      %v1632 = vsel %vm1360, %v1623, %v1631
      %v1649 = vld [vmem:[%s1 + $0x80] sm:$0xf]
      %v1650 = vld [vmem:[%s1 + $0x84] sm:$0xf]
      %v1651 = vld [vmem:[%s1 + $0x88] sm:$0xf]
      %v1652 = vld [vmem:[%s1 + $0x8c] sm:$0xf]
      %v1653 = vld [vmem:[%s1 + $0x90] sm:$0xf]
      %v1654 = vld [vmem:[%s1 + $0x94] sm:$0xf]
      %v1655 = vld [vmem:[%s1 + $0x98] sm:$0xf]
      %v1656 = vld [vmem:[%s1 + $0x9c] sm:$0xf]
      %v1657 = vld [vmem:[%s1 + $0xa0] sm:$0xf]
      %v1658 = vld [vmem:[%s1 + $0xa4] sm:$0xf]
      %v1659 = vld [vmem:[%s1 + $0xa8] sm:$0xf]
      %v1660 = vld [vmem:[%s1 + $0xac] sm:$0xf]
      %v1661 = vld [vmem:[%s1 + $0xb0] sm:$0xf]
      %v1662 = vld [vmem:[%s1 + $0xb4] sm:$0xf]
      %v1663 = vld [vmem:[%s1 + $0xb8] sm:$0xf]
      %v1664 = vld [vmem:[%s1 + $0xbc] sm:$0xf]
      %v1681 = vunpack.c.l.b16 %v1649
      %v1682 = vunpack.c.l.b16 %v1650
      %v1683 = vunpack.c.l.b16 %v1651
      %v1684 = vunpack.c.l.b16 %v1652
      %v1685 = vunpack.c.l.b16 %v1653
      %v1686 = vunpack.c.l.b16 %v1654
      %v1687 = vunpack.c.l.b16 %v1655
      %v1688 = vunpack.c.l.b16 %v1656
      %v1689 = vunpack.c.l.b16 %v1657
      %v1690 = vunpack.c.l.b16 %v1658
      %v1691 = vunpack.c.l.b16 %v1659
      %v1692 = vunpack.c.l.b16 %v1660
      %v1693 = vunpack.c.l.b16 %v1661
      %v1694 = vunpack.c.l.b16 %v1662
      %v1695 = vunpack.c.l.b16 %v1663
      %v1696 = vunpack.c.l.b16 %v1664
      %v1697 = vpack.c.b16 %v1682, %v1681
      %v1698 = vpack.c.b16 %v1684, %v1683
      %v1699 = vpack.c.b16 %v1686, %v1685
      %v1700 = vpack.c.b16 %v1688, %v1687
      %v1701 = vpack.c.b16 %v1690, %v1689
      %v1702 = vpack.c.b16 %v1692, %v1691
      %v1703 = vpack.c.b16 %v1694, %v1693
      %v1704 = vpack.c.b16 %v1696, %v1695
      %1713 = vmatprep.subr.bf16.mxu0 0
      %1714 = vmatpush1.bf16.msra.mxu0 %v1697
      %1715 = vmatprep.subr.bf16.mxu0 0
      %1716 = vmatpush1.bf16.msra.mxu0 %v1698
      %1717 = vmatprep.subr.bf16.mxu0 0
      %1718 = vmatpush1.bf16.msra.mxu0 %v1699
      %1719 = vmatprep.subr.bf16.mxu0 0
      %1720 = vmatpush1.bf16.msra.mxu0 %v1700
      %1721 = vmatprep.subr.bf16.mxu0 0
      %1722 = vmatpush1.bf16.msra.mxu0 %v1701
      %1723 = vmatprep.subr.bf16.mxu0 0
      %1724 = vmatpush1.bf16.msra.mxu0 %v1702
      %1725 = vmatprep.subr.bf16.mxu0 0
      %1726 = vmatpush1.bf16.msra.mxu0 %v1703
      %1727 = vmatprep.subr.bf16.mxu0 0
      %1728 = vmatpush1.bf16.msra.mxu0 %v1704
      %1729 = vmatprep.subr.bf16.mxu0 0
      %1730 = vmatpush1.bf16.msra.mxu0 0
      %1731 = vmatprep.subr.bf16.mxu0 0
      %1732 = vmatpush1.bf16.msra.mxu0 0
      %1733 = vmatprep.subr.bf16.mxu0 0
      %1734 = vmatpush1.bf16.msra.mxu0 0
      %1735 = vmatprep.subr.bf16.mxu0 0
      %1736 = vmatpush1.bf16.msra.mxu0 0
      %1737 = vmatprep.subr.bf16.mxu0 0
      %1738 = vmatpush1.bf16.msra.mxu0 0
      %1739 = vmatprep.subr.bf16.mxu0 0
      %1740 = vmatpush1.bf16.msra.mxu0 0
      %1741 = vmatprep.subr.bf16.mxu0 0
      %1742 = vmatpush1.bf16.msra.mxu0 0
      %1743 = vmatprep.subr.bf16.mxu0 0
      %1744 = vmatpush1.bf16.msra.mxu0 0
      %1745 = vmatprep.mubr.bf16.mxu0 0
      %1746 = vmatmul.mubr.bf16.gmra.mrb[0].mxu0 %v1377
      %v1747 = vpop.f32.mrb[0].mxu0
      %v1748 = vadd.f32 0.0, %v1747
      %v1749 = vpop.f32.mrb[0].mxu0
      %v1750 = vpop.f32.mrb[0].mxu0
      %v1751 = vadd.f32 0.0, %v1750
      %v1752 = vpop.f32.mrb[0].mxu0
      %1753 = vmatprep.mubr.bf16.mxu0 0
      %1754 = vmatmul.mubr.bf16.gmra.mrb[0].mxu0 %v1394
      %v1755 = vpop.f32.mrb[0].mxu0
      %v1756 = vadd.f32 0.0, %v1755
      %v1757 = vpop.f32.mrb[0].mxu0
      %v1758 = vpop.f32.mrb[0].mxu0
      %v1759 = vadd.f32 0.0, %v1758
      %v1760 = vpop.f32.mrb[0].mxu0
      %1761 = vmatprep.mubr.bf16.mxu0 0
      %1762 = vmatmul.mubr.bf16.gmra.mrb[0].mxu0 %v1411
      %v1763 = vpop.f32.mrb[0].mxu0
      %v1764 = vadd.f32 0.0, %v1763
      %v1765 = vpop.f32.mrb[0].mxu0
      %v1766 = vpop.f32.mrb[0].mxu0
      %v1767 = vadd.f32 0.0, %v1766
      %v1768 = vpop.f32.mrb[0].mxu0
      %1769 = vmatprep.mubr.bf16.mxu0 0
      %1770 = vmatmul.mubr.bf16.gmra.mrb[0].mxu0 %v1428
      %v1771 = vpop.f32.mrb[0].mxu0
      %v1772 = vadd.f32 0.0, %v1771
      %v1773 = vpop.f32.mrb[0].mxu0
      %v1774 = vpop.f32.mrb[0].mxu0
      %v1775 = vadd.f32 0.0, %v1774
      %v1776 = vpop.f32.mrb[0].mxu0
      %1777 = vmatprep.mubr.bf16.mxu0 0
      %1778 = vmatmul.mubr.bf16.gmra.mrb[0].mxu0 %v1445
      %v1779 = vpop.f32.mrb[0].mxu0
      %v1780 = vadd.f32 0.0, %v1779
      %v1781 = vpop.f32.mrb[0].mxu0
      %v1782 = vpop.f32.mrb[0].mxu0
      %v1783 = vadd.f32 0.0, %v1782
      %v1784 = vpop.f32.mrb[0].mxu0
      %1785 = vmatprep.mubr.bf16.mxu0 0
      %1786 = vmatmul.mubr.bf16.gmra.mrb[0].mxu0 %v1462
      %v1787 = vpop.f32.mrb[0].mxu0
      %v1788 = vadd.f32 0.0, %v1787
      %v1789 = vpop.f32.mrb[0].mxu0
      %v1790 = vpop.f32.mrb[0].mxu0
      %v1791 = vadd.f32 0.0, %v1790
      %v1792 = vpop.f32.mrb[0].mxu0
      %1793 = vmatprep.mubr.bf16.mxu0 0
      %1794 = vmatmul.mubr.bf16.gmra.mrb[0].mxu0 %v1479
      %v1795 = vpop.f32.mrb[0].mxu0
      %v1796 = vadd.f32 0.0, %v1795
      %v1797 = vpop.f32.mrb[0].mxu0
      %v1798 = vpop.f32.mrb[0].mxu0
      %v1799 = vadd.f32 0.0, %v1798
      %v1800 = vpop.f32.mrb[0].mxu0
      %1801 = vmatprep.mubr.bf16.mxu0 0
      %1802 = vmatmul.mubr.bf16.gmra.mrb[0].mxu0 %v1496
      %v1803 = vpop.f32.mrb[0].mxu0
      %v1804 = vadd.f32 0.0, %v1803
      %v1805 = vpop.f32.mrb[0].mxu0
      %v1806 = vpop.f32.mrb[0].mxu0
      %v1807 = vadd.f32 0.0, %v1806
      %v1808 = vpop.f32.mrb[0].mxu0
      %1809 = vmatprep.mubr.bf16.mxu0 0
      %1810 = vmatmul.mubr.bf16.gmra.mrb[0].mxu0 %v1513
      %v1811 = vpop.f32.mrb[0].mxu0
      %v1812 = vadd.f32 0.0, %v1811
      %v1813 = vpop.f32.mrb[0].mxu0
      %v1814 = vpop.f32.mrb[0].mxu0
      %v1815 = vadd.f32 0.0, %v1814
      %v1816 = vpop.f32.mrb[0].mxu0
      %1817 = vmatprep.mubr.bf16.mxu0 0
      %1818 = vmatmul.mubr.bf16.gmra.mrb[0].mxu0 %v1530
      %v1819 = vpop.f32.mrb[0].mxu0
      %v1820 = vadd.f32 0.0, %v1819
      %v1821 = vpop.f32.mrb[0].mxu0
      %v1822 = vpop.f32.mrb[0].mxu0
      %v1823 = vadd.f32 0.0, %v1822
      %v1824 = vpop.f32.mrb[0].mxu0
      %1825 = vmatprep.mubr.bf16.mxu0 0
      %1826 = vmatmul.mubr.bf16.gmra.mrb[0].mxu0 %v1547
      %v1827 = vpop.f32.mrb[0].mxu0
      %v1828 = vadd.f32 0.0, %v1827
      %v1829 = vpop.f32.mrb[0].mxu0
      %v1830 = vpop.f32.mrb[0].mxu0
      %v1831 = vadd.f32 0.0, %v1830
      %v1832 = vpop.f32.mrb[0].mxu0
      %1833 = vmatprep.mubr.bf16.mxu0 0
      %1834 = vmatmul.mubr.bf16.gmra.mrb[0].mxu0 %v1564
      %v1835 = vpop.f32.mrb[0].mxu0
      %v1836 = vadd.f32 0.0, %v1835
      %v1837 = vpop.f32.mrb[0].mxu0
      %v1838 = vpop.f32.mrb[0].mxu0
      %v1839 = vadd.f32 0.0, %v1838
      %v1840 = vpop.f32.mrb[0].mxu0
      %1841 = vmatprep.mubr.bf16.mxu0 0
      %1842 = vmatmul.mubr.bf16.gmra.mrb[0].mxu0 %v1581
      %v1843 = vpop.f32.mrb[0].mxu0
      %v1844 = vadd.f32 0.0, %v1843
      %v1845 = vpop.f32.mrb[0].mxu0
      %v1846 = vpop.f32.mrb[0].mxu0
      %v1847 = vadd.f32 0.0, %v1846
      %v1848 = vpop.f32.mrb[0].mxu0
      %1849 = vmatprep.mubr.bf16.mxu0 0
      %1850 = vmatmul.mubr.bf16.gmra.mrb[0].mxu0 %v1598
      %v1851 = vpop.f32.mrb[0].mxu0
      %v1852 = vadd.f32 0.0, %v1851
      %v1853 = vpop.f32.mrb[0].mxu0
      %v1854 = vpop.f32.mrb[0].mxu0
      %v1855 = vadd.f32 0.0, %v1854
      %v1856 = vpop.f32.mrb[0].mxu0
      %1857 = vmatprep.mubr.bf16.mxu0 0
      %1858 = vmatmul.mubr.bf16.gmra.mrb[0].mxu0 %v1615
      %v1859 = vpop.f32.mrb[0].mxu0
      %v1860 = vadd.f32 0.0, %v1859
      %v1861 = vpop.f32.mrb[0].mxu0
      %v1862 = vpop.f32.mrb[0].mxu0
      %v1863 = vadd.f32 0.0, %v1862
      %v1864 = vpop.f32.mrb[0].mxu0
      %1865 = vmatprep.mubr.bf16.mxu0 0
      %1866 = vmatmul.mubr.bf16.gmra.mrb[0].mxu0 %v1632
      %v1867 = vpop.f32.mrb[0].mxu0
      %v1868 = vadd.f32 0.0, %v1867
      %v1869 = vpop.f32.mrb[0].mxu0
      %v1870 = vpop.f32.mrb[0].mxu0
      %v1871 = vadd.f32 0.0, %v1870
      %v1872 = vpop.f32.mrb[0].mxu0
      %1873 = vdwg.mxu0
      %v1874 = vadd.f32 %v1218, %v1748
      %v1875 = vadd.f32 %v1221, %v1751
      %v1876 = vadd.f32 %v1226, %v1756
      %v1877 = vadd.f32 %v1229, %v1759
      %v1878 = vadd.f32 %v1234, %v1764
      %v1879 = vadd.f32 %v1237, %v1767
      %v1880 = vadd.f32 %v1242, %v1772
      %v1881 = vadd.f32 %v1245, %v1775
      %v1882 = vadd.f32 %v1250, %v1780
      %v1883 = vadd.f32 %v1253, %v1783
      %v1884 = vadd.f32 %v1258, %v1788
      %v1885 = vadd.f32 %v1261, %v1791
      %v1886 = vadd.f32 %v1266, %v1796
      %v1887 = vadd.f32 %v1269, %v1799
      %v1888 = vadd.f32 %v1274, %v1804
      %v1889 = vadd.f32 %v1277, %v1807
      %v1890 = vadd.f32 %v1282, %v1812
      %v1891 = vadd.f32 %v1285, %v1815
      %v1892 = vadd.f32 %v1290, %v1820
      %v1893 = vadd.f32 %v1293, %v1823
      %v1894 = vadd.f32 %v1298, %v1828
      %v1895 = vadd.f32 %v1301, %v1831
      %v1896 = vadd.f32 %v1306, %v1836
      %v1897 = vadd.f32 %v1309, %v1839
      %v1898 = vadd.f32 %v1314, %v1844
      %v1899 = vadd.f32 %v1317, %v1847
      %v1900 = vadd.f32 %v1322, %v1852
      %v1901 = vadd.f32 %v1325, %v1855
      %v1902 = vadd.f32 %v1330, %v1860
      %v1903 = vadd.f32 %v1333, %v1863
      %v1904 = vadd.f32 %v1338, %v1868
      %v1905 = vadd.f32 %v1341, %v1871
      %v1906 = vld [vmem:[%s427] sm:$0xf8]
      %v1907 = vld [vmem:[%s427 + $0x8] sm:$0xf]
      %v1908 = vld [vmem:[%s427 + $0x10] sm:$0xf8]
      %v1909 = vld [vmem:[%s427 + $0x18] sm:$0xf]
      %v1910 = vld [vmem:[%s427 + $0x20] sm:$0xf8]
      %v1911 = vld [vmem:[%s427 + $0x28] sm:$0xf]
      %v1912 = vld [vmem:[%s427 + $0x30] sm:$0xf8]
      %v1913 = vld [vmem:[%s427 + $0x38] sm:$0xf]
      %v1914 = vld [vmem:[%s427 + $0x40] sm:$0xf8]
      %v1915 = vld [vmem:[%s427 + $0x48] sm:$0xf]
      %v1916 = vld [vmem:[%s427 + $0x50] sm:$0xf8]
      %v1917 = vld [vmem:[%s427 + $0x58] sm:$0xf]
      %v1918 = vld [vmem:[%s427 + $0x60] sm:$0xf8]
      %v1919 = vld [vmem:[%s427 + $0x68] sm:$0xf]
      %v1920 = vld [vmem:[%s427 + $0x70] sm:$0xf8]
      %v1921 = vld [vmem:[%s427 + $0x78] sm:$0xf]
      %v1922 = vld [vmem:[%s427 + $0x80] sm:$0xf8]
      %v1923 = vld [vmem:[%s427 + $0x88] sm:$0xf]
      %v1924 = vld [vmem:[%s427 + $0x90] sm:$0xf8]
      %v1925 = vld [vmem:[%s427 + $0x98] sm:$0xf]
      %v1926 = vld [vmem:[%s427 + $0xa0] sm:$0xf8]
      %v1927 = vld [vmem:[%s427 + $0xa8] sm:$0xf]
      %v1928 = vld [vmem:[%s427 + $0xb0] sm:$0xf8]
      %v1929 = vld [vmem:[%s427 + $0xb8] sm:$0xf]
      %v1930 = vld [vmem:[%s427 + $0xc0] sm:$0xf8]
      %v1931 = vld [vmem:[%s427 + $0xc8] sm:$0xf]
      %v1932 = vld [vmem:[%s427 + $0xd0] sm:$0xf8]
      %v1933 = vld [vmem:[%s427 + $0xd8] sm:$0xf]
      %v1934 = vld [vmem:[%s427 + $0xe0] sm:$0xf8]
      %v1935 = vld [vmem:[%s427 + $0xe8] sm:$0xf]
      %v1936 = vld [vmem:[%s427 + $0xf0] sm:$0xf8]
      %v1937 = vld [vmem:[%s427 + $0xf8] sm:$0xf]
      %v1939 = vshrl.u32 %v1906, 16
      %v1941 = vrot.slane %v1939, 3
      %v1942 = vshll.u32 %v1906, 16
      %v1944 = vrot.slane %v1942, 4
      %v1945 = vor.u32 %v1941, %v1944
      %v1947 = vshrl.u32 %v1907, 16
      %v1949 = vrot.slane %v1947, 3
      %v1950 = vshll.u32 %v1907, 16
      %v1952 = vrot.slane %v1950, 4
      %v1953 = vor.u32 %v1949, %v1952
      %v1954 = vsel %vm492, %v1945, %v1953
      %v1956 = vshrl.u32 %v1908, 16
      %v1958 = vrot.slane %v1956, 3
      %v1959 = vshll.u32 %v1908, 16
      %v1961 = vrot.slane %v1959, 4
      %v1962 = vor.u32 %v1958, %v1961
      %v1964 = vshrl.u32 %v1909, 16
      %v1966 = vrot.slane %v1964, 3
      %v1967 = vshll.u32 %v1909, 16
      %v1969 = vrot.slane %v1967, 4
      %v1970 = vor.u32 %v1966, %v1969
      %v1971 = vsel %vm492, %v1962, %v1970
      %v1973 = vshrl.u32 %v1910, 16
      %v1975 = vrot.slane %v1973, 3
      %v1976 = vshll.u32 %v1910, 16
      %v1978 = vrot.slane %v1976, 4
      %v1979 = vor.u32 %v1975, %v1978
      %v1981 = vshrl.u32 %v1911, 16
      %v1983 = vrot.slane %v1981, 3
      %v1984 = vshll.u32 %v1911, 16
      %v1986 = vrot.slane %v1984, 4
      %v1987 = vor.u32 %v1983, %v1986
      %v1988 = vsel %vm492, %v1979, %v1987
      %v1990 = vshrl.u32 %v1912, 16
      %v1992 = vrot.slane %v1990, 3
      %v1993 = vshll.u32 %v1912, 16
      %v1995 = vrot.slane %v1993, 4
      %v1996 = vor.u32 %v1992, %v1995
      %v1998 = vshrl.u32 %v1913, 16
      %v2000 = vrot.slane %v1998, 3
      %v2001 = vshll.u32 %v1913, 16
      %v2003 = vrot.slane %v2001, 4
      %v2004 = vor.u32 %v2000, %v2003
      %v2005 = vsel %vm492, %v1996, %v2004
      %v2007 = vshrl.u32 %v1914, 16
      %v2009 = vrot.slane %v2007, 3
      %v2010 = vshll.u32 %v1914, 16
      %v2012 = vrot.slane %v2010, 4
      %v2013 = vor.u32 %v2009, %v2012
      %v2015 = vshrl.u32 %v1915, 16
      %v2017 = vrot.slane %v2015, 3
      %v2018 = vshll.u32 %v1915, 16
      %v2020 = vrot.slane %v2018, 4
      %v2021 = vor.u32 %v2017, %v2020
      %v2022 = vsel %vm492, %v2013, %v2021
      %v2024 = vshrl.u32 %v1916, 16
      %v2026 = vrot.slane %v2024, 3
      %v2027 = vshll.u32 %v1916, 16
      %v2029 = vrot.slane %v2027, 4
      %v2030 = vor.u32 %v2026, %v2029
      %v2032 = vshrl.u32 %v1917, 16
      %v2034 = vrot.slane %v2032, 3
      %v2035 = vshll.u32 %v1917, 16
      %v2037 = vrot.slane %v2035, 4
      %v2038 = vor.u32 %v2034, %v2037
      %v2039 = vsel %vm492, %v2030, %v2038
      %v2041 = vshrl.u32 %v1918, 16
      %v2043 = vrot.slane %v2041, 3
      %v2044 = vshll.u32 %v1918, 16
      %v2046 = vrot.slane %v2044, 4
      %v2047 = vor.u32 %v2043, %v2046
      %v2049 = vshrl.u32 %v1919, 16
      %v2051 = vrot.slane %v2049, 3
      %v2052 = vshll.u32 %v1919, 16
      %v2054 = vrot.slane %v2052, 4
      %v2055 = vor.u32 %v2051, %v2054
      %v2056 = vsel %vm492, %v2047, %v2055
      %v2058 = vshrl.u32 %v1920, 16
      %v2060 = vrot.slane %v2058, 3
      %v2061 = vshll.u32 %v1920, 16
      %v2063 = vrot.slane %v2061, 4
      %v2064 = vor.u32 %v2060, %v2063
      %v2066 = vshrl.u32 %v1921, 16
      %v2068 = vrot.slane %v2066, 3
      %v2069 = vshll.u32 %v1921, 16
      %v2071 = vrot.slane %v2069, 4
      %v2072 = vor.u32 %v2068, %v2071
      %v2073 = vsel %vm492, %v2064, %v2072
      %v2075 = vshrl.u32 %v1922, 16
      %v2077 = vrot.slane %v2075, 3
      %v2078 = vshll.u32 %v1922, 16
      %v2080 = vrot.slane %v2078, 4
      %v2081 = vor.u32 %v2077, %v2080
      %v2083 = vshrl.u32 %v1923, 16
      %v2085 = vrot.slane %v2083, 3
      %v2086 = vshll.u32 %v1923, 16
      %v2088 = vrot.slane %v2086, 4
      %v2089 = vor.u32 %v2085, %v2088
      %v2090 = vsel %vm492, %v2081, %v2089
      %v2092 = vshrl.u32 %v1924, 16
      %v2094 = vrot.slane %v2092, 3
      %v2095 = vshll.u32 %v1924, 16
      %v2097 = vrot.slane %v2095, 4
      %v2098 = vor.u32 %v2094, %v2097
      %v2100 = vshrl.u32 %v1925, 16
      %v2102 = vrot.slane %v2100, 3
      %v2103 = vshll.u32 %v1925, 16
      %v2105 = vrot.slane %v2103, 4
      %v2106 = vor.u32 %v2102, %v2105
      %v2107 = vsel %vm492, %v2098, %v2106
      %v2109 = vshrl.u32 %v1926, 16
      %v2111 = vrot.slane %v2109, 3
      %v2112 = vshll.u32 %v1926, 16
      %v2114 = vrot.slane %v2112, 4
      %v2115 = vor.u32 %v2111, %v2114
      %v2117 = vshrl.u32 %v1927, 16
      %v2119 = vrot.slane %v2117, 3
      %v2120 = vshll.u32 %v1927, 16
      %v2122 = vrot.slane %v2120, 4
      %v2123 = vor.u32 %v2119, %v2122
      %v2124 = vsel %vm492, %v2115, %v2123
      %v2126 = vshrl.u32 %v1928, 16
      %v2128 = vrot.slane %v2126, 3
      %v2129 = vshll.u32 %v1928, 16
      %v2131 = vrot.slane %v2129, 4
      %v2132 = vor.u32 %v2128, %v2131
      %v2134 = vshrl.u32 %v1929, 16
      %v2136 = vrot.slane %v2134, 3
      %v2137 = vshll.u32 %v1929, 16
      %v2139 = vrot.slane %v2137, 4
      %v2140 = vor.u32 %v2136, %v2139
      %v2141 = vsel %vm492, %v2132, %v2140
      %v2143 = vshrl.u32 %v1930, 16
      %v2145 = vrot.slane %v2143, 3
      %v2146 = vshll.u32 %v1930, 16
      %v2148 = vrot.slane %v2146, 4
      %v2149 = vor.u32 %v2145, %v2148
      %v2151 = vshrl.u32 %v1931, 16
      %v2153 = vrot.slane %v2151, 3
      %v2154 = vshll.u32 %v1931, 16
      %v2156 = vrot.slane %v2154, 4
      %v2157 = vor.u32 %v2153, %v2156
      %v2158 = vsel %vm492, %v2149, %v2157
      %v2160 = vshrl.u32 %v1932, 16
      %v2162 = vrot.slane %v2160, 3
      %v2163 = vshll.u32 %v1932, 16
      %v2165 = vrot.slane %v2163, 4
      %v2166 = vor.u32 %v2162, %v2165
      %v2168 = vshrl.u32 %v1933, 16
      %v2170 = vrot.slane %v2168, 3
      %v2171 = vshll.u32 %v1933, 16
      %v2173 = vrot.slane %v2171, 4
      %v2174 = vor.u32 %v2170, %v2173
      %v2175 = vsel %vm492, %v2166, %v2174
      %v2177 = vshrl.u32 %v1934, 16
      %v2179 = vrot.slane %v2177, 3
      %v2180 = vshll.u32 %v1934, 16
      %v2182 = vrot.slane %v2180, 4
      %v2183 = vor.u32 %v2179, %v2182
      %v2185 = vshrl.u32 %v1935, 16
      %v2187 = vrot.slane %v2185, 3
      %v2188 = vshll.u32 %v1935, 16
      %v2190 = vrot.slane %v2188, 4
      %v2191 = vor.u32 %v2187, %v2190
      %v2192 = vsel %vm492, %v2183, %v2191
      %v2194 = vshrl.u32 %v1936, 16
      %v2196 = vrot.slane %v2194, 3
      %v2197 = vshll.u32 %v1936, 16
      %v2199 = vrot.slane %v2197, 4
      %v2200 = vor.u32 %v2196, %v2199
      %v2202 = vshrl.u32 %v1937, 16
      %v2204 = vrot.slane %v2202, 3
      %v2205 = vshll.u32 %v1937, 16
      %v2207 = vrot.slane %v2205, 4
      %v2208 = vor.u32 %v2204, %v2207
      %v2209 = vsel %vm492, %v2200, %v2208
      %v2226 = vld [vmem:[%s1 + $0xc0] sm:$0xf]
      %v2227 = vld [vmem:[%s1 + $0xc4] sm:$0xf]
      %v2228 = vld [vmem:[%s1 + $0xc8] sm:$0xf]
      %v2229 = vld [vmem:[%s1 + $0xcc] sm:$0xf]
      %v2230 = vld [vmem:[%s1 + $0xd0] sm:$0xf]
      %v2231 = vld [vmem:[%s1 + $0xd4] sm:$0xf]
      %v2232 = vld [vmem:[%s1 + $0xd8] sm:$0xf]
      %v2233 = vld [vmem:[%s1 + $0xdc] sm:$0xf]
      %v2234 = vld [vmem:[%s1 + $0xe0] sm:$0xf]
      %v2235 = vld [vmem:[%s1 + $0xe4] sm:$0xf]
      %v2236 = vld [vmem:[%s1 + $0xe8] sm:$0xf]
      %v2237 = vld [vmem:[%s1 + $0xec] sm:$0xf]
      %v2238 = vld [vmem:[%s1 + $0xf0] sm:$0xf]
      %v2239 = vld [vmem:[%s1 + $0xf4] sm:$0xf]
      %v2240 = vld [vmem:[%s1 + $0xf8] sm:$0xf]
      %v2241 = vld [vmem:[%s1 + $0xfc] sm:$0xf]
      %v2258 = vunpack.c.l.b16 %v2226
      %v2259 = vunpack.c.l.b16 %v2227
      %v2260 = vunpack.c.l.b16 %v2228
      %v2261 = vunpack.c.l.b16 %v2229
      %v2262 = vunpack.c.l.b16 %v2230
      %v2263 = vunpack.c.l.b16 %v2231
      %v2264 = vunpack.c.l.b16 %v2232
      %v2265 = vunpack.c.l.b16 %v2233
      %v2266 = vunpack.c.l.b16 %v2234
      %v2267 = vunpack.c.l.b16 %v2235
      %v2268 = vunpack.c.l.b16 %v2236
      %v2269 = vunpack.c.l.b16 %v2237
      %v2270 = vunpack.c.l.b16 %v2238
      %v2271 = vunpack.c.l.b16 %v2239
      %v2272 = vunpack.c.l.b16 %v2240
      %v2273 = vunpack.c.l.b16 %v2241
      %v2274 = vpack.c.b16 %v2259, %v2258
      %v2275 = vpack.c.b16 %v2261, %v2260
      %v2276 = vpack.c.b16 %v2263, %v2262
      %v2277 = vpack.c.b16 %v2265, %v2264
      %v2278 = vpack.c.b16 %v2267, %v2266
      %v2279 = vpack.c.b16 %v2269, %v2268
      %v2280 = vpack.c.b16 %v2271, %v2270
      %v2281 = vpack.c.b16 %v2273, %v2272
      %2290 = vmatprep.subr.bf16.mxu0 0
      %2291 = vmatpush1.bf16.msra.mxu0 %v2274
      %2292 = vmatprep.subr.bf16.mxu0 0
      %2293 = vmatpush1.bf16.msra.mxu0 %v2275
      %2294 = vmatprep.subr.bf16.mxu0 0
      %2295 = vmatpush1.bf16.msra.mxu0 %v2276
      %2296 = vmatprep.subr.bf16.mxu0 0
      %2297 = vmatpush1.bf16.msra.mxu0 %v2277
      %2298 = vmatprep.subr.bf16.mxu0 0
      %2299 = vmatpush1.bf16.msra.mxu0 %v2278
      %2300 = vmatprep.subr.bf16.mxu0 0
      %2301 = vmatpush1.bf16.msra.mxu0 %v2279
      %2302 = vmatprep.subr.bf16.mxu0 0
      %2303 = vmatpush1.bf16.msra.mxu0 %v2280
      %2304 = vmatprep.subr.bf16.mxu0 0
      %2305 = vmatpush1.bf16.msra.mxu0 %v2281
      %2306 = vmatprep.subr.bf16.mxu0 0
      %2307 = vmatpush1.bf16.msra.mxu0 0
      %2308 = vmatprep.subr.bf16.mxu0 0
      %2309 = vmatpush1.bf16.msra.mxu0 0
      %2310 = vmatprep.subr.bf16.mxu0 0
      %2311 = vmatpush1.bf16.msra.mxu0 0
      %2312 = vmatprep.subr.bf16.mxu0 0
      %2313 = vmatpush1.bf16.msra.mxu0 0
      %2314 = vmatprep.subr.bf16.mxu0 0
      %2315 = vmatpush1.bf16.msra.mxu0 0
      %2316 = vmatprep.subr.bf16.mxu0 0
      %2317 = vmatpush1.bf16.msra.mxu0 0
      %2318 = vmatprep.subr.bf16.mxu0 0
      %2319 = vmatpush1.bf16.msra.mxu0 0
      %2320 = vmatprep.subr.bf16.mxu0 0
      %2321 = vmatpush1.bf16.msra.mxu0 0
      %2322 = vmatprep.mubr.bf16.mxu0 0
      %2323 = vmatmul.mubr.bf16.gmra.mrb[0].mxu0 %v1954
      %v2324 = vpop.f32.mrb[0].mxu0
      %v2325 = vadd.f32 0.0, %v2324
      %v2326 = vpop.f32.mrb[0].mxu0
      %v2327 = vpop.f32.mrb[0].mxu0
      %v2328 = vadd.f32 0.0, %v2327
      %v2329 = vpop.f32.mrb[0].mxu0
      %2330 = vmatprep.mubr.bf16.mxu0 0
      %2331 = vmatmul.mubr.bf16.gmra.mrb[0].mxu0 %v1971
      %v2332 = vpop.f32.mrb[0].mxu0
      %v2333 = vadd.f32 0.0, %v2332
      %v2334 = vpop.f32.mrb[0].mxu0
      %v2335 = vpop.f32.mrb[0].mxu0
      %v2336 = vadd.f32 0.0, %v2335
      %v2337 = vpop.f32.mrb[0].mxu0
      %2338 = vmatprep.mubr.bf16.mxu0 0
      %2339 = vmatmul.mubr.bf16.gmra.mrb[0].mxu0 %v1988
      %v2340 = vpop.f32.mrb[0].mxu0
      %v2341 = vadd.f32 0.0, %v2340
      %v2342 = vpop.f32.mrb[0].mxu0
      %v2343 = vpop.f32.mrb[0].mxu0
      %v2344 = vadd.f32 0.0, %v2343
      %v2345 = vpop.f32.mrb[0].mxu0
      %2346 = vmatprep.mubr.bf16.mxu0 0
      %2347 = vmatmul.mubr.bf16.gmra.mrb[0].mxu0 %v2005
      %v2348 = vpop.f32.mrb[0].mxu0
      %v2349 = vadd.f32 0.0, %v2348
      %v2350 = vpop.f32.mrb[0].mxu0
      %v2351 = vpop.f32.mrb[0].mxu0
      %v2352 = vadd.f32 0.0, %v2351
      %v2353 = vpop.f32.mrb[0].mxu0
      %2354 = vmatprep.mubr.bf16.mxu0 0
      %2355 = vmatmul.mubr.bf16.gmra.mrb[0].mxu0 %v2022
      %v2356 = vpop.f32.mrb[0].mxu0
      %v2357 = vadd.f32 0.0, %v2356
      %v2358 = vpop.f32.mrb[0].mxu0
      %v2359 = vpop.f32.mrb[0].mxu0
      %v2360 = vadd.f32 0.0, %v2359
      %v2361 = vpop.f32.mrb[0].mxu0
      %2362 = vmatprep.mubr.bf16.mxu0 0
      %2363 = vmatmul.mubr.bf16.gmra.mrb[0].mxu0 %v2039
      %v2364 = vpop.f32.mrb[0].mxu0
      %v2365 = vadd.f32 0.0, %v2364
      %v2366 = vpop.f32.mrb[0].mxu0
      %v2367 = vpop.f32.mrb[0].mxu0
      %v2368 = vadd.f32 0.0, %v2367
      %v2369 = vpop.f32.mrb[0].mxu0
      %2370 = vmatprep.mubr.bf16.mxu0 0
      %2371 = vmatmul.mubr.bf16.gmra.mrb[0].mxu0 %v2056
      %v2372 = vpop.f32.mrb[0].mxu0
      %v2373 = vadd.f32 0.0, %v2372
      %v2374 = vpop.f32.mrb[0].mxu0
      %v2375 = vpop.f32.mrb[0].mxu0
      %v2376 = vadd.f32 0.0, %v2375
      %v2377 = vpop.f32.mrb[0].mxu0
      %2378 = vmatprep.mubr.bf16.mxu0 0
      %2379 = vmatmul.mubr.bf16.gmra.mrb[0].mxu0 %v2073
      %v2380 = vpop.f32.mrb[0].mxu0
      %v2381 = vadd.f32 0.0, %v2380
      %v2382 = vpop.f32.mrb[0].mxu0
      %v2383 = vpop.f32.mrb[0].mxu0
      %v2384 = vadd.f32 0.0, %v2383
      %v2385 = vpop.f32.mrb[0].mxu0
      %2386 = vmatprep.mubr.bf16.mxu0 0
      %2387 = vmatmul.mubr.bf16.gmra.mrb[0].mxu0 %v2090
      %v2388 = vpop.f32.mrb[0].mxu0
      %v2389 = vadd.f32 0.0, %v2388
      %v2390 = vpop.f32.mrb[0].mxu0
      %v2391 = vpop.f32.mrb[0].mxu0
      %v2392 = vadd.f32 0.0, %v2391
      %v2393 = vpop.f32.mrb[0].mxu0
      %2394 = vmatprep.mubr.bf16.mxu0 0
      %2395 = vmatmul.mubr.bf16.gmra.mrb[0].mxu0 %v2107
      %v2396 = vpop.f32.mrb[0].mxu0
      %v2397 = vadd.f32 0.0, %v2396
      %v2398 = vpop.f32.mrb[0].mxu0
      %v2399 = vpop.f32.mrb[0].mxu0
      %v2400 = vadd.f32 0.0, %v2399
      %v2401 = vpop.f32.mrb[0].mxu0
      %2402 = vmatprep.mubr.bf16.mxu0 0
      %2403 = vmatmul.mubr.bf16.gmra.mrb[0].mxu0 %v2124
      %v2404 = vpop.f32.mrb[0].mxu0
      %v2405 = vadd.f32 0.0, %v2404
      %v2406 = vpop.f32.mrb[0].mxu0
      %v2407 = vpop.f32.mrb[0].mxu0
      %v2408 = vadd.f32 0.0, %v2407
      %v2409 = vpop.f32.mrb[0].mxu0
      %2410 = vmatprep.mubr.bf16.mxu0 0
      %2411 = vmatmul.mubr.bf16.gmra.mrb[0].mxu0 %v2141
      %v2412 = vpop.f32.mrb[0].mxu0
      %v2413 = vadd.f32 0.0, %v2412
      %v2414 = vpop.f32.mrb[0].mxu0
      %v2415 = vpop.f32.mrb[0].mxu0
      %v2416 = vadd.f32 0.0, %v2415
      %v2417 = vpop.f32.mrb[0].mxu0
      %2418 = vmatprep.mubr.bf16.mxu0 0
      %2419 = vmatmul.mubr.bf16.gmra.mrb[0].mxu0 %v2158
      %v2420 = vpop.f32.mrb[0].mxu0
      %v2421 = vadd.f32 0.0, %v2420
      %v2422 = vpop.f32.mrb[0].mxu0
      %v2423 = vpop.f32.mrb[0].mxu0
      %v2424 = vadd.f32 0.0, %v2423
      %v2425 = vpop.f32.mrb[0].mxu0
      %2426 = vmatprep.mubr.bf16.mxu0 0
      %2427 = vmatmul.mubr.bf16.gmra.mrb[0].mxu0 %v2175
      %v2428 = vpop.f32.mrb[0].mxu0
      %v2429 = vadd.f32 0.0, %v2428
      %v2430 = vpop.f32.mrb[0].mxu0
      %v2431 = vpop.f32.mrb[0].mxu0
      %v2432 = vadd.f32 0.0, %v2431
      %v2433 = vpop.f32.mrb[0].mxu0
      %2434 = vmatprep.mubr.bf16.mxu0 0
      %2435 = vmatmul.mubr.bf16.gmra.mrb[0].mxu0 %v2192
      %v2436 = vpop.f32.mrb[0].mxu0
      %v2437 = vadd.f32 0.0, %v2436
      %v2438 = vpop.f32.mrb[0].mxu0
      %v2439 = vpop.f32.mrb[0].mxu0
      %v2440 = vadd.f32 0.0, %v2439
      %v2441 = vpop.f32.mrb[0].mxu0
      %2442 = vmatprep.mubr.bf16.mxu0 0
      %2443 = vmatmul.mubr.bf16.gmra.mrb[0].mxu0 %v2209
      %v2444 = vpop.f32.mrb[0].mxu0
      %v2445 = vadd.f32 0.0, %v2444
      %v2446 = vpop.f32.mrb[0].mxu0
      %v2447 = vpop.f32.mrb[0].mxu0
      %v2448 = vadd.f32 0.0, %v2447
      %v2449 = vpop.f32.mrb[0].mxu0
      %2450 = vdwg.mxu0
      %v2451 = vadd.f32 %v1874, %v2325
      %v2452 = vadd.f32 %v1875, %v2328
      %v2453 = vadd.f32 %v1876, %v2333
      %v2454 = vadd.f32 %v1877, %v2336
      %v2455 = vadd.f32 %v1878, %v2341
      %v2456 = vadd.f32 %v1879, %v2344
      %v2457 = vadd.f32 %v1880, %v2349
      %v2458 = vadd.f32 %v1881, %v2352
      %v2459 = vadd.f32 %v1882, %v2357
      %v2460 = vadd.f32 %v1883, %v2360
      %v2461 = vadd.f32 %v1884, %v2365
      %v2462 = vadd.f32 %v1885, %v2368
      %v2463 = vadd.f32 %v1886, %v2373
      %v2464 = vadd.f32 %v1887, %v2376
      %v2465 = vadd.f32 %v1888, %v2381
      %v2466 = vadd.f32 %v1889, %v2384
      %v2467 = vadd.f32 %v1890, %v2389
      %v2468 = vadd.f32 %v1891, %v2392
      %v2469 = vadd.f32 %v1892, %v2397
      %v2470 = vadd.f32 %v1893, %v2400
      %v2471 = vadd.f32 %v1894, %v2405
      %v2472 = vadd.f32 %v1895, %v2408
      %v2473 = vadd.f32 %v1896, %v2413
      %v2474 = vadd.f32 %v1897, %v2416
      %v2475 = vadd.f32 %v1898, %v2421
      %v2476 = vadd.f32 %v1899, %v2424
      %v2477 = vadd.f32 %v1900, %v2429
      %v2478 = vadd.f32 %v1901, %v2432
      %v2479 = vadd.f32 %v1902, %v2437
      %v2480 = vadd.f32 %v1903, %v2440
      %v2481 = vadd.f32 %v1904, %v2445
      %v2482 = vadd.f32 %v1905, %v2448
      %v2483 = vld [vmem:[%s427] sm:$0xf0]
      %v2484 = vld [vmem:[%s427 + $0x10] sm:$0xf0]
      %v2485 = vld [vmem:[%s427 + $0x20] sm:$0xf0]
      %v2486 = vld [vmem:[%s427 + $0x30] sm:$0xf0]
      %v2487 = vld [vmem:[%s427 + $0x40] sm:$0xf0]
      %v2488 = vld [vmem:[%s427 + $0x50] sm:$0xf0]
      %v2489 = vld [vmem:[%s427 + $0x60] sm:$0xf0]
      %v2490 = vld [vmem:[%s427 + $0x70] sm:$0xf0]
      %v2491 = vld [vmem:[%s427 + $0x80] sm:$0xf0]
      %v2492 = vld [vmem:[%s427 + $0x90] sm:$0xf0]
      %v2493 = vld [vmem:[%s427 + $0xa0] sm:$0xf0]
      %v2494 = vld [vmem:[%s427 + $0xb0] sm:$0xf0]
      %v2495 = vld [vmem:[%s427 + $0xc0] sm:$0xf0]
      %v2496 = vld [vmem:[%s427 + $0xd0] sm:$0xf0]
      %v2497 = vld [vmem:[%s427 + $0xe0] sm:$0xf0]
      %v2498 = vld [vmem:[%s427 + $0xf0] sm:$0xf0]
      %v2531 = vrot.slane %v2483, 4
      %v2532 = vrot.slane %v1907, 4
      %v2533 = vsel %vm845, %v2531, %v2532
      %v2534 = vrot.slane %v2484, 4
      %v2535 = vrot.slane %v1909, 4
      %v2536 = vsel %vm845, %v2534, %v2535
      %v2537 = vrot.slane %v2485, 4
      %v2538 = vrot.slane %v1911, 4
      %v2539 = vsel %vm845, %v2537, %v2538
      %v2540 = vrot.slane %v2486, 4
      %v2541 = vrot.slane %v1913, 4
      %v2542 = vsel %vm845, %v2540, %v2541
      %v2543 = vrot.slane %v2487, 4
      %v2544 = vrot.slane %v1915, 4
      %v2545 = vsel %vm845, %v2543, %v2544
      %v2546 = vrot.slane %v2488, 4
      %v2547 = vrot.slane %v1917, 4
      %v2548 = vsel %vm845, %v2546, %v2547
      %v2549 = vrot.slane %v2489, 4
      %v2550 = vrot.slane %v1919, 4
      %v2551 = vsel %vm845, %v2549, %v2550
      %v2552 = vrot.slane %v2490, 4
      %v2553 = vrot.slane %v1921, 4
      %v2554 = vsel %vm845, %v2552, %v2553
      %v2555 = vrot.slane %v2491, 4
      %v2556 = vrot.slane %v1923, 4
      %v2557 = vsel %vm845, %v2555, %v2556
      %v2558 = vrot.slane %v2492, 4
      %v2559 = vrot.slane %v1925, 4
      %v2560 = vsel %vm845, %v2558, %v2559
      %v2561 = vrot.slane %v2493, 4
      %v2562 = vrot.slane %v1927, 4
      %v2563 = vsel %vm845, %v2561, %v2562
      %v2564 = vrot.slane %v2494, 4
      %v2565 = vrot.slane %v1929, 4
      %v2566 = vsel %vm845, %v2564, %v2565
      %v2567 = vrot.slane %v2495, 4
      %v2568 = vrot.slane %v1931, 4
      %v2569 = vsel %vm845, %v2567, %v2568
      %v2570 = vrot.slane %v2496, 4
      %v2571 = vrot.slane %v1933, 4
      %v2572 = vsel %vm845, %v2570, %v2571
      %v2573 = vrot.slane %v2497, 4
      %v2574 = vrot.slane %v1935, 4
      %v2575 = vsel %vm845, %v2573, %v2574
      %v2576 = vrot.slane %v2498, 4
      %v2577 = vrot.slane %v1937, 4
      %v2578 = vsel %vm845, %v2576, %v2577
      %v2595 = vld [vmem:[%s1 + $0x100] sm:$0xf]
      %v2596 = vld [vmem:[%s1 + $0x104] sm:$0xf]
      %v2597 = vld [vmem:[%s1 + $0x108] sm:$0xf]
      %v2598 = vld [vmem:[%s1 + $0x10c] sm:$0xf]
      %v2599 = vld [vmem:[%s1 + $0x110] sm:$0xf]
      %v2600 = vld [vmem:[%s1 + $0x114] sm:$0xf]
      %v2601 = vld [vmem:[%s1 + $0x118] sm:$0xf]
      %v2602 = vld [vmem:[%s1 + $0x11c] sm:$0xf]
      %v2603 = vld [vmem:[%s1 + $0x120] sm:$0xf]
      %v2604 = vld [vmem:[%s1 + $0x124] sm:$0xf]
      %v2605 = vld [vmem:[%s1 + $0x128] sm:$0xf]
      %v2606 = vld [vmem:[%s1 + $0x12c] sm:$0xf]
      %v2607 = vld [vmem:[%s1 + $0x130] sm:$0xf]
      %v2608 = vld [vmem:[%s1 + $0x134] sm:$0xf]
      %v2609 = vld [vmem:[%s1 + $0x138] sm:$0xf]
      %v2610 = vld [vmem:[%s1 + $0x13c] sm:$0xf]
      %v2627 = vunpack.c.l.b16 %v2595
      %v2628 = vunpack.c.l.b16 %v2596
      %v2629 = vunpack.c.l.b16 %v2597
      %v2630 = vunpack.c.l.b16 %v2598
      %v2631 = vunpack.c.l.b16 %v2599
      %v2632 = vunpack.c.l.b16 %v2600
      %v2633 = vunpack.c.l.b16 %v2601
      %v2634 = vunpack.c.l.b16 %v2602
      %v2635 = vunpack.c.l.b16 %v2603
      %v2636 = vunpack.c.l.b16 %v2604
      %v2637 = vunpack.c.l.b16 %v2605
      %v2638 = vunpack.c.l.b16 %v2606
      %v2639 = vunpack.c.l.b16 %v2607
      %v2640 = vunpack.c.l.b16 %v2608
      %v2641 = vunpack.c.l.b16 %v2609
      %v2642 = vunpack.c.l.b16 %v2610
      %v2643 = vpack.c.b16 %v2628, %v2627
      %v2644 = vpack.c.b16 %v2630, %v2629
      %v2645 = vpack.c.b16 %v2632, %v2631
      %v2646 = vpack.c.b16 %v2634, %v2633
      %v2647 = vpack.c.b16 %v2636, %v2635
      %v2648 = vpack.c.b16 %v2638, %v2637
      %v2649 = vpack.c.b16 %v2640, %v2639
      %v2650 = vpack.c.b16 %v2642, %v2641
      %2659 = vmatprep.subr.bf16.mxu0 0
      %2660 = vmatpush1.bf16.msra.mxu0 %v2643
      %2661 = vmatprep.subr.bf16.mxu0 0
      %2662 = vmatpush1.bf16.msra.mxu0 %v2644
      %2663 = vmatprep.subr.bf16.mxu0 0
      %2664 = vmatpush1.bf16.msra.mxu0 %v2645
      %2665 = vmatprep.subr.bf16.mxu0 0
      %2666 = vmatpush1.bf16.msra.mxu0 %v2646
      %2667 = vmatprep.subr.bf16.mxu0 0
      %2668 = vmatpush1.bf16.msra.mxu0 %v2647
      %2669 = vmatprep.subr.bf16.mxu0 0
      %2670 = vmatpush1.bf16.msra.mxu0 %v2648
      %2671 = vmatprep.subr.bf16.mxu0 0
      %2672 = vmatpush1.bf16.msra.mxu0 %v2649
      %2673 = vmatprep.subr.bf16.mxu0 0
      %2674 = vmatpush1.bf16.msra.mxu0 %v2650
      %2675 = vmatprep.subr.bf16.mxu0 0
      %2676 = vmatpush1.bf16.msra.mxu0 0
      %2677 = vmatprep.subr.bf16.mxu0 0
      %2678 = vmatpush1.bf16.msra.mxu0 0
      %2679 = vmatprep.subr.bf16.mxu0 0
      %2680 = vmatpush1.bf16.msra.mxu0 0
      %2681 = vmatprep.subr.bf16.mxu0 0
      %2682 = vmatpush1.bf16.msra.mxu0 0
      %2683 = vmatprep.subr.bf16.mxu0 0
      %2684 = vmatpush1.bf16.msra.mxu0 0
      %2685 = vmatprep.subr.bf16.mxu0 0
      %2686 = vmatpush1.bf16.msra.mxu0 0
      %2687 = vmatprep.subr.bf16.mxu0 0
      %2688 = vmatpush1.bf16.msra.mxu0 0
      %2689 = vmatprep.subr.bf16.mxu0 0
      %2690 = vmatpush1.bf16.msra.mxu0 0
      %2691 = vmatprep.mubr.bf16.mxu0 0
      %2692 = vmatmul.mubr.bf16.gmra.mrb[0].mxu0 %v2533
      %v2693 = vpop.f32.mrb[0].mxu0
      %v2694 = vadd.f32 0.0, %v2693
      %v2695 = vpop.f32.mrb[0].mxu0
      %v2696 = vpop.f32.mrb[0].mxu0
      %v2697 = vadd.f32 0.0, %v2696
      %v2698 = vpop.f32.mrb[0].mxu0
      %2699 = vmatprep.mubr.bf16.mxu0 0
      %2700 = vmatmul.mubr.bf16.gmra.mrb[0].mxu0 %v2536
      %v2701 = vpop.f32.mrb[0].mxu0
      %v2702 = vadd.f32 0.0, %v2701
      %v2703 = vpop.f32.mrb[0].mxu0
      %v2704 = vpop.f32.mrb[0].mxu0
      %v2705 = vadd.f32 0.0, %v2704
      %v2706 = vpop.f32.mrb[0].mxu0
      %2707 = vmatprep.mubr.bf16.mxu0 0
      %2708 = vmatmul.mubr.bf16.gmra.mrb[0].mxu0 %v2539
      %v2709 = vpop.f32.mrb[0].mxu0
      %v2710 = vadd.f32 0.0, %v2709
      %v2711 = vpop.f32.mrb[0].mxu0
      %v2712 = vpop.f32.mrb[0].mxu0
      %v2713 = vadd.f32 0.0, %v2712
      %v2714 = vpop.f32.mrb[0].mxu0
      %2715 = vmatprep.mubr.bf16.mxu0 0
      %2716 = vmatmul.mubr.bf16.gmra.mrb[0].mxu0 %v2542
      %v2717 = vpop.f32.mrb[0].mxu0
      %v2718 = vadd.f32 0.0, %v2717
      %v2719 = vpop.f32.mrb[0].mxu0
      %v2720 = vpop.f32.mrb[0].mxu0
      %v2721 = vadd.f32 0.0, %v2720
      %v2722 = vpop.f32.mrb[0].mxu0
      %2723 = vmatprep.mubr.bf16.mxu0 0
      %2724 = vmatmul.mubr.bf16.gmra.mrb[0].mxu0 %v2545
      %v2725 = vpop.f32.mrb[0].mxu0
      %v2726 = vadd.f32 0.0, %v2725
      %v2727 = vpop.f32.mrb[0].mxu0
      %v2728 = vpop.f32.mrb[0].mxu0
      %v2729 = vadd.f32 0.0, %v2728
      %v2730 = vpop.f32.mrb[0].mxu0
      %2731 = vmatprep.mubr.bf16.mxu0 0
      %2732 = vmatmul.mubr.bf16.gmra.mrb[0].mxu0 %v2548
      %v2733 = vpop.f32.mrb[0].mxu0
      %v2734 = vadd.f32 0.0, %v2733
      %v2735 = vpop.f32.mrb[0].mxu0
      %v2736 = vpop.f32.mrb[0].mxu0
      %v2737 = vadd.f32 0.0, %v2736
      %v2738 = vpop.f32.mrb[0].mxu0
      %2739 = vmatprep.mubr.bf16.mxu0 0
      %2740 = vmatmul.mubr.bf16.gmra.mrb[0].mxu0 %v2551
      %v2741 = vpop.f32.mrb[0].mxu0
      %v2742 = vadd.f32 0.0, %v2741
      %v2743 = vpop.f32.mrb[0].mxu0
      %v2744 = vpop.f32.mrb[0].mxu0
      %v2745 = vadd.f32 0.0, %v2744
      %v2746 = vpop.f32.mrb[0].mxu0
      %2747 = vmatprep.mubr.bf16.mxu0 0
      %2748 = vmatmul.mubr.bf16.gmra.mrb[0].mxu0 %v2554
      %v2749 = vpop.f32.mrb[0].mxu0
      %v2750 = vadd.f32 0.0, %v2749
      %v2751 = vpop.f32.mrb[0].mxu0
      %v2752 = vpop.f32.mrb[0].mxu0
      %v2753 = vadd.f32 0.0, %v2752
      %v2754 = vpop.f32.mrb[0].mxu0
      %2755 = vmatprep.mubr.bf16.mxu0 0
      %2756 = vmatmul.mubr.bf16.gmra.mrb[0].mxu0 %v2557
      %v2757 = vpop.f32.mrb[0].mxu0
      %v2758 = vadd.f32 0.0, %v2757
      %v2759 = vpop.f32.mrb[0].mxu0
      %v2760 = vpop.f32.mrb[0].mxu0
      %v2761 = vadd.f32 0.0, %v2760
      %v2762 = vpop.f32.mrb[0].mxu0
      %2763 = vmatprep.mubr.bf16.mxu0 0
      %2764 = vmatmul.mubr.bf16.gmra.mrb[0].mxu0 %v2560
      %v2765 = vpop.f32.mrb[0].mxu0
      %v2766 = vadd.f32 0.0, %v2765
      %v2767 = vpop.f32.mrb[0].mxu0
      %v2768 = vpop.f32.mrb[0].mxu0
      %v2769 = vadd.f32 0.0, %v2768
      %v2770 = vpop.f32.mrb[0].mxu0
      %2771 = vmatprep.mubr.bf16.mxu0 0
      %2772 = vmatmul.mubr.bf16.gmra.mrb[0].mxu0 %v2563
      %v2773 = vpop.f32.mrb[0].mxu0
      %v2774 = vadd.f32 0.0, %v2773
      %v2775 = vpop.f32.mrb[0].mxu0
      %v2776 = vpop.f32.mrb[0].mxu0
      %v2777 = vadd.f32 0.0, %v2776
      %v2778 = vpop.f32.mrb[0].mxu0
      %2779 = vmatprep.mubr.bf16.mxu0 0
      %2780 = vmatmul.mubr.bf16.gmra.mrb[0].mxu0 %v2566
      %v2781 = vpop.f32.mrb[0].mxu0
      %v2782 = vadd.f32 0.0, %v2781
      %v2783 = vpop.f32.mrb[0].mxu0
      %v2784 = vpop.f32.mrb[0].mxu0
      %v2785 = vadd.f32 0.0, %v2784
      %v2786 = vpop.f32.mrb[0].mxu0
      %2787 = vmatprep.mubr.bf16.mxu0 0
      %2788 = vmatmul.mubr.bf16.gmra.mrb[0].mxu0 %v2569
      %v2789 = vpop.f32.mrb[0].mxu0
      %v2790 = vadd.f32 0.0, %v2789
      %v2791 = vpop.f32.mrb[0].mxu0
      %v2792 = vpop.f32.mrb[0].mxu0
      %v2793 = vadd.f32 0.0, %v2792
      %v2794 = vpop.f32.mrb[0].mxu0
      %2795 = vmatprep.mubr.bf16.mxu0 0
      %2796 = vmatmul.mubr.bf16.gmra.mrb[0].mxu0 %v2572
      %v2797 = vpop.f32.mrb[0].mxu0
      %v2798 = vadd.f32 0.0, %v2797
      %v2799 = vpop.f32.mrb[0].mxu0
      %v2800 = vpop.f32.mrb[0].mxu0
      %v2801 = vadd.f32 0.0, %v2800
      %v2802 = vpop.f32.mrb[0].mxu0
      %2803 = vmatprep.mubr.bf16.mxu0 0
      %2804 = vmatmul.mubr.bf16.gmra.mrb[0].mxu0 %v2575
      %v2805 = vpop.f32.mrb[0].mxu0
      %v2806 = vadd.f32 0.0, %v2805
      %v2807 = vpop.f32.mrb[0].mxu0
      %v2808 = vpop.f32.mrb[0].mxu0
      %v2809 = vadd.f32 0.0, %v2808
      %v2810 = vpop.f32.mrb[0].mxu0
      %2811 = vmatprep.mubr.bf16.mxu0 0
      %2812 = vmatmul.mubr.bf16.gmra.mrb[0].mxu0 %v2578
      %v2813 = vpop.f32.mrb[0].mxu0
      %v2814 = vadd.f32 0.0, %v2813
      %v2815 = vpop.f32.mrb[0].mxu0
      %v2816 = vpop.f32.mrb[0].mxu0
      %v2817 = vadd.f32 0.0, %v2816
      %v2818 = vpop.f32.mrb[0].mxu0
      %2819 = vdwg.mxu0
      %v2820 = vadd.f32 %v2451, %v2694
      %v2821 = vadd.f32 %v2452, %v2697
      %v2822 = vadd.f32 %v2453, %v2702
      %v2823 = vadd.f32 %v2454, %v2705
      %v2824 = vadd.f32 %v2455, %v2710
      %v2825 = vadd.f32 %v2456, %v2713
      %v2826 = vadd.f32 %v2457, %v2718
      %v2827 = vadd.f32 %v2458, %v2721
      %v2828 = vadd.f32 %v2459, %v2726
      %v2829 = vadd.f32 %v2460, %v2729
      %v2830 = vadd.f32 %v2461, %v2734
      %v2831 = vadd.f32 %v2462, %v2737
      %v2832 = vadd.f32 %v2463, %v2742
      %v2833 = vadd.f32 %v2464, %v2745
      %v2834 = vadd.f32 %v2465, %v2750
      %v2835 = vadd.f32 %v2466, %v2753
      %v2836 = vadd.f32 %v2467, %v2758
      %v2837 = vadd.f32 %v2468, %v2761
      %v2838 = vadd.f32 %v2469, %v2766
      %v2839 = vadd.f32 %v2470, %v2769
      %v2840 = vadd.f32 %v2471, %v2774
      %v2841 = vadd.f32 %v2472, %v2777
      %v2842 = vadd.f32 %v2473, %v2782
      %v2843 = vadd.f32 %v2474, %v2785
      %v2844 = vadd.f32 %v2475, %v2790
      %v2845 = vadd.f32 %v2476, %v2793
      %v2846 = vadd.f32 %v2477, %v2798
      %v2847 = vadd.f32 %v2478, %v2801
      %v2848 = vadd.f32 %v2479, %v2806
      %v2849 = vadd.f32 %v2480, %v2809
      %v2850 = vadd.f32 %v2481, %v2814
      %v2851 = vadd.f32 %v2482, %v2817
      %v2852 = vld [vmem:[%s427 + $0x8] sm:$0x1f]
      %v2853 = vld [vmem:[%s427 + $0x18] sm:$0x1f]
      %v2854 = vld [vmem:[%s427 + $0x28] sm:$0x1f]
      %v2855 = vld [vmem:[%s427 + $0x38] sm:$0x1f]
      %v2856 = vld [vmem:[%s427 + $0x48] sm:$0x1f]
      %v2857 = vld [vmem:[%s427 + $0x58] sm:$0x1f]
      %v2858 = vld [vmem:[%s427 + $0x68] sm:$0x1f]
      %v2859 = vld [vmem:[%s427 + $0x78] sm:$0x1f]
      %v2860 = vld [vmem:[%s427 + $0x88] sm:$0x1f]
      %v2861 = vld [vmem:[%s427 + $0x98] sm:$0x1f]
      %v2862 = vld [vmem:[%s427 + $0xa8] sm:$0x1f]
      %v2863 = vld [vmem:[%s427 + $0xb8] sm:$0x1f]
      %v2864 = vld [vmem:[%s427 + $0xc8] sm:$0x1f]
      %v2865 = vld [vmem:[%s427 + $0xd8] sm:$0x1f]
      %v2866 = vld [vmem:[%s427 + $0xe8] sm:$0x1f]
      %v2867 = vld [vmem:[%s427 + $0xf8] sm:$0x1f]
      %v2869 = vshrl.u32 %v2483, 16
      %v2871 = vrot.slane %v2869, 4
      %v2872 = vshll.u32 %v2483, 16
      %v2874 = vrot.slane %v2872, 5
      %v2875 = vor.u32 %v2871, %v2874
      %v2877 = vshrl.u32 %v2852, 16
      %v2879 = vrot.slane %v2877, 4
      %v2880 = vshll.u32 %v2852, 16
      %v2882 = vrot.slane %v2880, 5
      %v2883 = vor.u32 %v2879, %v2882
      %v2884 = vsel %vm1360, %v2875, %v2883
      %v2886 = vshrl.u32 %v2484, 16
      %v2888 = vrot.slane %v2886, 4
      %v2889 = vshll.u32 %v2484, 16
      %v2891 = vrot.slane %v2889, 5
      %v2892 = vor.u32 %v2888, %v2891
      %v2894 = vshrl.u32 %v2853, 16
      %v2896 = vrot.slane %v2894, 4
      %v2897 = vshll.u32 %v2853, 16
      %v2899 = vrot.slane %v2897, 5
      %v2900 = vor.u32 %v2896, %v2899
      %v2901 = vsel %vm1360, %v2892, %v2900
      %v2903 = vshrl.u32 %v2485, 16
      %v2905 = vrot.slane %v2903, 4
      %v2906 = vshll.u32 %v2485, 16
      %v2908 = vrot.slane %v2906, 5
      %v2909 = vor.u32 %v2905, %v2908
      %v2911 = vshrl.u32 %v2854, 16
      %v2913 = vrot.slane %v2911, 4
      %v2914 = vshll.u32 %v2854, 16
      %v2916 = vrot.slane %v2914, 5
      %v2917 = vor.u32 %v2913, %v2916
      %v2918 = vsel %vm1360, %v2909, %v2917
      %v2920 = vshrl.u32 %v2486, 16
      %v2922 = vrot.slane %v2920, 4
      %v2923 = vshll.u32 %v2486, 16
      %v2925 = vrot.slane %v2923, 5
      %v2926 = vor.u32 %v2922, %v2925
      %v2928 = vshrl.u32 %v2855, 16
      %v2930 = vrot.slane %v2928, 4
      %v2931 = vshll.u32 %v2855, 16
      %v2933 = vrot.slane %v2931, 5
      %v2934 = vor.u32 %v2930, %v2933
      %v2935 = vsel %vm1360, %v2926, %v2934
      %v2937 = vshrl.u32 %v2487, 16
      %v2939 = vrot.slane %v2937, 4
      %v2940 = vshll.u32 %v2487, 16
      %v2942 = vrot.slane %v2940, 5
      %v2943 = vor.u32 %v2939, %v2942
      %v2945 = vshrl.u32 %v2856, 16
      %v2947 = vrot.slane %v2945, 4
      %v2948 = vshll.u32 %v2856, 16
      %v2950 = vrot.slane %v2948, 5
      %v2951 = vor.u32 %v2947, %v2950
      %v2952 = vsel %vm1360, %v2943, %v2951
      %v2954 = vshrl.u32 %v2488, 16
      %v2956 = vrot.slane %v2954, 4
      %v2957 = vshll.u32 %v2488, 16
      %v2959 = vrot.slane %v2957, 5
      %v2960 = vor.u32 %v2956, %v2959
      %v2962 = vshrl.u32 %v2857, 16
      %v2964 = vrot.slane %v2962, 4
      %v2965 = vshll.u32 %v2857, 16
      %v2967 = vrot.slane %v2965, 5
      %v2968 = vor.u32 %v2964, %v2967
      %v2969 = vsel %vm1360, %v2960, %v2968
      %v2971 = vshrl.u32 %v2489, 16
      %v2973 = vrot.slane %v2971, 4
      %v2974 = vshll.u32 %v2489, 16
      %v2976 = vrot.slane %v2974, 5
      %v2977 = vor.u32 %v2973, %v2976
      %v2979 = vshrl.u32 %v2858, 16
      %v2981 = vrot.slane %v2979, 4
      %v2982 = vshll.u32 %v2858, 16
      %v2984 = vrot.slane %v2982, 5
      %v2985 = vor.u32 %v2981, %v2984
      %v2986 = vsel %vm1360, %v2977, %v2985
      %v2988 = vshrl.u32 %v2490, 16
      %v2990 = vrot.slane %v2988, 4
      %v2991 = vshll.u32 %v2490, 16
      %v2993 = vrot.slane %v2991, 5
      %v2994 = vor.u32 %v2990, %v2993
      %v2996 = vshrl.u32 %v2859, 16
      %v2998 = vrot.slane %v2996, 4
      %v2999 = vshll.u32 %v2859, 16
      %v3001 = vrot.slane %v2999, 5
      %v3002 = vor.u32 %v2998, %v3001
      %v3003 = vsel %vm1360, %v2994, %v3002
      %v3005 = vshrl.u32 %v2491, 16
      %v3007 = vrot.slane %v3005, 4
      %v3008 = vshll.u32 %v2491, 16
      %v3010 = vrot.slane %v3008, 5
      %v3011 = vor.u32 %v3007, %v3010
      %v3013 = vshrl.u32 %v2860, 16
      %v3015 = vrot.slane %v3013, 4
      %v3016 = vshll.u32 %v2860, 16
      %v3018 = vrot.slane %v3016, 5
      %v3019 = vor.u32 %v3015, %v3018
      %v3020 = vsel %vm1360, %v3011, %v3019
      %v3022 = vshrl.u32 %v2492, 16
      %v3024 = vrot.slane %v3022, 4
      %v3025 = vshll.u32 %v2492, 16
      %v3027 = vrot.slane %v3025, 5
      %v3028 = vor.u32 %v3024, %v3027
      %v3030 = vshrl.u32 %v2861, 16
      %v3032 = vrot.slane %v3030, 4
      %v3033 = vshll.u32 %v2861, 16
      %v3035 = vrot.slane %v3033, 5
      %v3036 = vor.u32 %v3032, %v3035
      %v3037 = vsel %vm1360, %v3028, %v3036
      %v3039 = vshrl.u32 %v2493, 16
      %v3041 = vrot.slane %v3039, 4
      %v3042 = vshll.u32 %v2493, 16
      %v3044 = vrot.slane %v3042, 5
      %v3045 = vor.u32 %v3041, %v3044
      %v3047 = vshrl.u32 %v2862, 16
      %v3049 = vrot.slane %v3047, 4
      %v3050 = vshll.u32 %v2862, 16
      %v3052 = vrot.slane %v3050, 5
      %v3053 = vor.u32 %v3049, %v3052
      %v3054 = vsel %vm1360, %v3045, %v3053
      %v3056 = vshrl.u32 %v2494, 16
      %v3058 = vrot.slane %v3056, 4
      %v3059 = vshll.u32 %v2494, 16
      %v3061 = vrot.slane %v3059, 5
      %v3062 = vor.u32 %v3058, %v3061
      %v3064 = vshrl.u32 %v2863, 16
      %v3066 = vrot.slane %v3064, 4
      %v3067 = vshll.u32 %v2863, 16
      %v3069 = vrot.slane %v3067, 5
      %v3070 = vor.u32 %v3066, %v3069
      %v3071 = vsel %vm1360, %v3062, %v3070
      %v3073 = vshrl.u32 %v2495, 16
      %v3075 = vrot.slane %v3073, 4
      %v3076 = vshll.u32 %v2495, 16
      %v3078 = vrot.slane %v3076, 5
      %v3079 = vor.u32 %v3075, %v3078
      %v3081 = vshrl.u32 %v2864, 16
      %v3083 = vrot.slane %v3081, 4
      %v3084 = vshll.u32 %v2864, 16
      %v3086 = vrot.slane %v3084, 5
      %v3087 = vor.u32 %v3083, %v3086
      %v3088 = vsel %vm1360, %v3079, %v3087
      %v3090 = vshrl.u32 %v2496, 16
      %v3092 = vrot.slane %v3090, 4
      %v3093 = vshll.u32 %v2496, 16
      %v3095 = vrot.slane %v3093, 5
      %v3096 = vor.u32 %v3092, %v3095
      %v3098 = vshrl.u32 %v2865, 16
      %v3100 = vrot.slane %v3098, 4
      %v3101 = vshll.u32 %v2865, 16
      %v3103 = vrot.slane %v3101, 5
      %v3104 = vor.u32 %v3100, %v3103
      %v3105 = vsel %vm1360, %v3096, %v3104
      %v3107 = vshrl.u32 %v2497, 16
      %v3109 = vrot.slane %v3107, 4
      %v3110 = vshll.u32 %v2497, 16
      %v3112 = vrot.slane %v3110, 5
      %v3113 = vor.u32 %v3109, %v3112
      %v3115 = vshrl.u32 %v2866, 16
      %v3117 = vrot.slane %v3115, 4
      %v3118 = vshll.u32 %v2866, 16
      %v3120 = vrot.slane %v3118, 5
      %v3121 = vor.u32 %v3117, %v3120
      %v3122 = vsel %vm1360, %v3113, %v3121
      %v3124 = vshrl.u32 %v2498, 16
      %v3126 = vrot.slane %v3124, 4
      %v3127 = vshll.u32 %v2498, 16
      %v3129 = vrot.slane %v3127, 5
      %v3130 = vor.u32 %v3126, %v3129
      %v3132 = vshrl.u32 %v2867, 16
      %v3134 = vrot.slane %v3132, 4
      %v3135 = vshll.u32 %v2867, 16
      %v3137 = vrot.slane %v3135, 5
      %v3138 = vor.u32 %v3134, %v3137
      %v3139 = vsel %vm1360, %v3130, %v3138
      %v3156 = vld [vmem:[%s1 + $0x140] sm:$0xf]
      %v3157 = vld [vmem:[%s1 + $0x144] sm:$0xf]
      %v3158 = vld [vmem:[%s1 + $0x148] sm:$0xf]
      %v3159 = vld [vmem:[%s1 + $0x14c] sm:$0xf]
      %v3160 = vld [vmem:[%s1 + $0x150] sm:$0xf]
      %v3161 = vld [vmem:[%s1 + $0x154] sm:$0xf]
      %v3162 = vld [vmem:[%s1 + $0x158] sm:$0xf]
      %v3163 = vld [vmem:[%s1 + $0x15c] sm:$0xf]
      %v3164 = vld [vmem:[%s1 + $0x160] sm:$0xf]
      %v3165 = vld [vmem:[%s1 + $0x164] sm:$0xf]
      %v3166 = vld [vmem:[%s1 + $0x168] sm:$0xf]
      %v3167 = vld [vmem:[%s1 + $0x16c] sm:$0xf]
      %v3168 = vld [vmem:[%s1 + $0x170] sm:$0xf]
      %v3169 = vld [vmem:[%s1 + $0x174] sm:$0xf]
      %v3170 = vld [vmem:[%s1 + $0x178] sm:$0xf]
      %v3171 = vld [vmem:[%s1 + $0x17c] sm:$0xf]
      %v3188 = vunpack.c.l.b16 %v3156
      %v3189 = vunpack.c.l.b16 %v3157
      %v3190 = vunpack.c.l.b16 %v3158
      %v3191 = vunpack.c.l.b16 %v3159
      %v3192 = vunpack.c.l.b16 %v3160
      %v3193 = vunpack.c.l.b16 %v3161
      %v3194 = vunpack.c.l.b16 %v3162
      %v3195 = vunpack.c.l.b16 %v3163
      %v3196 = vunpack.c.l.b16 %v3164
      %v3197 = vunpack.c.l.b16 %v3165
      %v3198 = vunpack.c.l.b16 %v3166
      %v3199 = vunpack.c.l.b16 %v3167
      %v3200 = vunpack.c.l.b16 %v3168
      %v3201 = vunpack.c.l.b16 %v3169
      %v3202 = vunpack.c.l.b16 %v3170
      %v3203 = vunpack.c.l.b16 %v3171
      %v3204 = vpack.c.b16 %v3189, %v3188
      %v3205 = vpack.c.b16 %v3191, %v3190
      %v3206 = vpack.c.b16 %v3193, %v3192
      %v3207 = vpack.c.b16 %v3195, %v3194
      %v3208 = vpack.c.b16 %v3197, %v3196
      %v3209 = vpack.c.b16 %v3199, %v3198
      %v3210 = vpack.c.b16 %v3201, %v3200
      %v3211 = vpack.c.b16 %v3203, %v3202
      %3220 = vmatprep.subr.bf16.mxu0 0
      %3221 = vmatpush1.bf16.msra.mxu0 %v3204
      %3222 = vmatprep.subr.bf16.mxu0 0
      %3223 = vmatpush1.bf16.msra.mxu0 %v3205
      %3224 = vmatprep.subr.bf16.mxu0 0
      %3225 = vmatpush1.bf16.msra.mxu0 %v3206
      %3226 = vmatprep.subr.bf16.mxu0 0
      %3227 = vmatpush1.bf16.msra.mxu0 %v3207
      %3228 = vmatprep.subr.bf16.mxu0 0
      %3229 = vmatpush1.bf16.msra.mxu0 %v3208
      %3230 = vmatprep.subr.bf16.mxu0 0
      %3231 = vmatpush1.bf16.msra.mxu0 %v3209
      %3232 = vmatprep.subr.bf16.mxu0 0
      %3233 = vmatpush1.bf16.msra.mxu0 %v3210
      %3234 = vmatprep.subr.bf16.mxu0 0
      %3235 = vmatpush1.bf16.msra.mxu0 %v3211
      %3236 = vmatprep.subr.bf16.mxu0 0
      %3237 = vmatpush1.bf16.msra.mxu0 0
      %3238 = vmatprep.subr.bf16.mxu0 0
      %3239 = vmatpush1.bf16.msra.mxu0 0
      %3240 = vmatprep.subr.bf16.mxu0 0
      %3241 = vmatpush1.bf16.msra.mxu0 0
      %3242 = vmatprep.subr.bf16.mxu0 0
      %3243 = vmatpush1.bf16.msra.mxu0 0
      %3244 = vmatprep.subr.bf16.mxu0 0
      %3245 = vmatpush1.bf16.msra.mxu0 0
      %3246 = vmatprep.subr.bf16.mxu0 0
      %3247 = vmatpush1.bf16.msra.mxu0 0
      %3248 = vmatprep.subr.bf16.mxu0 0
      %3249 = vmatpush1.bf16.msra.mxu0 0
      %3250 = vmatprep.subr.bf16.mxu0 0
      %3251 = vmatpush1.bf16.msra.mxu0 0
      %3252 = vmatprep.mubr.bf16.mxu0 0
      %3253 = vmatmul.mubr.bf16.gmra.mrb[0].mxu0 %v2884
      %v3254 = vpop.f32.mrb[0].mxu0
      %v3255 = vadd.f32 0.0, %v3254
      %v3256 = vpop.f32.mrb[0].mxu0
      %v3257 = vpop.f32.mrb[0].mxu0
      %v3258 = vadd.f32 0.0, %v3257
      %v3259 = vpop.f32.mrb[0].mxu0
      %3260 = vmatprep.mubr.bf16.mxu0 0
      %3261 = vmatmul.mubr.bf16.gmra.mrb[0].mxu0 %v2901
      %v3262 = vpop.f32.mrb[0].mxu0
      %v3263 = vadd.f32 0.0, %v3262
      %v3264 = vpop.f32.mrb[0].mxu0
      %v3265 = vpop.f32.mrb[0].mxu0
      %v3266 = vadd.f32 0.0, %v3265
      %v3267 = vpop.f32.mrb[0].mxu0
      %3268 = vmatprep.mubr.bf16.mxu0 0
      %3269 = vmatmul.mubr.bf16.gmra.mrb[0].mxu0 %v2918
      %v3270 = vpop.f32.mrb[0].mxu0
      %v3271 = vadd.f32 0.0, %v3270
      %v3272 = vpop.f32.mrb[0].mxu0
      %v3273 = vpop.f32.mrb[0].mxu0
      %v3274 = vadd.f32 0.0, %v3273
      %v3275 = vpop.f32.mrb[0].mxu0
      %3276 = vmatprep.mubr.bf16.mxu0 0
      %3277 = vmatmul.mubr.bf16.gmra.mrb[0].mxu0 %v2935
      %v3278 = vpop.f32.mrb[0].mxu0
      %v3279 = vadd.f32 0.0, %v3278
      %v3280 = vpop.f32.mrb[0].mxu0
      %v3281 = vpop.f32.mrb[0].mxu0
      %v3282 = vadd.f32 0.0, %v3281
      %v3283 = vpop.f32.mrb[0].mxu0
      %3284 = vmatprep.mubr.bf16.mxu0 0
      %3285 = vmatmul.mubr.bf16.gmra.mrb[0].mxu0 %v2952
      %v3286 = vpop.f32.mrb[0].mxu0
      %v3287 = vadd.f32 0.0, %v3286
      %v3288 = vpop.f32.mrb[0].mxu0
      %v3289 = vpop.f32.mrb[0].mxu0
      %v3290 = vadd.f32 0.0, %v3289
      %v3291 = vpop.f32.mrb[0].mxu0
      %3292 = vmatprep.mubr.bf16.mxu0 0
      %3293 = vmatmul.mubr.bf16.gmra.mrb[0].mxu0 %v2969
      %v3294 = vpop.f32.mrb[0].mxu0
      %v3295 = vadd.f32 0.0, %v3294
      %v3296 = vpop.f32.mrb[0].mxu0
      %v3297 = vpop.f32.mrb[0].mxu0
      %v3298 = vadd.f32 0.0, %v3297
      %v3299 = vpop.f32.mrb[0].mxu0
      %3300 = vmatprep.mubr.bf16.mxu0 0
      %3301 = vmatmul.mubr.bf16.gmra.mrb[0].mxu0 %v2986
      %v3302 = vpop.f32.mrb[0].mxu0
      %v3303 = vadd.f32 0.0, %v3302
      %v3304 = vpop.f32.mrb[0].mxu0
      %v3305 = vpop.f32.mrb[0].mxu0
      %v3306 = vadd.f32 0.0, %v3305
      %v3307 = vpop.f32.mrb[0].mxu0
      %3308 = vmatprep.mubr.bf16.mxu0 0
      %3309 = vmatmul.mubr.bf16.gmra.mrb[0].mxu0 %v3003
      %v3310 = vpop.f32.mrb[0].mxu0
      %v3311 = vadd.f32 0.0, %v3310
      %v3312 = vpop.f32.mrb[0].mxu0
      %v3313 = vpop.f32.mrb[0].mxu0
      %v3314 = vadd.f32 0.0, %v3313
      %v3315 = vpop.f32.mrb[0].mxu0
      %3316 = vmatprep.mubr.bf16.mxu0 0
      %3317 = vmatmul.mubr.bf16.gmra.mrb[0].mxu0 %v3020
      %v3318 = vpop.f32.mrb[0].mxu0
      %v3319 = vadd.f32 0.0, %v3318
      %v3320 = vpop.f32.mrb[0].mxu0
      %v3321 = vpop.f32.mrb[0].mxu0
      %v3322 = vadd.f32 0.0, %v3321
      %v3323 = vpop.f32.mrb[0].mxu0
      %3324 = vmatprep.mubr.bf16.mxu0 0
      %3325 = vmatmul.mubr.bf16.gmra.mrb[0].mxu0 %v3037
      %v3326 = vpop.f32.mrb[0].mxu0
      %v3327 = vadd.f32 0.0, %v3326
      %v3328 = vpop.f32.mrb[0].mxu0
      %v3329 = vpop.f32.mrb[0].mxu0
      %v3330 = vadd.f32 0.0, %v3329
      %v3331 = vpop.f32.mrb[0].mxu0
      %3332 = vmatprep.mubr.bf16.mxu0 0
      %3333 = vmatmul.mubr.bf16.gmra.mrb[0].mxu0 %v3054
      %v3334 = vpop.f32.mrb[0].mxu0
      %v3335 = vadd.f32 0.0, %v3334
      %v3336 = vpop.f32.mrb[0].mxu0
      %v3337 = vpop.f32.mrb[0].mxu0
      %v3338 = vadd.f32 0.0, %v3337
      %v3339 = vpop.f32.mrb[0].mxu0
      %3340 = vmatprep.mubr.bf16.mxu0 0
      %3341 = vmatmul.mubr.bf16.gmra.mrb[0].mxu0 %v3071
      %v3342 = vpop.f32.mrb[0].mxu0
      %v3343 = vadd.f32 0.0, %v3342
      %v3344 = vpop.f32.mrb[0].mxu0
      %v3345 = vpop.f32.mrb[0].mxu0
      %v3346 = vadd.f32 0.0, %v3345
      %v3347 = vpop.f32.mrb[0].mxu0
      %3348 = vmatprep.mubr.bf16.mxu0 0
      %3349 = vmatmul.mubr.bf16.gmra.mrb[0].mxu0 %v3088
      %v3350 = vpop.f32.mrb[0].mxu0
      %v3351 = vadd.f32 0.0, %v3350
      %v3352 = vpop.f32.mrb[0].mxu0
      %v3353 = vpop.f32.mrb[0].mxu0
      %v3354 = vadd.f32 0.0, %v3353
      %v3355 = vpop.f32.mrb[0].mxu0
      %3356 = vmatprep.mubr.bf16.mxu0 0
      %3357 = vmatmul.mubr.bf16.gmra.mrb[0].mxu0 %v3105
      %v3358 = vpop.f32.mrb[0].mxu0
      %v3359 = vadd.f32 0.0, %v3358
      %v3360 = vpop.f32.mrb[0].mxu0
      %v3361 = vpop.f32.mrb[0].mxu0
      %v3362 = vadd.f32 0.0, %v3361
      %v3363 = vpop.f32.mrb[0].mxu0
      %3364 = vmatprep.mubr.bf16.mxu0 0
      %3365 = vmatmul.mubr.bf16.gmra.mrb[0].mxu0 %v3122
      %v3366 = vpop.f32.mrb[0].mxu0
      %v3367 = vadd.f32 0.0, %v3366
      %v3368 = vpop.f32.mrb[0].mxu0
      %v3369 = vpop.f32.mrb[0].mxu0
      %v3370 = vadd.f32 0.0, %v3369
      %v3371 = vpop.f32.mrb[0].mxu0
      %3372 = vmatprep.mubr.bf16.mxu0 0
      %3373 = vmatmul.mubr.bf16.gmra.mrb[0].mxu0 %v3139
      %v3374 = vpop.f32.mrb[0].mxu0
      %v3375 = vadd.f32 0.0, %v3374
      %v3376 = vpop.f32.mrb[0].mxu0
      %v3377 = vpop.f32.mrb[0].mxu0
      %v3378 = vadd.f32 0.0, %v3377
      %v3379 = vpop.f32.mrb[0].mxu0
      %3380 = vdwg.mxu0
      %v3381 = vadd.f32 %v2820, %v3255
      %v3382 = vadd.f32 %v2821, %v3258
      %v3383 = vadd.f32 %v2822, %v3263
      %v3384 = vadd.f32 %v2823, %v3266
      %v3385 = vadd.f32 %v2824, %v3271
      %v3386 = vadd.f32 %v2825, %v3274
      %v3387 = vadd.f32 %v2826, %v3279
      %v3388 = vadd.f32 %v2827, %v3282
      %v3389 = vadd.f32 %v2828, %v3287
      %v3390 = vadd.f32 %v2829, %v3290
      %v3391 = vadd.f32 %v2830, %v3295
      %v3392 = vadd.f32 %v2831, %v3298
      %v3393 = vadd.f32 %v2832, %v3303
      %v3394 = vadd.f32 %v2833, %v3306
      %v3395 = vadd.f32 %v2834, %v3311
      %v3396 = vadd.f32 %v2835, %v3314
      %v3397 = vadd.f32 %v2836, %v3319
      %v3398 = vadd.f32 %v2837, %v3322
      %v3399 = vadd.f32 %v2838, %v3327
      %v3400 = vadd.f32 %v2839, %v3330
      %v3401 = vadd.f32 %v2840, %v3335
      %v3402 = vadd.f32 %v2841, %v3338
      %v3403 = vadd.f32 %v2842, %v3343
      %v3404 = vadd.f32 %v2843, %v3346
      %v3405 = vadd.f32 %v2844, %v3351
      %v3406 = vadd.f32 %v2845, %v3354
      %v3407 = vadd.f32 %v2846, %v3359
      %v3408 = vadd.f32 %v2847, %v3362
      %v3409 = vadd.f32 %v2848, %v3367
      %v3410 = vadd.f32 %v2849, %v3370
      %v3411 = vadd.f32 %v2850, %v3375
      %v3412 = vadd.f32 %v2851, %v3378
      %s3413 = scalar_lea.vmem [#allocation2], 32
      %v3414 = vld [vmem:[%s3413] sm:$0xf8]
      %v3415 = vld [vmem:[%s3413 + $0x8] sm:$0xf]
      %v3416 = vld [vmem:[%s3413 + $0x10] sm:$0xf8]
      %v3417 = vld [vmem:[%s3413 + $0x18] sm:$0xf]
      %v3418 = vld [vmem:[%s3413 + $0x20] sm:$0xf8]
      %v3419 = vld [vmem:[%s3413 + $0x28] sm:$0xf]
      %v3420 = vld [vmem:[%s3413 + $0x30] sm:$0xf8]
      %v3421 = vld [vmem:[%s3413 + $0x38] sm:$0xf]
      %v3422 = vld [vmem:[%s3413 + $0x40] sm:$0xf8]
      %v3423 = vld [vmem:[%s3413 + $0x48] sm:$0xf]
      %v3424 = vld [vmem:[%s3413 + $0x50] sm:$0xf8]
      %v3425 = vld [vmem:[%s3413 + $0x58] sm:$0xf]
      %v3426 = vld [vmem:[%s3413 + $0x60] sm:$0xf8]
      %v3427 = vld [vmem:[%s3413 + $0x68] sm:$0xf]
      %v3428 = vld [vmem:[%s3413 + $0x70] sm:$0xf8]
      %v3429 = vld [vmem:[%s3413 + $0x78] sm:$0xf]
      %v3430 = vld [vmem:[%s3413 + $0x80] sm:$0xf8]
      %v3431 = vld [vmem:[%s3413 + $0x88] sm:$0xf]
      %v3432 = vld [vmem:[%s3413 + $0x90] sm:$0xf8]
      %v3433 = vld [vmem:[%s3413 + $0x98] sm:$0xf]
      %v3434 = vld [vmem:[%s3413 + $0xa0] sm:$0xf8]
      %v3435 = vld [vmem:[%s3413 + $0xa8] sm:$0xf]
      %v3436 = vld [vmem:[%s3413 + $0xb0] sm:$0xf8]
      %v3437 = vld [vmem:[%s3413 + $0xb8] sm:$0xf]
      %v3438 = vld [vmem:[%s3413 + $0xc0] sm:$0xf8]
      %v3439 = vld [vmem:[%s3413 + $0xc8] sm:$0xf]
      %v3440 = vld [vmem:[%s3413 + $0xd0] sm:$0xf8]
      %v3441 = vld [vmem:[%s3413 + $0xd8] sm:$0xf]
      %v3442 = vld [vmem:[%s3413 + $0xe0] sm:$0xf8]
      %v3443 = vld [vmem:[%s3413 + $0xe8] sm:$0xf]
      %v3444 = vld [vmem:[%s3413 + $0xf0] sm:$0xf8]
      %v3445 = vld [vmem:[%s3413 + $0xf8] sm:$0xf]
      %v3447 = vshrl.u32 %v3414, 16
      %v3449 = vrot.slane %v3447, 3
      %v3450 = vshll.u32 %v3414, 16
      %v3452 = vrot.slane %v3450, 4
      %v3453 = vor.u32 %v3449, %v3452
      %v3455 = vshrl.u32 %v3415, 16
      %v3457 = vrot.slane %v3455, 3
      %v3458 = vshll.u32 %v3415, 16
      %v3460 = vrot.slane %v3458, 4
      %v3461 = vor.u32 %v3457, %v3460
      %v3462 = vsel %vm492, %v3453, %v3461
      %v3464 = vshrl.u32 %v3416, 16
      %v3466 = vrot.slane %v3464, 3
      %v3467 = vshll.u32 %v3416, 16
      %v3469 = vrot.slane %v3467, 4
      %v3470 = vor.u32 %v3466, %v3469
      %v3472 = vshrl.u32 %v3417, 16
      %v3474 = vrot.slane %v3472, 3
      %v3475 = vshll.u32 %v3417, 16
      %v3477 = vrot.slane %v3475, 4
      %v3478 = vor.u32 %v3474, %v3477
      %v3479 = vsel %vm492, %v3470, %v3478
      %v3481 = vshrl.u32 %v3418, 16
      %v3483 = vrot.slane %v3481, 3
      %v3484 = vshll.u32 %v3418, 16
      %v3486 = vrot.slane %v3484, 4
      %v3487 = vor.u32 %v3483, %v3486
      %v3489 = vshrl.u32 %v3419, 16
      %v3491 = vrot.slane %v3489, 3
      %v3492 = vshll.u32 %v3419, 16
      %v3494 = vrot.slane %v3492, 4
      %v3495 = vor.u32 %v3491, %v3494
      %v3496 = vsel %vm492, %v3487, %v3495
      %v3498 = vshrl.u32 %v3420, 16
      %v3500 = vrot.slane %v3498, 3
      %v3501 = vshll.u32 %v3420, 16
      %v3503 = vrot.slane %v3501, 4
      %v3504 = vor.u32 %v3500, %v3503
      %v3506 = vshrl.u32 %v3421, 16
      %v3508 = vrot.slane %v3506, 3
      %v3509 = vshll.u32 %v3421, 16
      %v3511 = vrot.slane %v3509, 4
      %v3512 = vor.u32 %v3508, %v3511
      %v3513 = vsel %vm492, %v3504, %v3512
      %v3515 = vshrl.u32 %v3422, 16
      %v3517 = vrot.slane %v3515, 3
      %v3518 = vshll.u32 %v3422, 16
      %v3520 = vrot.slane %v3518, 4
      %v3521 = vor.u32 %v3517, %v3520
      %v3523 = vshrl.u32 %v3423, 16
      %v3525 = vrot.slane %v3523, 3
      %v3526 = vshll.u32 %v3423, 16
      %v3528 = vrot.slane %v3526, 4
      %v3529 = vor.u32 %v3525, %v3528
      %v3530 = vsel %vm492, %v3521, %v3529
      %v3532 = vshrl.u32 %v3424, 16
      %v3534 = vrot.slane %v3532, 3
      %v3535 = vshll.u32 %v3424, 16
      %v3537 = vrot.slane %v3535, 4
      %v3538 = vor.u32 %v3534, %v3537
      %v3540 = vshrl.u32 %v3425, 16
      %v3542 = vrot.slane %v3540, 3
      %v3543 = vshll.u32 %v3425, 16
      %v3545 = vrot.slane %v3543, 4
      %v3546 = vor.u32 %v3542, %v3545
      %v3547 = vsel %vm492, %v3538, %v3546
      %v3549 = vshrl.u32 %v3426, 16
      %v3551 = vrot.slane %v3549, 3
      %v3552 = vshll.u32 %v3426, 16
      %v3554 = vrot.slane %v3552, 4
      %v3555 = vor.u32 %v3551, %v3554
      %v3557 = vshrl.u32 %v3427, 16
      %v3559 = vrot.slane %v3557, 3
      %v3560 = vshll.u32 %v3427, 16
      %v3562 = vrot.slane %v3560, 4
      %v3563 = vor.u32 %v3559, %v3562
      %v3564 = vsel %vm492, %v3555, %v3563
      %v3566 = vshrl.u32 %v3428, 16
      %v3568 = vrot.slane %v3566, 3
      %v3569 = vshll.u32 %v3428, 16
      %v3571 = vrot.slane %v3569, 4
      %v3572 = vor.u32 %v3568, %v3571
      %v3574 = vshrl.u32 %v3429, 16
      %v3576 = vrot.slane %v3574, 3
      %v3577 = vshll.u32 %v3429, 16
      %v3579 = vrot.slane %v3577, 4
      %v3580 = vor.u32 %v3576, %v3579
      %v3581 = vsel %vm492, %v3572, %v3580
      %v3583 = vshrl.u32 %v3430, 16
      %v3585 = vrot.slane %v3583, 3
      %v3586 = vshll.u32 %v3430, 16
      %v3588 = vrot.slane %v3586, 4
      %v3589 = vor.u32 %v3585, %v3588
      %v3591 = vshrl.u32 %v3431, 16
      %v3593 = vrot.slane %v3591, 3
      %v3594 = vshll.u32 %v3431, 16
      %v3596 = vrot.slane %v3594, 4
      %v3597 = vor.u32 %v3593, %v3596
      %v3598 = vsel %vm492, %v3589, %v3597
      %v3600 = vshrl.u32 %v3432, 16
      %v3602 = vrot.slane %v3600, 3
      %v3603 = vshll.u32 %v3432, 16
      %v3605 = vrot.slane %v3603, 4
      %v3606 = vor.u32 %v3602, %v3605
      %v3608 = vshrl.u32 %v3433, 16
      %v3610 = vrot.slane %v3608, 3
      %v3611 = vshll.u32 %v3433, 16
      %v3613 = vrot.slane %v3611, 4
      %v3614 = vor.u32 %v3610, %v3613
      %v3615 = vsel %vm492, %v3606, %v3614
      %v3617 = vshrl.u32 %v3434, 16
      %v3619 = vrot.slane %v3617, 3
      %v3620 = vshll.u32 %v3434, 16
      %v3622 = vrot.slane %v3620, 4
      %v3623 = vor.u32 %v3619, %v3622
      %v3625 = vshrl.u32 %v3435, 16
      %v3627 = vrot.slane %v3625, 3
      %v3628 = vshll.u32 %v3435, 16
      %v3630 = vrot.slane %v3628, 4
      %v3631 = vor.u32 %v3627, %v3630
      %v3632 = vsel %vm492, %v3623, %v3631
      %v3634 = vshrl.u32 %v3436, 16
      %v3636 = vrot.slane %v3634, 3
      %v3637 = vshll.u32 %v3436, 16
      %v3639 = vrot.slane %v3637, 4
      %v3640 = vor.u32 %v3636, %v3639
      %v3642 = vshrl.u32 %v3437, 16
      %v3644 = vrot.slane %v3642, 3
      %v3645 = vshll.u32 %v3437, 16
      %v3647 = vrot.slane %v3645, 4
      %v3648 = vor.u32 %v3644, %v3647
      %v3649 = vsel %vm492, %v3640, %v3648
      %v3651 = vshrl.u32 %v3438, 16
      %v3653 = vrot.slane %v3651, 3
      %v3654 = vshll.u32 %v3438, 16
      %v3656 = vrot.slane %v3654, 4
      %v3657 = vor.u32 %v3653, %v3656
      %v3659 = vshrl.u32 %v3439, 16
      %v3661 = vrot.slane %v3659, 3
      %v3662 = vshll.u32 %v3439, 16
      %v3664 = vrot.slane %v3662, 4
      %v3665 = vor.u32 %v3661, %v3664
      %v3666 = vsel %vm492, %v3657, %v3665
      %v3668 = vshrl.u32 %v3440, 16
      %v3670 = vrot.slane %v3668, 3
      %v3671 = vshll.u32 %v3440, 16
      %v3673 = vrot.slane %v3671, 4
      %v3674 = vor.u32 %v3670, %v3673
      %v3676 = vshrl.u32 %v3441, 16
      %v3678 = vrot.slane %v3676, 3
      %v3679 = vshll.u32 %v3441, 16
      %v3681 = vrot.slane %v3679, 4
      %v3682 = vor.u32 %v3678, %v3681
      %v3683 = vsel %vm492, %v3674, %v3682
      %v3685 = vshrl.u32 %v3442, 16
      %v3687 = vrot.slane %v3685, 3
      %v3688 = vshll.u32 %v3442, 16
      %v3690 = vrot.slane %v3688, 4
      %v3691 = vor.u32 %v3687, %v3690
      %v3693 = vshrl.u32 %v3443, 16
      %v3695 = vrot.slane %v3693, 3
      %v3696 = vshll.u32 %v3443, 16
      %v3698 = vrot.slane %v3696, 4
      %v3699 = vor.u32 %v3695, %v3698
      %v3700 = vsel %vm492, %v3691, %v3699
      %v3702 = vshrl.u32 %v3444, 16
      %v3704 = vrot.slane %v3702, 3
      %v3705 = vshll.u32 %v3444, 16
      %v3707 = vrot.slane %v3705, 4
      %v3708 = vor.u32 %v3704, %v3707
      %v3710 = vshrl.u32 %v3445, 16
      %v3712 = vrot.slane %v3710, 3
      %v3713 = vshll.u32 %v3445, 16
      %v3715 = vrot.slane %v3713, 4
      %v3716 = vor.u32 %v3712, %v3715
      %v3717 = vsel %vm492, %v3708, %v3716
      %v3734 = vld [vmem:[%s1 + $0x180] sm:$0xf]
      %v3735 = vld [vmem:[%s1 + $0x184] sm:$0xf]
      %v3736 = vld [vmem:[%s1 + $0x188] sm:$0xf]
      %v3737 = vld [vmem:[%s1 + $0x18c] sm:$0xf]
      %v3738 = vld [vmem:[%s1 + $0x190] sm:$0xf]
      %v3739 = vld [vmem:[%s1 + $0x194] sm:$0xf]
      %v3740 = vld [vmem:[%s1 + $0x198] sm:$0xf]
      %v3741 = vld [vmem:[%s1 + $0x19c] sm:$0xf]
      %v3742 = vld [vmem:[%s1 + $0x1a0] sm:$0xf]
      %v3743 = vld [vmem:[%s1 + $0x1a4] sm:$0xf]
      %v3744 = vld [vmem:[%s1 + $0x1a8] sm:$0xf]
      %v3745 = vld [vmem:[%s1 + $0x1ac] sm:$0xf]
      %v3746 = vld [vmem:[%s1 + $0x1b0] sm:$0xf]
      %v3747 = vld [vmem:[%s1 + $0x1b4] sm:$0xf]
      %v3748 = vld [vmem:[%s1 + $0x1b8] sm:$0xf]
      %v3749 = vld [vmem:[%s1 + $0x1bc] sm:$0xf]
      %v3766 = vunpack.c.l.b16 %v3734
      %v3767 = vunpack.c.l.b16 %v3735
      %v3768 = vunpack.c.l.b16 %v3736
      %v3769 = vunpack.c.l.b16 %v3737
      %v3770 = vunpack.c.l.b16 %v3738
      %v3771 = vunpack.c.l.b16 %v3739
      %v3772 = vunpack.c.l.b16 %v3740
      %v3773 = vunpack.c.l.b16 %v3741
      %v3774 = vunpack.c.l.b16 %v3742
      %v3775 = vunpack.c.l.b16 %v3743
      %v3776 = vunpack.c.l.b16 %v3744
      %v3777 = vunpack.c.l.b16 %v3745
      %v3778 = vunpack.c.l.b16 %v3746
      %v3779 = vunpack.c.l.b16 %v3747
      %v3780 = vunpack.c.l.b16 %v3748
      %v3781 = vunpack.c.l.b16 %v3749
      %v3782 = vpack.c.b16 %v3767, %v3766
      %v3783 = vpack.c.b16 %v3769, %v3768
      %v3784 = vpack.c.b16 %v3771, %v3770
      %v3785 = vpack.c.b16 %v3773, %v3772
      %v3786 = vpack.c.b16 %v3775, %v3774
      %v3787 = vpack.c.b16 %v3777, %v3776
      %v3788 = vpack.c.b16 %v3779, %v3778
      %v3789 = vpack.c.b16 %v3781, %v3780
      %3798 = vmatprep.subr.bf16.mxu0 0
      %3799 = vmatpush1.bf16.msra.mxu0 %v3782
      %3800 = vmatprep.subr.bf16.mxu0 0
      %3801 = vmatpush1.bf16.msra.mxu0 %v3783
      %3802 = vmatprep.subr.bf16.mxu0 0
      %3803 = vmatpush1.bf16.msra.mxu0 %v3784
      %3804 = vmatprep.subr.bf16.mxu0 0
      %3805 = vmatpush1.bf16.msra.mxu0 %v3785
      %3806 = vmatprep.subr.bf16.mxu0 0
      %3807 = vmatpush1.bf16.msra.mxu0 %v3786
      %3808 = vmatprep.subr.bf16.mxu0 0
      %3809 = vmatpush1.bf16.msra.mxu0 %v3787
      %3810 = vmatprep.subr.bf16.mxu0 0
      %3811 = vmatpush1.bf16.msra.mxu0 %v3788
      %3812 = vmatprep.subr.bf16.mxu0 0
      %3813 = vmatpush1.bf16.msra.mxu0 %v3789
      %3814 = vmatprep.subr.bf16.mxu0 0
      %3815 = vmatpush1.bf16.msra.mxu0 0
      %3816 = vmatprep.subr.bf16.mxu0 0
      %3817 = vmatpush1.bf16.msra.mxu0 0
      %3818 = vmatprep.subr.bf16.mxu0 0
      %3819 = vmatpush1.bf16.msra.mxu0 0
      %3820 = vmatprep.subr.bf16.mxu0 0
      %3821 = vmatpush1.bf16.msra.mxu0 0
      %3822 = vmatprep.subr.bf16.mxu0 0
      %3823 = vmatpush1.bf16.msra.mxu0 0
      %3824 = vmatprep.subr.bf16.mxu0 0
      %3825 = vmatpush1.bf16.msra.mxu0 0
      %3826 = vmatprep.subr.bf16.mxu0 0
      %3827 = vmatpush1.bf16.msra.mxu0 0
      %3828 = vmatprep.subr.bf16.mxu0 0
      %3829 = vmatpush1.bf16.msra.mxu0 0
      %3830 = vmatprep.mubr.bf16.mxu0 0
      %3831 = vmatmul.mubr.bf16.gmra.mrb[0].mxu0 %v3462
      %v3832 = vpop.f32.mrb[0].mxu0
      %v3833 = vadd.f32 0.0, %v3832
      %v3834 = vpop.f32.mrb[0].mxu0
      %v3835 = vpop.f32.mrb[0].mxu0
      %v3836 = vadd.f32 0.0, %v3835
      %v3837 = vpop.f32.mrb[0].mxu0
      %3838 = vmatprep.mubr.bf16.mxu0 0
      %3839 = vmatmul.mubr.bf16.gmra.mrb[0].mxu0 %v3479
      %v3840 = vpop.f32.mrb[0].mxu0
      %v3841 = vadd.f32 0.0, %v3840
      %v3842 = vpop.f32.mrb[0].mxu0
      %v3843 = vpop.f32.mrb[0].mxu0
      %v3844 = vadd.f32 0.0, %v3843
      %v3845 = vpop.f32.mrb[0].mxu0
      %3846 = vmatprep.mubr.bf16.mxu0 0
      %3847 = vmatmul.mubr.bf16.gmra.mrb[0].mxu0 %v3496
      %v3848 = vpop.f32.mrb[0].mxu0
      %v3849 = vadd.f32 0.0, %v3848
      %v3850 = vpop.f32.mrb[0].mxu0
      %v3851 = vpop.f32.mrb[0].mxu0
      %v3852 = vadd.f32 0.0, %v3851
      %v3853 = vpop.f32.mrb[0].mxu0
      %3854 = vmatprep.mubr.bf16.mxu0 0
      %3855 = vmatmul.mubr.bf16.gmra.mrb[0].mxu0 %v3513
      %v3856 = vpop.f32.mrb[0].mxu0
      %v3857 = vadd.f32 0.0, %v3856
      %v3858 = vpop.f32.mrb[0].mxu0
      %v3859 = vpop.f32.mrb[0].mxu0
      %v3860 = vadd.f32 0.0, %v3859
      %v3861 = vpop.f32.mrb[0].mxu0
      %3862 = vmatprep.mubr.bf16.mxu0 0
      %3863 = vmatmul.mubr.bf16.gmra.mrb[0].mxu0 %v3530
      %v3864 = vpop.f32.mrb[0].mxu0
      %v3865 = vadd.f32 0.0, %v3864
      %v3866 = vpop.f32.mrb[0].mxu0
      %v3867 = vpop.f32.mrb[0].mxu0
      %v3868 = vadd.f32 0.0, %v3867
      %v3869 = vpop.f32.mrb[0].mxu0
      %3870 = vmatprep.mubr.bf16.mxu0 0
      %3871 = vmatmul.mubr.bf16.gmra.mrb[0].mxu0 %v3547
      %v3872 = vpop.f32.mrb[0].mxu0
      %v3873 = vadd.f32 0.0, %v3872
      %v3874 = vpop.f32.mrb[0].mxu0
      %v3875 = vpop.f32.mrb[0].mxu0
      %v3876 = vadd.f32 0.0, %v3875
      %v3877 = vpop.f32.mrb[0].mxu0
      %3878 = vmatprep.mubr.bf16.mxu0 0
      %3879 = vmatmul.mubr.bf16.gmra.mrb[0].mxu0 %v3564
      %v3880 = vpop.f32.mrb[0].mxu0
      %v3881 = vadd.f32 0.0, %v3880
      %v3882 = vpop.f32.mrb[0].mxu0
      %v3883 = vpop.f32.mrb[0].mxu0
      %v3884 = vadd.f32 0.0, %v3883
      %v3885 = vpop.f32.mrb[0].mxu0
      %3886 = vmatprep.mubr.bf16.mxu0 0
      %3887 = vmatmul.mubr.bf16.gmra.mrb[0].mxu0 %v3581
      %v3888 = vpop.f32.mrb[0].mxu0
      %v3889 = vadd.f32 0.0, %v3888
      %v3890 = vpop.f32.mrb[0].mxu0
      %v3891 = vpop.f32.mrb[0].mxu0
      %v3892 = vadd.f32 0.0, %v3891
      %v3893 = vpop.f32.mrb[0].mxu0
      %3894 = vmatprep.mubr.bf16.mxu0 0
      %3895 = vmatmul.mubr.bf16.gmra.mrb[0].mxu0 %v3598
      %v3896 = vpop.f32.mrb[0].mxu0
      %v3897 = vadd.f32 0.0, %v3896
      %v3898 = vpop.f32.mrb[0].mxu0
      %v3899 = vpop.f32.mrb[0].mxu0
      %v3900 = vadd.f32 0.0, %v3899
      %v3901 = vpop.f32.mrb[0].mxu0
      %3902 = vmatprep.mubr.bf16.mxu0 0
      %3903 = vmatmul.mubr.bf16.gmra.mrb[0].mxu0 %v3615
      %v3904 = vpop.f32.mrb[0].mxu0
      %v3905 = vadd.f32 0.0, %v3904
      %v3906 = vpop.f32.mrb[0].mxu0
      %v3907 = vpop.f32.mrb[0].mxu0
      %v3908 = vadd.f32 0.0, %v3907
      %v3909 = vpop.f32.mrb[0].mxu0
      %3910 = vmatprep.mubr.bf16.mxu0 0
      %3911 = vmatmul.mubr.bf16.gmra.mrb[0].mxu0 %v3632
      %v3912 = vpop.f32.mrb[0].mxu0
      %v3913 = vadd.f32 0.0, %v3912
      %v3914 = vpop.f32.mrb[0].mxu0
      %v3915 = vpop.f32.mrb[0].mxu0
      %v3916 = vadd.f32 0.0, %v3915
      %v3917 = vpop.f32.mrb[0].mxu0
      %3918 = vmatprep.mubr.bf16.mxu0 0
      %3919 = vmatmul.mubr.bf16.gmra.mrb[0].mxu0 %v3649
      %v3920 = vpop.f32.mrb[0].mxu0
      %v3921 = vadd.f32 0.0, %v3920
      %v3922 = vpop.f32.mrb[0].mxu0
      %v3923 = vpop.f32.mrb[0].mxu0
      %v3924 = vadd.f32 0.0, %v3923
      %v3925 = vpop.f32.mrb[0].mxu0
      %3926 = vmatprep.mubr.bf16.mxu0 0
      %3927 = vmatmul.mubr.bf16.gmra.mrb[0].mxu0 %v3666
      %v3928 = vpop.f32.mrb[0].mxu0
      %v3929 = vadd.f32 0.0, %v3928
      %v3930 = vpop.f32.mrb[0].mxu0
      %v3931 = vpop.f32.mrb[0].mxu0
      %v3932 = vadd.f32 0.0, %v3931
      %v3933 = vpop.f32.mrb[0].mxu0
      %3934 = vmatprep.mubr.bf16.mxu0 0
      %3935 = vmatmul.mubr.bf16.gmra.mrb[0].mxu0 %v3683
      %v3936 = vpop.f32.mrb[0].mxu0
      %v3937 = vadd.f32 0.0, %v3936
      %v3938 = vpop.f32.mrb[0].mxu0
      %v3939 = vpop.f32.mrb[0].mxu0
      %v3940 = vadd.f32 0.0, %v3939
      %v3941 = vpop.f32.mrb[0].mxu0
      %3942 = vmatprep.mubr.bf16.mxu0 0
      %3943 = vmatmul.mubr.bf16.gmra.mrb[0].mxu0 %v3700
      %v3944 = vpop.f32.mrb[0].mxu0
      %v3945 = vadd.f32 0.0, %v3944
      %v3946 = vpop.f32.mrb[0].mxu0
      %v3947 = vpop.f32.mrb[0].mxu0
      %v3948 = vadd.f32 0.0, %v3947
      %v3949 = vpop.f32.mrb[0].mxu0
      %3950 = vmatprep.mubr.bf16.mxu0 0
      %3951 = vmatmul.mubr.bf16.gmra.mrb[0].mxu0 %v3717
      %v3952 = vpop.f32.mrb[0].mxu0
      %v3953 = vadd.f32 0.0, %v3952
      %v3954 = vpop.f32.mrb[0].mxu0
      %v3955 = vpop.f32.mrb[0].mxu0
      %v3956 = vadd.f32 0.0, %v3955
      %v3957 = vpop.f32.mrb[0].mxu0
      %3958 = vdwg.mxu0
      %v3959 = vadd.f32 %v3381, %v3833
      %v3960 = vadd.f32 %v3382, %v3836
      %v3961 = vadd.f32 %v3383, %v3841
      %v3962 = vadd.f32 %v3384, %v3844
      %v3963 = vadd.f32 %v3385, %v3849
      %v3964 = vadd.f32 %v3386, %v3852
      %v3965 = vadd.f32 %v3387, %v3857
      %v3966 = vadd.f32 %v3388, %v3860
      %v3967 = vadd.f32 %v3389, %v3865
      %v3968 = vadd.f32 %v3390, %v3868
      %v3969 = vadd.f32 %v3391, %v3873
      %v3970 = vadd.f32 %v3392, %v3876
      %v3971 = vadd.f32 %v3393, %v3881
      %v3972 = vadd.f32 %v3394, %v3884
      %v3973 = vadd.f32 %v3395, %v3889
      %v3974 = vadd.f32 %v3396, %v3892
      %v3975 = vadd.f32 %v3397, %v3897
      %v3976 = vadd.f32 %v3398, %v3900
      %v3977 = vadd.f32 %v3399, %v3905
      %v3978 = vadd.f32 %v3400, %v3908
      %v3979 = vadd.f32 %v3401, %v3913
      %v3980 = vadd.f32 %v3402, %v3916
      %v3981 = vadd.f32 %v3403, %v3921
      %v3982 = vadd.f32 %v3404, %v3924
      %v3983 = vadd.f32 %v3405, %v3929
      %v3984 = vadd.f32 %v3406, %v3932
      %v3985 = vadd.f32 %v3407, %v3937
      %v3986 = vadd.f32 %v3408, %v3940
      %v3987 = vadd.f32 %v3409, %v3945
      %v3988 = vadd.f32 %v3410, %v3948
      %v3989 = vadd.f32 %v3411, %v3953
      %v3990 = vadd.f32 %v3412, %v3956
      %v3991 = vld [vmem:[%s3413] sm:$0xf0]
      %v3992 = vld [vmem:[%s3413 + $0x10] sm:$0xf0]
      %v3993 = vld [vmem:[%s3413 + $0x20] sm:$0xf0]
      %v3994 = vld [vmem:[%s3413 + $0x30] sm:$0xf0]
      %v3995 = vld [vmem:[%s3413 + $0x40] sm:$0xf0]
      %v3996 = vld [vmem:[%s3413 + $0x50] sm:$0xf0]
      %v3997 = vld [vmem:[%s3413 + $0x60] sm:$0xf0]
      %v3998 = vld [vmem:[%s3413 + $0x70] sm:$0xf0]
      %v3999 = vld [vmem:[%s3413 + $0x80] sm:$0xf0]
      %v4000 = vld [vmem:[%s3413 + $0x90] sm:$0xf0]
      %v4001 = vld [vmem:[%s3413 + $0xa0] sm:$0xf0]
      %v4002 = vld [vmem:[%s3413 + $0xb0] sm:$0xf0]
      %v4003 = vld [vmem:[%s3413 + $0xc0] sm:$0xf0]
      %v4004 = vld [vmem:[%s3413 + $0xd0] sm:$0xf0]
      %v4005 = vld [vmem:[%s3413 + $0xe0] sm:$0xf0]
      %v4006 = vld [vmem:[%s3413 + $0xf0] sm:$0xf0]
      %v4039 = vrot.slane %v3991, 4
      %v4040 = vrot.slane %v3415, 4
      %v4041 = vsel %vm845, %v4039, %v4040
      %v4042 = vrot.slane %v3992, 4
      %v4043 = vrot.slane %v3417, 4
      %v4044 = vsel %vm845, %v4042, %v4043
      %v4045 = vrot.slane %v3993, 4
      %v4046 = vrot.slane %v3419, 4
      %v4047 = vsel %vm845, %v4045, %v4046
      %v4048 = vrot.slane %v3994, 4
      %v4049 = vrot.slane %v3421, 4
      %v4050 = vsel %vm845, %v4048, %v4049
      %v4051 = vrot.slane %v3995, 4
      %v4052 = vrot.slane %v3423, 4
      %v4053 = vsel %vm845, %v4051, %v4052
      %v4054 = vrot.slane %v3996, 4
      %v4055 = vrot.slane %v3425, 4
      %v4056 = vsel %vm845, %v4054, %v4055
      %v4057 = vrot.slane %v3997, 4
      %v4058 = vrot.slane %v3427, 4
      %v4059 = vsel %vm845, %v4057, %v4058
      %v4060 = vrot.slane %v3998, 4
      %v4061 = vrot.slane %v3429, 4
      %v4062 = vsel %vm845, %v4060, %v4061
      %v4063 = vrot.slane %v3999, 4
      %v4064 = vrot.slane %v3431, 4
      %v4065 = vsel %vm845, %v4063, %v4064
      %v4066 = vrot.slane %v4000, 4
      %v4067 = vrot.slane %v3433, 4
      %v4068 = vsel %vm845, %v4066, %v4067
      %v4069 = vrot.slane %v4001, 4
      %v4070 = vrot.slane %v3435, 4
      %v4071 = vsel %vm845, %v4069, %v4070
      %v4072 = vrot.slane %v4002, 4
      %v4073 = vrot.slane %v3437, 4
      %v4074 = vsel %vm845, %v4072, %v4073
      %v4075 = vrot.slane %v4003, 4
      %v4076 = vrot.slane %v3439, 4
      %v4077 = vsel %vm845, %v4075, %v4076
      %v4078 = vrot.slane %v4004, 4
      %v4079 = vrot.slane %v3441, 4
      %v4080 = vsel %vm845, %v4078, %v4079
      %v4081 = vrot.slane %v4005, 4
      %v4082 = vrot.slane %v3443, 4
      %v4083 = vsel %vm845, %v4081, %v4082
      %v4084 = vrot.slane %v4006, 4
      %v4085 = vrot.slane %v3445, 4
      %v4086 = vsel %vm845, %v4084, %v4085
      %v4103 = vld [vmem:[%s1 + $0x1c0] sm:$0xf]
      %v4104 = vld [vmem:[%s1 + $0x1c4] sm:$0xf]
      %v4105 = vld [vmem:[%s1 + $0x1c8] sm:$0xf]
      %v4106 = vld [vmem:[%s1 + $0x1cc] sm:$0xf]
      %v4107 = vld [vmem:[%s1 + $0x1d0] sm:$0xf]
      %v4108 = vld [vmem:[%s1 + $0x1d4] sm:$0xf]
      %v4109 = vld [vmem:[%s1 + $0x1d8] sm:$0xf]
      %v4110 = vld [vmem:[%s1 + $0x1dc] sm:$0xf]
      %v4111 = vld [vmem:[%s1 + $0x1e0] sm:$0xf]
      %v4112 = vld [vmem:[%s1 + $0x1e4] sm:$0xf]
      %v4113 = vld [vmem:[%s1 + $0x1e8] sm:$0xf]
      %v4114 = vld [vmem:[%s1 + $0x1ec] sm:$0xf]
      %v4115 = vld [vmem:[%s1 + $0x1f0] sm:$0xf]
      %v4116 = vld [vmem:[%s1 + $0x1f4] sm:$0xf]
      %v4117 = vld [vmem:[%s1 + $0x1f8] sm:$0xf]
      %v4118 = vld [vmem:[%s1 + $0x1fc] sm:$0xf]
      %v4135 = vunpack.c.l.b16 %v4103
      %v4136 = vunpack.c.l.b16 %v4104
      %v4137 = vunpack.c.l.b16 %v4105
      %v4138 = vunpack.c.l.b16 %v4106
      %v4139 = vunpack.c.l.b16 %v4107
      %v4140 = vunpack.c.l.b16 %v4108
      %v4141 = vunpack.c.l.b16 %v4109
      %v4142 = vunpack.c.l.b16 %v4110
      %v4143 = vunpack.c.l.b16 %v4111
      %v4144 = vunpack.c.l.b16 %v4112
      %v4145 = vunpack.c.l.b16 %v4113
      %v4146 = vunpack.c.l.b16 %v4114
      %v4147 = vunpack.c.l.b16 %v4115
      %v4148 = vunpack.c.l.b16 %v4116
      %v4149 = vunpack.c.l.b16 %v4117
      %v4150 = vunpack.c.l.b16 %v4118
      %v4151 = vpack.c.b16 %v4136, %v4135
      %v4152 = vpack.c.b16 %v4138, %v4137
      %v4153 = vpack.c.b16 %v4140, %v4139
      %v4154 = vpack.c.b16 %v4142, %v4141
      %v4155 = vpack.c.b16 %v4144, %v4143
      %v4156 = vpack.c.b16 %v4146, %v4145
      %v4157 = vpack.c.b16 %v4148, %v4147
      %v4158 = vpack.c.b16 %v4150, %v4149
      %4167 = vmatprep.subr.bf16.mxu0 0
      %4168 = vmatpush1.bf16.msra.mxu0 %v4151
      %4169 = vmatprep.subr.bf16.mxu0 0
      %4170 = vmatpush1.bf16.msra.mxu0 %v4152
      %4171 = vmatprep.subr.bf16.mxu0 0
      %4172 = vmatpush1.bf16.msra.mxu0 %v4153
      %4173 = vmatprep.subr.bf16.mxu0 0
      %4174 = vmatpush1.bf16.msra.mxu0 %v4154
      %4175 = vmatprep.subr.bf16.mxu0 0
      %4176 = vmatpush1.bf16.msra.mxu0 %v4155
      %4177 = vmatprep.subr.bf16.mxu0 0
      %4178 = vmatpush1.bf16.msra.mxu0 %v4156
      %4179 = vmatprep.subr.bf16.mxu0 0
      %4180 = vmatpush1.bf16.msra.mxu0 %v4157
      %4181 = vmatprep.subr.bf16.mxu0 0
      %4182 = vmatpush1.bf16.msra.mxu0 %v4158
      %4183 = vmatprep.subr.bf16.mxu0 0
      %4184 = vmatpush1.bf16.msra.mxu0 0
      %4185 = vmatprep.subr.bf16.mxu0 0
      %4186 = vmatpush1.bf16.msra.mxu0 0
      %4187 = vmatprep.subr.bf16.mxu0 0
      %4188 = vmatpush1.bf16.msra.mxu0 0
      %4189 = vmatprep.subr.bf16.mxu0 0
      %4190 = vmatpush1.bf16.msra.mxu0 0
      %4191 = vmatprep.subr.bf16.mxu0 0
      %4192 = vmatpush1.bf16.msra.mxu0 0
      %4193 = vmatprep.subr.bf16.mxu0 0
      %4194 = vmatpush1.bf16.msra.mxu0 0
      %4195 = vmatprep.subr.bf16.mxu0 0
      %4196 = vmatpush1.bf16.msra.mxu0 0
      %4197 = vmatprep.subr.bf16.mxu0 0
      %4198 = vmatpush1.bf16.msra.mxu0 0
      %4199 = vmatprep.mubr.bf16.mxu0 0
      %4200 = vmatmul.mubr.bf16.gmra.mrb[0].mxu0 %v4041
      %v4201 = vpop.f32.mrb[0].mxu0
      %v4202 = vadd.f32 0.0, %v4201
      %v4203 = vpop.f32.mrb[0].mxu0
      %v4204 = vpop.f32.mrb[0].mxu0
      %v4205 = vadd.f32 0.0, %v4204
      %v4206 = vpop.f32.mrb[0].mxu0
      %4207 = vmatprep.mubr.bf16.mxu0 0
      %4208 = vmatmul.mubr.bf16.gmra.mrb[0].mxu0 %v4044
      %v4209 = vpop.f32.mrb[0].mxu0
      %v4210 = vadd.f32 0.0, %v4209
      %v4211 = vpop.f32.mrb[0].mxu0
      %v4212 = vpop.f32.mrb[0].mxu0
      %v4213 = vadd.f32 0.0, %v4212
      %v4214 = vpop.f32.mrb[0].mxu0
      %4215 = vmatprep.mubr.bf16.mxu0 0
      %4216 = vmatmul.mubr.bf16.gmra.mrb[0].mxu0 %v4047
      %v4217 = vpop.f32.mrb[0].mxu0
      %v4218 = vadd.f32 0.0, %v4217
      %v4219 = vpop.f32.mrb[0].mxu0
      %v4220 = vpop.f32.mrb[0].mxu0
      %v4221 = vadd.f32 0.0, %v4220
      %v4222 = vpop.f32.mrb[0].mxu0
      %4223 = vmatprep.mubr.bf16.mxu0 0
      %4224 = vmatmul.mubr.bf16.gmra.mrb[0].mxu0 %v4050
      %v4225 = vpop.f32.mrb[0].mxu0
      %v4226 = vadd.f32 0.0, %v4225
      %v4227 = vpop.f32.mrb[0].mxu0
      %v4228 = vpop.f32.mrb[0].mxu0
      %v4229 = vadd.f32 0.0, %v4228
      %v4230 = vpop.f32.mrb[0].mxu0
      %4231 = vmatprep.mubr.bf16.mxu0 0
      %4232 = vmatmul.mubr.bf16.gmra.mrb[0].mxu0 %v4053
      %v4233 = vpop.f32.mrb[0].mxu0
      %v4234 = vadd.f32 0.0, %v4233
      %v4235 = vpop.f32.mrb[0].mxu0
      %v4236 = vpop.f32.mrb[0].mxu0
      %v4237 = vadd.f32 0.0, %v4236
      %v4238 = vpop.f32.mrb[0].mxu0
      %4239 = vmatprep.mubr.bf16.mxu0 0
      %4240 = vmatmul.mubr.bf16.gmra.mrb[0].mxu0 %v4056
      %v4241 = vpop.f32.mrb[0].mxu0
      %v4242 = vadd.f32 0.0, %v4241
      %v4243 = vpop.f32.mrb[0].mxu0
      %v4244 = vpop.f32.mrb[0].mxu0
      %v4245 = vadd.f32 0.0, %v4244
      %v4246 = vpop.f32.mrb[0].mxu0
      %4247 = vmatprep.mubr.bf16.mxu0 0
      %4248 = vmatmul.mubr.bf16.gmra.mrb[0].mxu0 %v4059
      %v4249 = vpop.f32.mrb[0].mxu0
      %v4250 = vadd.f32 0.0, %v4249
      %v4251 = vpop.f32.mrb[0].mxu0
      %v4252 = vpop.f32.mrb[0].mxu0
      %v4253 = vadd.f32 0.0, %v4252
      %v4254 = vpop.f32.mrb[0].mxu0
      %4255 = vmatprep.mubr.bf16.mxu0 0
      %4256 = vmatmul.mubr.bf16.gmra.mrb[0].mxu0 %v4062
      %v4257 = vpop.f32.mrb[0].mxu0
      %v4258 = vadd.f32 0.0, %v4257
      %v4259 = vpop.f32.mrb[0].mxu0
      %v4260 = vpop.f32.mrb[0].mxu0
      %v4261 = vadd.f32 0.0, %v4260
      %v4262 = vpop.f32.mrb[0].mxu0
      %4263 = vmatprep.mubr.bf16.mxu0 0
      %4264 = vmatmul.mubr.bf16.gmra.mrb[0].mxu0 %v4065
      %v4265 = vpop.f32.mrb[0].mxu0
      %v4266 = vadd.f32 0.0, %v4265
      %v4267 = vpop.f32.mrb[0].mxu0
      %v4268 = vpop.f32.mrb[0].mxu0
      %v4269 = vadd.f32 0.0, %v4268
      %v4270 = vpop.f32.mrb[0].mxu0
      %4271 = vmatprep.mubr.bf16.mxu0 0
      %4272 = vmatmul.mubr.bf16.gmra.mrb[0].mxu0 %v4068
      %v4273 = vpop.f32.mrb[0].mxu0
      %v4274 = vadd.f32 0.0, %v4273
      %v4275 = vpop.f32.mrb[0].mxu0
      %v4276 = vpop.f32.mrb[0].mxu0
      %v4277 = vadd.f32 0.0, %v4276
      %v4278 = vpop.f32.mrb[0].mxu0
      %4279 = vmatprep.mubr.bf16.mxu0 0
      %4280 = vmatmul.mubr.bf16.gmra.mrb[0].mxu0 %v4071
      %v4281 = vpop.f32.mrb[0].mxu0
      %v4282 = vadd.f32 0.0, %v4281
      %v4283 = vpop.f32.mrb[0].mxu0
      %v4284 = vpop.f32.mrb[0].mxu0
      %v4285 = vadd.f32 0.0, %v4284
      %v4286 = vpop.f32.mrb[0].mxu0
      %4287 = vmatprep.mubr.bf16.mxu0 0
      %4288 = vmatmul.mubr.bf16.gmra.mrb[0].mxu0 %v4074
      %v4289 = vpop.f32.mrb[0].mxu0
      %v4290 = vadd.f32 0.0, %v4289
      %v4291 = vpop.f32.mrb[0].mxu0
      %v4292 = vpop.f32.mrb[0].mxu0
      %v4293 = vadd.f32 0.0, %v4292
      %v4294 = vpop.f32.mrb[0].mxu0
      %4295 = vmatprep.mubr.bf16.mxu0 0
      %4296 = vmatmul.mubr.bf16.gmra.mrb[0].mxu0 %v4077
      %v4297 = vpop.f32.mrb[0].mxu0
      %v4298 = vadd.f32 0.0, %v4297
      %v4299 = vpop.f32.mrb[0].mxu0
      %v4300 = vpop.f32.mrb[0].mxu0
      %v4301 = vadd.f32 0.0, %v4300
      %v4302 = vpop.f32.mrb[0].mxu0
      %4303 = vmatprep.mubr.bf16.mxu0 0
      %4304 = vmatmul.mubr.bf16.gmra.mrb[0].mxu0 %v4080
      %v4305 = vpop.f32.mrb[0].mxu0
      %v4306 = vadd.f32 0.0, %v4305
      %v4307 = vpop.f32.mrb[0].mxu0
      %v4308 = vpop.f32.mrb[0].mxu0
      %v4309 = vadd.f32 0.0, %v4308
      %v4310 = vpop.f32.mrb[0].mxu0
      %4311 = vmatprep.mubr.bf16.mxu0 0
      %4312 = vmatmul.mubr.bf16.gmra.mrb[0].mxu0 %v4083
      %v4313 = vpop.f32.mrb[0].mxu0
      %v4314 = vadd.f32 0.0, %v4313
      %v4315 = vpop.f32.mrb[0].mxu0
      %v4316 = vpop.f32.mrb[0].mxu0
      %v4317 = vadd.f32 0.0, %v4316
      %v4318 = vpop.f32.mrb[0].mxu0
      %4319 = vmatprep.mubr.bf16.mxu0 0
      %4320 = vmatmul.mubr.bf16.gmra.mrb[0].mxu0 %v4086
      %v4321 = vpop.f32.mrb[0].mxu0
      %v4322 = vadd.f32 0.0, %v4321
      %v4323 = vpop.f32.mrb[0].mxu0
      %v4324 = vpop.f32.mrb[0].mxu0
      %v4325 = vadd.f32 0.0, %v4324
      %v4326 = vpop.f32.mrb[0].mxu0
      %4327 = vdwg.mxu0
      %v4328 = vadd.f32 %v3959, %v4202
      %v4329 = vadd.f32 %v3960, %v4205
      %v4330 = vadd.f32 %v3961, %v4210
      %v4331 = vadd.f32 %v3962, %v4213
      %v4332 = vadd.f32 %v3963, %v4218
      %v4333 = vadd.f32 %v3964, %v4221
      %v4334 = vadd.f32 %v3965, %v4226
      %v4335 = vadd.f32 %v3966, %v4229
      %v4336 = vadd.f32 %v3967, %v4234
      %v4337 = vadd.f32 %v3968, %v4237
      %v4338 = vadd.f32 %v3969, %v4242
      %v4339 = vadd.f32 %v3970, %v4245
      %v4340 = vadd.f32 %v3971, %v4250
      %v4341 = vadd.f32 %v3972, %v4253
      %v4342 = vadd.f32 %v3973, %v4258
      %v4343 = vadd.f32 %v3974, %v4261
      %v4344 = vadd.f32 %v3975, %v4266
      %v4345 = vadd.f32 %v3976, %v4269
      %v4346 = vadd.f32 %v3977, %v4274
      %v4347 = vadd.f32 %v3978, %v4277
      %v4348 = vadd.f32 %v3979, %v4282
      %v4349 = vadd.f32 %v3980, %v4285
      %v4350 = vadd.f32 %v3981, %v4290
      %v4351 = vadd.f32 %v3982, %v4293
      %v4352 = vadd.f32 %v3983, %v4298
      %v4353 = vadd.f32 %v3984, %v4301
      %v4354 = vadd.f32 %v3985, %v4306
      %v4355 = vadd.f32 %v3986, %v4309
      %v4356 = vadd.f32 %v3987, %v4314
      %v4357 = vadd.f32 %v3988, %v4317
      %v4358 = vadd.f32 %v3989, %v4322
      %v4359 = vadd.f32 %v3990, %v4325
      %v4360 = vld [vmem:[%s3413 + $0x8] sm:$0x1f]
      %v4361 = vld [vmem:[%s3413 + $0x18] sm:$0x1f]
      %v4362 = vld [vmem:[%s3413 + $0x28] sm:$0x1f]
      %v4363 = vld [vmem:[%s3413 + $0x38] sm:$0x1f]
      %v4364 = vld [vmem:[%s3413 + $0x48] sm:$0x1f]
      %v4365 = vld [vmem:[%s3413 + $0x58] sm:$0x1f]
      %v4366 = vld [vmem:[%s3413 + $0x68] sm:$0x1f]
      %v4367 = vld [vmem:[%s3413 + $0x78] sm:$0x1f]
      %v4368 = vld [vmem:[%s3413 + $0x88] sm:$0x1f]
      %v4369 = vld [vmem:[%s3413 + $0x98] sm:$0x1f]
      %v4370 = vld [vmem:[%s3413 + $0xa8] sm:$0x1f]
      %v4371 = vld [vmem:[%s3413 + $0xb8] sm:$0x1f]
      %v4372 = vld [vmem:[%s3413 + $0xc8] sm:$0x1f]
      %v4373 = vld [vmem:[%s3413 + $0xd8] sm:$0x1f]
      %v4374 = vld [vmem:[%s3413 + $0xe8] sm:$0x1f]
      %v4375 = vld [vmem:[%s3413 + $0xf8] sm:$0x1f]
      %v4377 = vshrl.u32 %v3991, 16
      %v4379 = vrot.slane %v4377, 4
      %v4380 = vshll.u32 %v3991, 16
      %v4382 = vrot.slane %v4380, 5
      %v4383 = vor.u32 %v4379, %v4382
      %v4385 = vshrl.u32 %v4360, 16
      %v4387 = vrot.slane %v4385, 4
      %v4388 = vshll.u32 %v4360, 16
      %v4390 = vrot.slane %v4388, 5
      %v4391 = vor.u32 %v4387, %v4390
      %v4392 = vsel %vm1360, %v4383, %v4391
      %v4394 = vshrl.u32 %v3992, 16
      %v4396 = vrot.slane %v4394, 4
      %v4397 = vshll.u32 %v3992, 16
      %v4399 = vrot.slane %v4397, 5
      %v4400 = vor.u32 %v4396, %v4399
      %v4402 = vshrl.u32 %v4361, 16
      %v4404 = vrot.slane %v4402, 4
      %v4405 = vshll.u32 %v4361, 16
      %v4407 = vrot.slane %v4405, 5
      %v4408 = vor.u32 %v4404, %v4407
      %v4409 = vsel %vm1360, %v4400, %v4408
      %v4411 = vshrl.u32 %v3993, 16
      %v4413 = vrot.slane %v4411, 4
      %v4414 = vshll.u32 %v3993, 16
      %v4416 = vrot.slane %v4414, 5
      %v4417 = vor.u32 %v4413, %v4416
      %v4419 = vshrl.u32 %v4362, 16
      %v4421 = vrot.slane %v4419, 4
      %v4422 = vshll.u32 %v4362, 16
      %v4424 = vrot.slane %v4422, 5
      %v4425 = vor.u32 %v4421, %v4424
      %v4426 = vsel %vm1360, %v4417, %v4425
      %v4428 = vshrl.u32 %v3994, 16
      %v4430 = vrot.slane %v4428, 4
      %v4431 = vshll.u32 %v3994, 16
      %v4433 = vrot.slane %v4431, 5
      %v4434 = vor.u32 %v4430, %v4433
      %v4436 = vshrl.u32 %v4363, 16
      %v4438 = vrot.slane %v4436, 4
      %v4439 = vshll.u32 %v4363, 16
      %v4441 = vrot.slane %v4439, 5
      %v4442 = vor.u32 %v4438, %v4441
      %v4443 = vsel %vm1360, %v4434, %v4442
      %v4445 = vshrl.u32 %v3995, 16
      %v4447 = vrot.slane %v4445, 4
      %v4448 = vshll.u32 %v3995, 16
      %v4450 = vrot.slane %v4448, 5
      %v4451 = vor.u32 %v4447, %v4450
      %v4453 = vshrl.u32 %v4364, 16
      %v4455 = vrot.slane %v4453, 4
      %v4456 = vshll.u32 %v4364, 16
      %v4458 = vrot.slane %v4456, 5
      %v4459 = vor.u32 %v4455, %v4458
      %v4460 = vsel %vm1360, %v4451, %v4459
      %v4462 = vshrl.u32 %v3996, 16
      %v4464 = vrot.slane %v4462, 4
      %v4465 = vshll.u32 %v3996, 16
      %v4467 = vrot.slane %v4465, 5
      %v4468 = vor.u32 %v4464, %v4467
      %v4470 = vshrl.u32 %v4365, 16
      %v4472 = vrot.slane %v4470, 4
      %v4473 = vshll.u32 %v4365, 16
      %v4475 = vrot.slane %v4473, 5
      %v4476 = vor.u32 %v4472, %v4475
      %v4477 = vsel %vm1360, %v4468, %v4476
      %v4479 = vshrl.u32 %v3997, 16
      %v4481 = vrot.slane %v4479, 4
      %v4482 = vshll.u32 %v3997, 16
      %v4484 = vrot.slane %v4482, 5
      %v4485 = vor.u32 %v4481, %v4484
      %v4487 = vshrl.u32 %v4366, 16
      %v4489 = vrot.slane %v4487, 4
      %v4490 = vshll.u32 %v4366, 16
      %v4492 = vrot.slane %v4490, 5
      %v4493 = vor.u32 %v4489, %v4492
      %v4494 = vsel %vm1360, %v4485, %v4493
      %v4496 = vshrl.u32 %v3998, 16
      %v4498 = vrot.slane %v4496, 4
      %v4499 = vshll.u32 %v3998, 16
      %v4501 = vrot.slane %v4499, 5
      %v4502 = vor.u32 %v4498, %v4501
      %v4504 = vshrl.u32 %v4367, 16
      %v4506 = vrot.slane %v4504, 4
      %v4507 = vshll.u32 %v4367, 16
      %v4509 = vrot.slane %v4507, 5
      %v4510 = vor.u32 %v4506, %v4509
      %v4511 = vsel %vm1360, %v4502, %v4510
      %v4513 = vshrl.u32 %v3999, 16
      %v4515 = vrot.slane %v4513, 4
      %v4516 = vshll.u32 %v3999, 16
      %v4518 = vrot.slane %v4516, 5
      %v4519 = vor.u32 %v4515, %v4518
      %v4521 = vshrl.u32 %v4368, 16
      %v4523 = vrot.slane %v4521, 4
      %v4524 = vshll.u32 %v4368, 16
      %v4526 = vrot.slane %v4524, 5
      %v4527 = vor.u32 %v4523, %v4526
      %v4528 = vsel %vm1360, %v4519, %v4527
      %v4530 = vshrl.u32 %v4000, 16
      %v4532 = vrot.slane %v4530, 4
      %v4533 = vshll.u32 %v4000, 16
      %v4535 = vrot.slane %v4533, 5
      %v4536 = vor.u32 %v4532, %v4535
      %v4538 = vshrl.u32 %v4369, 16
      %v4540 = vrot.slane %v4538, 4
      %v4541 = vshll.u32 %v4369, 16
      %v4543 = vrot.slane %v4541, 5
      %v4544 = vor.u32 %v4540, %v4543
      %v4545 = vsel %vm1360, %v4536, %v4544
      %v4547 = vshrl.u32 %v4001, 16
      %v4549 = vrot.slane %v4547, 4
      %v4550 = vshll.u32 %v4001, 16
      %v4552 = vrot.slane %v4550, 5
      %v4553 = vor.u32 %v4549, %v4552
      %v4555 = vshrl.u32 %v4370, 16
      %v4557 = vrot.slane %v4555, 4
      %v4558 = vshll.u32 %v4370, 16
      %v4560 = vrot.slane %v4558, 5
      %v4561 = vor.u32 %v4557, %v4560
      %v4562 = vsel %vm1360, %v4553, %v4561
      %v4564 = vshrl.u32 %v4002, 16
      %v4566 = vrot.slane %v4564, 4
      %v4567 = vshll.u32 %v4002, 16
      %v4569 = vrot.slane %v4567, 5
      %v4570 = vor.u32 %v4566, %v4569
      %v4572 = vshrl.u32 %v4371, 16
      %v4574 = vrot.slane %v4572, 4
      %v4575 = vshll.u32 %v4371, 16
      %v4577 = vrot.slane %v4575, 5
      %v4578 = vor.u32 %v4574, %v4577
      %v4579 = vsel %vm1360, %v4570, %v4578
      %v4581 = vshrl.u32 %v4003, 16
      %v4583 = vrot.slane %v4581, 4
      %v4584 = vshll.u32 %v4003, 16
      %v4586 = vrot.slane %v4584, 5
      %v4587 = vor.u32 %v4583, %v4586
      %v4589 = vshrl.u32 %v4372, 16
      %v4591 = vrot.slane %v4589, 4
      %v4592 = vshll.u32 %v4372, 16
      %v4594 = vrot.slane %v4592, 5
      %v4595 = vor.u32 %v4591, %v4594
      %v4596 = vsel %vm1360, %v4587, %v4595
      %v4598 = vshrl.u32 %v4004, 16
      %v4600 = vrot.slane %v4598, 4
      %v4601 = vshll.u32 %v4004, 16
      %v4603 = vrot.slane %v4601, 5
      %v4604 = vor.u32 %v4600, %v4603
      %v4606 = vshrl.u32 %v4373, 16
      %v4608 = vrot.slane %v4606, 4
      %v4609 = vshll.u32 %v4373, 16
      %v4611 = vrot.slane %v4609, 5
      %v4612 = vor.u32 %v4608, %v4611
      %v4613 = vsel %vm1360, %v4604, %v4612
      %v4615 = vshrl.u32 %v4005, 16
      %v4617 = vrot.slane %v4615, 4
      %v4618 = vshll.u32 %v4005, 16
      %v4620 = vrot.slane %v4618, 5
      %v4621 = vor.u32 %v4617, %v4620
      %v4623 = vshrl.u32 %v4374, 16
      %v4625 = vrot.slane %v4623, 4
      %v4626 = vshll.u32 %v4374, 16
      %v4628 = vrot.slane %v4626, 5
      %v4629 = vor.u32 %v4625, %v4628
      %v4630 = vsel %vm1360, %v4621, %v4629
      %v4632 = vshrl.u32 %v4006, 16
      %v4634 = vrot.slane %v4632, 4
      %v4635 = vshll.u32 %v4006, 16
      %v4637 = vrot.slane %v4635, 5
      %v4638 = vor.u32 %v4634, %v4637
      %v4640 = vshrl.u32 %v4375, 16
      %v4642 = vrot.slane %v4640, 4
      %v4643 = vshll.u32 %v4375, 16
      %v4645 = vrot.slane %v4643, 5
      %v4646 = vor.u32 %v4642, %v4645
      %v4647 = vsel %vm1360, %v4638, %v4646
      %v4664 = vld [vmem:[%s1 + $0x200] sm:$0xf]
      %v4665 = vld [vmem:[%s1 + $0x204] sm:$0xf]
      %v4666 = vld [vmem:[%s1 + $0x208] sm:$0xf]
      %v4667 = vld [vmem:[%s1 + $0x20c] sm:$0xf]
      %v4668 = vld [vmem:[%s1 + $0x210] sm:$0xf]
      %v4669 = vld [vmem:[%s1 + $0x214] sm:$0xf]
      %v4670 = vld [vmem:[%s1 + $0x218] sm:$0xf]
      %v4671 = vld [vmem:[%s1 + $0x21c] sm:$0xf]
      %v4672 = vld [vmem:[%s1 + $0x220] sm:$0xf]
      %v4673 = vld [vmem:[%s1 + $0x224] sm:$0xf]
      %v4674 = vld [vmem:[%s1 + $0x228] sm:$0xf]
      %v4675 = vld [vmem:[%s1 + $0x22c] sm:$0xf]
      %v4676 = vld [vmem:[%s1 + $0x230] sm:$0xf]
      %v4677 = vld [vmem:[%s1 + $0x234] sm:$0xf]
      %v4678 = vld [vmem:[%s1 + $0x238] sm:$0xf]
      %v4679 = vld [vmem:[%s1 + $0x23c] sm:$0xf]
      %v4696 = vunpack.c.l.b16 %v4664
      %v4697 = vunpack.c.l.b16 %v4665
      %v4698 = vunpack.c.l.b16 %v4666
      %v4699 = vunpack.c.l.b16 %v4667
      %v4700 = vunpack.c.l.b16 %v4668
      %v4701 = vunpack.c.l.b16 %v4669
      %v4702 = vunpack.c.l.b16 %v4670
      %v4703 = vunpack.c.l.b16 %v4671
      %v4704 = vunpack.c.l.b16 %v4672
      %v4705 = vunpack.c.l.b16 %v4673
      %v4706 = vunpack.c.l.b16 %v4674
      %v4707 = vunpack.c.l.b16 %v4675
      %v4708 = vunpack.c.l.b16 %v4676
      %v4709 = vunpack.c.l.b16 %v4677
      %v4710 = vunpack.c.l.b16 %v4678
      %v4711 = vunpack.c.l.b16 %v4679
      %v4712 = vpack.c.b16 %v4697, %v4696
      %v4713 = vpack.c.b16 %v4699, %v4698
      %v4714 = vpack.c.b16 %v4701, %v4700
      %v4715 = vpack.c.b16 %v4703, %v4702
      %v4716 = vpack.c.b16 %v4705, %v4704
      %v4717 = vpack.c.b16 %v4707, %v4706
      %v4718 = vpack.c.b16 %v4709, %v4708
      %v4719 = vpack.c.b16 %v4711, %v4710
      %4728 = vmatprep.subr.bf16.mxu0 0
      %4729 = vmatpush1.bf16.msra.mxu0 %v4712
      %4730 = vmatprep.subr.bf16.mxu0 0
      %4731 = vmatpush1.bf16.msra.mxu0 %v4713
      %4732 = vmatprep.subr.bf16.mxu0 0
      %4733 = vmatpush1.bf16.msra.mxu0 %v4714
      %4734 = vmatprep.subr.bf16.mxu0 0
      %4735 = vmatpush1.bf16.msra.mxu0 %v4715
      %4736 = vmatprep.subr.bf16.mxu0 0
      %4737 = vmatpush1.bf16.msra.mxu0 %v4716
      %4738 = vmatprep.subr.bf16.mxu0 0
      %4739 = vmatpush1.bf16.msra.mxu0 %v4717
      %4740 = vmatprep.subr.bf16.mxu0 0
      %4741 = vmatpush1.bf16.msra.mxu0 %v4718
      %4742 = vmatprep.subr.bf16.mxu0 0
      %4743 = vmatpush1.bf16.msra.mxu0 %v4719
      %4744 = vmatprep.subr.bf16.mxu0 0
      %4745 = vmatpush1.bf16.msra.mxu0 0
      %4746 = vmatprep.subr.bf16.mxu0 0
      %4747 = vmatpush1.bf16.msra.mxu0 0
      %4748 = vmatprep.subr.bf16.mxu0 0
      %4749 = vmatpush1.bf16.msra.mxu0 0
      %4750 = vmatprep.subr.bf16.mxu0 0
      %4751 = vmatpush1.bf16.msra.mxu0 0
      %4752 = vmatprep.subr.bf16.mxu0 0
      %4753 = vmatpush1.bf16.msra.mxu0 0
      %4754 = vmatprep.subr.bf16.mxu0 0
      %4755 = vmatpush1.bf16.msra.mxu0 0
      %4756 = vmatprep.subr.bf16.mxu0 0
      %4757 = vmatpush1.bf16.msra.mxu0 0
      %4758 = vmatprep.subr.bf16.mxu0 0
      %4759 = vmatpush1.bf16.msra.mxu0 0
      %4760 = vmatprep.mubr.bf16.mxu0 0
      %4761 = vmatmul.mubr.bf16.gmra.mrb[0].mxu0 %v4392
      %v4762 = vpop.f32.mrb[0].mxu0
      %v4763 = vadd.f32 0.0, %v4762
      %v4764 = vpop.f32.mrb[0].mxu0
      %v4765 = vpop.f32.mrb[0].mxu0
      %v4766 = vadd.f32 0.0, %v4765
      %v4767 = vpop.f32.mrb[0].mxu0
      %4768 = vmatprep.mubr.bf16.mxu0 0
      %4769 = vmatmul.mubr.bf16.gmra.mrb[0].mxu0 %v4409
      %v4770 = vpop.f32.mrb[0].mxu0
      %v4771 = vadd.f32 0.0, %v4770
      %v4772 = vpop.f32.mrb[0].mxu0
      %v4773 = vpop.f32.mrb[0].mxu0
      %v4774 = vadd.f32 0.0, %v4773
      %v4775 = vpop.f32.mrb[0].mxu0
      %4776 = vmatprep.mubr.bf16.mxu0 0
      %4777 = vmatmul.mubr.bf16.gmra.mrb[0].mxu0 %v4426
      %v4778 = vpop.f32.mrb[0].mxu0
      %v4779 = vadd.f32 0.0, %v4778
      %v4780 = vpop.f32.mrb[0].mxu0
      %v4781 = vpop.f32.mrb[0].mxu0
      %v4782 = vadd.f32 0.0, %v4781
      %v4783 = vpop.f32.mrb[0].mxu0
      %4784 = vmatprep.mubr.bf16.mxu0 0
      %4785 = vmatmul.mubr.bf16.gmra.mrb[0].mxu0 %v4443
      %v4786 = vpop.f32.mrb[0].mxu0
      %v4787 = vadd.f32 0.0, %v4786
      %v4788 = vpop.f32.mrb[0].mxu0
      %v4789 = vpop.f32.mrb[0].mxu0
      %v4790 = vadd.f32 0.0, %v4789
      %v4791 = vpop.f32.mrb[0].mxu0
      %4792 = vmatprep.mubr.bf16.mxu0 0
      %4793 = vmatmul.mubr.bf16.gmra.mrb[0].mxu0 %v4460
      %v4794 = vpop.f32.mrb[0].mxu0
      %v4795 = vadd.f32 0.0, %v4794
      %v4796 = vpop.f32.mrb[0].mxu0
      %v4797 = vpop.f32.mrb[0].mxu0
      %v4798 = vadd.f32 0.0, %v4797
      %v4799 = vpop.f32.mrb[0].mxu0
      %4800 = vmatprep.mubr.bf16.mxu0 0
      %4801 = vmatmul.mubr.bf16.gmra.mrb[0].mxu0 %v4477
      %v4802 = vpop.f32.mrb[0].mxu0
      %v4803 = vadd.f32 0.0, %v4802
      %v4804 = vpop.f32.mrb[0].mxu0
      %v4805 = vpop.f32.mrb[0].mxu0
      %v4806 = vadd.f32 0.0, %v4805
      %v4807 = vpop.f32.mrb[0].mxu0
      %4808 = vmatprep.mubr.bf16.mxu0 0
      %4809 = vmatmul.mubr.bf16.gmra.mrb[0].mxu0 %v4494
      %v4810 = vpop.f32.mrb[0].mxu0
      %v4811 = vadd.f32 0.0, %v4810
      %v4812 = vpop.f32.mrb[0].mxu0
      %v4813 = vpop.f32.mrb[0].mxu0
      %v4814 = vadd.f32 0.0, %v4813
      %v4815 = vpop.f32.mrb[0].mxu0
      %4816 = vmatprep.mubr.bf16.mxu0 0
      %4817 = vmatmul.mubr.bf16.gmra.mrb[0].mxu0 %v4511
      %v4818 = vpop.f32.mrb[0].mxu0
      %v4819 = vadd.f32 0.0, %v4818
      %v4820 = vpop.f32.mrb[0].mxu0
      %v4821 = vpop.f32.mrb[0].mxu0
      %v4822 = vadd.f32 0.0, %v4821
      %v4823 = vpop.f32.mrb[0].mxu0
      %4824 = vmatprep.mubr.bf16.mxu0 0
      %4825 = vmatmul.mubr.bf16.gmra.mrb[0].mxu0 %v4528
      %v4826 = vpop.f32.mrb[0].mxu0
      %v4827 = vadd.f32 0.0, %v4826
      %v4828 = vpop.f32.mrb[0].mxu0
      %v4829 = vpop.f32.mrb[0].mxu0
      %v4830 = vadd.f32 0.0, %v4829
      %v4831 = vpop.f32.mrb[0].mxu0
      %4832 = vmatprep.mubr.bf16.mxu0 0
      %4833 = vmatmul.mubr.bf16.gmra.mrb[0].mxu0 %v4545
      %v4834 = vpop.f32.mrb[0].mxu0
      %v4835 = vadd.f32 0.0, %v4834
      %v4836 = vpop.f32.mrb[0].mxu0
      %v4837 = vpop.f32.mrb[0].mxu0
      %v4838 = vadd.f32 0.0, %v4837
      %v4839 = vpop.f32.mrb[0].mxu0
      %4840 = vmatprep.mubr.bf16.mxu0 0
      %4841 = vmatmul.mubr.bf16.gmra.mrb[0].mxu0 %v4562
      %v4842 = vpop.f32.mrb[0].mxu0
      %v4843 = vadd.f32 0.0, %v4842
      %v4844 = vpop.f32.mrb[0].mxu0
      %v4845 = vpop.f32.mrb[0].mxu0
      %v4846 = vadd.f32 0.0, %v4845
      %v4847 = vpop.f32.mrb[0].mxu0
      %4848 = vmatprep.mubr.bf16.mxu0 0
      %4849 = vmatmul.mubr.bf16.gmra.mrb[0].mxu0 %v4579
      %v4850 = vpop.f32.mrb[0].mxu0
      %v4851 = vadd.f32 0.0, %v4850
      %v4852 = vpop.f32.mrb[0].mxu0
      %v4853 = vpop.f32.mrb[0].mxu0
      %v4854 = vadd.f32 0.0, %v4853
      %v4855 = vpop.f32.mrb[0].mxu0
      %4856 = vmatprep.mubr.bf16.mxu0 0
      %4857 = vmatmul.mubr.bf16.gmra.mrb[0].mxu0 %v4596
      %v4858 = vpop.f32.mrb[0].mxu0
      %v4859 = vadd.f32 0.0, %v4858
      %v4860 = vpop.f32.mrb[0].mxu0
      %v4861 = vpop.f32.mrb[0].mxu0
      %v4862 = vadd.f32 0.0, %v4861
      %v4863 = vpop.f32.mrb[0].mxu0
      %4864 = vmatprep.mubr.bf16.mxu0 0
      %4865 = vmatmul.mubr.bf16.gmra.mrb[0].mxu0 %v4613
      %v4866 = vpop.f32.mrb[0].mxu0
      %v4867 = vadd.f32 0.0, %v4866
      %v4868 = vpop.f32.mrb[0].mxu0
      %v4869 = vpop.f32.mrb[0].mxu0
      %v4870 = vadd.f32 0.0, %v4869
      %v4871 = vpop.f32.mrb[0].mxu0
      %4872 = vmatprep.mubr.bf16.mxu0 0
      %4873 = vmatmul.mubr.bf16.gmra.mrb[0].mxu0 %v4630
      %v4874 = vpop.f32.mrb[0].mxu0
      %v4875 = vadd.f32 0.0, %v4874
      %v4876 = vpop.f32.mrb[0].mxu0
      %v4877 = vpop.f32.mrb[0].mxu0
      %v4878 = vadd.f32 0.0, %v4877
      %v4879 = vpop.f32.mrb[0].mxu0
      %4880 = vmatprep.mubr.bf16.mxu0 0
      %4881 = vmatmul.mubr.bf16.gmra.mrb[0].mxu0 %v4647
      %v4882 = vpop.f32.mrb[0].mxu0
      %v4883 = vadd.f32 0.0, %v4882
      %v4884 = vpop.f32.mrb[0].mxu0
      %v4885 = vpop.f32.mrb[0].mxu0
      %v4886 = vadd.f32 0.0, %v4885
      %v4887 = vpop.f32.mrb[0].mxu0
      %4888 = vdwg.mxu0
      %v4889 = vadd.f32 %v4328, %v4763
      %v4890 = vadd.f32 %v4329, %v4766
      %v4891 = vadd.f32 %v4330, %v4771
      %v4892 = vadd.f32 %v4331, %v4774
      %v4893 = vadd.f32 %v4332, %v4779
      %v4894 = vadd.f32 %v4333, %v4782
      %v4895 = vadd.f32 %v4334, %v4787
      %v4896 = vadd.f32 %v4335, %v4790
      %v4897 = vadd.f32 %v4336, %v4795
      %v4898 = vadd.f32 %v4337, %v4798
      %v4899 = vadd.f32 %v4338, %v4803
      %v4900 = vadd.f32 %v4339, %v4806
      %v4901 = vadd.f32 %v4340, %v4811
      %v4902 = vadd.f32 %v4341, %v4814
      %v4903 = vadd.f32 %v4342, %v4819
      %v4904 = vadd.f32 %v4343, %v4822
      %v4905 = vadd.f32 %v4344, %v4827
      %v4906 = vadd.f32 %v4345, %v4830
      %v4907 = vadd.f32 %v4346, %v4835
      %v4908 = vadd.f32 %v4347, %v4838
      %v4909 = vadd.f32 %v4348, %v4843
      %v4910 = vadd.f32 %v4349, %v4846
      %v4911 = vadd.f32 %v4350, %v4851
      %v4912 = vadd.f32 %v4351, %v4854
      %v4913 = vadd.f32 %v4352, %v4859
      %v4914 = vadd.f32 %v4353, %v4862
      %v4915 = vadd.f32 %v4354, %v4867
      %v4916 = vadd.f32 %v4355, %v4870
      %v4917 = vadd.f32 %v4356, %v4875
      %v4918 = vadd.f32 %v4357, %v4878
      %v4919 = vadd.f32 %v4358, %v4883
      %v4920 = vadd.f32 %v4359, %v4886
      %v4921 = vld [vmem:[%s3] sm:$0x1]
      %v4923 = vlaneseq
      %v4924 = vshrl.u32 %v4923, 7
      %v4925 = vsub.s32 0, %v4924
      %v4926 = vrot.slane %v4921, %v4925
      %v4928 = vadd.f32 %v4889, %v4926
      %v4929 = vadd.f32 %v4890, %v4926
      %v4930 = vadd.f32 %v4891, %v4926
      %v4931 = vadd.f32 %v4892, %v4926
      %v4932 = vadd.f32 %v4893, %v4926
      %v4933 = vadd.f32 %v4894, %v4926
      %v4934 = vadd.f32 %v4895, %v4926
      %v4935 = vadd.f32 %v4896, %v4926
      %v4936 = vadd.f32 %v4897, %v4926
      %v4937 = vadd.f32 %v4898, %v4926
      %v4938 = vadd.f32 %v4899, %v4926
      %v4939 = vadd.f32 %v4900, %v4926
      %v4940 = vadd.f32 %v4901, %v4926
      %v4941 = vadd.f32 %v4902, %v4926
      %v4942 = vadd.f32 %v4903, %v4926
      %v4943 = vadd.f32 %v4904, %v4926
      %v4944 = vadd.f32 %v4905, %v4926
      %v4945 = vadd.f32 %v4906, %v4926
      %v4946 = vadd.f32 %v4907, %v4926
      %v4947 = vadd.f32 %v4908, %v4926
      %v4948 = vadd.f32 %v4909, %v4926
      %v4949 = vadd.f32 %v4910, %v4926
      %v4950 = vadd.f32 %v4911, %v4926
      %v4951 = vadd.f32 %v4912, %v4926
      %v4952 = vadd.f32 %v4913, %v4926
      %v4953 = vadd.f32 %v4914, %v4926
      %v4954 = vadd.f32 %v4915, %v4926
      %v4955 = vadd.f32 %v4916, %v4926
      %v4956 = vadd.f32 %v4917, %v4926
      %v4957 = vadd.f32 %v4918, %v4926
      %v4958 = vadd.f32 %v4919, %v4926
      %v4959 = vadd.f32 %v4920, %v4926
      %v4960 = vmax.f32 %v4928, 0.0
      %v4961 = vmax.f32 %v4929, 0.0
      %v4962 = vmax.f32 %v4930, 0.0
      %v4963 = vmax.f32 %v4931, 0.0
      %v4964 = vmax.f32 %v4932, 0.0
      %v4965 = vmax.f32 %v4933, 0.0
      %v4966 = vmax.f32 %v4934, 0.0
      %v4967 = vmax.f32 %v4935, 0.0
      %v4968 = vmax.f32 %v4936, 0.0
      %v4969 = vmax.f32 %v4937, 0.0
      %v4970 = vmax.f32 %v4938, 0.0
      %v4971 = vmax.f32 %v4939, 0.0
      %v4972 = vmax.f32 %v4940, 0.0
      %v4973 = vmax.f32 %v4941, 0.0
      %v4974 = vmax.f32 %v4942, 0.0
      %v4975 = vmax.f32 %v4943, 0.0
      %v4976 = vmax.f32 %v4944, 0.0
      %v4977 = vmax.f32 %v4945, 0.0
      %v4978 = vmax.f32 %v4946, 0.0
      %v4979 = vmax.f32 %v4947, 0.0
      %v4980 = vmax.f32 %v4948, 0.0
      %v4981 = vmax.f32 %v4949, 0.0
      %v4982 = vmax.f32 %v4950, 0.0
      %v4983 = vmax.f32 %v4951, 0.0
      %v4984 = vmax.f32 %v4952, 0.0
      %v4985 = vmax.f32 %v4953, 0.0
      %v4986 = vmax.f32 %v4954, 0.0
      %v4987 = vmax.f32 %v4955, 0.0
      %v4988 = vmax.f32 %v4956, 0.0
      %v4989 = vmax.f32 %v4957, 0.0
      %v4990 = vmax.f32 %v4958, 0.0
      %v4991 = vmax.f32 %v4959, 0.0
      %v4992 = vpack.c.bf16 %v4961, %v4960
      %v4993 = vpack.c.bf16 %v4963, %v4962
      %v4994 = vpack.c.bf16 %v4965, %v4964
      %v4995 = vpack.c.bf16 %v4967, %v4966
      %v4996 = vpack.c.bf16 %v4969, %v4968
      %v4997 = vpack.c.bf16 %v4971, %v4970
      %v4998 = vpack.c.bf16 %v4973, %v4972
      %v4999 = vpack.c.bf16 %v4975, %v4974
      %v5000 = vpack.c.bf16 %v4977, %v4976
      %v5001 = vpack.c.bf16 %v4979, %v4978
      %v5002 = vpack.c.bf16 %v4981, %v4980
      %v5003 = vpack.c.bf16 %v4983, %v4982
      %v5004 = vpack.c.bf16 %v4985, %v4984
      %v5005 = vpack.c.bf16 %v4987, %v4986
      %v5006 = vpack.c.bf16 %v4989, %v4988
      %v5007 = vpack.c.bf16 %v4991, %v4990
      %v5024 = vrot.slane %v4992, 4
      %v5025 = vrot.slane %v4993, 4
      %v5026 = vrot.slane %v4994, 4
      %v5027 = vrot.slane %v4995, 4
      %v5028 = vrot.slane %v4996, 4
      %v5029 = vrot.slane %v4997, 4
      %v5030 = vrot.slane %v4998, 4
      %v5031 = vrot.slane %v4999, 4
      %v5032 = vrot.slane %v5000, 4
      %v5033 = vrot.slane %v5001, 4
      %v5034 = vrot.slane %v5002, 4
      %v5035 = vrot.slane %v5003, 4
      %v5036 = vrot.slane %v5004, 4
      %v5037 = vrot.slane %v5005, 4
      %v5038 = vrot.slane %v5006, 4
      %v5039 = vrot.slane %v5007, 4
      %5056 = vst [vmem:[%s427] sm:$0xf0] %v5024
      %5057 = vst [vmem:[%s427 + $0x8] sm:$0xf] %v5024
      %5058 = vst [vmem:[%s427 + $0x10] sm:$0xf0] %v5025
      %5059 = vst [vmem:[%s427 + $0x18] sm:$0xf] %v5025
      %5060 = vst [vmem:[%s427 + $0x20] sm:$0xf0] %v5026
      %5061 = vst [vmem:[%s427 + $0x28] sm:$0xf] %v5026
      %5062 = vst [vmem:[%s427 + $0x30] sm:$0xf0] %v5027
      %5063 = vst [vmem:[%s427 + $0x38] sm:$0xf] %v5027
      %5064 = vst [vmem:[%s427 + $0x40] sm:$0xf0] %v5028
      %5065 = vst [vmem:[%s427 + $0x48] sm:$0xf] %v5028
      %5066 = vst [vmem:[%s427 + $0x50] sm:$0xf0] %v5029
      %5067 = vst [vmem:[%s427 + $0x58] sm:$0xf] %v5029
      %5068 = vst [vmem:[%s427 + $0x60] sm:$0xf0] %v5030
      %5069 = vst [vmem:[%s427 + $0x68] sm:$0xf] %v5030
      %5070 = vst [vmem:[%s427 + $0x70] sm:$0xf0] %v5031
      %5071 = vst [vmem:[%s427 + $0x78] sm:$0xf] %v5031
      %5072 = vst [vmem:[%s427 + $0x80] sm:$0xf0] %v5032
      %5073 = vst [vmem:[%s427 + $0x88] sm:$0xf] %v5032
      %5074 = vst [vmem:[%s427 + $0x90] sm:$0xf0] %v5033
      %5075 = vst [vmem:[%s427 + $0x98] sm:$0xf] %v5033
      %5076 = vst [vmem:[%s427 + $0xa0] sm:$0xf0] %v5034
      %5077 = vst [vmem:[%s427 + $0xa8] sm:$0xf] %v5034
      %5078 = vst [vmem:[%s427 + $0xb0] sm:$0xf0] %v5035
      %5079 = vst [vmem:[%s427 + $0xb8] sm:$0xf] %v5035
      %5080 = vst [vmem:[%s427 + $0xc0] sm:$0xf0] %v5036
      %5081 = vst [vmem:[%s427 + $0xc8] sm:$0xf] %v5036
      %5082 = vst [vmem:[%s427 + $0xd0] sm:$0xf0] %v5037
      %5083 = vst [vmem:[%s427 + $0xd8] sm:$0xf] %v5037
      %5084 = vst [vmem:[%s427 + $0xe0] sm:$0xf0] %v5038
      %5085 = vst [vmem:[%s427 + $0xe8] sm:$0xf] %v5038
      %5086 = vst [vmem:[%s427 + $0xf0] sm:$0xf0] %v5039
      %5087 = vst [vmem:[%s427 + $0xf8] sm:$0xf] %v5039
      %v5088 = vld [vmem:[#allocation2] sm:$0xf8]
      %v5089 = vld [vmem:[#allocation2 + $0x8] sm:$0xf]
      %v5090 = vld [vmem:[#allocation2 + $0x10] sm:$0xf8]
      %v5091 = vld [vmem:[#allocation2 + $0x18] sm:$0xf]
      %v5092 = vld [vmem:[#allocation2 + $0x20] sm:$0xf8]
      %v5093 = vld [vmem:[#allocation2 + $0x28] sm:$0xf]
      %v5094 = vld [vmem:[#allocation2 + $0x30] sm:$0xf8]
      %v5095 = vld [vmem:[#allocation2 + $0x38] sm:$0xf]
      %v5096 = vld [vmem:[#allocation2 + $0x40] sm:$0xf8]
      %v5097 = vld [vmem:[#allocation2 + $0x48] sm:$0xf]
      %v5098 = vld [vmem:[#allocation2 + $0x50] sm:$0xf8]
      %v5099 = vld [vmem:[#allocation2 + $0x58] sm:$0xf]
      %v5100 = vld [vmem:[#allocation2 + $0x60] sm:$0xf8]
      %v5101 = vld [vmem:[#allocation2 + $0x68] sm:$0xf]
      %v5102 = vld [vmem:[#allocation2 + $0x70] sm:$0xf8]
      %v5103 = vld [vmem:[#allocation2 + $0x78] sm:$0xf]
      %v5104 = vld [vmem:[#allocation2 + $0x80] sm:$0xf8]
      %v5105 = vld [vmem:[#allocation2 + $0x88] sm:$0xf]
      %v5106 = vld [vmem:[#allocation2 + $0x90] sm:$0xf8]
      %v5107 = vld [vmem:[#allocation2 + $0x98] sm:$0xf]
      %v5108 = vld [vmem:[#allocation2 + $0xa0] sm:$0xf8]
      %v5109 = vld [vmem:[#allocation2 + $0xa8] sm:$0xf]
      %v5110 = vld [vmem:[#allocation2 + $0xb0] sm:$0xf8]
      %v5111 = vld [vmem:[#allocation2 + $0xb8] sm:$0xf]
      %v5112 = vld [vmem:[#allocation2 + $0xc0] sm:$0xf8]
      %v5113 = vld [vmem:[#allocation2 + $0xc8] sm:$0xf]
      %v5114 = vld [vmem:[#allocation2 + $0xd0] sm:$0xf8]
      %v5115 = vld [vmem:[#allocation2 + $0xd8] sm:$0xf]
      %v5116 = vld [vmem:[#allocation2 + $0xe0] sm:$0xf8]
      %v5117 = vld [vmem:[#allocation2 + $0xe8] sm:$0xf]
      %v5118 = vld [vmem:[#allocation2 + $0xf0] sm:$0xf8]
      %v5119 = vld [vmem:[#allocation2 + $0xf8] sm:$0xf]
      %v5121 = vshrl.u32 %v5088, 16
      %v5123 = vrot.slane %v5121, 3
      %v5124 = vshll.u32 %v5088, 16
      %v5126 = vrot.slane %v5124, 4
      %v5127 = vor.u32 %v5123, %v5126
      %v5129 = vshrl.u32 %v5089, 16
      %v5131 = vrot.slane %v5129, 3
      %v5132 = vshll.u32 %v5089, 16
      %v5134 = vrot.slane %v5132, 4
      %v5135 = vor.u32 %v5131, %v5134
      %v5136 = vsel %vm492, %v5127, %v5135
      %v5138 = vshrl.u32 %v5090, 16
      %v5140 = vrot.slane %v5138, 3
      %v5141 = vshll.u32 %v5090, 16
      %v5143 = vrot.slane %v5141, 4
      %v5144 = vor.u32 %v5140, %v5143
      %v5146 = vshrl.u32 %v5091, 16
      %v5148 = vrot.slane %v5146, 3
      %v5149 = vshll.u32 %v5091, 16
      %v5151 = vrot.slane %v5149, 4
      %v5152 = vor.u32 %v5148, %v5151
      %v5153 = vsel %vm492, %v5144, %v5152
      %v5155 = vshrl.u32 %v5092, 16
      %v5157 = vrot.slane %v5155, 3
      %v5158 = vshll.u32 %v5092, 16
      %v5160 = vrot.slane %v5158, 4
      %v5161 = vor.u32 %v5157, %v5160
      %v5163 = vshrl.u32 %v5093, 16
      %v5165 = vrot.slane %v5163, 3
      %v5166 = vshll.u32 %v5093, 16
      %v5168 = vrot.slane %v5166, 4
      %v5169 = vor.u32 %v5165, %v5168
      %v5170 = vsel %vm492, %v5161, %v5169
      %v5172 = vshrl.u32 %v5094, 16
      %v5174 = vrot.slane %v5172, 3
      %v5175 = vshll.u32 %v5094, 16
      %v5177 = vrot.slane %v5175, 4
      %v5178 = vor.u32 %v5174, %v5177
      %v5180 = vshrl.u32 %v5095, 16
      %v5182 = vrot.slane %v5180, 3
      %v5183 = vshll.u32 %v5095, 16
      %v5185 = vrot.slane %v5183, 4
      %v5186 = vor.u32 %v5182, %v5185
      %v5187 = vsel %vm492, %v5178, %v5186
      %v5189 = vshrl.u32 %v5096, 16
      %v5191 = vrot.slane %v5189, 3
      %v5192 = vshll.u32 %v5096, 16
      %v5194 = vrot.slane %v5192, 4
      %v5195 = vor.u32 %v5191, %v5194
      %v5197 = vshrl.u32 %v5097, 16
      %v5199 = vrot.slane %v5197, 3
      %v5200 = vshll.u32 %v5097, 16
      %v5202 = vrot.slane %v5200, 4
      %v5203 = vor.u32 %v5199, %v5202
      %v5204 = vsel %vm492, %v5195, %v5203
      %v5206 = vshrl.u32 %v5098, 16
      %v5208 = vrot.slane %v5206, 3
      %v5209 = vshll.u32 %v5098, 16
      %v5211 = vrot.slane %v5209, 4
      %v5212 = vor.u32 %v5208, %v5211
      %v5214 = vshrl.u32 %v5099, 16
      %v5216 = vrot.slane %v5214, 3
      %v5217 = vshll.u32 %v5099, 16
      %v5219 = vrot.slane %v5217, 4
      %v5220 = vor.u32 %v5216, %v5219
      %v5221 = vsel %vm492, %v5212, %v5220
      %v5223 = vshrl.u32 %v5100, 16
      %v5225 = vrot.slane %v5223, 3
      %v5226 = vshll.u32 %v5100, 16
      %v5228 = vrot.slane %v5226, 4
      %v5229 = vor.u32 %v5225, %v5228
      %v5231 = vshrl.u32 %v5101, 16
      %v5233 = vrot.slane %v5231, 3
      %v5234 = vshll.u32 %v5101, 16
      %v5236 = vrot.slane %v5234, 4
      %v5237 = vor.u32 %v5233, %v5236
      %v5238 = vsel %vm492, %v5229, %v5237
      %v5240 = vshrl.u32 %v5102, 16
      %v5242 = vrot.slane %v5240, 3
      %v5243 = vshll.u32 %v5102, 16
      %v5245 = vrot.slane %v5243, 4
      %v5246 = vor.u32 %v5242, %v5245
      %v5248 = vshrl.u32 %v5103, 16
      %v5250 = vrot.slane %v5248, 3
      %v5251 = vshll.u32 %v5103, 16
      %v5253 = vrot.slane %v5251, 4
      %v5254 = vor.u32 %v5250, %v5253
      %v5255 = vsel %vm492, %v5246, %v5254
      %v5257 = vshrl.u32 %v5104, 16
      %v5259 = vrot.slane %v5257, 3
      %v5260 = vshll.u32 %v5104, 16
      %v5262 = vrot.slane %v5260, 4
      %v5263 = vor.u32 %v5259, %v5262
      %v5265 = vshrl.u32 %v5105, 16
      %v5267 = vrot.slane %v5265, 3
      %v5268 = vshll.u32 %v5105, 16
      %v5270 = vrot.slane %v5268, 4
      %v5271 = vor.u32 %v5267, %v5270
      %v5272 = vsel %vm492, %v5263, %v5271
      %v5274 = vshrl.u32 %v5106, 16
      %v5276 = vrot.slane %v5274, 3
      %v5277 = vshll.u32 %v5106, 16
      %v5279 = vrot.slane %v5277, 4
      %v5280 = vor.u32 %v5276, %v5279
      %v5282 = vshrl.u32 %v5107, 16
      %v5284 = vrot.slane %v5282, 3
      %v5285 = vshll.u32 %v5107, 16
      %v5287 = vrot.slane %v5285, 4
      %v5288 = vor.u32 %v5284, %v5287
      %v5289 = vsel %vm492, %v5280, %v5288
      %v5291 = vshrl.u32 %v5108, 16
      %v5293 = vrot.slane %v5291, 3
      %v5294 = vshll.u32 %v5108, 16
      %v5296 = vrot.slane %v5294, 4
      %v5297 = vor.u32 %v5293, %v5296
      %v5299 = vshrl.u32 %v5109, 16
      %v5301 = vrot.slane %v5299, 3
      %v5302 = vshll.u32 %v5109, 16
      %v5304 = vrot.slane %v5302, 4
      %v5305 = vor.u32 %v5301, %v5304
      %v5306 = vsel %vm492, %v5297, %v5305
      %v5308 = vshrl.u32 %v5110, 16
      %v5310 = vrot.slane %v5308, 3
      %v5311 = vshll.u32 %v5110, 16
      %v5313 = vrot.slane %v5311, 4
      %v5314 = vor.u32 %v5310, %v5313
      %v5316 = vshrl.u32 %v5111, 16
      %v5318 = vrot.slane %v5316, 3
      %v5319 = vshll.u32 %v5111, 16
      %v5321 = vrot.slane %v5319, 4
      %v5322 = vor.u32 %v5318, %v5321
      %v5323 = vsel %vm492, %v5314, %v5322
      %v5325 = vshrl.u32 %v5112, 16
      %v5327 = vrot.slane %v5325, 3
      %v5328 = vshll.u32 %v5112, 16
      %v5330 = vrot.slane %v5328, 4
      %v5331 = vor.u32 %v5327, %v5330
      %v5333 = vshrl.u32 %v5113, 16
      %v5335 = vrot.slane %v5333, 3
      %v5336 = vshll.u32 %v5113, 16
      %v5338 = vrot.slane %v5336, 4
      %v5339 = vor.u32 %v5335, %v5338
      %v5340 = vsel %vm492, %v5331, %v5339
      %v5342 = vshrl.u32 %v5114, 16
      %v5344 = vrot.slane %v5342, 3
      %v5345 = vshll.u32 %v5114, 16
      %v5347 = vrot.slane %v5345, 4
      %v5348 = vor.u32 %v5344, %v5347
      %v5350 = vshrl.u32 %v5115, 16
      %v5352 = vrot.slane %v5350, 3
      %v5353 = vshll.u32 %v5115, 16
      %v5355 = vrot.slane %v5353, 4
      %v5356 = vor.u32 %v5352, %v5355
      %v5357 = vsel %vm492, %v5348, %v5356
      %v5359 = vshrl.u32 %v5116, 16
      %v5361 = vrot.slane %v5359, 3
      %v5362 = vshll.u32 %v5116, 16
      %v5364 = vrot.slane %v5362, 4
      %v5365 = vor.u32 %v5361, %v5364
      %v5367 = vshrl.u32 %v5117, 16
      %v5369 = vrot.slane %v5367, 3
      %v5370 = vshll.u32 %v5117, 16
      %v5372 = vrot.slane %v5370, 4
      %v5373 = vor.u32 %v5369, %v5372
      %v5374 = vsel %vm492, %v5365, %v5373
      %v5376 = vshrl.u32 %v5118, 16
      %v5378 = vrot.slane %v5376, 3
      %v5379 = vshll.u32 %v5118, 16
      %v5381 = vrot.slane %v5379, 4
      %v5382 = vor.u32 %v5378, %v5381
      %v5384 = vshrl.u32 %v5119, 16
      %v5386 = vrot.slane %v5384, 3
      %v5387 = vshll.u32 %v5119, 16
      %v5389 = vrot.slane %v5387, 4
      %v5390 = vor.u32 %v5386, %v5389
      %v5391 = vsel %vm492, %v5382, %v5390
      %v5408 = vld [vmem:[%s2] sm:$0xf]
      %v5409 = vld [vmem:[%s2 + $0x4] sm:$0xf]
      %v5410 = vld [vmem:[%s2 + $0x8] sm:$0xf]
      %v5411 = vld [vmem:[%s2 + $0xc] sm:$0xf]
      %v5412 = vld [vmem:[%s2 + $0x10] sm:$0xf]
      %v5413 = vld [vmem:[%s2 + $0x14] sm:$0xf]
      %v5414 = vld [vmem:[%s2 + $0x18] sm:$0xf]
      %v5415 = vld [vmem:[%s2 + $0x1c] sm:$0xf]
      %v5416 = vld [vmem:[%s2 + $0x20] sm:$0xf]
      %v5417 = vld [vmem:[%s2 + $0x24] sm:$0xf]
      %v5418 = vld [vmem:[%s2 + $0x28] sm:$0xf]
      %v5419 = vld [vmem:[%s2 + $0x2c] sm:$0xf]
      %v5420 = vld [vmem:[%s2 + $0x30] sm:$0xf]
      %v5421 = vld [vmem:[%s2 + $0x34] sm:$0xf]
      %v5422 = vld [vmem:[%s2 + $0x38] sm:$0xf]
      %v5423 = vld [vmem:[%s2 + $0x3c] sm:$0xf]
      %v5424 = vld [vmem:[#allocation2] sm:$0xf0]
      %v5425 = vld [vmem:[#allocation2 + $0x10] sm:$0xf0]
      %v5426 = vld [vmem:[#allocation2 + $0x20] sm:$0xf0]
      %v5427 = vld [vmem:[#allocation2 + $0x30] sm:$0xf0]
      %v5428 = vld [vmem:[#allocation2 + $0x40] sm:$0xf0]
      %v5429 = vld [vmem:[#allocation2 + $0x50] sm:$0xf0]
      %v5430 = vld [vmem:[#allocation2 + $0x60] sm:$0xf0]
      %v5431 = vld [vmem:[#allocation2 + $0x70] sm:$0xf0]
      %v5432 = vld [vmem:[#allocation2 + $0x80] sm:$0xf0]
      %v5433 = vld [vmem:[#allocation2 + $0x90] sm:$0xf0]
      %v5434 = vld [vmem:[#allocation2 + $0xa0] sm:$0xf0]
      %v5435 = vld [vmem:[#allocation2 + $0xb0] sm:$0xf0]
      %v5436 = vld [vmem:[#allocation2 + $0xc0] sm:$0xf0]
      %v5437 = vld [vmem:[#allocation2 + $0xd0] sm:$0xf0]
      %v5438 = vld [vmem:[#allocation2 + $0xe0] sm:$0xf0]
      %v5439 = vld [vmem:[#allocation2 + $0xf0] sm:$0xf0]
      %v5472 = vrot.slane %v5424, 4
      %v5473 = vrot.slane %v5089, 4
      %v5474 = vsel %vm845, %v5472, %v5473
      %v5475 = vrot.slane %v5425, 4
      %v5476 = vrot.slane %v5091, 4
      %v5477 = vsel %vm845, %v5475, %v5476
      %v5478 = vrot.slane %v5426, 4
      %v5479 = vrot.slane %v5093, 4
      %v5480 = vsel %vm845, %v5478, %v5479
      %v5481 = vrot.slane %v5427, 4
      %v5482 = vrot.slane %v5095, 4
      %v5483 = vsel %vm845, %v5481, %v5482
      %v5484 = vrot.slane %v5428, 4
      %v5485 = vrot.slane %v5097, 4
      %v5486 = vsel %vm845, %v5484, %v5485
      %v5487 = vrot.slane %v5429, 4
      %v5488 = vrot.slane %v5099, 4
      %v5489 = vsel %vm845, %v5487, %v5488
      %v5490 = vrot.slane %v5430, 4
      %v5491 = vrot.slane %v5101, 4
      %v5492 = vsel %vm845, %v5490, %v5491
      %v5493 = vrot.slane %v5431, 4
      %v5494 = vrot.slane %v5103, 4
      %v5495 = vsel %vm845, %v5493, %v5494
      %v5496 = vrot.slane %v5432, 4
      %v5497 = vrot.slane %v5105, 4
      %v5498 = vsel %vm845, %v5496, %v5497
      %v5499 = vrot.slane %v5433, 4
      %v5500 = vrot.slane %v5107, 4
      %v5501 = vsel %vm845, %v5499, %v5500
      %v5502 = vrot.slane %v5434, 4
      %v5503 = vrot.slane %v5109, 4
      %v5504 = vsel %vm845, %v5502, %v5503
      %v5505 = vrot.slane %v5435, 4
      %v5506 = vrot.slane %v5111, 4
      %v5507 = vsel %vm845, %v5505, %v5506
      %v5508 = vrot.slane %v5436, 4
      %v5509 = vrot.slane %v5113, 4
      %v5510 = vsel %vm845, %v5508, %v5509
      %v5511 = vrot.slane %v5437, 4
      %v5512 = vrot.slane %v5115, 4
      %v5513 = vsel %vm845, %v5511, %v5512
      %v5514 = vrot.slane %v5438, 4
      %v5515 = vrot.slane %v5117, 4
      %v5516 = vsel %vm845, %v5514, %v5515
      %v5517 = vrot.slane %v5439, 4
      %v5518 = vrot.slane %v5119, 4
      %v5519 = vsel %vm845, %v5517, %v5518
      %v5536 = vld [vmem:[%s2 + $0x40] sm:$0xf]
      %v5537 = vld [vmem:[%s2 + $0x44] sm:$0xf]
      %v5538 = vld [vmem:[%s2 + $0x48] sm:$0xf]
      %v5539 = vld [vmem:[%s2 + $0x4c] sm:$0xf]
      %v5540 = vld [vmem:[%s2 + $0x50] sm:$0xf]
      %v5541 = vld [vmem:[%s2 + $0x54] sm:$0xf]
      %v5542 = vld [vmem:[%s2 + $0x58] sm:$0xf]
      %v5543 = vld [vmem:[%s2 + $0x5c] sm:$0xf]
      %v5544 = vld [vmem:[%s2 + $0x60] sm:$0xf]
      %v5545 = vld [vmem:[%s2 + $0x64] sm:$0xf]
      %v5546 = vld [vmem:[%s2 + $0x68] sm:$0xf]
      %v5547 = vld [vmem:[%s2 + $0x6c] sm:$0xf]
      %v5548 = vld [vmem:[%s2 + $0x70] sm:$0xf]
      %v5549 = vld [vmem:[%s2 + $0x74] sm:$0xf]
      %v5550 = vld [vmem:[%s2 + $0x78] sm:$0xf]
      %v5551 = vld [vmem:[%s2 + $0x7c] sm:$0xf]
      %v5568 = vunpack.c.l.b16 %v5536
      %v5569 = vunpack.c.l.b16 %v5537
      %v5570 = vunpack.c.l.b16 %v5538
      %v5571 = vunpack.c.l.b16 %v5539
      %v5572 = vunpack.c.l.b16 %v5540
      %v5573 = vunpack.c.l.b16 %v5541
      %v5574 = vunpack.c.l.b16 %v5542
      %v5575 = vunpack.c.l.b16 %v5543
      %v5576 = vunpack.c.l.b16 %v5544
      %v5577 = vunpack.c.l.b16 %v5545
      %v5578 = vunpack.c.l.b16 %v5546
      %v5579 = vunpack.c.l.b16 %v5547
      %v5580 = vunpack.c.l.b16 %v5548
      %v5581 = vunpack.c.l.b16 %v5549
      %v5582 = vunpack.c.l.b16 %v5550
      %v5583 = vunpack.c.l.b16 %v5551
      %v5584 = vpack.c.b16 %v5569, %v5568
      %v5585 = vpack.c.b16 %v5571, %v5570
      %v5586 = vpack.c.b16 %v5573, %v5572
      %v5587 = vpack.c.b16 %v5575, %v5574
      %v5588 = vpack.c.b16 %v5577, %v5576
      %v5589 = vpack.c.b16 %v5579, %v5578
      %v5590 = vpack.c.b16 %v5581, %v5580
      %v5591 = vpack.c.b16 %v5583, %v5582
      %5600 = vmatprep.subr.bf16.mxu0 0
      %5601 = vmatpush1.bf16.msra.mxu0 %v5584
      %5602 = vmatprep.subr.bf16.mxu0 0
      %5603 = vmatpush1.bf16.msra.mxu0 %v5585
      %5604 = vmatprep.subr.bf16.mxu0 0
      %5605 = vmatpush1.bf16.msra.mxu0 %v5586
      %5606 = vmatprep.subr.bf16.mxu0 0
      %5607 = vmatpush1.bf16.msra.mxu0 %v5587
      %5608 = vmatprep.subr.bf16.mxu0 0
      %5609 = vmatpush1.bf16.msra.mxu0 %v5588
      %5610 = vmatprep.subr.bf16.mxu0 0
      %5611 = vmatpush1.bf16.msra.mxu0 %v5589
      %5612 = vmatprep.subr.bf16.mxu0 0
      %5613 = vmatpush1.bf16.msra.mxu0 %v5590
      %5614 = vmatprep.subr.bf16.mxu0 0
      %5615 = vmatpush1.bf16.msra.mxu0 %v5591
      %5616 = vmatprep.subr.bf16.mxu0 0
      %5617 = vmatpush1.bf16.msra.mxu0 0
      %5618 = vmatprep.subr.bf16.mxu0 0
      %5619 = vmatpush1.bf16.msra.mxu0 0
      %5620 = vmatprep.subr.bf16.mxu0 0
      %5621 = vmatpush1.bf16.msra.mxu0 0
      %5622 = vmatprep.subr.bf16.mxu0 0
      %5623 = vmatpush1.bf16.msra.mxu0 0
      %5624 = vmatprep.subr.bf16.mxu0 0
      %5625 = vmatpush1.bf16.msra.mxu0 0
      %5626 = vmatprep.subr.bf16.mxu0 0
      %5627 = vmatpush1.bf16.msra.mxu0 0
      %5628 = vmatprep.subr.bf16.mxu0 0
      %5629 = vmatpush1.bf16.msra.mxu0 0
      %5630 = vmatprep.subr.bf16.mxu0 0
      %5631 = vmatpush1.bf16.msra.mxu0 0
      %5632 = vmatprep.mubr.bf16.mxu0 0
      %5633 = vmatmul.mubr.bf16.gmra.mrb[0].mxu0 %v5474
      %v5634 = vpop.f32.mrb[0].mxu0
      %v5635 = vadd.f32 0.0, %v5634
      %v5636 = vpop.f32.mrb[0].mxu0
      %v5637 = vpop.f32.mrb[0].mxu0
      %v5638 = vadd.f32 0.0, %v5637
      %v5639 = vpop.f32.mrb[0].mxu0
      %5640 = vmatprep.mubr.bf16.mxu0 0
      %5641 = vmatmul.mubr.bf16.gmra.mrb[0].mxu0 %v5477
      %v5642 = vpop.f32.mrb[0].mxu0
      %v5643 = vadd.f32 0.0, %v5642
      %v5644 = vpop.f32.mrb[0].mxu0
      %v5645 = vpop.f32.mrb[0].mxu0
      %v5646 = vadd.f32 0.0, %v5645
      %v5647 = vpop.f32.mrb[0].mxu0
      %5648 = vmatprep.mubr.bf16.mxu0 0
      %5649 = vmatmul.mubr.bf16.gmra.mrb[0].mxu0 %v5480
      %v5650 = vpop.f32.mrb[0].mxu0
      %v5651 = vadd.f32 0.0, %v5650
      %v5652 = vpop.f32.mrb[0].mxu0
      %v5653 = vpop.f32.mrb[0].mxu0
      %v5654 = vadd.f32 0.0, %v5653
      %v5655 = vpop.f32.mrb[0].mxu0
      %5656 = vmatprep.mubr.bf16.mxu0 0
      %5657 = vmatmul.mubr.bf16.gmra.mrb[0].mxu0 %v5483
      %v5658 = vpop.f32.mrb[0].mxu0
      %v5659 = vadd.f32 0.0, %v5658
      %v5660 = vpop.f32.mrb[0].mxu0
      %v5661 = vpop.f32.mrb[0].mxu0
      %v5662 = vadd.f32 0.0, %v5661
      %v5663 = vpop.f32.mrb[0].mxu0
      %5664 = vmatprep.mubr.bf16.mxu0 0
      %5665 = vmatmul.mubr.bf16.gmra.mrb[0].mxu0 %v5486
      %v5666 = vpop.f32.mrb[0].mxu0
      %v5667 = vadd.f32 0.0, %v5666
      %v5668 = vpop.f32.mrb[0].mxu0
      %v5669 = vpop.f32.mrb[0].mxu0
      %v5670 = vadd.f32 0.0, %v5669
      %v5671 = vpop.f32.mrb[0].mxu0
      %5672 = vmatprep.mubr.bf16.mxu0 0
      %5673 = vmatmul.mubr.bf16.gmra.mrb[0].mxu0 %v5489
      %v5674 = vpop.f32.mrb[0].mxu0
      %v5675 = vadd.f32 0.0, %v5674
      %v5676 = vpop.f32.mrb[0].mxu0
      %v5677 = vpop.f32.mrb[0].mxu0
      %v5678 = vadd.f32 0.0, %v5677
      %v5679 = vpop.f32.mrb[0].mxu0
      %5680 = vmatprep.mubr.bf16.mxu0 0
      %5681 = vmatmul.mubr.bf16.gmra.mrb[0].mxu0 %v5492
      %v5682 = vpop.f32.mrb[0].mxu0
      %v5683 = vadd.f32 0.0, %v5682
      %v5684 = vpop.f32.mrb[0].mxu0
      %v5685 = vpop.f32.mrb[0].mxu0
      %v5686 = vadd.f32 0.0, %v5685
      %v5687 = vpop.f32.mrb[0].mxu0
      %5688 = vmatprep.mubr.bf16.mxu0 0
      %5689 = vmatmul.mubr.bf16.gmra.mrb[0].mxu0 %v5495
      %v5690 = vpop.f32.mrb[0].mxu0
      %v5691 = vadd.f32 0.0, %v5690
      %v5692 = vpop.f32.mrb[0].mxu0
      %v5693 = vpop.f32.mrb[0].mxu0
      %v5694 = vadd.f32 0.0, %v5693
      %v5695 = vpop.f32.mrb[0].mxu0
      %5696 = vmatprep.mubr.bf16.mxu0 0
      %5697 = vmatmul.mubr.bf16.gmra.mrb[0].mxu0 %v5498
      %v5698 = vpop.f32.mrb[0].mxu0
      %v5699 = vadd.f32 0.0, %v5698
      %v5700 = vpop.f32.mrb[0].mxu0
      %v5701 = vpop.f32.mrb[0].mxu0
      %v5702 = vadd.f32 0.0, %v5701
      %v5703 = vpop.f32.mrb[0].mxu0
      %5704 = vmatprep.mubr.bf16.mxu0 0
      %5705 = vmatmul.mubr.bf16.gmra.mrb[0].mxu0 %v5501
      %v5706 = vpop.f32.mrb[0].mxu0
      %v5707 = vadd.f32 0.0, %v5706
      %v5708 = vpop.f32.mrb[0].mxu0
      %v5709 = vpop.f32.mrb[0].mxu0
      %v5710 = vadd.f32 0.0, %v5709
      %v5711 = vpop.f32.mrb[0].mxu0
      %5712 = vmatprep.mubr.bf16.mxu0 0
      %5713 = vmatmul.mubr.bf16.gmra.mrb[0].mxu0 %v5504
      %v5714 = vpop.f32.mrb[0].mxu0
      %v5715 = vadd.f32 0.0, %v5714
      %v5716 = vpop.f32.mrb[0].mxu0
      %v5717 = vpop.f32.mrb[0].mxu0
      %v5718 = vadd.f32 0.0, %v5717
      %v5719 = vpop.f32.mrb[0].mxu0
      %5720 = vmatprep.mubr.bf16.mxu0 0
      %5721 = vmatmul.mubr.bf16.gmra.mrb[0].mxu0 %v5507
      %v5722 = vpop.f32.mrb[0].mxu0
      %v5723 = vadd.f32 0.0, %v5722
      %v5724 = vpop.f32.mrb[0].mxu0
      %v5725 = vpop.f32.mrb[0].mxu0
      %v5726 = vadd.f32 0.0, %v5725
      %v5727 = vpop.f32.mrb[0].mxu0
      %5728 = vmatprep.mubr.bf16.mxu0 0
      %5729 = vmatmul.mubr.bf16.gmra.mrb[0].mxu0 %v5510
      %v5730 = vpop.f32.mrb[0].mxu0
      %v5731 = vadd.f32 0.0, %v5730
      %v5732 = vpop.f32.mrb[0].mxu0
      %v5733 = vpop.f32.mrb[0].mxu0
      %v5734 = vadd.f32 0.0, %v5733
      %v5735 = vpop.f32.mrb[0].mxu0
      %5736 = vmatprep.mubr.bf16.mxu0 0
      %5737 = vmatmul.mubr.bf16.gmra.mrb[0].mxu0 %v5513
      %v5738 = vpop.f32.mrb[0].mxu0
      %v5739 = vadd.f32 0.0, %v5738
      %v5740 = vpop.f32.mrb[0].mxu0
      %v5741 = vpop.f32.mrb[0].mxu0
      %v5742 = vadd.f32 0.0, %v5741
      %v5743 = vpop.f32.mrb[0].mxu0
      %5744 = vmatprep.mubr.bf16.mxu0 0
      %5745 = vmatmul.mubr.bf16.gmra.mrb[0].mxu0 %v5516
      %v5746 = vpop.f32.mrb[0].mxu0
      %v5747 = vadd.f32 0.0, %v5746
      %v5748 = vpop.f32.mrb[0].mxu0
      %v5749 = vpop.f32.mrb[0].mxu0
      %v5750 = vadd.f32 0.0, %v5749
      %v5751 = vpop.f32.mrb[0].mxu0
      %5752 = vmatprep.mubr.bf16.mxu0 0
      %5753 = vmatmul.mubr.bf16.gmra.mrb[0].mxu0 %v5519
      %v5754 = vpop.f32.mrb[0].mxu0
      %v5755 = vadd.f32 0.0, %v5754
      %v5756 = vpop.f32.mrb[0].mxu0
      %v5757 = vpop.f32.mrb[0].mxu0
      %v5758 = vadd.f32 0.0, %v5757
      %v5759 = vpop.f32.mrb[0].mxu0
      %5760 = vdwg.mxu0
      %v5777 = vunpack.c.l.b16 %v5408
      %v5778 = vunpack.c.l.b16 %v5409
      %v5779 = vunpack.c.l.b16 %v5410
      %v5780 = vunpack.c.l.b16 %v5411
      %v5781 = vunpack.c.l.b16 %v5412
      %v5782 = vunpack.c.l.b16 %v5413
      %v5783 = vunpack.c.l.b16 %v5414
      %v5784 = vunpack.c.l.b16 %v5415
      %v5785 = vunpack.c.l.b16 %v5416
      %v5786 = vunpack.c.l.b16 %v5417
      %v5787 = vunpack.c.l.b16 %v5418
      %v5788 = vunpack.c.l.b16 %v5419
      %v5789 = vunpack.c.l.b16 %v5420
      %v5790 = vunpack.c.l.b16 %v5421
      %v5791 = vunpack.c.l.b16 %v5422
      %v5792 = vunpack.c.l.b16 %v5423
      %v5793 = vpack.c.b16 %v5778, %v5777
      %v5794 = vpack.c.b16 %v5780, %v5779
      %v5795 = vpack.c.b16 %v5782, %v5781
      %v5796 = vpack.c.b16 %v5784, %v5783
      %v5797 = vpack.c.b16 %v5786, %v5785
      %v5798 = vpack.c.b16 %v5788, %v5787
      %v5799 = vpack.c.b16 %v5790, %v5789
      %v5800 = vpack.c.b16 %v5792, %v5791
      %5809 = vmatprep.subr.bf16.mxu0 0
      %5810 = vmatpush1.bf16.msra.mxu0 %v5793
      %5811 = vmatprep.subr.bf16.mxu0 0
      %5812 = vmatpush1.bf16.msra.mxu0 %v5794
      %5813 = vmatprep.subr.bf16.mxu0 0
      %5814 = vmatpush1.bf16.msra.mxu0 %v5795
      %5815 = vmatprep.subr.bf16.mxu0 0
      %5816 = vmatpush1.bf16.msra.mxu0 %v5796
      %5817 = vmatprep.subr.bf16.mxu0 0
      %5818 = vmatpush1.bf16.msra.mxu0 %v5797
      %5819 = vmatprep.subr.bf16.mxu0 0
      %5820 = vmatpush1.bf16.msra.mxu0 %v5798
      %5821 = vmatprep.subr.bf16.mxu0 0
      %5822 = vmatpush1.bf16.msra.mxu0 %v5799
      %5823 = vmatprep.subr.bf16.mxu0 0
      %5824 = vmatpush1.bf16.msra.mxu0 %v5800
      %5825 = vmatprep.subr.bf16.mxu0 0
      %5826 = vmatpush1.bf16.msra.mxu0 0
      %5827 = vmatprep.subr.bf16.mxu0 0
      %5828 = vmatpush1.bf16.msra.mxu0 0
      %5829 = vmatprep.subr.bf16.mxu0 0
      %5830 = vmatpush1.bf16.msra.mxu0 0
      %5831 = vmatprep.subr.bf16.mxu0 0
      %5832 = vmatpush1.bf16.msra.mxu0 0
      %5833 = vmatprep.subr.bf16.mxu0 0
      %5834 = vmatpush1.bf16.msra.mxu0 0
      %5835 = vmatprep.subr.bf16.mxu0 0
      %5836 = vmatpush1.bf16.msra.mxu0 0
      %5837 = vmatprep.subr.bf16.mxu0 0
      %5838 = vmatpush1.bf16.msra.mxu0 0
      %5839 = vmatprep.subr.bf16.mxu0 0
      %5840 = vmatpush1.bf16.msra.mxu0 0
      %5841 = vmatprep.mubr.bf16.mxu0 0
      %5842 = vmatmul.mubr.bf16.gmra.mrb[0].mxu0 %v5136
      %v5843 = vpop.f32.mrb[0].mxu0
      %v5844 = vadd.f32 %v5635, %v5843
      %v5845 = vpop.f32.mrb[0].mxu0
      %v5846 = vpop.f32.mrb[0].mxu0
      %v5847 = vadd.f32 %v5638, %v5846
      %v5848 = vpop.f32.mrb[0].mxu0
      %5849 = vmatprep.mubr.bf16.mxu0 0
      %5850 = vmatmul.mubr.bf16.gmra.mrb[0].mxu0 %v5153
      %v5851 = vpop.f32.mrb[0].mxu0
      %v5852 = vadd.f32 %v5643, %v5851
      %v5853 = vpop.f32.mrb[0].mxu0
      %v5854 = vpop.f32.mrb[0].mxu0
      %v5855 = vadd.f32 %v5646, %v5854
      %v5856 = vpop.f32.mrb[0].mxu0
      %5857 = vmatprep.mubr.bf16.mxu0 0
      %5858 = vmatmul.mubr.bf16.gmra.mrb[0].mxu0 %v5170
      %v5859 = vpop.f32.mrb[0].mxu0
      %v5860 = vadd.f32 %v5651, %v5859
      %v5861 = vpop.f32.mrb[0].mxu0
      %v5862 = vpop.f32.mrb[0].mxu0
      %v5863 = vadd.f32 %v5654, %v5862
      %v5864 = vpop.f32.mrb[0].mxu0
      %5865 = vmatprep.mubr.bf16.mxu0 0
      %5866 = vmatmul.mubr.bf16.gmra.mrb[0].mxu0 %v5187
      %v5867 = vpop.f32.mrb[0].mxu0
      %v5868 = vadd.f32 %v5659, %v5867
      %v5869 = vpop.f32.mrb[0].mxu0
      %v5870 = vpop.f32.mrb[0].mxu0
      %v5871 = vadd.f32 %v5662, %v5870
      %v5872 = vpop.f32.mrb[0].mxu0
      %5873 = vmatprep.mubr.bf16.mxu0 0
      %5874 = vmatmul.mubr.bf16.gmra.mrb[0].mxu0 %v5204
      %v5875 = vpop.f32.mrb[0].mxu0
      %v5876 = vadd.f32 %v5667, %v5875
      %v5877 = vpop.f32.mrb[0].mxu0
      %v5878 = vpop.f32.mrb[0].mxu0
      %v5879 = vadd.f32 %v5670, %v5878
      %v5880 = vpop.f32.mrb[0].mxu0
      %5881 = vmatprep.mubr.bf16.mxu0 0
      %5882 = vmatmul.mubr.bf16.gmra.mrb[0].mxu0 %v5221
      %v5883 = vpop.f32.mrb[0].mxu0
      %v5884 = vadd.f32 %v5675, %v5883
      %v5885 = vpop.f32.mrb[0].mxu0
      %v5886 = vpop.f32.mrb[0].mxu0
      %v5887 = vadd.f32 %v5678, %v5886
      %v5888 = vpop.f32.mrb[0].mxu0
      %5889 = vmatprep.mubr.bf16.mxu0 0
      %5890 = vmatmul.mubr.bf16.gmra.mrb[0].mxu0 %v5238
      %v5891 = vpop.f32.mrb[0].mxu0
      %v5892 = vadd.f32 %v5683, %v5891
      %v5893 = vpop.f32.mrb[0].mxu0
      %v5894 = vpop.f32.mrb[0].mxu0
      %v5895 = vadd.f32 %v5686, %v5894
      %v5896 = vpop.f32.mrb[0].mxu0
      %5897 = vmatprep.mubr.bf16.mxu0 0
      %5898 = vmatmul.mubr.bf16.gmra.mrb[0].mxu0 %v5255
      %v5899 = vpop.f32.mrb[0].mxu0
      %v5900 = vadd.f32 %v5691, %v5899
      %v5901 = vpop.f32.mrb[0].mxu0
      %v5902 = vpop.f32.mrb[0].mxu0
      %v5903 = vadd.f32 %v5694, %v5902
      %v5904 = vpop.f32.mrb[0].mxu0
      %5905 = vmatprep.mubr.bf16.mxu0 0
      %5906 = vmatmul.mubr.bf16.gmra.mrb[0].mxu0 %v5272
      %v5907 = vpop.f32.mrb[0].mxu0
      %v5908 = vadd.f32 %v5699, %v5907
      %v5909 = vpop.f32.mrb[0].mxu0
      %v5910 = vpop.f32.mrb[0].mxu0
      %v5911 = vadd.f32 %v5702, %v5910
      %v5912 = vpop.f32.mrb[0].mxu0
      %5913 = vmatprep.mubr.bf16.mxu0 0
      %5914 = vmatmul.mubr.bf16.gmra.mrb[0].mxu0 %v5289
      %v5915 = vpop.f32.mrb[0].mxu0
      %v5916 = vadd.f32 %v5707, %v5915
      %v5917 = vpop.f32.mrb[0].mxu0
      %v5918 = vpop.f32.mrb[0].mxu0
      %v5919 = vadd.f32 %v5710, %v5918
      %v5920 = vpop.f32.mrb[0].mxu0
      %5921 = vmatprep.mubr.bf16.mxu0 0
      %5922 = vmatmul.mubr.bf16.gmra.mrb[0].mxu0 %v5306
      %v5923 = vpop.f32.mrb[0].mxu0
      %v5924 = vadd.f32 %v5715, %v5923
      %v5925 = vpop.f32.mrb[0].mxu0
      %v5926 = vpop.f32.mrb[0].mxu0
      %v5927 = vadd.f32 %v5718, %v5926
      %v5928 = vpop.f32.mrb[0].mxu0
      %5929 = vmatprep.mubr.bf16.mxu0 0
      %5930 = vmatmul.mubr.bf16.gmra.mrb[0].mxu0 %v5323
      %v5931 = vpop.f32.mrb[0].mxu0
      %v5932 = vadd.f32 %v5723, %v5931
      %v5933 = vpop.f32.mrb[0].mxu0
      %v5934 = vpop.f32.mrb[0].mxu0
      %v5935 = vadd.f32 %v5726, %v5934
      %v5936 = vpop.f32.mrb[0].mxu0
      %5937 = vmatprep.mubr.bf16.mxu0 0
      %5938 = vmatmul.mubr.bf16.gmra.mrb[0].mxu0 %v5340
      %v5939 = vpop.f32.mrb[0].mxu0
      %v5940 = vadd.f32 %v5731, %v5939
      %v5941 = vpop.f32.mrb[0].mxu0
      %v5942 = vpop.f32.mrb[0].mxu0
      %v5943 = vadd.f32 %v5734, %v5942
      %v5944 = vpop.f32.mrb[0].mxu0
      %5945 = vmatprep.mubr.bf16.mxu0 0
      %5946 = vmatmul.mubr.bf16.gmra.mrb[0].mxu0 %v5357
      %v5947 = vpop.f32.mrb[0].mxu0
      %v5948 = vadd.f32 %v5739, %v5947
      %v5949 = vpop.f32.mrb[0].mxu0
      %v5950 = vpop.f32.mrb[0].mxu0
      %v5951 = vadd.f32 %v5742, %v5950
      %v5952 = vpop.f32.mrb[0].mxu0
      %5953 = vmatprep.mubr.bf16.mxu0 0
      %5954 = vmatmul.mubr.bf16.gmra.mrb[0].mxu0 %v5374
      %v5955 = vpop.f32.mrb[0].mxu0
      %v5956 = vadd.f32 %v5747, %v5955
      %v5957 = vpop.f32.mrb[0].mxu0
      %v5958 = vpop.f32.mrb[0].mxu0
      %v5959 = vadd.f32 %v5750, %v5958
      %v5960 = vpop.f32.mrb[0].mxu0
      %5961 = vmatprep.mubr.bf16.mxu0 0
      %5962 = vmatmul.mubr.bf16.gmra.mrb[0].mxu0 %v5391
      %v5963 = vpop.f32.mrb[0].mxu0
      %v5964 = vadd.f32 %v5755, %v5963
      %v5965 = vpop.f32.mrb[0].mxu0
      %v5966 = vpop.f32.mrb[0].mxu0
      %v5967 = vadd.f32 %v5758, %v5966
      %v5968 = vpop.f32.mrb[0].mxu0
      %5969 = vdwg.mxu0
      %v5970 = vld [vmem:[#allocation2 + $0x8] sm:$0x1f]
      %v5971 = vld [vmem:[#allocation2 + $0x18] sm:$0x1f]
      %v5972 = vld [vmem:[#allocation2 + $0x28] sm:$0x1f]
      %v5973 = vld [vmem:[#allocation2 + $0x38] sm:$0x1f]
      %v5974 = vld [vmem:[#allocation2 + $0x48] sm:$0x1f]
      %v5975 = vld [vmem:[#allocation2 + $0x58] sm:$0x1f]
      %v5976 = vld [vmem:[#allocation2 + $0x68] sm:$0x1f]
      %v5977 = vld [vmem:[#allocation2 + $0x78] sm:$0x1f]
      %v5978 = vld [vmem:[#allocation2 + $0x88] sm:$0x1f]
      %v5979 = vld [vmem:[#allocation2 + $0x98] sm:$0x1f]
      %v5980 = vld [vmem:[#allocation2 + $0xa8] sm:$0x1f]
      %v5981 = vld [vmem:[#allocation2 + $0xb8] sm:$0x1f]
      %v5982 = vld [vmem:[#allocation2 + $0xc8] sm:$0x1f]
      %v5983 = vld [vmem:[#allocation2 + $0xd8] sm:$0x1f]
      %v5984 = vld [vmem:[#allocation2 + $0xe8] sm:$0x1f]
      %v5985 = vld [vmem:[#allocation2 + $0xf8] sm:$0x1f]
      %v5987 = vshrl.u32 %v5424, 16
      %v5989 = vrot.slane %v5987, 4
      %v5990 = vshll.u32 %v5424, 16
      %v5992 = vrot.slane %v5990, 5
      %v5993 = vor.u32 %v5989, %v5992
      %v5995 = vshrl.u32 %v5970, 16
      %v5997 = vrot.slane %v5995, 4
      %v5998 = vshll.u32 %v5970, 16
      %v6000 = vrot.slane %v5998, 5
      %v6001 = vor.u32 %v5997, %v6000
      %v6002 = vsel %vm1360, %v5993, %v6001
      %v6004 = vshrl.u32 %v5425, 16
      %v6006 = vrot.slane %v6004, 4
      %v6007 = vshll.u32 %v5425, 16
      %v6009 = vrot.slane %v6007, 5
      %v6010 = vor.u32 %v6006, %v6009
      %v6012 = vshrl.u32 %v5971, 16
      %v6014 = vrot.slane %v6012, 4
      %v6015 = vshll.u32 %v5971, 16
      %v6017 = vrot.slane %v6015, 5
      %v6018 = vor.u32 %v6014, %v6017
      %v6019 = vsel %vm1360, %v6010, %v6018
      %v6021 = vshrl.u32 %v5426, 16
      %v6023 = vrot.slane %v6021, 4
      %v6024 = vshll.u32 %v5426, 16
      %v6026 = vrot.slane %v6024, 5
      %v6027 = vor.u32 %v6023, %v6026
      %v6029 = vshrl.u32 %v5972, 16
      %v6031 = vrot.slane %v6029, 4
      %v6032 = vshll.u32 %v5972, 16
      %v6034 = vrot.slane %v6032, 5
      %v6035 = vor.u32 %v6031, %v6034
      %v6036 = vsel %vm1360, %v6027, %v6035
      %v6038 = vshrl.u32 %v5427, 16
      %v6040 = vrot.slane %v6038, 4
      %v6041 = vshll.u32 %v5427, 16
      %v6043 = vrot.slane %v6041, 5
      %v6044 = vor.u32 %v6040, %v6043
      %v6046 = vshrl.u32 %v5973, 16
      %v6048 = vrot.slane %v6046, 4
      %v6049 = vshll.u32 %v5973, 16
      %v6051 = vrot.slane %v6049, 5
      %v6052 = vor.u32 %v6048, %v6051
      %v6053 = vsel %vm1360, %v6044, %v6052
      %v6055 = vshrl.u32 %v5428, 16
      %v6057 = vrot.slane %v6055, 4
      %v6058 = vshll.u32 %v5428, 16
      %v6060 = vrot.slane %v6058, 5
      %v6061 = vor.u32 %v6057, %v6060
      %v6063 = vshrl.u32 %v5974, 16
      %v6065 = vrot.slane %v6063, 4
      %v6066 = vshll.u32 %v5974, 16
      %v6068 = vrot.slane %v6066, 5
      %v6069 = vor.u32 %v6065, %v6068
      %v6070 = vsel %vm1360, %v6061, %v6069
      %v6072 = vshrl.u32 %v5429, 16
      %v6074 = vrot.slane %v6072, 4
      %v6075 = vshll.u32 %v5429, 16
      %v6077 = vrot.slane %v6075, 5
      %v6078 = vor.u32 %v6074, %v6077
      %v6080 = vshrl.u32 %v5975, 16
      %v6082 = vrot.slane %v6080, 4
      %v6083 = vshll.u32 %v5975, 16
      %v6085 = vrot.slane %v6083, 5
      %v6086 = vor.u32 %v6082, %v6085
      %v6087 = vsel %vm1360, %v6078, %v6086
      %v6089 = vshrl.u32 %v5430, 16
      %v6091 = vrot.slane %v6089, 4
      %v6092 = vshll.u32 %v5430, 16
      %v6094 = vrot.slane %v6092, 5
      %v6095 = vor.u32 %v6091, %v6094
      %v6097 = vshrl.u32 %v5976, 16
      %v6099 = vrot.slane %v6097, 4
      %v6100 = vshll.u32 %v5976, 16
      %v6102 = vrot.slane %v6100, 5
      %v6103 = vor.u32 %v6099, %v6102
      %v6104 = vsel %vm1360, %v6095, %v6103
      %v6106 = vshrl.u32 %v5431, 16
      %v6108 = vrot.slane %v6106, 4
      %v6109 = vshll.u32 %v5431, 16
      %v6111 = vrot.slane %v6109, 5
      %v6112 = vor.u32 %v6108, %v6111
      %v6114 = vshrl.u32 %v5977, 16
      %v6116 = vrot.slane %v6114, 4
      %v6117 = vshll.u32 %v5977, 16
      %v6119 = vrot.slane %v6117, 5
      %v6120 = vor.u32 %v6116, %v6119
      %v6121 = vsel %vm1360, %v6112, %v6120
      %v6123 = vshrl.u32 %v5432, 16
      %v6125 = vrot.slane %v6123, 4
      %v6126 = vshll.u32 %v5432, 16
      %v6128 = vrot.slane %v6126, 5
      %v6129 = vor.u32 %v6125, %v6128
      %v6131 = vshrl.u32 %v5978, 16
      %v6133 = vrot.slane %v6131, 4
      %v6134 = vshll.u32 %v5978, 16
      %v6136 = vrot.slane %v6134, 5
      %v6137 = vor.u32 %v6133, %v6136
      %v6138 = vsel %vm1360, %v6129, %v6137
      %v6140 = vshrl.u32 %v5433, 16
      %v6142 = vrot.slane %v6140, 4
      %v6143 = vshll.u32 %v5433, 16
      %v6145 = vrot.slane %v6143, 5
      %v6146 = vor.u32 %v6142, %v6145
      %v6148 = vshrl.u32 %v5979, 16
      %v6150 = vrot.slane %v6148, 4
      %v6151 = vshll.u32 %v5979, 16
      %v6153 = vrot.slane %v6151, 5
      %v6154 = vor.u32 %v6150, %v6153
      %v6155 = vsel %vm1360, %v6146, %v6154
      %v6157 = vshrl.u32 %v5434, 16
      %v6159 = vrot.slane %v6157, 4
      %v6160 = vshll.u32 %v5434, 16
      %v6162 = vrot.slane %v6160, 5
      %v6163 = vor.u32 %v6159, %v6162
      %v6165 = vshrl.u32 %v5980, 16
      %v6167 = vrot.slane %v6165, 4
      %v6168 = vshll.u32 %v5980, 16
      %v6170 = vrot.slane %v6168, 5
      %v6171 = vor.u32 %v6167, %v6170
      %v6172 = vsel %vm1360, %v6163, %v6171
      %v6174 = vshrl.u32 %v5435, 16
      %v6176 = vrot.slane %v6174, 4
      %v6177 = vshll.u32 %v5435, 16
      %v6179 = vrot.slane %v6177, 5
      %v6180 = vor.u32 %v6176, %v6179
      %v6182 = vshrl.u32 %v5981, 16
      %v6184 = vrot.slane %v6182, 4
      %v6185 = vshll.u32 %v5981, 16
      %v6187 = vrot.slane %v6185, 5
      %v6188 = vor.u32 %v6184, %v6187
      %v6189 = vsel %vm1360, %v6180, %v6188
      %v6191 = vshrl.u32 %v5436, 16
      %v6193 = vrot.slane %v6191, 4
      %v6194 = vshll.u32 %v5436, 16
      %v6196 = vrot.slane %v6194, 5
      %v6197 = vor.u32 %v6193, %v6196
      %v6199 = vshrl.u32 %v5982, 16
      %v6201 = vrot.slane %v6199, 4
      %v6202 = vshll.u32 %v5982, 16
      %v6204 = vrot.slane %v6202, 5
      %v6205 = vor.u32 %v6201, %v6204
      %v6206 = vsel %vm1360, %v6197, %v6205
      %v6208 = vshrl.u32 %v5437, 16
      %v6210 = vrot.slane %v6208, 4
      %v6211 = vshll.u32 %v5437, 16
      %v6213 = vrot.slane %v6211, 5
      %v6214 = vor.u32 %v6210, %v6213
      %v6216 = vshrl.u32 %v5983, 16
      %v6218 = vrot.slane %v6216, 4
      %v6219 = vshll.u32 %v5983, 16
      %v6221 = vrot.slane %v6219, 5
      %v6222 = vor.u32 %v6218, %v6221
      %v6223 = vsel %vm1360, %v6214, %v6222
      %v6225 = vshrl.u32 %v5438, 16
      %v6227 = vrot.slane %v6225, 4
      %v6228 = vshll.u32 %v5438, 16
      %v6230 = vrot.slane %v6228, 5
      %v6231 = vor.u32 %v6227, %v6230
      %v6233 = vshrl.u32 %v5984, 16
      %v6235 = vrot.slane %v6233, 4
      %v6236 = vshll.u32 %v5984, 16
      %v6238 = vrot.slane %v6236, 5
      %v6239 = vor.u32 %v6235, %v6238
      %v6240 = vsel %vm1360, %v6231, %v6239
      %v6242 = vshrl.u32 %v5439, 16
      %v6244 = vrot.slane %v6242, 4
      %v6245 = vshll.u32 %v5439, 16
      %v6247 = vrot.slane %v6245, 5
      %v6248 = vor.u32 %v6244, %v6247
      %v6250 = vshrl.u32 %v5985, 16
      %v6252 = vrot.slane %v6250, 4
      %v6253 = vshll.u32 %v5985, 16
      %v6255 = vrot.slane %v6253, 5
      %v6256 = vor.u32 %v6252, %v6255
      %v6257 = vsel %vm1360, %v6248, %v6256
      %v6274 = vld [vmem:[%s2 + $0x80] sm:$0xf]
      %v6275 = vld [vmem:[%s2 + $0x84] sm:$0xf]
      %v6276 = vld [vmem:[%s2 + $0x88] sm:$0xf]
      %v6277 = vld [vmem:[%s2 + $0x8c] sm:$0xf]
      %v6278 = vld [vmem:[%s2 + $0x90] sm:$0xf]
      %v6279 = vld [vmem:[%s2 + $0x94] sm:$0xf]
      %v6280 = vld [vmem:[%s2 + $0x98] sm:$0xf]
      %v6281 = vld [vmem:[%s2 + $0x9c] sm:$0xf]
      %v6282 = vld [vmem:[%s2 + $0xa0] sm:$0xf]
      %v6283 = vld [vmem:[%s2 + $0xa4] sm:$0xf]
      %v6284 = vld [vmem:[%s2 + $0xa8] sm:$0xf]
      %v6285 = vld [vmem:[%s2 + $0xac] sm:$0xf]
      %v6286 = vld [vmem:[%s2 + $0xb0] sm:$0xf]
      %v6287 = vld [vmem:[%s2 + $0xb4] sm:$0xf]
      %v6288 = vld [vmem:[%s2 + $0xb8] sm:$0xf]
      %v6289 = vld [vmem:[%s2 + $0xbc] sm:$0xf]
      %v6306 = vunpack.c.l.b16 %v6274
      %v6307 = vunpack.c.l.b16 %v6275
      %v6308 = vunpack.c.l.b16 %v6276
      %v6309 = vunpack.c.l.b16 %v6277
      %v6310 = vunpack.c.l.b16 %v6278
      %v6311 = vunpack.c.l.b16 %v6279
      %v6312 = vunpack.c.l.b16 %v6280
      %v6313 = vunpack.c.l.b16 %v6281
      %v6314 = vunpack.c.l.b16 %v6282
      %v6315 = vunpack.c.l.b16 %v6283
      %v6316 = vunpack.c.l.b16 %v6284
      %v6317 = vunpack.c.l.b16 %v6285
      %v6318 = vunpack.c.l.b16 %v6286
      %v6319 = vunpack.c.l.b16 %v6287
      %v6320 = vunpack.c.l.b16 %v6288
      %v6321 = vunpack.c.l.b16 %v6289
      %v6322 = vpack.c.b16 %v6307, %v6306
      %v6323 = vpack.c.b16 %v6309, %v6308
      %v6324 = vpack.c.b16 %v6311, %v6310
      %v6325 = vpack.c.b16 %v6313, %v6312
      %v6326 = vpack.c.b16 %v6315, %v6314
      %v6327 = vpack.c.b16 %v6317, %v6316
      %v6328 = vpack.c.b16 %v6319, %v6318
      %v6329 = vpack.c.b16 %v6321, %v6320
      %6338 = vmatprep.subr.bf16.mxu0 0
      %6339 = vmatpush1.bf16.msra.mxu0 %v6322
      %6340 = vmatprep.subr.bf16.mxu0 0
      %6341 = vmatpush1.bf16.msra.mxu0 %v6323
      %6342 = vmatprep.subr.bf16.mxu0 0
      %6343 = vmatpush1.bf16.msra.mxu0 %v6324
      %6344 = vmatprep.subr.bf16.mxu0 0
      %6345 = vmatpush1.bf16.msra.mxu0 %v6325
      %6346 = vmatprep.subr.bf16.mxu0 0
      %6347 = vmatpush1.bf16.msra.mxu0 %v6326
      %6348 = vmatprep.subr.bf16.mxu0 0
      %6349 = vmatpush1.bf16.msra.mxu0 %v6327
      %6350 = vmatprep.subr.bf16.mxu0 0
      %6351 = vmatpush1.bf16.msra.mxu0 %v6328
      %6352 = vmatprep.subr.bf16.mxu0 0
      %6353 = vmatpush1.bf16.msra.mxu0 %v6329
      %6354 = vmatprep.subr.bf16.mxu0 0
      %6355 = vmatpush1.bf16.msra.mxu0 0
      %6356 = vmatprep.subr.bf16.mxu0 0
      %6357 = vmatpush1.bf16.msra.mxu0 0
      %6358 = vmatprep.subr.bf16.mxu0 0
      %6359 = vmatpush1.bf16.msra.mxu0 0
      %6360 = vmatprep.subr.bf16.mxu0 0
      %6361 = vmatpush1.bf16.msra.mxu0 0
      %6362 = vmatprep.subr.bf16.mxu0 0
      %6363 = vmatpush1.bf16.msra.mxu0 0
      %6364 = vmatprep.subr.bf16.mxu0 0
      %6365 = vmatpush1.bf16.msra.mxu0 0
      %6366 = vmatprep.subr.bf16.mxu0 0
      %6367 = vmatpush1.bf16.msra.mxu0 0
      %6368 = vmatprep.subr.bf16.mxu0 0
      %6369 = vmatpush1.bf16.msra.mxu0 0
      %6370 = vmatprep.mubr.bf16.mxu0 0
      %6371 = vmatmul.mubr.bf16.gmra.mrb[0].mxu0 %v6002
      %v6372 = vpop.f32.mrb[0].mxu0
      %v6373 = vadd.f32 0.0, %v6372
      %v6374 = vpop.f32.mrb[0].mxu0
      %v6375 = vpop.f32.mrb[0].mxu0
      %v6376 = vadd.f32 0.0, %v6375
      %v6377 = vpop.f32.mrb[0].mxu0
      %6378 = vmatprep.mubr.bf16.mxu0 0
      %6379 = vmatmul.mubr.bf16.gmra.mrb[0].mxu0 %v6019
      %v6380 = vpop.f32.mrb[0].mxu0
      %v6381 = vadd.f32 0.0, %v6380
      %v6382 = vpop.f32.mrb[0].mxu0
      %v6383 = vpop.f32.mrb[0].mxu0
      %v6384 = vadd.f32 0.0, %v6383
      %v6385 = vpop.f32.mrb[0].mxu0
      %6386 = vmatprep.mubr.bf16.mxu0 0
      %6387 = vmatmul.mubr.bf16.gmra.mrb[0].mxu0 %v6036
      %v6388 = vpop.f32.mrb[0].mxu0
      %v6389 = vadd.f32 0.0, %v6388
      %v6390 = vpop.f32.mrb[0].mxu0
      %v6391 = vpop.f32.mrb[0].mxu0
      %v6392 = vadd.f32 0.0, %v6391
      %v6393 = vpop.f32.mrb[0].mxu0
      %6394 = vmatprep.mubr.bf16.mxu0 0
      %6395 = vmatmul.mubr.bf16.gmra.mrb[0].mxu0 %v6053
      %v6396 = vpop.f32.mrb[0].mxu0
      %v6397 = vadd.f32 0.0, %v6396
      %v6398 = vpop.f32.mrb[0].mxu0
      %v6399 = vpop.f32.mrb[0].mxu0
      %v6400 = vadd.f32 0.0, %v6399
      %v6401 = vpop.f32.mrb[0].mxu0
      %6402 = vmatprep.mubr.bf16.mxu0 0
      %6403 = vmatmul.mubr.bf16.gmra.mrb[0].mxu0 %v6070
      %v6404 = vpop.f32.mrb[0].mxu0
      %v6405 = vadd.f32 0.0, %v6404
      %v6406 = vpop.f32.mrb[0].mxu0
      %v6407 = vpop.f32.mrb[0].mxu0
      %v6408 = vadd.f32 0.0, %v6407
      %v6409 = vpop.f32.mrb[0].mxu0
      %6410 = vmatprep.mubr.bf16.mxu0 0
      %6411 = vmatmul.mubr.bf16.gmra.mrb[0].mxu0 %v6087
      %v6412 = vpop.f32.mrb[0].mxu0
      %v6413 = vadd.f32 0.0, %v6412
      %v6414 = vpop.f32.mrb[0].mxu0
      %v6415 = vpop.f32.mrb[0].mxu0
      %v6416 = vadd.f32 0.0, %v6415
      %v6417 = vpop.f32.mrb[0].mxu0
      %6418 = vmatprep.mubr.bf16.mxu0 0
      %6419 = vmatmul.mubr.bf16.gmra.mrb[0].mxu0 %v6104
      %v6420 = vpop.f32.mrb[0].mxu0
      %v6421 = vadd.f32 0.0, %v6420
      %v6422 = vpop.f32.mrb[0].mxu0
      %v6423 = vpop.f32.mrb[0].mxu0
      %v6424 = vadd.f32 0.0, %v6423
      %v6425 = vpop.f32.mrb[0].mxu0
      %6426 = vmatprep.mubr.bf16.mxu0 0
      %6427 = vmatmul.mubr.bf16.gmra.mrb[0].mxu0 %v6121
      %v6428 = vpop.f32.mrb[0].mxu0
      %v6429 = vadd.f32 0.0, %v6428
      %v6430 = vpop.f32.mrb[0].mxu0
      %v6431 = vpop.f32.mrb[0].mxu0
      %v6432 = vadd.f32 0.0, %v6431
      %v6433 = vpop.f32.mrb[0].mxu0
      %6434 = vmatprep.mubr.bf16.mxu0 0
      %6435 = vmatmul.mubr.bf16.gmra.mrb[0].mxu0 %v6138
      %v6436 = vpop.f32.mrb[0].mxu0
      %v6437 = vadd.f32 0.0, %v6436
      %v6438 = vpop.f32.mrb[0].mxu0
      %v6439 = vpop.f32.mrb[0].mxu0
      %v6440 = vadd.f32 0.0, %v6439
      %v6441 = vpop.f32.mrb[0].mxu0
      %6442 = vmatprep.mubr.bf16.mxu0 0
      %6443 = vmatmul.mubr.bf16.gmra.mrb[0].mxu0 %v6155
      %v6444 = vpop.f32.mrb[0].mxu0
      %v6445 = vadd.f32 0.0, %v6444
      %v6446 = vpop.f32.mrb[0].mxu0
      %v6447 = vpop.f32.mrb[0].mxu0
      %v6448 = vadd.f32 0.0, %v6447
      %v6449 = vpop.f32.mrb[0].mxu0
      %6450 = vmatprep.mubr.bf16.mxu0 0
      %6451 = vmatmul.mubr.bf16.gmra.mrb[0].mxu0 %v6172
      %v6452 = vpop.f32.mrb[0].mxu0
      %v6453 = vadd.f32 0.0, %v6452
      %v6454 = vpop.f32.mrb[0].mxu0
      %v6455 = vpop.f32.mrb[0].mxu0
      %v6456 = vadd.f32 0.0, %v6455
      %v6457 = vpop.f32.mrb[0].mxu0
      %6458 = vmatprep.mubr.bf16.mxu0 0
      %6459 = vmatmul.mubr.bf16.gmra.mrb[0].mxu0 %v6189
      %v6460 = vpop.f32.mrb[0].mxu0
      %v6461 = vadd.f32 0.0, %v6460
      %v6462 = vpop.f32.mrb[0].mxu0
      %v6463 = vpop.f32.mrb[0].mxu0
      %v6464 = vadd.f32 0.0, %v6463
      %v6465 = vpop.f32.mrb[0].mxu0
      %6466 = vmatprep.mubr.bf16.mxu0 0
      %6467 = vmatmul.mubr.bf16.gmra.mrb[0].mxu0 %v6206
      %v6468 = vpop.f32.mrb[0].mxu0
      %v6469 = vadd.f32 0.0, %v6468
      %v6470 = vpop.f32.mrb[0].mxu0
      %v6471 = vpop.f32.mrb[0].mxu0
      %v6472 = vadd.f32 0.0, %v6471
      %v6473 = vpop.f32.mrb[0].mxu0
      %6474 = vmatprep.mubr.bf16.mxu0 0
      %6475 = vmatmul.mubr.bf16.gmra.mrb[0].mxu0 %v6223
      %v6476 = vpop.f32.mrb[0].mxu0
      %v6477 = vadd.f32 0.0, %v6476
      %v6478 = vpop.f32.mrb[0].mxu0
      %v6479 = vpop.f32.mrb[0].mxu0
      %v6480 = vadd.f32 0.0, %v6479
      %v6481 = vpop.f32.mrb[0].mxu0
      %6482 = vmatprep.mubr.bf16.mxu0 0
      %6483 = vmatmul.mubr.bf16.gmra.mrb[0].mxu0 %v6240
      %v6484 = vpop.f32.mrb[0].mxu0
      %v6485 = vadd.f32 0.0, %v6484
      %v6486 = vpop.f32.mrb[0].mxu0
      %v6487 = vpop.f32.mrb[0].mxu0
      %v6488 = vadd.f32 0.0, %v6487
      %v6489 = vpop.f32.mrb[0].mxu0
      %6490 = vmatprep.mubr.bf16.mxu0 0
      %6491 = vmatmul.mubr.bf16.gmra.mrb[0].mxu0 %v6257
      %v6492 = vpop.f32.mrb[0].mxu0
      %v6493 = vadd.f32 0.0, %v6492
      %v6494 = vpop.f32.mrb[0].mxu0
      %v6495 = vpop.f32.mrb[0].mxu0
      %v6496 = vadd.f32 0.0, %v6495
      %v6497 = vpop.f32.mrb[0].mxu0
      %6498 = vdwg.mxu0
      %v6499 = vadd.f32 %v5844, %v6373
      %v6500 = vadd.f32 %v5847, %v6376
      %v6501 = vadd.f32 %v5852, %v6381
      %v6502 = vadd.f32 %v5855, %v6384
      %v6503 = vadd.f32 %v5860, %v6389
      %v6504 = vadd.f32 %v5863, %v6392
      %v6505 = vadd.f32 %v5868, %v6397
      %v6506 = vadd.f32 %v5871, %v6400
      %v6507 = vadd.f32 %v5876, %v6405
      %v6508 = vadd.f32 %v5879, %v6408
      %v6509 = vadd.f32 %v5884, %v6413
      %v6510 = vadd.f32 %v5887, %v6416
      %v6511 = vadd.f32 %v5892, %v6421
      %v6512 = vadd.f32 %v5895, %v6424
      %v6513 = vadd.f32 %v5900, %v6429
      %v6514 = vadd.f32 %v5903, %v6432
      %v6515 = vadd.f32 %v5908, %v6437
      %v6516 = vadd.f32 %v5911, %v6440
      %v6517 = vadd.f32 %v5916, %v6445
      %v6518 = vadd.f32 %v5919, %v6448
      %v6519 = vadd.f32 %v5924, %v6453
      %v6520 = vadd.f32 %v5927, %v6456
      %v6521 = vadd.f32 %v5932, %v6461
      %v6522 = vadd.f32 %v5935, %v6464
      %v6523 = vadd.f32 %v5940, %v6469
      %v6524 = vadd.f32 %v5943, %v6472
      %v6525 = vadd.f32 %v5948, %v6477
      %v6526 = vadd.f32 %v5951, %v6480
      %v6527 = vadd.f32 %v5956, %v6485
      %v6528 = vadd.f32 %v5959, %v6488
      %v6529 = vadd.f32 %v5964, %v6493
      %v6530 = vadd.f32 %v5967, %v6496
      %v6531 = vld [vmem:[%s427] sm:$0xf8]
      %v6532 = vld [vmem:[%s427 + $0x8] sm:$0xf]
      %v6533 = vld [vmem:[%s427 + $0x10] sm:$0xf8]
      %v6534 = vld [vmem:[%s427 + $0x18] sm:$0xf]
      %v6535 = vld [vmem:[%s427 + $0x20] sm:$0xf8]
      %v6536 = vld [vmem:[%s427 + $0x28] sm:$0xf]
      %v6537 = vld [vmem:[%s427 + $0x30] sm:$0xf8]
      %v6538 = vld [vmem:[%s427 + $0x38] sm:$0xf]
      %v6539 = vld [vmem:[%s427 + $0x40] sm:$0xf8]
      %v6540 = vld [vmem:[%s427 + $0x48] sm:$0xf]
      %v6541 = vld [vmem:[%s427 + $0x50] sm:$0xf8]
      %v6542 = vld [vmem:[%s427 + $0x58] sm:$0xf]
      %v6543 = vld [vmem:[%s427 + $0x60] sm:$0xf8]
      %v6544 = vld [vmem:[%s427 + $0x68] sm:$0xf]
      %v6545 = vld [vmem:[%s427 + $0x70] sm:$0xf8]
      %v6546 = vld [vmem:[%s427 + $0x78] sm:$0xf]
      %v6547 = vld [vmem:[%s427 + $0x80] sm:$0xf8]
      %v6548 = vld [vmem:[%s427 + $0x88] sm:$0xf]
      %v6549 = vld [vmem:[%s427 + $0x90] sm:$0xf8]
      %v6550 = vld [vmem:[%s427 + $0x98] sm:$0xf]
      %v6551 = vld [vmem:[%s427 + $0xa0] sm:$0xf8]
      %v6552 = vld [vmem:[%s427 + $0xa8] sm:$0xf]
      %v6553 = vld [vmem:[%s427 + $0xb0] sm:$0xf8]
      %v6554 = vld [vmem:[%s427 + $0xb8] sm:$0xf]
      %v6555 = vld [vmem:[%s427 + $0xc0] sm:$0xf8]
      %v6556 = vld [vmem:[%s427 + $0xc8] sm:$0xf]
      %v6557 = vld [vmem:[%s427 + $0xd0] sm:$0xf8]
      %v6558 = vld [vmem:[%s427 + $0xd8] sm:$0xf]
      %v6559 = vld [vmem:[%s427 + $0xe0] sm:$0xf8]
      %v6560 = vld [vmem:[%s427 + $0xe8] sm:$0xf]
      %v6561 = vld [vmem:[%s427 + $0xf0] sm:$0xf8]
      %v6562 = vld [vmem:[%s427 + $0xf8] sm:$0xf]
      %v6564 = vshrl.u32 %v6531, 16
      %v6566 = vrot.slane %v6564, 3
      %v6567 = vshll.u32 %v6531, 16
      %v6569 = vrot.slane %v6567, 4
      %v6570 = vor.u32 %v6566, %v6569
      %v6572 = vshrl.u32 %v6532, 16
      %v6574 = vrot.slane %v6572, 3
      %v6575 = vshll.u32 %v6532, 16
      %v6577 = vrot.slane %v6575, 4
      %v6578 = vor.u32 %v6574, %v6577
      %v6579 = vsel %vm492, %v6570, %v6578
      %v6581 = vshrl.u32 %v6533, 16
      %v6583 = vrot.slane %v6581, 3
      %v6584 = vshll.u32 %v6533, 16
      %v6586 = vrot.slane %v6584, 4
      %v6587 = vor.u32 %v6583, %v6586
      %v6589 = vshrl.u32 %v6534, 16
      %v6591 = vrot.slane %v6589, 3
      %v6592 = vshll.u32 %v6534, 16
      %v6594 = vrot.slane %v6592, 4
      %v6595 = vor.u32 %v6591, %v6594
      %v6596 = vsel %vm492, %v6587, %v6595
      %v6598 = vshrl.u32 %v6535, 16
      %v6600 = vrot.slane %v6598, 3
      %v6601 = vshll.u32 %v6535, 16
      %v6603 = vrot.slane %v6601, 4
      %v6604 = vor.u32 %v6600, %v6603
      %v6606 = vshrl.u32 %v6536, 16
      %v6608 = vrot.slane %v6606, 3
      %v6609 = vshll.u32 %v6536, 16
      %v6611 = vrot.slane %v6609, 4
      %v6612 = vor.u32 %v6608, %v6611
      %v6613 = vsel %vm492, %v6604, %v6612
      %v6615 = vshrl.u32 %v6537, 16
      %v6617 = vrot.slane %v6615, 3
      %v6618 = vshll.u32 %v6537, 16
      %v6620 = vrot.slane %v6618, 4
      %v6621 = vor.u32 %v6617, %v6620
      %v6623 = vshrl.u32 %v6538, 16
      %v6625 = vrot.slane %v6623, 3
      %v6626 = vshll.u32 %v6538, 16
      %v6628 = vrot.slane %v6626, 4
      %v6629 = vor.u32 %v6625, %v6628
      %v6630 = vsel %vm492, %v6621, %v6629
      %v6632 = vshrl.u32 %v6539, 16
      %v6634 = vrot.slane %v6632, 3
      %v6635 = vshll.u32 %v6539, 16
      %v6637 = vrot.slane %v6635, 4
      %v6638 = vor.u32 %v6634, %v6637
      %v6640 = vshrl.u32 %v6540, 16
      %v6642 = vrot.slane %v6640, 3
      %v6643 = vshll.u32 %v6540, 16
      %v6645 = vrot.slane %v6643, 4
      %v6646 = vor.u32 %v6642, %v6645
      %v6647 = vsel %vm492, %v6638, %v6646
      %v6649 = vshrl.u32 %v6541, 16
      %v6651 = vrot.slane %v6649, 3
      %v6652 = vshll.u32 %v6541, 16
      %v6654 = vrot.slane %v6652, 4
      %v6655 = vor.u32 %v6651, %v6654
      %v6657 = vshrl.u32 %v6542, 16
      %v6659 = vrot.slane %v6657, 3
      %v6660 = vshll.u32 %v6542, 16
      %v6662 = vrot.slane %v6660, 4
      %v6663 = vor.u32 %v6659, %v6662
      %v6664 = vsel %vm492, %v6655, %v6663
      %v6666 = vshrl.u32 %v6543, 16
      %v6668 = vrot.slane %v6666, 3
      %v6669 = vshll.u32 %v6543, 16
      %v6671 = vrot.slane %v6669, 4
      %v6672 = vor.u32 %v6668, %v6671
      %v6674 = vshrl.u32 %v6544, 16
      %v6676 = vrot.slane %v6674, 3
      %v6677 = vshll.u32 %v6544, 16
      %v6679 = vrot.slane %v6677, 4
      %v6680 = vor.u32 %v6676, %v6679
      %v6681 = vsel %vm492, %v6672, %v6680
      %v6683 = vshrl.u32 %v6545, 16
      %v6685 = vrot.slane %v6683, 3
      %v6686 = vshll.u32 %v6545, 16
      %v6688 = vrot.slane %v6686, 4
      %v6689 = vor.u32 %v6685, %v6688
      %v6691 = vshrl.u32 %v6546, 16
      %v6693 = vrot.slane %v6691, 3
      %v6694 = vshll.u32 %v6546, 16
      %v6696 = vrot.slane %v6694, 4
      %v6697 = vor.u32 %v6693, %v6696
      %v6698 = vsel %vm492, %v6689, %v6697
      %v6700 = vshrl.u32 %v6547, 16
      %v6702 = vrot.slane %v6700, 3
      %v6703 = vshll.u32 %v6547, 16
      %v6705 = vrot.slane %v6703, 4
      %v6706 = vor.u32 %v6702, %v6705
      %v6708 = vshrl.u32 %v6548, 16
      %v6710 = vrot.slane %v6708, 3
      %v6711 = vshll.u32 %v6548, 16
      %v6713 = vrot.slane %v6711, 4
      %v6714 = vor.u32 %v6710, %v6713
      %v6715 = vsel %vm492, %v6706, %v6714
      %v6717 = vshrl.u32 %v6549, 16
      %v6719 = vrot.slane %v6717, 3
      %v6720 = vshll.u32 %v6549, 16
      %v6722 = vrot.slane %v6720, 4
      %v6723 = vor.u32 %v6719, %v6722
      %v6725 = vshrl.u32 %v6550, 16
      %v6727 = vrot.slane %v6725, 3
      %v6728 = vshll.u32 %v6550, 16
      %v6730 = vrot.slane %v6728, 4
      %v6731 = vor.u32 %v6727, %v6730
      %v6732 = vsel %vm492, %v6723, %v6731
      %v6734 = vshrl.u32 %v6551, 16
      %v6736 = vrot.slane %v6734, 3
      %v6737 = vshll.u32 %v6551, 16
      %v6739 = vrot.slane %v6737, 4
      %v6740 = vor.u32 %v6736, %v6739
      %v6742 = vshrl.u32 %v6552, 16
      %v6744 = vrot.slane %v6742, 3
      %v6745 = vshll.u32 %v6552, 16
      %v6747 = vrot.slane %v6745, 4
      %v6748 = vor.u32 %v6744, %v6747
      %v6749 = vsel %vm492, %v6740, %v6748
      %v6751 = vshrl.u32 %v6553, 16
      %v6753 = vrot.slane %v6751, 3
      %v6754 = vshll.u32 %v6553, 16
      %v6756 = vrot.slane %v6754, 4
      %v6757 = vor.u32 %v6753, %v6756
      %v6759 = vshrl.u32 %v6554, 16
      %v6761 = vrot.slane %v6759, 3
      %v6762 = vshll.u32 %v6554, 16
      %v6764 = vrot.slane %v6762, 4
      %v6765 = vor.u32 %v6761, %v6764
      %v6766 = vsel %vm492, %v6757, %v6765
      %v6768 = vshrl.u32 %v6555, 16
      %v6770 = vrot.slane %v6768, 3
      %v6771 = vshll.u32 %v6555, 16
      %v6773 = vrot.slane %v6771, 4
      %v6774 = vor.u32 %v6770, %v6773
      %v6776 = vshrl.u32 %v6556, 16
      %v6778 = vrot.slane %v6776, 3
      %v6779 = vshll.u32 %v6556, 16
      %v6781 = vrot.slane %v6779, 4
      %v6782 = vor.u32 %v6778, %v6781
      %v6783 = vsel %vm492, %v6774, %v6782
      %v6785 = vshrl.u32 %v6557, 16
      %v6787 = vrot.slane %v6785, 3
      %v6788 = vshll.u32 %v6557, 16
      %v6790 = vrot.slane %v6788, 4
      %v6791 = vor.u32 %v6787, %v6790
      %v6793 = vshrl.u32 %v6558, 16
      %v6795 = vrot.slane %v6793, 3
      %v6796 = vshll.u32 %v6558, 16
      %v6798 = vrot.slane %v6796, 4
      %v6799 = vor.u32 %v6795, %v6798
      %v6800 = vsel %vm492, %v6791, %v6799
      %v6802 = vshrl.u32 %v6559, 16
      %v6804 = vrot.slane %v6802, 3
      %v6805 = vshll.u32 %v6559, 16
      %v6807 = vrot.slane %v6805, 4
      %v6808 = vor.u32 %v6804, %v6807
      %v6810 = vshrl.u32 %v6560, 16
      %v6812 = vrot.slane %v6810, 3
      %v6813 = vshll.u32 %v6560, 16
      %v6815 = vrot.slane %v6813, 4
      %v6816 = vor.u32 %v6812, %v6815
      %v6817 = vsel %vm492, %v6808, %v6816
      %v6819 = vshrl.u32 %v6561, 16
      %v6821 = vrot.slane %v6819, 3
      %v6822 = vshll.u32 %v6561, 16
      %v6824 = vrot.slane %v6822, 4
      %v6825 = vor.u32 %v6821, %v6824
      %v6827 = vshrl.u32 %v6562, 16
      %v6829 = vrot.slane %v6827, 3
      %v6830 = vshll.u32 %v6562, 16
      %v6832 = vrot.slane %v6830, 4
      %v6833 = vor.u32 %v6829, %v6832
      %v6834 = vsel %vm492, %v6825, %v6833
      %v6851 = vld [vmem:[%s2 + $0xc0] sm:$0xf]
      %v6852 = vld [vmem:[%s2 + $0xc4] sm:$0xf]
      %v6853 = vld [vmem:[%s2 + $0xc8] sm:$0xf]
      %v6854 = vld [vmem:[%s2 + $0xcc] sm:$0xf]
      %v6855 = vld [vmem:[%s2 + $0xd0] sm:$0xf]
      %v6856 = vld [vmem:[%s2 + $0xd4] sm:$0xf]
      %v6857 = vld [vmem:[%s2 + $0xd8] sm:$0xf]
      %v6858 = vld [vmem:[%s2 + $0xdc] sm:$0xf]
      %v6859 = vld [vmem:[%s2 + $0xe0] sm:$0xf]
      %v6860 = vld [vmem:[%s2 + $0xe4] sm:$0xf]
      %v6861 = vld [vmem:[%s2 + $0xe8] sm:$0xf]
      %v6862 = vld [vmem:[%s2 + $0xec] sm:$0xf]
      %v6863 = vld [vmem:[%s2 + $0xf0] sm:$0xf]
      %v6864 = vld [vmem:[%s2 + $0xf4] sm:$0xf]
      %v6865 = vld [vmem:[%s2 + $0xf8] sm:$0xf]
      %v6866 = vld [vmem:[%s2 + $0xfc] sm:$0xf]
      %v6883 = vunpack.c.l.b16 %v6851
      %v6884 = vunpack.c.l.b16 %v6852
      %v6885 = vunpack.c.l.b16 %v6853
      %v6886 = vunpack.c.l.b16 %v6854
      %v6887 = vunpack.c.l.b16 %v6855
      %v6888 = vunpack.c.l.b16 %v6856
      %v6889 = vunpack.c.l.b16 %v6857
      %v6890 = vunpack.c.l.b16 %v6858
      %v6891 = vunpack.c.l.b16 %v6859
      %v6892 = vunpack.c.l.b16 %v6860
      %v6893 = vunpack.c.l.b16 %v6861
      %v6894 = vunpack.c.l.b16 %v6862
      %v6895 = vunpack.c.l.b16 %v6863
      %v6896 = vunpack.c.l.b16 %v6864
      %v6897 = vunpack.c.l.b16 %v6865
      %v6898 = vunpack.c.l.b16 %v6866
      %v6899 = vpack.c.b16 %v6884, %v6883
      %v6900 = vpack.c.b16 %v6886, %v6885
      %v6901 = vpack.c.b16 %v6888, %v6887
      %v6902 = vpack.c.b16 %v6890, %v6889
      %v6903 = vpack.c.b16 %v6892, %v6891
      %v6904 = vpack.c.b16 %v6894, %v6893
      %v6905 = vpack.c.b16 %v6896, %v6895
      %v6906 = vpack.c.b16 %v6898, %v6897
      %6915 = vmatprep.subr.bf16.mxu0 0
      %6916 = vmatpush1.bf16.msra.mxu0 %v6899
      %6917 = vmatprep.subr.bf16.mxu0 0
      %6918 = vmatpush1.bf16.msra.mxu0 %v6900
      %6919 = vmatprep.subr.bf16.mxu0 0
      %6920 = vmatpush1.bf16.msra.mxu0 %v6901
      %6921 = vmatprep.subr.bf16.mxu0 0
      %6922 = vmatpush1.bf16.msra.mxu0 %v6902
      %6923 = vmatprep.subr.bf16.mxu0 0
      %6924 = vmatpush1.bf16.msra.mxu0 %v6903
      %6925 = vmatprep.subr.bf16.mxu0 0
      %6926 = vmatpush1.bf16.msra.mxu0 %v6904
      %6927 = vmatprep.subr.bf16.mxu0 0
      %6928 = vmatpush1.bf16.msra.mxu0 %v6905
      %6929 = vmatprep.subr.bf16.mxu0 0
      %6930 = vmatpush1.bf16.msra.mxu0 %v6906
      %6931 = vmatprep.subr.bf16.mxu0 0
      %6932 = vmatpush1.bf16.msra.mxu0 0
      %6933 = vmatprep.subr.bf16.mxu0 0
      %6934 = vmatpush1.bf16.msra.mxu0 0
      %6935 = vmatprep.subr.bf16.mxu0 0
      %6936 = vmatpush1.bf16.msra.mxu0 0
      %6937 = vmatprep.subr.bf16.mxu0 0
      %6938 = vmatpush1.bf16.msra.mxu0 0
      %6939 = vmatprep.subr.bf16.mxu0 0
      %6940 = vmatpush1.bf16.msra.mxu0 0
      %6941 = vmatprep.subr.bf16.mxu0 0
      %6942 = vmatpush1.bf16.msra.mxu0 0
      %6943 = vmatprep.subr.bf16.mxu0 0
      %6944 = vmatpush1.bf16.msra.mxu0 0
      %6945 = vmatprep.subr.bf16.mxu0 0
      %6946 = vmatpush1.bf16.msra.mxu0 0
      %6947 = vmatprep.mubr.bf16.mxu0 0
      %6948 = vmatmul.mubr.bf16.gmra.mrb[0].mxu0 %v6579
      %v6949 = vpop.f32.mrb[0].mxu0
      %v6950 = vadd.f32 0.0, %v6949
      %v6951 = vpop.f32.mrb[0].mxu0
      %v6952 = vpop.f32.mrb[0].mxu0
      %v6953 = vadd.f32 0.0, %v6952
      %v6954 = vpop.f32.mrb[0].mxu0
      %6955 = vmatprep.mubr.bf16.mxu0 0
      %6956 = vmatmul.mubr.bf16.gmra.mrb[0].mxu0 %v6596
      %v6957 = vpop.f32.mrb[0].mxu0
      %v6958 = vadd.f32 0.0, %v6957
      %v6959 = vpop.f32.mrb[0].mxu0
      %v6960 = vpop.f32.mrb[0].mxu0
      %v6961 = vadd.f32 0.0, %v6960
      %v6962 = vpop.f32.mrb[0].mxu0
      %6963 = vmatprep.mubr.bf16.mxu0 0
      %6964 = vmatmul.mubr.bf16.gmra.mrb[0].mxu0 %v6613
      %v6965 = vpop.f32.mrb[0].mxu0
      %v6966 = vadd.f32 0.0, %v6965
      %v6967 = vpop.f32.mrb[0].mxu0
      %v6968 = vpop.f32.mrb[0].mxu0
      %v6969 = vadd.f32 0.0, %v6968
      %v6970 = vpop.f32.mrb[0].mxu0
      %6971 = vmatprep.mubr.bf16.mxu0 0
      %6972 = vmatmul.mubr.bf16.gmra.mrb[0].mxu0 %v6630
      %v6973 = vpop.f32.mrb[0].mxu0
      %v6974 = vadd.f32 0.0, %v6973
      %v6975 = vpop.f32.mrb[0].mxu0
      %v6976 = vpop.f32.mrb[0].mxu0
      %v6977 = vadd.f32 0.0, %v6976
      %v6978 = vpop.f32.mrb[0].mxu0
      %6979 = vmatprep.mubr.bf16.mxu0 0
      %6980 = vmatmul.mubr.bf16.gmra.mrb[0].mxu0 %v6647
      %v6981 = vpop.f32.mrb[0].mxu0
      %v6982 = vadd.f32 0.0, %v6981
      %v6983 = vpop.f32.mrb[0].mxu0
      %v6984 = vpop.f32.mrb[0].mxu0
      %v6985 = vadd.f32 0.0, %v6984
      %v6986 = vpop.f32.mrb[0].mxu0
      %6987 = vmatprep.mubr.bf16.mxu0 0
      %6988 = vmatmul.mubr.bf16.gmra.mrb[0].mxu0 %v6664
      %v6989 = vpop.f32.mrb[0].mxu0
      %v6990 = vadd.f32 0.0, %v6989
      %v6991 = vpop.f32.mrb[0].mxu0
      %v6992 = vpop.f32.mrb[0].mxu0
      %v6993 = vadd.f32 0.0, %v6992
      %v6994 = vpop.f32.mrb[0].mxu0
      %6995 = vmatprep.mubr.bf16.mxu0 0
      %6996 = vmatmul.mubr.bf16.gmra.mrb[0].mxu0 %v6681
      %v6997 = vpop.f32.mrb[0].mxu0
      %v6998 = vadd.f32 0.0, %v6997
      %v6999 = vpop.f32.mrb[0].mxu0
      %v7000 = vpop.f32.mrb[0].mxu0
      %v7001 = vadd.f32 0.0, %v7000
      %v7002 = vpop.f32.mrb[0].mxu0
      %7003 = vmatprep.mubr.bf16.mxu0 0
      %7004 = vmatmul.mubr.bf16.gmra.mrb[0].mxu0 %v6698
      %v7005 = vpop.f32.mrb[0].mxu0
      %v7006 = vadd.f32 0.0, %v7005
      %v7007 = vpop.f32.mrb[0].mxu0
      %v7008 = vpop.f32.mrb[0].mxu0
      %v7009 = vadd.f32 0.0, %v7008
      %v7010 = vpop.f32.mrb[0].mxu0
      %7011 = vmatprep.mubr.bf16.mxu0 0
      %7012 = vmatmul.mubr.bf16.gmra.mrb[0].mxu0 %v6715
      %v7013 = vpop.f32.mrb[0].mxu0
      %v7014 = vadd.f32 0.0, %v7013
      %v7015 = vpop.f32.mrb[0].mxu0
      %v7016 = vpop.f32.mrb[0].mxu0
      %v7017 = vadd.f32 0.0, %v7016
      %v7018 = vpop.f32.mrb[0].mxu0
      %7019 = vmatprep.mubr.bf16.mxu0 0
      %7020 = vmatmul.mubr.bf16.gmra.mrb[0].mxu0 %v6732
      %v7021 = vpop.f32.mrb[0].mxu0
      %v7022 = vadd.f32 0.0, %v7021
      %v7023 = vpop.f32.mrb[0].mxu0
      %v7024 = vpop.f32.mrb[0].mxu0
      %v7025 = vadd.f32 0.0, %v7024
      %v7026 = vpop.f32.mrb[0].mxu0
      %7027 = vmatprep.mubr.bf16.mxu0 0
      %7028 = vmatmul.mubr.bf16.gmra.mrb[0].mxu0 %v6749
      %v7029 = vpop.f32.mrb[0].mxu0
      %v7030 = vadd.f32 0.0, %v7029
      %v7031 = vpop.f32.mrb[0].mxu0
      %v7032 = vpop.f32.mrb[0].mxu0
      %v7033 = vadd.f32 0.0, %v7032
      %v7034 = vpop.f32.mrb[0].mxu0
      %7035 = vmatprep.mubr.bf16.mxu0 0
      %7036 = vmatmul.mubr.bf16.gmra.mrb[0].mxu0 %v6766
      %v7037 = vpop.f32.mrb[0].mxu0
      %v7038 = vadd.f32 0.0, %v7037
      %v7039 = vpop.f32.mrb[0].mxu0
      %v7040 = vpop.f32.mrb[0].mxu0
      %v7041 = vadd.f32 0.0, %v7040
      %v7042 = vpop.f32.mrb[0].mxu0
      %7043 = vmatprep.mubr.bf16.mxu0 0
      %7044 = vmatmul.mubr.bf16.gmra.mrb[0].mxu0 %v6783
      %v7045 = vpop.f32.mrb[0].mxu0
      %v7046 = vadd.f32 0.0, %v7045
      %v7047 = vpop.f32.mrb[0].mxu0
      %v7048 = vpop.f32.mrb[0].mxu0
      %v7049 = vadd.f32 0.0, %v7048
      %v7050 = vpop.f32.mrb[0].mxu0
      %7051 = vmatprep.mubr.bf16.mxu0 0
      %7052 = vmatmul.mubr.bf16.gmra.mrb[0].mxu0 %v6800
      %v7053 = vpop.f32.mrb[0].mxu0
      %v7054 = vadd.f32 0.0, %v7053
      %v7055 = vpop.f32.mrb[0].mxu0
      %v7056 = vpop.f32.mrb[0].mxu0
      %v7057 = vadd.f32 0.0, %v7056
      %v7058 = vpop.f32.mrb[0].mxu0
      %7059 = vmatprep.mubr.bf16.mxu0 0
      %7060 = vmatmul.mubr.bf16.gmra.mrb[0].mxu0 %v6817
      %v7061 = vpop.f32.mrb[0].mxu0
      %v7062 = vadd.f32 0.0, %v7061
      %v7063 = vpop.f32.mrb[0].mxu0
      %v7064 = vpop.f32.mrb[0].mxu0
      %v7065 = vadd.f32 0.0, %v7064
      %v7066 = vpop.f32.mrb[0].mxu0
      %7067 = vmatprep.mubr.bf16.mxu0 0
      %7068 = vmatmul.mubr.bf16.gmra.mrb[0].mxu0 %v6834
      %v7069 = vpop.f32.mrb[0].mxu0
      %v7070 = vadd.f32 0.0, %v7069
      %v7071 = vpop.f32.mrb[0].mxu0
      %v7072 = vpop.f32.mrb[0].mxu0
      %v7073 = vadd.f32 0.0, %v7072
      %v7074 = vpop.f32.mrb[0].mxu0
      %7075 = vdwg.mxu0
      %v7076 = vadd.f32 %v6499, %v6950
      %v7077 = vadd.f32 %v6500, %v6953
      %v7078 = vadd.f32 %v6501, %v6958
      %v7079 = vadd.f32 %v6502, %v6961
      %v7080 = vadd.f32 %v6503, %v6966
      %v7081 = vadd.f32 %v6504, %v6969
      %v7082 = vadd.f32 %v6505, %v6974
      %v7083 = vadd.f32 %v6506, %v6977
      %v7084 = vadd.f32 %v6507, %v6982
      %v7085 = vadd.f32 %v6508, %v6985
      %v7086 = vadd.f32 %v6509, %v6990
      %v7087 = vadd.f32 %v6510, %v6993
      %v7088 = vadd.f32 %v6511, %v6998
      %v7089 = vadd.f32 %v6512, %v7001
      %v7090 = vadd.f32 %v6513, %v7006
      %v7091 = vadd.f32 %v6514, %v7009
      %v7092 = vadd.f32 %v6515, %v7014
      %v7093 = vadd.f32 %v6516, %v7017
      %v7094 = vadd.f32 %v6517, %v7022
      %v7095 = vadd.f32 %v6518, %v7025
      %v7096 = vadd.f32 %v6519, %v7030
      %v7097 = vadd.f32 %v6520, %v7033
      %v7098 = vadd.f32 %v6521, %v7038
      %v7099 = vadd.f32 %v6522, %v7041
      %v7100 = vadd.f32 %v6523, %v7046
      %v7101 = vadd.f32 %v6524, %v7049
      %v7102 = vadd.f32 %v6525, %v7054
      %v7103 = vadd.f32 %v6526, %v7057
      %v7104 = vadd.f32 %v6527, %v7062
      %v7105 = vadd.f32 %v6528, %v7065
      %v7106 = vadd.f32 %v6529, %v7070
      %v7107 = vadd.f32 %v6530, %v7073
      %v7108 = vld [vmem:[%s427] sm:$0xf0]
      %v7109 = vld [vmem:[%s427 + $0x10] sm:$0xf0]
      %v7110 = vld [vmem:[%s427 + $0x20] sm:$0xf0]
      %v7111 = vld [vmem:[%s427 + $0x30] sm:$0xf0]
      %v7112 = vld [vmem:[%s427 + $0x40] sm:$0xf0]
      %v7113 = vld [vmem:[%s427 + $0x50] sm:$0xf0]
      %v7114 = vld [vmem:[%s427 + $0x60] sm:$0xf0]
      %v7115 = vld [vmem:[%s427 + $0x70] sm:$0xf0]
      %v7116 = vld [vmem:[%s427 + $0x80] sm:$0xf0]
      %v7117 = vld [vmem:[%s427 + $0x90] sm:$0xf0]
      %v7118 = vld [vmem:[%s427 + $0xa0] sm:$0xf0]
      %v7119 = vld [vmem:[%s427 + $0xb0] sm:$0xf0]
      %v7120 = vld [vmem:[%s427 + $0xc0] sm:$0xf0]
      %v7121 = vld [vmem:[%s427 + $0xd0] sm:$0xf0]
      %v7122 = vld [vmem:[%s427 + $0xe0] sm:$0xf0]
      %v7123 = vld [vmem:[%s427 + $0xf0] sm:$0xf0]
      %v7156 = vrot.slane %v7108, 4
      %v7157 = vrot.slane %v6532, 4
      %v7158 = vsel %vm845, %v7156, %v7157
      %v7159 = vrot.slane %v7109, 4
      %v7160 = vrot.slane %v6534, 4
      %v7161 = vsel %vm845, %v7159, %v7160
      %v7162 = vrot.slane %v7110, 4
      %v7163 = vrot.slane %v6536, 4
      %v7164 = vsel %vm845, %v7162, %v7163
      %v7165 = vrot.slane %v7111, 4
      %v7166 = vrot.slane %v6538, 4
      %v7167 = vsel %vm845, %v7165, %v7166
      %v7168 = vrot.slane %v7112, 4
      %v7169 = vrot.slane %v6540, 4
      %v7170 = vsel %vm845, %v7168, %v7169
      %v7171 = vrot.slane %v7113, 4
      %v7172 = vrot.slane %v6542, 4
      %v7173 = vsel %vm845, %v7171, %v7172
      %v7174 = vrot.slane %v7114, 4
      %v7175 = vrot.slane %v6544, 4
      %v7176 = vsel %vm845, %v7174, %v7175
      %v7177 = vrot.slane %v7115, 4
      %v7178 = vrot.slane %v6546, 4
      %v7179 = vsel %vm845, %v7177, %v7178
      %v7180 = vrot.slane %v7116, 4
      %v7181 = vrot.slane %v6548, 4
      %v7182 = vsel %vm845, %v7180, %v7181
      %v7183 = vrot.slane %v7117, 4
      %v7184 = vrot.slane %v6550, 4
      %v7185 = vsel %vm845, %v7183, %v7184
      %v7186 = vrot.slane %v7118, 4
      %v7187 = vrot.slane %v6552, 4
      %v7188 = vsel %vm845, %v7186, %v7187
      %v7189 = vrot.slane %v7119, 4
      %v7190 = vrot.slane %v6554, 4
      %v7191 = vsel %vm845, %v7189, %v7190
      %v7192 = vrot.slane %v7120, 4
      %v7193 = vrot.slane %v6556, 4
      %v7194 = vsel %vm845, %v7192, %v7193
      %v7195 = vrot.slane %v7121, 4
      %v7196 = vrot.slane %v6558, 4
      %v7197 = vsel %vm845, %v7195, %v7196
      %v7198 = vrot.slane %v7122, 4
      %v7199 = vrot.slane %v6560, 4
      %v7200 = vsel %vm845, %v7198, %v7199
      %v7201 = vrot.slane %v7123, 4
      %v7202 = vrot.slane %v6562, 4
      %v7203 = vsel %vm845, %v7201, %v7202
      %v7220 = vld [vmem:[%s2 + $0x100] sm:$0xf]
      %v7221 = vld [vmem:[%s2 + $0x104] sm:$0xf]
      %v7222 = vld [vmem:[%s2 + $0x108] sm:$0xf]
      %v7223 = vld [vmem:[%s2 + $0x10c] sm:$0xf]
      %v7224 = vld [vmem:[%s2 + $0x110] sm:$0xf]
      %v7225 = vld [vmem:[%s2 + $0x114] sm:$0xf]
      %v7226 = vld [vmem:[%s2 + $0x118] sm:$0xf]
      %v7227 = vld [vmem:[%s2 + $0x11c] sm:$0xf]
      %v7228 = vld [vmem:[%s2 + $0x120] sm:$0xf]
      %v7229 = vld [vmem:[%s2 + $0x124] sm:$0xf]
      %v7230 = vld [vmem:[%s2 + $0x128] sm:$0xf]
      %v7231 = vld [vmem:[%s2 + $0x12c] sm:$0xf]
      %v7232 = vld [vmem:[%s2 + $0x130] sm:$0xf]
      %v7233 = vld [vmem:[%s2 + $0x134] sm:$0xf]
      %v7234 = vld [vmem:[%s2 + $0x138] sm:$0xf]
      %v7235 = vld [vmem:[%s2 + $0x13c] sm:$0xf]
      %v7252 = vunpack.c.l.b16 %v7220
      %v7253 = vunpack.c.l.b16 %v7221
      %v7254 = vunpack.c.l.b16 %v7222
      %v7255 = vunpack.c.l.b16 %v7223
      %v7256 = vunpack.c.l.b16 %v7224
      %v7257 = vunpack.c.l.b16 %v7225
      %v7258 = vunpack.c.l.b16 %v7226
      %v7259 = vunpack.c.l.b16 %v7227
      %v7260 = vunpack.c.l.b16 %v7228
      %v7261 = vunpack.c.l.b16 %v7229
      %v7262 = vunpack.c.l.b16 %v7230
      %v7263 = vunpack.c.l.b16 %v7231
      %v7264 = vunpack.c.l.b16 %v7232
      %v7265 = vunpack.c.l.b16 %v7233
      %v7266 = vunpack.c.l.b16 %v7234
      %v7267 = vunpack.c.l.b16 %v7235
      %v7268 = vpack.c.b16 %v7253, %v7252
      %v7269 = vpack.c.b16 %v7255, %v7254
      %v7270 = vpack.c.b16 %v7257, %v7256
      %v7271 = vpack.c.b16 %v7259, %v7258
      %v7272 = vpack.c.b16 %v7261, %v7260
      %v7273 = vpack.c.b16 %v7263, %v7262
      %v7274 = vpack.c.b16 %v7265, %v7264
      %v7275 = vpack.c.b16 %v7267, %v7266
      %7284 = vmatprep.subr.bf16.mxu0 0
      %7285 = vmatpush1.bf16.msra.mxu0 %v7268
      %7286 = vmatprep.subr.bf16.mxu0 0
      %7287 = vmatpush1.bf16.msra.mxu0 %v7269
      %7288 = vmatprep.subr.bf16.mxu0 0
      %7289 = vmatpush1.bf16.msra.mxu0 %v7270
      %7290 = vmatprep.subr.bf16.mxu0 0
      %7291 = vmatpush1.bf16.msra.mxu0 %v7271
      %7292 = vmatprep.subr.bf16.mxu0 0
      %7293 = vmatpush1.bf16.msra.mxu0 %v7272
      %7294 = vmatprep.subr.bf16.mxu0 0
      %7295 = vmatpush1.bf16.msra.mxu0 %v7273
      %7296 = vmatprep.subr.bf16.mxu0 0
      %7297 = vmatpush1.bf16.msra.mxu0 %v7274
      %7298 = vmatprep.subr.bf16.mxu0 0
      %7299 = vmatpush1.bf16.msra.mxu0 %v7275
      %7300 = vmatprep.subr.bf16.mxu0 0
      %7301 = vmatpush1.bf16.msra.mxu0 0
      %7302 = vmatprep.subr.bf16.mxu0 0
      %7303 = vmatpush1.bf16.msra.mxu0 0
      %7304 = vmatprep.subr.bf16.mxu0 0
      %7305 = vmatpush1.bf16.msra.mxu0 0
      %7306 = vmatprep.subr.bf16.mxu0 0
      %7307 = vmatpush1.bf16.msra.mxu0 0
      %7308 = vmatprep.subr.bf16.mxu0 0
      %7309 = vmatpush1.bf16.msra.mxu0 0
      %7310 = vmatprep.subr.bf16.mxu0 0
      %7311 = vmatpush1.bf16.msra.mxu0 0
      %7312 = vmatprep.subr.bf16.mxu0 0
      %7313 = vmatpush1.bf16.msra.mxu0 0
      %7314 = vmatprep.subr.bf16.mxu0 0
      %7315 = vmatpush1.bf16.msra.mxu0 0
      %7316 = vmatprep.mubr.bf16.mxu0 0
      %7317 = vmatmul.mubr.bf16.gmra.mrb[0].mxu0 %v7158
      %v7318 = vpop.f32.mrb[0].mxu0
      %v7319 = vadd.f32 0.0, %v7318
      %v7320 = vpop.f32.mrb[0].mxu0
      %v7321 = vpop.f32.mrb[0].mxu0
      %v7322 = vadd.f32 0.0, %v7321
      %v7323 = vpop.f32.mrb[0].mxu0
      %7324 = vmatprep.mubr.bf16.mxu0 0
      %7325 = vmatmul.mubr.bf16.gmra.mrb[0].mxu0 %v7161
      %v7326 = vpop.f32.mrb[0].mxu0
      %v7327 = vadd.f32 0.0, %v7326
      %v7328 = vpop.f32.mrb[0].mxu0
      %v7329 = vpop.f32.mrb[0].mxu0
      %v7330 = vadd.f32 0.0, %v7329
      %v7331 = vpop.f32.mrb[0].mxu0
      %7332 = vmatprep.mubr.bf16.mxu0 0
      %7333 = vmatmul.mubr.bf16.gmra.mrb[0].mxu0 %v7164
      %v7334 = vpop.f32.mrb[0].mxu0
      %v7335 = vadd.f32 0.0, %v7334
      %v7336 = vpop.f32.mrb[0].mxu0
      %v7337 = vpop.f32.mrb[0].mxu0
      %v7338 = vadd.f32 0.0, %v7337
      %v7339 = vpop.f32.mrb[0].mxu0
      %7340 = vmatprep.mubr.bf16.mxu0 0
      %7341 = vmatmul.mubr.bf16.gmra.mrb[0].mxu0 %v7167
      %v7342 = vpop.f32.mrb[0].mxu0
      %v7343 = vadd.f32 0.0, %v7342
      %v7344 = vpop.f32.mrb[0].mxu0
      %v7345 = vpop.f32.mrb[0].mxu0
      %v7346 = vadd.f32 0.0, %v7345
      %v7347 = vpop.f32.mrb[0].mxu0
      %7348 = vmatprep.mubr.bf16.mxu0 0
      %7349 = vmatmul.mubr.bf16.gmra.mrb[0].mxu0 %v7170
      %v7350 = vpop.f32.mrb[0].mxu0
      %v7351 = vadd.f32 0.0, %v7350
      %v7352 = vpop.f32.mrb[0].mxu0
      %v7353 = vpop.f32.mrb[0].mxu0
      %v7354 = vadd.f32 0.0, %v7353
      %v7355 = vpop.f32.mrb[0].mxu0
      %7356 = vmatprep.mubr.bf16.mxu0 0
      %7357 = vmatmul.mubr.bf16.gmra.mrb[0].mxu0 %v7173
      %v7358 = vpop.f32.mrb[0].mxu0
      %v7359 = vadd.f32 0.0, %v7358
      %v7360 = vpop.f32.mrb[0].mxu0
      %v7361 = vpop.f32.mrb[0].mxu0
      %v7362 = vadd.f32 0.0, %v7361
      %v7363 = vpop.f32.mrb[0].mxu0
      %7364 = vmatprep.mubr.bf16.mxu0 0
      %7365 = vmatmul.mubr.bf16.gmra.mrb[0].mxu0 %v7176
      %v7366 = vpop.f32.mrb[0].mxu0
      %v7367 = vadd.f32 0.0, %v7366
      %v7368 = vpop.f32.mrb[0].mxu0
      %v7369 = vpop.f32.mrb[0].mxu0
      %v7370 = vadd.f32 0.0, %v7369
      %v7371 = vpop.f32.mrb[0].mxu0
      %7372 = vmatprep.mubr.bf16.mxu0 0
      %7373 = vmatmul.mubr.bf16.gmra.mrb[0].mxu0 %v7179
      %v7374 = vpop.f32.mrb[0].mxu0
      %v7375 = vadd.f32 0.0, %v7374
      %v7376 = vpop.f32.mrb[0].mxu0
      %v7377 = vpop.f32.mrb[0].mxu0
      %v7378 = vadd.f32 0.0, %v7377
      %v7379 = vpop.f32.mrb[0].mxu0
      %7380 = vmatprep.mubr.bf16.mxu0 0
      %7381 = vmatmul.mubr.bf16.gmra.mrb[0].mxu0 %v7182
      %v7382 = vpop.f32.mrb[0].mxu0
      %v7383 = vadd.f32 0.0, %v7382
      %v7384 = vpop.f32.mrb[0].mxu0
      %v7385 = vpop.f32.mrb[0].mxu0
      %v7386 = vadd.f32 0.0, %v7385
      %v7387 = vpop.f32.mrb[0].mxu0
      %7388 = vmatprep.mubr.bf16.mxu0 0
      %7389 = vmatmul.mubr.bf16.gmra.mrb[0].mxu0 %v7185
      %v7390 = vpop.f32.mrb[0].mxu0
      %v7391 = vadd.f32 0.0, %v7390
      %v7392 = vpop.f32.mrb[0].mxu0
      %v7393 = vpop.f32.mrb[0].mxu0
      %v7394 = vadd.f32 0.0, %v7393
      %v7395 = vpop.f32.mrb[0].mxu0
      %7396 = vmatprep.mubr.bf16.mxu0 0
      %7397 = vmatmul.mubr.bf16.gmra.mrb[0].mxu0 %v7188
      %v7398 = vpop.f32.mrb[0].mxu0
      %v7399 = vadd.f32 0.0, %v7398
      %v7400 = vpop.f32.mrb[0].mxu0
      %v7401 = vpop.f32.mrb[0].mxu0
      %v7402 = vadd.f32 0.0, %v7401
      %v7403 = vpop.f32.mrb[0].mxu0
      %7404 = vmatprep.mubr.bf16.mxu0 0
      %7405 = vmatmul.mubr.bf16.gmra.mrb[0].mxu0 %v7191
      %v7406 = vpop.f32.mrb[0].mxu0
      %v7407 = vadd.f32 0.0, %v7406
      %v7408 = vpop.f32.mrb[0].mxu0
      %v7409 = vpop.f32.mrb[0].mxu0
      %v7410 = vadd.f32 0.0, %v7409
      %v7411 = vpop.f32.mrb[0].mxu0
      %7412 = vmatprep.mubr.bf16.mxu0 0
      %7413 = vmatmul.mubr.bf16.gmra.mrb[0].mxu0 %v7194
      %v7414 = vpop.f32.mrb[0].mxu0
      %v7415 = vadd.f32 0.0, %v7414
      %v7416 = vpop.f32.mrb[0].mxu0
      %v7417 = vpop.f32.mrb[0].mxu0
      %v7418 = vadd.f32 0.0, %v7417
      %v7419 = vpop.f32.mrb[0].mxu0
      %7420 = vmatprep.mubr.bf16.mxu0 0
      %7421 = vmatmul.mubr.bf16.gmra.mrb[0].mxu0 %v7197
      %v7422 = vpop.f32.mrb[0].mxu0
      %v7423 = vadd.f32 0.0, %v7422
      %v7424 = vpop.f32.mrb[0].mxu0
      %v7425 = vpop.f32.mrb[0].mxu0
      %v7426 = vadd.f32 0.0, %v7425
      %v7427 = vpop.f32.mrb[0].mxu0
      %7428 = vmatprep.mubr.bf16.mxu0 0
      %7429 = vmatmul.mubr.bf16.gmra.mrb[0].mxu0 %v7200
      %v7430 = vpop.f32.mrb[0].mxu0
      %v7431 = vadd.f32 0.0, %v7430
      %v7432 = vpop.f32.mrb[0].mxu0
      %v7433 = vpop.f32.mrb[0].mxu0
      %v7434 = vadd.f32 0.0, %v7433
      %v7435 = vpop.f32.mrb[0].mxu0
      %7436 = vmatprep.mubr.bf16.mxu0 0
      %7437 = vmatmul.mubr.bf16.gmra.mrb[0].mxu0 %v7203
      %v7438 = vpop.f32.mrb[0].mxu0
      %v7439 = vadd.f32 0.0, %v7438
      %v7440 = vpop.f32.mrb[0].mxu0
      %v7441 = vpop.f32.mrb[0].mxu0
      %v7442 = vadd.f32 0.0, %v7441
      %v7443 = vpop.f32.mrb[0].mxu0
      %7444 = vdwg.mxu0
      %v7445 = vadd.f32 %v7076, %v7319
      %v7446 = vadd.f32 %v7077, %v7322
      %v7447 = vadd.f32 %v7078, %v7327
      %v7448 = vadd.f32 %v7079, %v7330
      %v7449 = vadd.f32 %v7080, %v7335
      %v7450 = vadd.f32 %v7081, %v7338
      %v7451 = vadd.f32 %v7082, %v7343
      %v7452 = vadd.f32 %v7083, %v7346
      %v7453 = vadd.f32 %v7084, %v7351
      %v7454 = vadd.f32 %v7085, %v7354
      %v7455 = vadd.f32 %v7086, %v7359
      %v7456 = vadd.f32 %v7087, %v7362
      %v7457 = vadd.f32 %v7088, %v7367
      %v7458 = vadd.f32 %v7089, %v7370
      %v7459 = vadd.f32 %v7090, %v7375
      %v7460 = vadd.f32 %v7091, %v7378
      %v7461 = vadd.f32 %v7092, %v7383
      %v7462 = vadd.f32 %v7093, %v7386
      %v7463 = vadd.f32 %v7094, %v7391
      %v7464 = vadd.f32 %v7095, %v7394
      %v7465 = vadd.f32 %v7096, %v7399
      %v7466 = vadd.f32 %v7097, %v7402
      %v7467 = vadd.f32 %v7098, %v7407
      %v7468 = vadd.f32 %v7099, %v7410
      %v7469 = vadd.f32 %v7100, %v7415
      %v7470 = vadd.f32 %v7101, %v7418
      %v7471 = vadd.f32 %v7102, %v7423
      %v7472 = vadd.f32 %v7103, %v7426
      %v7473 = vadd.f32 %v7104, %v7431
      %v7474 = vadd.f32 %v7105, %v7434
      %v7475 = vadd.f32 %v7106, %v7439
      %v7476 = vadd.f32 %v7107, %v7442
      %v7477 = vld [vmem:[%s427 + $0x8] sm:$0x1f]
      %v7478 = vld [vmem:[%s427 + $0x18] sm:$0x1f]
      %v7479 = vld [vmem:[%s427 + $0x28] sm:$0x1f]
      %v7480 = vld [vmem:[%s427 + $0x38] sm:$0x1f]
      %v7481 = vld [vmem:[%s427 + $0x48] sm:$0x1f]
      %v7482 = vld [vmem:[%s427 + $0x58] sm:$0x1f]
      %v7483 = vld [vmem:[%s427 + $0x68] sm:$0x1f]
      %v7484 = vld [vmem:[%s427 + $0x78] sm:$0x1f]
      %v7485 = vld [vmem:[%s427 + $0x88] sm:$0x1f]
      %v7486 = vld [vmem:[%s427 + $0x98] sm:$0x1f]
      %v7487 = vld [vmem:[%s427 + $0xa8] sm:$0x1f]
      %v7488 = vld [vmem:[%s427 + $0xb8] sm:$0x1f]
      %v7489 = vld [vmem:[%s427 + $0xc8] sm:$0x1f]
      %v7490 = vld [vmem:[%s427 + $0xd8] sm:$0x1f]
      %v7491 = vld [vmem:[%s427 + $0xe8] sm:$0x1f]
      %v7492 = vld [vmem:[%s427 + $0xf8] sm:$0x1f]
      %v7494 = vshrl.u32 %v7108, 16
      %v7496 = vrot.slane %v7494, 4
      %v7497 = vshll.u32 %v7108, 16
      %v7499 = vrot.slane %v7497, 5
      %v7500 = vor.u32 %v7496, %v7499
      %v7502 = vshrl.u32 %v7477, 16
      %v7504 = vrot.slane %v7502, 4
      %v7505 = vshll.u32 %v7477, 16
      %v7507 = vrot.slane %v7505, 5
      %v7508 = vor.u32 %v7504, %v7507
      %v7509 = vsel %vm1360, %v7500, %v7508
      %v7511 = vshrl.u32 %v7109, 16
      %v7513 = vrot.slane %v7511, 4
      %v7514 = vshll.u32 %v7109, 16
      %v7516 = vrot.slane %v7514, 5
      %v7517 = vor.u32 %v7513, %v7516
      %v7519 = vshrl.u32 %v7478, 16
      %v7521 = vrot.slane %v7519, 4
      %v7522 = vshll.u32 %v7478, 16
      %v7524 = vrot.slane %v7522, 5
      %v7525 = vor.u32 %v7521, %v7524
      %v7526 = vsel %vm1360, %v7517, %v7525
      %v7528 = vshrl.u32 %v7110, 16
      %v7530 = vrot.slane %v7528, 4
      %v7531 = vshll.u32 %v7110, 16
      %v7533 = vrot.slane %v7531, 5
      %v7534 = vor.u32 %v7530, %v7533
      %v7536 = vshrl.u32 %v7479, 16
      %v7538 = vrot.slane %v7536, 4
      %v7539 = vshll.u32 %v7479, 16
      %v7541 = vrot.slane %v7539, 5
      %v7542 = vor.u32 %v7538, %v7541
      %v7543 = vsel %vm1360, %v7534, %v7542
      %v7545 = vshrl.u32 %v7111, 16
      %v7547 = vrot.slane %v7545, 4
      %v7548 = vshll.u32 %v7111, 16
      %v7550 = vrot.slane %v7548, 5
      %v7551 = vor.u32 %v7547, %v7550
      %v7553 = vshrl.u32 %v7480, 16
      %v7555 = vrot.slane %v7553, 4
      %v7556 = vshll.u32 %v7480, 16
      %v7558 = vrot.slane %v7556, 5
      %v7559 = vor.u32 %v7555, %v7558
      %v7560 = vsel %vm1360, %v7551, %v7559
      %v7562 = vshrl.u32 %v7112, 16
      %v7564 = vrot.slane %v7562, 4
      %v7565 = vshll.u32 %v7112, 16
      %v7567 = vrot.slane %v7565, 5
      %v7568 = vor.u32 %v7564, %v7567
      %v7570 = vshrl.u32 %v7481, 16
      %v7572 = vrot.slane %v7570, 4
      %v7573 = vshll.u32 %v7481, 16
      %v7575 = vrot.slane %v7573, 5
      %v7576 = vor.u32 %v7572, %v7575
      %v7577 = vsel %vm1360, %v7568, %v7576
      %v7579 = vshrl.u32 %v7113, 16
      %v7581 = vrot.slane %v7579, 4
      %v7582 = vshll.u32 %v7113, 16
      %v7584 = vrot.slane %v7582, 5
      %v7585 = vor.u32 %v7581, %v7584
      %v7587 = vshrl.u32 %v7482, 16
      %v7589 = vrot.slane %v7587, 4
      %v7590 = vshll.u32 %v7482, 16
      %v7592 = vrot.slane %v7590, 5
      %v7593 = vor.u32 %v7589, %v7592
      %v7594 = vsel %vm1360, %v7585, %v7593
      %v7596 = vshrl.u32 %v7114, 16
      %v7598 = vrot.slane %v7596, 4
      %v7599 = vshll.u32 %v7114, 16
      %v7601 = vrot.slane %v7599, 5
      %v7602 = vor.u32 %v7598, %v7601
      %v7604 = vshrl.u32 %v7483, 16
      %v7606 = vrot.slane %v7604, 4
      %v7607 = vshll.u32 %v7483, 16
      %v7609 = vrot.slane %v7607, 5
      %v7610 = vor.u32 %v7606, %v7609
      %v7611 = vsel %vm1360, %v7602, %v7610
      %v7613 = vshrl.u32 %v7115, 16
      %v7615 = vrot.slane %v7613, 4
      %v7616 = vshll.u32 %v7115, 16
      %v7618 = vrot.slane %v7616, 5
      %v7619 = vor.u32 %v7615, %v7618
      %v7621 = vshrl.u32 %v7484, 16
      %v7623 = vrot.slane %v7621, 4
      %v7624 = vshll.u32 %v7484, 16
      %v7626 = vrot.slane %v7624, 5
      %v7627 = vor.u32 %v7623, %v7626
      %v7628 = vsel %vm1360, %v7619, %v7627
      %v7630 = vshrl.u32 %v7116, 16
      %v7632 = vrot.slane %v7630, 4
      %v7633 = vshll.u32 %v7116, 16
      %v7635 = vrot.slane %v7633, 5
      %v7636 = vor.u32 %v7632, %v7635
      %v7638 = vshrl.u32 %v7485, 16
      %v7640 = vrot.slane %v7638, 4
      %v7641 = vshll.u32 %v7485, 16
      %v7643 = vrot.slane %v7641, 5
      %v7644 = vor.u32 %v7640, %v7643
      %v7645 = vsel %vm1360, %v7636, %v7644
      %v7647 = vshrl.u32 %v7117, 16
      %v7649 = vrot.slane %v7647, 4
      %v7650 = vshll.u32 %v7117, 16
      %v7652 = vrot.slane %v7650, 5
      %v7653 = vor.u32 %v7649, %v7652
      %v7655 = vshrl.u32 %v7486, 16
      %v7657 = vrot.slane %v7655, 4
      %v7658 = vshll.u32 %v7486, 16
      %v7660 = vrot.slane %v7658, 5
      %v7661 = vor.u32 %v7657, %v7660
      %v7662 = vsel %vm1360, %v7653, %v7661
      %v7664 = vshrl.u32 %v7118, 16
      %v7666 = vrot.slane %v7664, 4
      %v7667 = vshll.u32 %v7118, 16
      %v7669 = vrot.slane %v7667, 5
      %v7670 = vor.u32 %v7666, %v7669
      %v7672 = vshrl.u32 %v7487, 16
      %v7674 = vrot.slane %v7672, 4
      %v7675 = vshll.u32 %v7487, 16
      %v7677 = vrot.slane %v7675, 5
      %v7678 = vor.u32 %v7674, %v7677
      %v7679 = vsel %vm1360, %v7670, %v7678
      %v7681 = vshrl.u32 %v7119, 16
      %v7683 = vrot.slane %v7681, 4
      %v7684 = vshll.u32 %v7119, 16
      %v7686 = vrot.slane %v7684, 5
      %v7687 = vor.u32 %v7683, %v7686
      %v7689 = vshrl.u32 %v7488, 16
      %v7691 = vrot.slane %v7689, 4
      %v7692 = vshll.u32 %v7488, 16
      %v7694 = vrot.slane %v7692, 5
      %v7695 = vor.u32 %v7691, %v7694
      %v7696 = vsel %vm1360, %v7687, %v7695
      %v7698 = vshrl.u32 %v7120, 16
      %v7700 = vrot.slane %v7698, 4
      %v7701 = vshll.u32 %v7120, 16
      %v7703 = vrot.slane %v7701, 5
      %v7704 = vor.u32 %v7700, %v7703
      %v7706 = vshrl.u32 %v7489, 16
      %v7708 = vrot.slane %v7706, 4
      %v7709 = vshll.u32 %v7489, 16
      %v7711 = vrot.slane %v7709, 5
      %v7712 = vor.u32 %v7708, %v7711
      %v7713 = vsel %vm1360, %v7704, %v7712
      %v7715 = vshrl.u32 %v7121, 16
      %v7717 = vrot.slane %v7715, 4
      %v7718 = vshll.u32 %v7121, 16
      %v7720 = vrot.slane %v7718, 5
      %v7721 = vor.u32 %v7717, %v7720
      %v7723 = vshrl.u32 %v7490, 16
      %v7725 = vrot.slane %v7723, 4
      %v7726 = vshll.u32 %v7490, 16
      %v7728 = vrot.slane %v7726, 5
      %v7729 = vor.u32 %v7725, %v7728
      %v7730 = vsel %vm1360, %v7721, %v7729
      %v7732 = vshrl.u32 %v7122, 16
      %v7734 = vrot.slane %v7732, 4
      %v7735 = vshll.u32 %v7122, 16
      %v7737 = vrot.slane %v7735, 5
      %v7738 = vor.u32 %v7734, %v7737
      %v7740 = vshrl.u32 %v7491, 16
      %v7742 = vrot.slane %v7740, 4
      %v7743 = vshll.u32 %v7491, 16
      %v7745 = vrot.slane %v7743, 5
      %v7746 = vor.u32 %v7742, %v7745
      %v7747 = vsel %vm1360, %v7738, %v7746
      %v7749 = vshrl.u32 %v7123, 16
      %v7751 = vrot.slane %v7749, 4
      %v7752 = vshll.u32 %v7123, 16
      %v7754 = vrot.slane %v7752, 5
      %v7755 = vor.u32 %v7751, %v7754
      %v7757 = vshrl.u32 %v7492, 16
      %v7759 = vrot.slane %v7757, 4
      %v7760 = vshll.u32 %v7492, 16
      %v7762 = vrot.slane %v7760, 5
      %v7763 = vor.u32 %v7759, %v7762
      %v7764 = vsel %vm1360, %v7755, %v7763
      %v7781 = vld [vmem:[%s2 + $0x140] sm:$0xf]
      %v7782 = vld [vmem:[%s2 + $0x144] sm:$0xf]
      %v7783 = vld [vmem:[%s2 + $0x148] sm:$0xf]
      %v7784 = vld [vmem:[%s2 + $0x14c] sm:$0xf]
      %v7785 = vld [vmem:[%s2 + $0x150] sm:$0xf]
      %v7786 = vld [vmem:[%s2 + $0x154] sm:$0xf]
      %v7787 = vld [vmem:[%s2 + $0x158] sm:$0xf]
      %v7788 = vld [vmem:[%s2 + $0x15c] sm:$0xf]
      %v7789 = vld [vmem:[%s2 + $0x160] sm:$0xf]
      %v7790 = vld [vmem:[%s2 + $0x164] sm:$0xf]
      %v7791 = vld [vmem:[%s2 + $0x168] sm:$0xf]
      %v7792 = vld [vmem:[%s2 + $0x16c] sm:$0xf]
      %v7793 = vld [vmem:[%s2 + $0x170] sm:$0xf]
      %v7794 = vld [vmem:[%s2 + $0x174] sm:$0xf]
      %v7795 = vld [vmem:[%s2 + $0x178] sm:$0xf]
      %v7796 = vld [vmem:[%s2 + $0x17c] sm:$0xf]
      %v7813 = vunpack.c.l.b16 %v7781
      %v7814 = vunpack.c.l.b16 %v7782
      %v7815 = vunpack.c.l.b16 %v7783
      %v7816 = vunpack.c.l.b16 %v7784
      %v7817 = vunpack.c.l.b16 %v7785
      %v7818 = vunpack.c.l.b16 %v7786
      %v7819 = vunpack.c.l.b16 %v7787
      %v7820 = vunpack.c.l.b16 %v7788
      %v7821 = vunpack.c.l.b16 %v7789
      %v7822 = vunpack.c.l.b16 %v7790
      %v7823 = vunpack.c.l.b16 %v7791
      %v7824 = vunpack.c.l.b16 %v7792
      %v7825 = vunpack.c.l.b16 %v7793
      %v7826 = vunpack.c.l.b16 %v7794
      %v7827 = vunpack.c.l.b16 %v7795
      %v7828 = vunpack.c.l.b16 %v7796
      %v7829 = vpack.c.b16 %v7814, %v7813
      %v7830 = vpack.c.b16 %v7816, %v7815
      %v7831 = vpack.c.b16 %v7818, %v7817
      %v7832 = vpack.c.b16 %v7820, %v7819
      %v7833 = vpack.c.b16 %v7822, %v7821
      %v7834 = vpack.c.b16 %v7824, %v7823
      %v7835 = vpack.c.b16 %v7826, %v7825
      %v7836 = vpack.c.b16 %v7828, %v7827
      %7845 = vmatprep.subr.bf16.mxu0 0
      %7846 = vmatpush1.bf16.msra.mxu0 %v7829
      %7847 = vmatprep.subr.bf16.mxu0 0
      %7848 = vmatpush1.bf16.msra.mxu0 %v7830
      %7849 = vmatprep.subr.bf16.mxu0 0
      %7850 = vmatpush1.bf16.msra.mxu0 %v7831
      %7851 = vmatprep.subr.bf16.mxu0 0
      %7852 = vmatpush1.bf16.msra.mxu0 %v7832
      %7853 = vmatprep.subr.bf16.mxu0 0
      %7854 = vmatpush1.bf16.msra.mxu0 %v7833
      %7855 = vmatprep.subr.bf16.mxu0 0
      %7856 = vmatpush1.bf16.msra.mxu0 %v7834
      %7857 = vmatprep.subr.bf16.mxu0 0
      %7858 = vmatpush1.bf16.msra.mxu0 %v7835
      %7859 = vmatprep.subr.bf16.mxu0 0
      %7860 = vmatpush1.bf16.msra.mxu0 %v7836
      %7861 = vmatprep.subr.bf16.mxu0 0
      %7862 = vmatpush1.bf16.msra.mxu0 0
      %7863 = vmatprep.subr.bf16.mxu0 0
      %7864 = vmatpush1.bf16.msra.mxu0 0
      %7865 = vmatprep.subr.bf16.mxu0 0
      %7866 = vmatpush1.bf16.msra.mxu0 0
      %7867 = vmatprep.subr.bf16.mxu0 0
      %7868 = vmatpush1.bf16.msra.mxu0 0
      %7869 = vmatprep.subr.bf16.mxu0 0
      %7870 = vmatpush1.bf16.msra.mxu0 0
      %7871 = vmatprep.subr.bf16.mxu0 0
      %7872 = vmatpush1.bf16.msra.mxu0 0
      %7873 = vmatprep.subr.bf16.mxu0 0
      %7874 = vmatpush1.bf16.msra.mxu0 0
      %7875 = vmatprep.subr.bf16.mxu0 0
      %7876 = vmatpush1.bf16.msra.mxu0 0
      %7877 = vmatprep.mubr.bf16.mxu0 0
      %7878 = vmatmul.mubr.bf16.gmra.mrb[0].mxu0 %v7509
      %v7879 = vpop.f32.mrb[0].mxu0
      %v7880 = vadd.f32 0.0, %v7879
      %v7881 = vpop.f32.mrb[0].mxu0
      %v7882 = vpop.f32.mrb[0].mxu0
      %v7883 = vadd.f32 0.0, %v7882
      %v7884 = vpop.f32.mrb[0].mxu0
      %7885 = vmatprep.mubr.bf16.mxu0 0
      %7886 = vmatmul.mubr.bf16.gmra.mrb[0].mxu0 %v7526
      %v7887 = vpop.f32.mrb[0].mxu0
      %v7888 = vadd.f32 0.0, %v7887
      %v7889 = vpop.f32.mrb[0].mxu0
      %v7890 = vpop.f32.mrb[0].mxu0
      %v7891 = vadd.f32 0.0, %v7890
      %v7892 = vpop.f32.mrb[0].mxu0
      %7893 = vmatprep.mubr.bf16.mxu0 0
      %7894 = vmatmul.mubr.bf16.gmra.mrb[0].mxu0 %v7543
      %v7895 = vpop.f32.mrb[0].mxu0
      %v7896 = vadd.f32 0.0, %v7895
      %v7897 = vpop.f32.mrb[0].mxu0
      %v7898 = vpop.f32.mrb[0].mxu0
      %v7899 = vadd.f32 0.0, %v7898
      %v7900 = vpop.f32.mrb[0].mxu0
      %7901 = vmatprep.mubr.bf16.mxu0 0
      %7902 = vmatmul.mubr.bf16.gmra.mrb[0].mxu0 %v7560
      %v7903 = vpop.f32.mrb[0].mxu0
      %v7904 = vadd.f32 0.0, %v7903
      %v7905 = vpop.f32.mrb[0].mxu0
      %v7906 = vpop.f32.mrb[0].mxu0
      %v7907 = vadd.f32 0.0, %v7906
      %v7908 = vpop.f32.mrb[0].mxu0
      %7909 = vmatprep.mubr.bf16.mxu0 0
      %7910 = vmatmul.mubr.bf16.gmra.mrb[0].mxu0 %v7577
      %v7911 = vpop.f32.mrb[0].mxu0
      %v7912 = vadd.f32 0.0, %v7911
      %v7913 = vpop.f32.mrb[0].mxu0
      %v7914 = vpop.f32.mrb[0].mxu0
      %v7915 = vadd.f32 0.0, %v7914
      %v7916 = vpop.f32.mrb[0].mxu0
      %7917 = vmatprep.mubr.bf16.mxu0 0
      %7918 = vmatmul.mubr.bf16.gmra.mrb[0].mxu0 %v7594
      %v7919 = vpop.f32.mrb[0].mxu0
      %v7920 = vadd.f32 0.0, %v7919
      %v7921 = vpop.f32.mrb[0].mxu0
      %v7922 = vpop.f32.mrb[0].mxu0
      %v7923 = vadd.f32 0.0, %v7922
      %v7924 = vpop.f32.mrb[0].mxu0
      %7925 = vmatprep.mubr.bf16.mxu0 0
      %7926 = vmatmul.mubr.bf16.gmra.mrb[0].mxu0 %v7611
      %v7927 = vpop.f32.mrb[0].mxu0
      %v7928 = vadd.f32 0.0, %v7927
      %v7929 = vpop.f32.mrb[0].mxu0
      %v7930 = vpop.f32.mrb[0].mxu0
      %v7931 = vadd.f32 0.0, %v7930
      %v7932 = vpop.f32.mrb[0].mxu0
      %7933 = vmatprep.mubr.bf16.mxu0 0
      %7934 = vmatmul.mubr.bf16.gmra.mrb[0].mxu0 %v7628
      %v7935 = vpop.f32.mrb[0].mxu0
      %v7936 = vadd.f32 0.0, %v7935
      %v7937 = vpop.f32.mrb[0].mxu0
      %v7938 = vpop.f32.mrb[0].mxu0
      %v7939 = vadd.f32 0.0, %v7938
      %v7940 = vpop.f32.mrb[0].mxu0
      %7941 = vmatprep.mubr.bf16.mxu0 0
      %7942 = vmatmul.mubr.bf16.gmra.mrb[0].mxu0 %v7645
      %v7943 = vpop.f32.mrb[0].mxu0
      %v7944 = vadd.f32 0.0, %v7943
      %v7945 = vpop.f32.mrb[0].mxu0
      %v7946 = vpop.f32.mrb[0].mxu0
      %v7947 = vadd.f32 0.0, %v7946
      %v7948 = vpop.f32.mrb[0].mxu0
      %7949 = vmatprep.mubr.bf16.mxu0 0
      %7950 = vmatmul.mubr.bf16.gmra.mrb[0].mxu0 %v7662
      %v7951 = vpop.f32.mrb[0].mxu0
      %v7952 = vadd.f32 0.0, %v7951
      %v7953 = vpop.f32.mrb[0].mxu0
      %v7954 = vpop.f32.mrb[0].mxu0
      %v7955 = vadd.f32 0.0, %v7954
      %v7956 = vpop.f32.mrb[0].mxu0
      %7957 = vmatprep.mubr.bf16.mxu0 0
      %7958 = vmatmul.mubr.bf16.gmra.mrb[0].mxu0 %v7679
      %v7959 = vpop.f32.mrb[0].mxu0
      %v7960 = vadd.f32 0.0, %v7959
      %v7961 = vpop.f32.mrb[0].mxu0
      %v7962 = vpop.f32.mrb[0].mxu0
      %v7963 = vadd.f32 0.0, %v7962
      %v7964 = vpop.f32.mrb[0].mxu0
      %7965 = vmatprep.mubr.bf16.mxu0 0
      %7966 = vmatmul.mubr.bf16.gmra.mrb[0].mxu0 %v7696
      %v7967 = vpop.f32.mrb[0].mxu0
      %v7968 = vadd.f32 0.0, %v7967
      %v7969 = vpop.f32.mrb[0].mxu0
      %v7970 = vpop.f32.mrb[0].mxu0
      %v7971 = vadd.f32 0.0, %v7970
      %v7972 = vpop.f32.mrb[0].mxu0
      %7973 = vmatprep.mubr.bf16.mxu0 0
      %7974 = vmatmul.mubr.bf16.gmra.mrb[0].mxu0 %v7713
      %v7975 = vpop.f32.mrb[0].mxu0
      %v7976 = vadd.f32 0.0, %v7975
      %v7977 = vpop.f32.mrb[0].mxu0
      %v7978 = vpop.f32.mrb[0].mxu0
      %v7979 = vadd.f32 0.0, %v7978
      %v7980 = vpop.f32.mrb[0].mxu0
      %7981 = vmatprep.mubr.bf16.mxu0 0
      %7982 = vmatmul.mubr.bf16.gmra.mrb[0].mxu0 %v7730
      %v7983 = vpop.f32.mrb[0].mxu0
      %v7984 = vadd.f32 0.0, %v7983
      %v7985 = vpop.f32.mrb[0].mxu0
      %v7986 = vpop.f32.mrb[0].mxu0
      %v7987 = vadd.f32 0.0, %v7986
      %v7988 = vpop.f32.mrb[0].mxu0
      %7989 = vmatprep.mubr.bf16.mxu0 0
      %7990 = vmatmul.mubr.bf16.gmra.mrb[0].mxu0 %v7747
      %v7991 = vpop.f32.mrb[0].mxu0
      %v7992 = vadd.f32 0.0, %v7991
      %v7993 = vpop.f32.mrb[0].mxu0
      %v7994 = vpop.f32.mrb[0].mxu0
      %v7995 = vadd.f32 0.0, %v7994
      %v7996 = vpop.f32.mrb[0].mxu0
      %7997 = vmatprep.mubr.bf16.mxu0 0
      %7998 = vmatmul.mubr.bf16.gmra.mrb[0].mxu0 %v7764
      %v7999 = vpop.f32.mrb[0].mxu0
      %v8000 = vadd.f32 0.0, %v7999
      %v8001 = vpop.f32.mrb[0].mxu0
      %v8002 = vpop.f32.mrb[0].mxu0
      %v8003 = vadd.f32 0.0, %v8002
      %v8004 = vpop.f32.mrb[0].mxu0
      %8005 = vdwg.mxu0
      %v8006 = vadd.f32 %v7445, %v7880
      %v8007 = vadd.f32 %v7446, %v7883
      %v8008 = vadd.f32 %v7447, %v7888
      %v8009 = vadd.f32 %v7448, %v7891
      %v8010 = vadd.f32 %v7449, %v7896
      %v8011 = vadd.f32 %v7450, %v7899
      %v8012 = vadd.f32 %v7451, %v7904
      %v8013 = vadd.f32 %v7452, %v7907
      %v8014 = vadd.f32 %v7453, %v7912
      %v8015 = vadd.f32 %v7454, %v7915
      %v8016 = vadd.f32 %v7455, %v7920
      %v8017 = vadd.f32 %v7456, %v7923
      %v8018 = vadd.f32 %v7457, %v7928
      %v8019 = vadd.f32 %v7458, %v7931
      %v8020 = vadd.f32 %v7459, %v7936
      %v8021 = vadd.f32 %v7460, %v7939
      %v8022 = vadd.f32 %v7461, %v7944
      %v8023 = vadd.f32 %v7462, %v7947
      %v8024 = vadd.f32 %v7463, %v7952
      %v8025 = vadd.f32 %v7464, %v7955
      %v8026 = vadd.f32 %v7465, %v7960
      %v8027 = vadd.f32 %v7466, %v7963
      %v8028 = vadd.f32 %v7467, %v7968
      %v8029 = vadd.f32 %v7468, %v7971
      %v8030 = vadd.f32 %v7469, %v7976
      %v8031 = vadd.f32 %v7470, %v7979
      %v8032 = vadd.f32 %v7471, %v7984
      %v8033 = vadd.f32 %v7472, %v7987
      %v8034 = vadd.f32 %v7473, %v7992
      %v8035 = vadd.f32 %v7474, %v7995
      %v8036 = vadd.f32 %v7475, %v8000
      %v8037 = vadd.f32 %v7476, %v8003
      %v8038 = vld [vmem:[%s3413] sm:$0xf8]
      %v8039 = vld [vmem:[%s3413 + $0x8] sm:$0xf]
      %v8040 = vld [vmem:[%s3413 + $0x10] sm:$0xf8]
      %v8041 = vld [vmem:[%s3413 + $0x18] sm:$0xf]
      %v8042 = vld [vmem:[%s3413 + $0x20] sm:$0xf8]
      %v8043 = vld [vmem:[%s3413 + $0x28] sm:$0xf]
      %v8044 = vld [vmem:[%s3413 + $0x30] sm:$0xf8]
      %v8045 = vld [vmem:[%s3413 + $0x38] sm:$0xf]
      %v8046 = vld [vmem:[%s3413 + $0x40] sm:$0xf8]
      %v8047 = vld [vmem:[%s3413 + $0x48] sm:$0xf]
      %v8048 = vld [vmem:[%s3413 + $0x50] sm:$0xf8]
      %v8049 = vld [vmem:[%s3413 + $0x58] sm:$0xf]
      %v8050 = vld [vmem:[%s3413 + $0x60] sm:$0xf8]
      %v8051 = vld [vmem:[%s3413 + $0x68] sm:$0xf]
      %v8052 = vld [vmem:[%s3413 + $0x70] sm:$0xf8]
      %v8053 = vld [vmem:[%s3413 + $0x78] sm:$0xf]
      %v8054 = vld [vmem:[%s3413 + $0x80] sm:$0xf8]
      %v8055 = vld [vmem:[%s3413 + $0x88] sm:$0xf]
      %v8056 = vld [vmem:[%s3413 + $0x90] sm:$0xf8]
      %v8057 = vld [vmem:[%s3413 + $0x98] sm:$0xf]
      %v8058 = vld [vmem:[%s3413 + $0xa0] sm:$0xf8]
      %v8059 = vld [vmem:[%s3413 + $0xa8] sm:$0xf]
      %v8060 = vld [vmem:[%s3413 + $0xb0] sm:$0xf8]
      %v8061 = vld [vmem:[%s3413 + $0xb8] sm:$0xf]
      %v8062 = vld [vmem:[%s3413 + $0xc0] sm:$0xf8]
      %v8063 = vld [vmem:[%s3413 + $0xc8] sm:$0xf]
      %v8064 = vld [vmem:[%s3413 + $0xd0] sm:$0xf8]
      %v8065 = vld [vmem:[%s3413 + $0xd8] sm:$0xf]
      %v8066 = vld [vmem:[%s3413 + $0xe0] sm:$0xf8]
      %v8067 = vld [vmem:[%s3413 + $0xe8] sm:$0xf]
      %v8068 = vld [vmem:[%s3413 + $0xf0] sm:$0xf8]
      %v8069 = vld [vmem:[%s3413 + $0xf8] sm:$0xf]
      %v8071 = vshrl.u32 %v8038, 16
      %v8073 = vrot.slane %v8071, 3
      %v8074 = vshll.u32 %v8038, 16
      %v8076 = vrot.slane %v8074, 4
      %v8077 = vor.u32 %v8073, %v8076
      %v8079 = vshrl.u32 %v8039, 16
      %v8081 = vrot.slane %v8079, 3
      %v8082 = vshll.u32 %v8039, 16
      %v8084 = vrot.slane %v8082, 4
      %v8085 = vor.u32 %v8081, %v8084
      %v8086 = vsel %vm492, %v8077, %v8085
      %v8088 = vshrl.u32 %v8040, 16
      %v8090 = vrot.slane %v8088, 3
      %v8091 = vshll.u32 %v8040, 16
      %v8093 = vrot.slane %v8091, 4
      %v8094 = vor.u32 %v8090, %v8093
      %v8096 = vshrl.u32 %v8041, 16
      %v8098 = vrot.slane %v8096, 3
      %v8099 = vshll.u32 %v8041, 16
      %v8101 = vrot.slane %v8099, 4
      %v8102 = vor.u32 %v8098, %v8101
      %v8103 = vsel %vm492, %v8094, %v8102
      %v8105 = vshrl.u32 %v8042, 16
      %v8107 = vrot.slane %v8105, 3
      %v8108 = vshll.u32 %v8042, 16
      %v8110 = vrot.slane %v8108, 4
      %v8111 = vor.u32 %v8107, %v8110
      %v8113 = vshrl.u32 %v8043, 16
      %v8115 = vrot.slane %v8113, 3
      %v8116 = vshll.u32 %v8043, 16
      %v8118 = vrot.slane %v8116, 4
      %v8119 = vor.u32 %v8115, %v8118
      %v8120 = vsel %vm492, %v8111, %v8119
      %v8122 = vshrl.u32 %v8044, 16
      %v8124 = vrot.slane %v8122, 3
      %v8125 = vshll.u32 %v8044, 16
      %v8127 = vrot.slane %v8125, 4
      %v8128 = vor.u32 %v8124, %v8127
      %v8130 = vshrl.u32 %v8045, 16
      %v8132 = vrot.slane %v8130, 3
      %v8133 = vshll.u32 %v8045, 16
      %v8135 = vrot.slane %v8133, 4
      %v8136 = vor.u32 %v8132, %v8135
      %v8137 = vsel %vm492, %v8128, %v8136
      %v8139 = vshrl.u32 %v8046, 16
      %v8141 = vrot.slane %v8139, 3
      %v8142 = vshll.u32 %v8046, 16
      %v8144 = vrot.slane %v8142, 4
      %v8145 = vor.u32 %v8141, %v8144
      %v8147 = vshrl.u32 %v8047, 16
      %v8149 = vrot.slane %v8147, 3
      %v8150 = vshll.u32 %v8047, 16
      %v8152 = vrot.slane %v8150, 4
      %v8153 = vor.u32 %v8149, %v8152
      %v8154 = vsel %vm492, %v8145, %v8153
      %v8156 = vshrl.u32 %v8048, 16
      %v8158 = vrot.slane %v8156, 3
      %v8159 = vshll.u32 %v8048, 16
      %v8161 = vrot.slane %v8159, 4
      %v8162 = vor.u32 %v8158, %v8161
      %v8164 = vshrl.u32 %v8049, 16
      %v8166 = vrot.slane %v8164, 3
      %v8167 = vshll.u32 %v8049, 16
      %v8169 = vrot.slane %v8167, 4
      %v8170 = vor.u32 %v8166, %v8169
      %v8171 = vsel %vm492, %v8162, %v8170
      %v8173 = vshrl.u32 %v8050, 16
      %v8175 = vrot.slane %v8173, 3
      %v8176 = vshll.u32 %v8050, 16
      %v8178 = vrot.slane %v8176, 4
      %v8179 = vor.u32 %v8175, %v8178
      %v8181 = vshrl.u32 %v8051, 16
      %v8183 = vrot.slane %v8181, 3
      %v8184 = vshll.u32 %v8051, 16
      %v8186 = vrot.slane %v8184, 4
      %v8187 = vor.u32 %v8183, %v8186
      %v8188 = vsel %vm492, %v8179, %v8187
      %v8190 = vshrl.u32 %v8052, 16
      %v8192 = vrot.slane %v8190, 3
      %v8193 = vshll.u32 %v8052, 16
      %v8195 = vrot.slane %v8193, 4
      %v8196 = vor.u32 %v8192, %v8195
      %v8198 = vshrl.u32 %v8053, 16
      %v8200 = vrot.slane %v8198, 3
      %v8201 = vshll.u32 %v8053, 16
      %v8203 = vrot.slane %v8201, 4
      %v8204 = vor.u32 %v8200, %v8203
      %v8205 = vsel %vm492, %v8196, %v8204
      %v8207 = vshrl.u32 %v8054, 16
      %v8209 = vrot.slane %v8207, 3
      %v8210 = vshll.u32 %v8054, 16
      %v8212 = vrot.slane %v8210, 4
      %v8213 = vor.u32 %v8209, %v8212
      %v8215 = vshrl.u32 %v8055, 16
      %v8217 = vrot.slane %v8215, 3
      %v8218 = vshll.u32 %v8055, 16
      %v8220 = vrot.slane %v8218, 4
      %v8221 = vor.u32 %v8217, %v8220
      %v8222 = vsel %vm492, %v8213, %v8221
      %v8224 = vshrl.u32 %v8056, 16
      %v8226 = vrot.slane %v8224, 3
      %v8227 = vshll.u32 %v8056, 16
      %v8229 = vrot.slane %v8227, 4
      %v8230 = vor.u32 %v8226, %v8229
      %v8232 = vshrl.u32 %v8057, 16
      %v8234 = vrot.slane %v8232, 3
      %v8235 = vshll.u32 %v8057, 16
      %v8237 = vrot.slane %v8235, 4
      %v8238 = vor.u32 %v8234, %v8237
      %v8239 = vsel %vm492, %v8230, %v8238
      %v8241 = vshrl.u32 %v8058, 16
      %v8243 = vrot.slane %v8241, 3
      %v8244 = vshll.u32 %v8058, 16
      %v8246 = vrot.slane %v8244, 4
      %v8247 = vor.u32 %v8243, %v8246
      %v8249 = vshrl.u32 %v8059, 16
      %v8251 = vrot.slane %v8249, 3
      %v8252 = vshll.u32 %v8059, 16
      %v8254 = vrot.slane %v8252, 4
      %v8255 = vor.u32 %v8251, %v8254
      %v8256 = vsel %vm492, %v8247, %v8255
      %v8258 = vshrl.u32 %v8060, 16
      %v8260 = vrot.slane %v8258, 3
      %v8261 = vshll.u32 %v8060, 16
      %v8263 = vrot.slane %v8261, 4
      %v8264 = vor.u32 %v8260, %v8263
      %v8266 = vshrl.u32 %v8061, 16
      %v8268 = vrot.slane %v8266, 3
      %v8269 = vshll.u32 %v8061, 16
      %v8271 = vrot.slane %v8269, 4
      %v8272 = vor.u32 %v8268, %v8271
      %v8273 = vsel %vm492, %v8264, %v8272
      %v8275 = vshrl.u32 %v8062, 16
      %v8277 = vrot.slane %v8275, 3
      %v8278 = vshll.u32 %v8062, 16
      %v8280 = vrot.slane %v8278, 4
      %v8281 = vor.u32 %v8277, %v8280
      %v8283 = vshrl.u32 %v8063, 16
      %v8285 = vrot.slane %v8283, 3
      %v8286 = vshll.u32 %v8063, 16
      %v8288 = vrot.slane %v8286, 4
      %v8289 = vor.u32 %v8285, %v8288
      %v8290 = vsel %vm492, %v8281, %v8289
      %v8292 = vshrl.u32 %v8064, 16
      %v8294 = vrot.slane %v8292, 3
      %v8295 = vshll.u32 %v8064, 16
      %v8297 = vrot.slane %v8295, 4
      %v8298 = vor.u32 %v8294, %v8297
      %v8300 = vshrl.u32 %v8065, 16
      %v8302 = vrot.slane %v8300, 3
      %v8303 = vshll.u32 %v8065, 16
      %v8305 = vrot.slane %v8303, 4
      %v8306 = vor.u32 %v8302, %v8305
      %v8307 = vsel %vm492, %v8298, %v8306
      %v8309 = vshrl.u32 %v8066, 16
      %v8311 = vrot.slane %v8309, 3
      %v8312 = vshll.u32 %v8066, 16
      %v8314 = vrot.slane %v8312, 4
      %v8315 = vor.u32 %v8311, %v8314
      %v8317 = vshrl.u32 %v8067, 16
      %v8319 = vrot.slane %v8317, 3
      %v8320 = vshll.u32 %v8067, 16
      %v8322 = vrot.slane %v8320, 4
      %v8323 = vor.u32 %v8319, %v8322
      %v8324 = vsel %vm492, %v8315, %v8323
      %v8326 = vshrl.u32 %v8068, 16
      %v8328 = vrot.slane %v8326, 3
      %v8329 = vshll.u32 %v8068, 16
      %v8331 = vrot.slane %v8329, 4
      %v8332 = vor.u32 %v8328, %v8331
      %v8334 = vshrl.u32 %v8069, 16
      %v8336 = vrot.slane %v8334, 3
      %v8337 = vshll.u32 %v8069, 16
      %v8339 = vrot.slane %v8337, 4
      %v8340 = vor.u32 %v8336, %v8339
      %v8341 = vsel %vm492, %v8332, %v8340
      %v8358 = vld [vmem:[%s2 + $0x180] sm:$0xf]
      %v8359 = vld [vmem:[%s2 + $0x184] sm:$0xf]
      %v8360 = vld [vmem:[%s2 + $0x188] sm:$0xf]
      %v8361 = vld [vmem:[%s2 + $0x18c] sm:$0xf]
      %v8362 = vld [vmem:[%s2 + $0x190] sm:$0xf]
      %v8363 = vld [vmem:[%s2 + $0x194] sm:$0xf]
      %v8364 = vld [vmem:[%s2 + $0x198] sm:$0xf]
      %v8365 = vld [vmem:[%s2 + $0x19c] sm:$0xf]
      %v8366 = vld [vmem:[%s2 + $0x1a0] sm:$0xf]
      %v8367 = vld [vmem:[%s2 + $0x1a4] sm:$0xf]
      %v8368 = vld [vmem:[%s2 + $0x1a8] sm:$0xf]
      %v8369 = vld [vmem:[%s2 + $0x1ac] sm:$0xf]
      %v8370 = vld [vmem:[%s2 + $0x1b0] sm:$0xf]
      %v8371 = vld [vmem:[%s2 + $0x1b4] sm:$0xf]
      %v8372 = vld [vmem:[%s2 + $0x1b8] sm:$0xf]
      %v8373 = vld [vmem:[%s2 + $0x1bc] sm:$0xf]
      %v8390 = vunpack.c.l.b16 %v8358
      %v8391 = vunpack.c.l.b16 %v8359
      %v8392 = vunpack.c.l.b16 %v8360
      %v8393 = vunpack.c.l.b16 %v8361
      %v8394 = vunpack.c.l.b16 %v8362
      %v8395 = vunpack.c.l.b16 %v8363
      %v8396 = vunpack.c.l.b16 %v8364
      %v8397 = vunpack.c.l.b16 %v8365
      %v8398 = vunpack.c.l.b16 %v8366
      %v8399 = vunpack.c.l.b16 %v8367
      %v8400 = vunpack.c.l.b16 %v8368
      %v8401 = vunpack.c.l.b16 %v8369
      %v8402 = vunpack.c.l.b16 %v8370
      %v8403 = vunpack.c.l.b16 %v8371
      %v8404 = vunpack.c.l.b16 %v8372
      %v8405 = vunpack.c.l.b16 %v8373
      %v8406 = vpack.c.b16 %v8391, %v8390
      %v8407 = vpack.c.b16 %v8393, %v8392
      %v8408 = vpack.c.b16 %v8395, %v8394
      %v8409 = vpack.c.b16 %v8397, %v8396
      %v8410 = vpack.c.b16 %v8399, %v8398
      %v8411 = vpack.c.b16 %v8401, %v8400
      %v8412 = vpack.c.b16 %v8403, %v8402
      %v8413 = vpack.c.b16 %v8405, %v8404
      %8422 = vmatprep.subr.bf16.mxu0 0
      %8423 = vmatpush1.bf16.msra.mxu0 %v8406
      %8424 = vmatprep.subr.bf16.mxu0 0
      %8425 = vmatpush1.bf16.msra.mxu0 %v8407
      %8426 = vmatprep.subr.bf16.mxu0 0
      %8427 = vmatpush1.bf16.msra.mxu0 %v8408
      %8428 = vmatprep.subr.bf16.mxu0 0
      %8429 = vmatpush1.bf16.msra.mxu0 %v8409
      %8430 = vmatprep.subr.bf16.mxu0 0
      %8431 = vmatpush1.bf16.msra.mxu0 %v8410
      %8432 = vmatprep.subr.bf16.mxu0 0
      %8433 = vmatpush1.bf16.msra.mxu0 %v8411
      %8434 = vmatprep.subr.bf16.mxu0 0
      %8435 = vmatpush1.bf16.msra.mxu0 %v8412
      %8436 = vmatprep.subr.bf16.mxu0 0
      %8437 = vmatpush1.bf16.msra.mxu0 %v8413
      %8438 = vmatprep.subr.bf16.mxu0 0
      %8439 = vmatpush1.bf16.msra.mxu0 0
      %8440 = vmatprep.subr.bf16.mxu0 0
      %8441 = vmatpush1.bf16.msra.mxu0 0
      %8442 = vmatprep.subr.bf16.mxu0 0
      %8443 = vmatpush1.bf16.msra.mxu0 0
      %8444 = vmatprep.subr.bf16.mxu0 0
      %8445 = vmatpush1.bf16.msra.mxu0 0
      %8446 = vmatprep.subr.bf16.mxu0 0
      %8447 = vmatpush1.bf16.msra.mxu0 0
      %8448 = vmatprep.subr.bf16.mxu0 0
      %8449 = vmatpush1.bf16.msra.mxu0 0
      %8450 = vmatprep.subr.bf16.mxu0 0
      %8451 = vmatpush1.bf16.msra.mxu0 0
      %8452 = vmatprep.subr.bf16.mxu0 0
      %8453 = vmatpush1.bf16.msra.mxu0 0
      %8454 = vmatprep.mubr.bf16.mxu0 0
      %8455 = vmatmul.mubr.bf16.gmra.mrb[0].mxu0 %v8086
      %v8456 = vpop.f32.mrb[0].mxu0
      %v8457 = vadd.f32 0.0, %v8456
      %v8458 = vpop.f32.mrb[0].mxu0
      %v8459 = vpop.f32.mrb[0].mxu0
      %v8460 = vadd.f32 0.0, %v8459
      %v8461 = vpop.f32.mrb[0].mxu0
      %8462 = vmatprep.mubr.bf16.mxu0 0
      %8463 = vmatmul.mubr.bf16.gmra.mrb[0].mxu0 %v8103
      %v8464 = vpop.f32.mrb[0].mxu0
      %v8465 = vadd.f32 0.0, %v8464
      %v8466 = vpop.f32.mrb[0].mxu0
      %v8467 = vpop.f32.mrb[0].mxu0
      %v8468 = vadd.f32 0.0, %v8467
      %v8469 = vpop.f32.mrb[0].mxu0
      %8470 = vmatprep.mubr.bf16.mxu0 0
      %8471 = vmatmul.mubr.bf16.gmra.mrb[0].mxu0 %v8120
      %v8472 = vpop.f32.mrb[0].mxu0
      %v8473 = vadd.f32 0.0, %v8472
      %v8474 = vpop.f32.mrb[0].mxu0
      %v8475 = vpop.f32.mrb[0].mxu0
      %v8476 = vadd.f32 0.0, %v8475
      %v8477 = vpop.f32.mrb[0].mxu0
      %8478 = vmatprep.mubr.bf16.mxu0 0
      %8479 = vmatmul.mubr.bf16.gmra.mrb[0].mxu0 %v8137
      %v8480 = vpop.f32.mrb[0].mxu0
      %v8481 = vadd.f32 0.0, %v8480
      %v8482 = vpop.f32.mrb[0].mxu0
      %v8483 = vpop.f32.mrb[0].mxu0
      %v8484 = vadd.f32 0.0, %v8483
      %v8485 = vpop.f32.mrb[0].mxu0
      %8486 = vmatprep.mubr.bf16.mxu0 0
      %8487 = vmatmul.mubr.bf16.gmra.mrb[0].mxu0 %v8154
      %v8488 = vpop.f32.mrb[0].mxu0
      %v8489 = vadd.f32 0.0, %v8488
      %v8490 = vpop.f32.mrb[0].mxu0
      %v8491 = vpop.f32.mrb[0].mxu0
      %v8492 = vadd.f32 0.0, %v8491
      %v8493 = vpop.f32.mrb[0].mxu0
      %8494 = vmatprep.mubr.bf16.mxu0 0
      %8495 = vmatmul.mubr.bf16.gmra.mrb[0].mxu0 %v8171
      %v8496 = vpop.f32.mrb[0].mxu0
      %v8497 = vadd.f32 0.0, %v8496
      %v8498 = vpop.f32.mrb[0].mxu0
      %v8499 = vpop.f32.mrb[0].mxu0
      %v8500 = vadd.f32 0.0, %v8499
      %v8501 = vpop.f32.mrb[0].mxu0
      %8502 = vmatprep.mubr.bf16.mxu0 0
      %8503 = vmatmul.mubr.bf16.gmra.mrb[0].mxu0 %v8188
      %v8504 = vpop.f32.mrb[0].mxu0
      %v8505 = vadd.f32 0.0, %v8504
      %v8506 = vpop.f32.mrb[0].mxu0
      %v8507 = vpop.f32.mrb[0].mxu0
      %v8508 = vadd.f32 0.0, %v8507
      %v8509 = vpop.f32.mrb[0].mxu0
      %8510 = vmatprep.mubr.bf16.mxu0 0
      %8511 = vmatmul.mubr.bf16.gmra.mrb[0].mxu0 %v8205
      %v8512 = vpop.f32.mrb[0].mxu0
      %v8513 = vadd.f32 0.0, %v8512
      %v8514 = vpop.f32.mrb[0].mxu0
      %v8515 = vpop.f32.mrb[0].mxu0
      %v8516 = vadd.f32 0.0, %v8515
      %v8517 = vpop.f32.mrb[0].mxu0
      %8518 = vmatprep.mubr.bf16.mxu0 0
      %8519 = vmatmul.mubr.bf16.gmra.mrb[0].mxu0 %v8222
      %v8520 = vpop.f32.mrb[0].mxu0
      %v8521 = vadd.f32 0.0, %v8520
      %v8522 = vpop.f32.mrb[0].mxu0
      %v8523 = vpop.f32.mrb[0].mxu0
      %v8524 = vadd.f32 0.0, %v8523
      %v8525 = vpop.f32.mrb[0].mxu0
      %8526 = vmatprep.mubr.bf16.mxu0 0
      %8527 = vmatmul.mubr.bf16.gmra.mrb[0].mxu0 %v8239
      %v8528 = vpop.f32.mrb[0].mxu0
      %v8529 = vadd.f32 0.0, %v8528
      %v8530 = vpop.f32.mrb[0].mxu0
      %v8531 = vpop.f32.mrb[0].mxu0
      %v8532 = vadd.f32 0.0, %v8531
      %v8533 = vpop.f32.mrb[0].mxu0
      %8534 = vmatprep.mubr.bf16.mxu0 0
      %8535 = vmatmul.mubr.bf16.gmra.mrb[0].mxu0 %v8256
      %v8536 = vpop.f32.mrb[0].mxu0
      %v8537 = vadd.f32 0.0, %v8536
      %v8538 = vpop.f32.mrb[0].mxu0
      %v8539 = vpop.f32.mrb[0].mxu0
      %v8540 = vadd.f32 0.0, %v8539
      %v8541 = vpop.f32.mrb[0].mxu0
      %8542 = vmatprep.mubr.bf16.mxu0 0
      %8543 = vmatmul.mubr.bf16.gmra.mrb[0].mxu0 %v8273
      %v8544 = vpop.f32.mrb[0].mxu0
      %v8545 = vadd.f32 0.0, %v8544
      %v8546 = vpop.f32.mrb[0].mxu0
      %v8547 = vpop.f32.mrb[0].mxu0
      %v8548 = vadd.f32 0.0, %v8547
      %v8549 = vpop.f32.mrb[0].mxu0
      %8550 = vmatprep.mubr.bf16.mxu0 0
      %8551 = vmatmul.mubr.bf16.gmra.mrb[0].mxu0 %v8290
      %v8552 = vpop.f32.mrb[0].mxu0
      %v8553 = vadd.f32 0.0, %v8552
      %v8554 = vpop.f32.mrb[0].mxu0
      %v8555 = vpop.f32.mrb[0].mxu0
      %v8556 = vadd.f32 0.0, %v8555
      %v8557 = vpop.f32.mrb[0].mxu0
      %8558 = vmatprep.mubr.bf16.mxu0 0
      %8559 = vmatmul.mubr.bf16.gmra.mrb[0].mxu0 %v8307
      %v8560 = vpop.f32.mrb[0].mxu0
      %v8561 = vadd.f32 0.0, %v8560
      %v8562 = vpop.f32.mrb[0].mxu0
      %v8563 = vpop.f32.mrb[0].mxu0
      %v8564 = vadd.f32 0.0, %v8563
      %v8565 = vpop.f32.mrb[0].mxu0
      %8566 = vmatprep.mubr.bf16.mxu0 0
      %8567 = vmatmul.mubr.bf16.gmra.mrb[0].mxu0 %v8324
      %v8568 = vpop.f32.mrb[0].mxu0
      %v8569 = vadd.f32 0.0, %v8568
      %v8570 = vpop.f32.mrb[0].mxu0
      %v8571 = vpop.f32.mrb[0].mxu0
      %v8572 = vadd.f32 0.0, %v8571
      %v8573 = vpop.f32.mrb[0].mxu0
      %8574 = vmatprep.mubr.bf16.mxu0 0
      %8575 = vmatmul.mubr.bf16.gmra.mrb[0].mxu0 %v8341
      %v8576 = vpop.f32.mrb[0].mxu0
      %v8577 = vadd.f32 0.0, %v8576
      %v8578 = vpop.f32.mrb[0].mxu0
      %v8579 = vpop.f32.mrb[0].mxu0
      %v8580 = vadd.f32 0.0, %v8579
      %v8581 = vpop.f32.mrb[0].mxu0
      %8582 = vdwg.mxu0
      %v8583 = vadd.f32 %v8006, %v8457
      %v8584 = vadd.f32 %v8007, %v8460
      %v8585 = vadd.f32 %v8008, %v8465
      %v8586 = vadd.f32 %v8009, %v8468
      %v8587 = vadd.f32 %v8010, %v8473
      %v8588 = vadd.f32 %v8011, %v8476
      %v8589 = vadd.f32 %v8012, %v8481
      %v8590 = vadd.f32 %v8013, %v8484
      %v8591 = vadd.f32 %v8014, %v8489
      %v8592 = vadd.f32 %v8015, %v8492
      %v8593 = vadd.f32 %v8016, %v8497
      %v8594 = vadd.f32 %v8017, %v8500
      %v8595 = vadd.f32 %v8018, %v8505
      %v8596 = vadd.f32 %v8019, %v8508
      %v8597 = vadd.f32 %v8020, %v8513
      %v8598 = vadd.f32 %v8021, %v8516
      %v8599 = vadd.f32 %v8022, %v8521
      %v8600 = vadd.f32 %v8023, %v8524
      %v8601 = vadd.f32 %v8024, %v8529
      %v8602 = vadd.f32 %v8025, %v8532
      %v8603 = vadd.f32 %v8026, %v8537
      %v8604 = vadd.f32 %v8027, %v8540
      %v8605 = vadd.f32 %v8028, %v8545
      %v8606 = vadd.f32 %v8029, %v8548
      %v8607 = vadd.f32 %v8030, %v8553
      %v8608 = vadd.f32 %v8031, %v8556
      %v8609 = vadd.f32 %v8032, %v8561
      %v8610 = vadd.f32 %v8033, %v8564
      %v8611 = vadd.f32 %v8034, %v8569
      %v8612 = vadd.f32 %v8035, %v8572
      %v8613 = vadd.f32 %v8036, %v8577
      %v8614 = vadd.f32 %v8037, %v8580
      %v8615 = vld [vmem:[%s3413] sm:$0xf0]
      %v8616 = vld [vmem:[%s3413 + $0x10] sm:$0xf0]
      %v8617 = vld [vmem:[%s3413 + $0x20] sm:$0xf0]
      %v8618 = vld [vmem:[%s3413 + $0x30] sm:$0xf0]
      %v8619 = vld [vmem:[%s3413 + $0x40] sm:$0xf0]
      %v8620 = vld [vmem:[%s3413 + $0x50] sm:$0xf0]
      %v8621 = vld [vmem:[%s3413 + $0x60] sm:$0xf0]
      %v8622 = vld [vmem:[%s3413 + $0x70] sm:$0xf0]
      %v8623 = vld [vmem:[%s3413 + $0x80] sm:$0xf0]
      %v8624 = vld [vmem:[%s3413 + $0x90] sm:$0xf0]
      %v8625 = vld [vmem:[%s3413 + $0xa0] sm:$0xf0]
      %v8626 = vld [vmem:[%s3413 + $0xb0] sm:$0xf0]
      %v8627 = vld [vmem:[%s3413 + $0xc0] sm:$0xf0]
      %v8628 = vld [vmem:[%s3413 + $0xd0] sm:$0xf0]
      %v8629 = vld [vmem:[%s3413 + $0xe0] sm:$0xf0]
      %v8630 = vld [vmem:[%s3413 + $0xf0] sm:$0xf0]
      %v8663 = vrot.slane %v8615, 4
      %v8664 = vrot.slane %v8039, 4
      %v8665 = vsel %vm845, %v8663, %v8664
      %v8666 = vrot.slane %v8616, 4
      %v8667 = vrot.slane %v8041, 4
      %v8668 = vsel %vm845, %v8666, %v8667
      %v8669 = vrot.slane %v8617, 4
      %v8670 = vrot.slane %v8043, 4
      %v8671 = vsel %vm845, %v8669, %v8670
      %v8672 = vrot.slane %v8618, 4
      %v8673 = vrot.slane %v8045, 4
      %v8674 = vsel %vm845, %v8672, %v8673
      %v8675 = vrot.slane %v8619, 4
      %v8676 = vrot.slane %v8047, 4
      %v8677 = vsel %vm845, %v8675, %v8676
      %v8678 = vrot.slane %v8620, 4
      %v8679 = vrot.slane %v8049, 4
      %v8680 = vsel %vm845, %v8678, %v8679
      %v8681 = vrot.slane %v8621, 4
      %v8682 = vrot.slane %v8051, 4
      %v8683 = vsel %vm845, %v8681, %v8682
      %v8684 = vrot.slane %v8622, 4
      %v8685 = vrot.slane %v8053, 4
      %v8686 = vsel %vm845, %v8684, %v8685
      %v8687 = vrot.slane %v8623, 4
      %v8688 = vrot.slane %v8055, 4
      %v8689 = vsel %vm845, %v8687, %v8688
      %v8690 = vrot.slane %v8624, 4
      %v8691 = vrot.slane %v8057, 4
      %v8692 = vsel %vm845, %v8690, %v8691
      %v8693 = vrot.slane %v8625, 4
      %v8694 = vrot.slane %v8059, 4
      %v8695 = vsel %vm845, %v8693, %v8694
      %v8696 = vrot.slane %v8626, 4
      %v8697 = vrot.slane %v8061, 4
      %v8698 = vsel %vm845, %v8696, %v8697
      %v8699 = vrot.slane %v8627, 4
      %v8700 = vrot.slane %v8063, 4
      %v8701 = vsel %vm845, %v8699, %v8700
      %v8702 = vrot.slane %v8628, 4
      %v8703 = vrot.slane %v8065, 4
      %v8704 = vsel %vm845, %v8702, %v8703
      %v8705 = vrot.slane %v8629, 4
      %v8706 = vrot.slane %v8067, 4
      %v8707 = vsel %vm845, %v8705, %v8706
      %v8708 = vrot.slane %v8630, 4
      %v8709 = vrot.slane %v8069, 4
      %v8710 = vsel %vm845, %v8708, %v8709
      %v8727 = vld [vmem:[%s2 + $0x1c0] sm:$0xf]
      %v8728 = vld [vmem:[%s2 + $0x1c4] sm:$0xf]
      %v8729 = vld [vmem:[%s2 + $0x1c8] sm:$0xf]
      %v8730 = vld [vmem:[%s2 + $0x1cc] sm:$0xf]
      %v8731 = vld [vmem:[%s2 + $0x1d0] sm:$0xf]
      %v8732 = vld [vmem:[%s2 + $0x1d4] sm:$0xf]
      %v8733 = vld [vmem:[%s2 + $0x1d8] sm:$0xf]
      %v8734 = vld [vmem:[%s2 + $0x1dc] sm:$0xf]
      %v8735 = vld [vmem:[%s2 + $0x1e0] sm:$0xf]
      %v8736 = vld [vmem:[%s2 + $0x1e4] sm:$0xf]
      %v8737 = vld [vmem:[%s2 + $0x1e8] sm:$0xf]
      %v8738 = vld [vmem:[%s2 + $0x1ec] sm:$0xf]
      %v8739 = vld [vmem:[%s2 + $0x1f0] sm:$0xf]
      %v8740 = vld [vmem:[%s2 + $0x1f4] sm:$0xf]
      %v8741 = vld [vmem:[%s2 + $0x1f8] sm:$0xf]
      %v8742 = vld [vmem:[%s2 + $0x1fc] sm:$0xf]
      %v8759 = vunpack.c.l.b16 %v8727
      %v8760 = vunpack.c.l.b16 %v8728
      %v8761 = vunpack.c.l.b16 %v8729
      %v8762 = vunpack.c.l.b16 %v8730
      %v8763 = vunpack.c.l.b16 %v8731
      %v8764 = vunpack.c.l.b16 %v8732
      %v8765 = vunpack.c.l.b16 %v8733
      %v8766 = vunpack.c.l.b16 %v8734
      %v8767 = vunpack.c.l.b16 %v8735
      %v8768 = vunpack.c.l.b16 %v8736
      %v8769 = vunpack.c.l.b16 %v8737
      %v8770 = vunpack.c.l.b16 %v8738
      %v8771 = vunpack.c.l.b16 %v8739
      %v8772 = vunpack.c.l.b16 %v8740
      %v8773 = vunpack.c.l.b16 %v8741
      %v8774 = vunpack.c.l.b16 %v8742
      %v8775 = vpack.c.b16 %v8760, %v8759
      %v8776 = vpack.c.b16 %v8762, %v8761
      %v8777 = vpack.c.b16 %v8764, %v8763
      %v8778 = vpack.c.b16 %v8766, %v8765
      %v8779 = vpack.c.b16 %v8768, %v8767
      %v8780 = vpack.c.b16 %v8770, %v8769
      %v8781 = vpack.c.b16 %v8772, %v8771
      %v8782 = vpack.c.b16 %v8774, %v8773
      %8791 = vmatprep.subr.bf16.mxu0 0
      %8792 = vmatpush1.bf16.msra.mxu0 %v8775
      %8793 = vmatprep.subr.bf16.mxu0 0
      %8794 = vmatpush1.bf16.msra.mxu0 %v8776
      %8795 = vmatprep.subr.bf16.mxu0 0
      %8796 = vmatpush1.bf16.msra.mxu0 %v8777
      %8797 = vmatprep.subr.bf16.mxu0 0
      %8798 = vmatpush1.bf16.msra.mxu0 %v8778
      %8799 = vmatprep.subr.bf16.mxu0 0
      %8800 = vmatpush1.bf16.msra.mxu0 %v8779
      %8801 = vmatprep.subr.bf16.mxu0 0
      %8802 = vmatpush1.bf16.msra.mxu0 %v8780
      %8803 = vmatprep.subr.bf16.mxu0 0
      %8804 = vmatpush1.bf16.msra.mxu0 %v8781
      %8805 = vmatprep.subr.bf16.mxu0 0
      %8806 = vmatpush1.bf16.msra.mxu0 %v8782
      %8807 = vmatprep.subr.bf16.mxu0 0
      %8808 = vmatpush1.bf16.msra.mxu0 0
      %8809 = vmatprep.subr.bf16.mxu0 0
      %8810 = vmatpush1.bf16.msra.mxu0 0
      %8811 = vmatprep.subr.bf16.mxu0 0
      %8812 = vmatpush1.bf16.msra.mxu0 0
      %8813 = vmatprep.subr.bf16.mxu0 0
      %8814 = vmatpush1.bf16.msra.mxu0 0
      %8815 = vmatprep.subr.bf16.mxu0 0
      %8816 = vmatpush1.bf16.msra.mxu0 0
      %8817 = vmatprep.subr.bf16.mxu0 0
      %8818 = vmatpush1.bf16.msra.mxu0 0
      %8819 = vmatprep.subr.bf16.mxu0 0
      %8820 = vmatpush1.bf16.msra.mxu0 0
      %8821 = vmatprep.subr.bf16.mxu0 0
      %8822 = vmatpush1.bf16.msra.mxu0 0
      %8823 = vmatprep.mubr.bf16.mxu0 0
      %8824 = vmatmul.mubr.bf16.gmra.mrb[0].mxu0 %v8665
      %v8825 = vpop.f32.mrb[0].mxu0
      %v8826 = vadd.f32 0.0, %v8825
      %v8827 = vpop.f32.mrb[0].mxu0
      %v8828 = vpop.f32.mrb[0].mxu0
      %v8829 = vadd.f32 0.0, %v8828
      %v8830 = vpop.f32.mrb[0].mxu0
      %8831 = vmatprep.mubr.bf16.mxu0 0
      %8832 = vmatmul.mubr.bf16.gmra.mrb[0].mxu0 %v8668
      %v8833 = vpop.f32.mrb[0].mxu0
      %v8834 = vadd.f32 0.0, %v8833
      %v8835 = vpop.f32.mrb[0].mxu0
      %v8836 = vpop.f32.mrb[0].mxu0
      %v8837 = vadd.f32 0.0, %v8836
      %v8838 = vpop.f32.mrb[0].mxu0
      %8839 = vmatprep.mubr.bf16.mxu0 0
      %8840 = vmatmul.mubr.bf16.gmra.mrb[0].mxu0 %v8671
      %v8841 = vpop.f32.mrb[0].mxu0
      %v8842 = vadd.f32 0.0, %v8841
      %v8843 = vpop.f32.mrb[0].mxu0
      %v8844 = vpop.f32.mrb[0].mxu0
      %v8845 = vadd.f32 0.0, %v8844
      %v8846 = vpop.f32.mrb[0].mxu0
      %8847 = vmatprep.mubr.bf16.mxu0 0
      %8848 = vmatmul.mubr.bf16.gmra.mrb[0].mxu0 %v8674
      %v8849 = vpop.f32.mrb[0].mxu0
      %v8850 = vadd.f32 0.0, %v8849
      %v8851 = vpop.f32.mrb[0].mxu0
      %v8852 = vpop.f32.mrb[0].mxu0
      %v8853 = vadd.f32 0.0, %v8852
      %v8854 = vpop.f32.mrb[0].mxu0
      %8855 = vmatprep.mubr.bf16.mxu0 0
      %8856 = vmatmul.mubr.bf16.gmra.mrb[0].mxu0 %v8677
      %v8857 = vpop.f32.mrb[0].mxu0
      %v8858 = vadd.f32 0.0, %v8857
      %v8859 = vpop.f32.mrb[0].mxu0
      %v8860 = vpop.f32.mrb[0].mxu0
      %v8861 = vadd.f32 0.0, %v8860
      %v8862 = vpop.f32.mrb[0].mxu0
      %8863 = vmatprep.mubr.bf16.mxu0 0
      %8864 = vmatmul.mubr.bf16.gmra.mrb[0].mxu0 %v8680
      %v8865 = vpop.f32.mrb[0].mxu0
      %v8866 = vadd.f32 0.0, %v8865
      %v8867 = vpop.f32.mrb[0].mxu0
      %v8868 = vpop.f32.mrb[0].mxu0
      %v8869 = vadd.f32 0.0, %v8868
      %v8870 = vpop.f32.mrb[0].mxu0
      %8871 = vmatprep.mubr.bf16.mxu0 0
      %8872 = vmatmul.mubr.bf16.gmra.mrb[0].mxu0 %v8683
      %v8873 = vpop.f32.mrb[0].mxu0
      %v8874 = vadd.f32 0.0, %v8873
      %v8875 = vpop.f32.mrb[0].mxu0
      %v8876 = vpop.f32.mrb[0].mxu0
      %v8877 = vadd.f32 0.0, %v8876
      %v8878 = vpop.f32.mrb[0].mxu0
      %8879 = vmatprep.mubr.bf16.mxu0 0
      %8880 = vmatmul.mubr.bf16.gmra.mrb[0].mxu0 %v8686
      %v8881 = vpop.f32.mrb[0].mxu0
      %v8882 = vadd.f32 0.0, %v8881
      %v8883 = vpop.f32.mrb[0].mxu0
      %v8884 = vpop.f32.mrb[0].mxu0
      %v8885 = vadd.f32 0.0, %v8884
      %v8886 = vpop.f32.mrb[0].mxu0
      %8887 = vmatprep.mubr.bf16.mxu0 0
      %8888 = vmatmul.mubr.bf16.gmra.mrb[0].mxu0 %v8689
      %v8889 = vpop.f32.mrb[0].mxu0
      %v8890 = vadd.f32 0.0, %v8889
      %v8891 = vpop.f32.mrb[0].mxu0
      %v8892 = vpop.f32.mrb[0].mxu0
      %v8893 = vadd.f32 0.0, %v8892
      %v8894 = vpop.f32.mrb[0].mxu0
      %8895 = vmatprep.mubr.bf16.mxu0 0
      %8896 = vmatmul.mubr.bf16.gmra.mrb[0].mxu0 %v8692
      %v8897 = vpop.f32.mrb[0].mxu0
      %v8898 = vadd.f32 0.0, %v8897
      %v8899 = vpop.f32.mrb[0].mxu0
      %v8900 = vpop.f32.mrb[0].mxu0
      %v8901 = vadd.f32 0.0, %v8900
      %v8902 = vpop.f32.mrb[0].mxu0
      %8903 = vmatprep.mubr.bf16.mxu0 0
      %8904 = vmatmul.mubr.bf16.gmra.mrb[0].mxu0 %v8695
      %v8905 = vpop.f32.mrb[0].mxu0
      %v8906 = vadd.f32 0.0, %v8905
      %v8907 = vpop.f32.mrb[0].mxu0
      %v8908 = vpop.f32.mrb[0].mxu0
      %v8909 = vadd.f32 0.0, %v8908
      %v8910 = vpop.f32.mrb[0].mxu0
      %8911 = vmatprep.mubr.bf16.mxu0 0
      %8912 = vmatmul.mubr.bf16.gmra.mrb[0].mxu0 %v8698
      %v8913 = vpop.f32.mrb[0].mxu0
      %v8914 = vadd.f32 0.0, %v8913
      %v8915 = vpop.f32.mrb[0].mxu0
      %v8916 = vpop.f32.mrb[0].mxu0
      %v8917 = vadd.f32 0.0, %v8916
      %v8918 = vpop.f32.mrb[0].mxu0
      %8919 = vmatprep.mubr.bf16.mxu0 0
      %8920 = vmatmul.mubr.bf16.gmra.mrb[0].mxu0 %v8701
      %v8921 = vpop.f32.mrb[0].mxu0
      %v8922 = vadd.f32 0.0, %v8921
      %v8923 = vpop.f32.mrb[0].mxu0
      %v8924 = vpop.f32.mrb[0].mxu0
      %v8925 = vadd.f32 0.0, %v8924
      %v8926 = vpop.f32.mrb[0].mxu0
      %8927 = vmatprep.mubr.bf16.mxu0 0
      %8928 = vmatmul.mubr.bf16.gmra.mrb[0].mxu0 %v8704
      %v8929 = vpop.f32.mrb[0].mxu0
      %v8930 = vadd.f32 0.0, %v8929
      %v8931 = vpop.f32.mrb[0].mxu0
      %v8932 = vpop.f32.mrb[0].mxu0
      %v8933 = vadd.f32 0.0, %v8932
      %v8934 = vpop.f32.mrb[0].mxu0
      %8935 = vmatprep.mubr.bf16.mxu0 0
      %8936 = vmatmul.mubr.bf16.gmra.mrb[0].mxu0 %v8707
      %v8937 = vpop.f32.mrb[0].mxu0
      %v8938 = vadd.f32 0.0, %v8937
      %v8939 = vpop.f32.mrb[0].mxu0
      %v8940 = vpop.f32.mrb[0].mxu0
      %v8941 = vadd.f32 0.0, %v8940
      %v8942 = vpop.f32.mrb[0].mxu0
      %8943 = vmatprep.mubr.bf16.mxu0 0
      %8944 = vmatmul.mubr.bf16.gmra.mrb[0].mxu0 %v8710
      %v8945 = vpop.f32.mrb[0].mxu0
      %v8946 = vadd.f32 0.0, %v8945
      %v8947 = vpop.f32.mrb[0].mxu0
      %v8948 = vpop.f32.mrb[0].mxu0
      %v8949 = vadd.f32 0.0, %v8948
      %v8950 = vpop.f32.mrb[0].mxu0
      %8951 = vdwg.mxu0
      %v8952 = vadd.f32 %v8583, %v8826
      %v8953 = vadd.f32 %v8584, %v8829
      %v8954 = vadd.f32 %v8585, %v8834
      %v8955 = vadd.f32 %v8586, %v8837
      %v8956 = vadd.f32 %v8587, %v8842
      %v8957 = vadd.f32 %v8588, %v8845
      %v8958 = vadd.f32 %v8589, %v8850
      %v8959 = vadd.f32 %v8590, %v8853
      %v8960 = vadd.f32 %v8591, %v8858
      %v8961 = vadd.f32 %v8592, %v8861
      %v8962 = vadd.f32 %v8593, %v8866
      %v8963 = vadd.f32 %v8594, %v8869
      %v8964 = vadd.f32 %v8595, %v8874
      %v8965 = vadd.f32 %v8596, %v8877
      %v8966 = vadd.f32 %v8597, %v8882
      %v8967 = vadd.f32 %v8598, %v8885
      %v8968 = vadd.f32 %v8599, %v8890
      %v8969 = vadd.f32 %v8600, %v8893
      %v8970 = vadd.f32 %v8601, %v8898
      %v8971 = vadd.f32 %v8602, %v8901
      %v8972 = vadd.f32 %v8603, %v8906
      %v8973 = vadd.f32 %v8604, %v8909
      %v8974 = vadd.f32 %v8605, %v8914
      %v8975 = vadd.f32 %v8606, %v8917
      %v8976 = vadd.f32 %v8607, %v8922
      %v8977 = vadd.f32 %v8608, %v8925
      %v8978 = vadd.f32 %v8609, %v8930
      %v8979 = vadd.f32 %v8610, %v8933
      %v8980 = vadd.f32 %v8611, %v8938
      %v8981 = vadd.f32 %v8612, %v8941
      %v8982 = vadd.f32 %v8613, %v8946
      %v8983 = vadd.f32 %v8614, %v8949
      %v8984 = vld [vmem:[%s3413 + $0x8] sm:$0x1f]
      %v8985 = vld [vmem:[%s3413 + $0x18] sm:$0x1f]
      %v8986 = vld [vmem:[%s3413 + $0x28] sm:$0x1f]
      %v8987 = vld [vmem:[%s3413 + $0x38] sm:$0x1f]
      %v8988 = vld [vmem:[%s3413 + $0x48] sm:$0x1f]
      %v8989 = vld [vmem:[%s3413 + $0x58] sm:$0x1f]
      %v8990 = vld [vmem:[%s3413 + $0x68] sm:$0x1f]
      %v8991 = vld [vmem:[%s3413 + $0x78] sm:$0x1f]
      %v8992 = vld [vmem:[%s3413 + $0x88] sm:$0x1f]
      %v8993 = vld [vmem:[%s3413 + $0x98] sm:$0x1f]
      %v8994 = vld [vmem:[%s3413 + $0xa8] sm:$0x1f]
      %v8995 = vld [vmem:[%s3413 + $0xb8] sm:$0x1f]
      %v8996 = vld [vmem:[%s3413 + $0xc8] sm:$0x1f]
      %v8997 = vld [vmem:[%s3413 + $0xd8] sm:$0x1f]
      %v8998 = vld [vmem:[%s3413 + $0xe8] sm:$0x1f]
      %v8999 = vld [vmem:[%s3413 + $0xf8] sm:$0x1f]
      %v9001 = vshrl.u32 %v8615, 16
      %v9003 = vrot.slane %v9001, 4
      %v9004 = vshll.u32 %v8615, 16
      %v9006 = vrot.slane %v9004, 5
      %v9007 = vor.u32 %v9003, %v9006
      %v9009 = vshrl.u32 %v8984, 16
      %v9011 = vrot.slane %v9009, 4
      %v9012 = vshll.u32 %v8984, 16
      %v9014 = vrot.slane %v9012, 5
      %v9015 = vor.u32 %v9011, %v9014
      %v9016 = vsel %vm1360, %v9007, %v9015
      %v9018 = vshrl.u32 %v8616, 16
      %v9020 = vrot.slane %v9018, 4
      %v9021 = vshll.u32 %v8616, 16
      %v9023 = vrot.slane %v9021, 5
      %v9024 = vor.u32 %v9020, %v9023
      %v9026 = vshrl.u32 %v8985, 16
      %v9028 = vrot.slane %v9026, 4
      %v9029 = vshll.u32 %v8985, 16
      %v9031 = vrot.slane %v9029, 5
      %v9032 = vor.u32 %v9028, %v9031
      %v9033 = vsel %vm1360, %v9024, %v9032
      %v9035 = vshrl.u32 %v8617, 16
      %v9037 = vrot.slane %v9035, 4
      %v9038 = vshll.u32 %v8617, 16
      %v9040 = vrot.slane %v9038, 5
      %v9041 = vor.u32 %v9037, %v9040
      %v9043 = vshrl.u32 %v8986, 16
      %v9045 = vrot.slane %v9043, 4
      %v9046 = vshll.u32 %v8986, 16
      %v9048 = vrot.slane %v9046, 5
      %v9049 = vor.u32 %v9045, %v9048
      %v9050 = vsel %vm1360, %v9041, %v9049
      %v9052 = vshrl.u32 %v8618, 16
      %v9054 = vrot.slane %v9052, 4
      %v9055 = vshll.u32 %v8618, 16
      %v9057 = vrot.slane %v9055, 5
      %v9058 = vor.u32 %v9054, %v9057
      %v9060 = vshrl.u32 %v8987, 16
      %v9062 = vrot.slane %v9060, 4
      %v9063 = vshll.u32 %v8987, 16
      %v9065 = vrot.slane %v9063, 5
      %v9066 = vor.u32 %v9062, %v9065
      %v9067 = vsel %vm1360, %v9058, %v9066
      %v9069 = vshrl.u32 %v8619, 16
      %v9071 = vrot.slane %v9069, 4
      %v9072 = vshll.u32 %v8619, 16
      %v9074 = vrot.slane %v9072, 5
      %v9075 = vor.u32 %v9071, %v9074
      %v9077 = vshrl.u32 %v8988, 16
      %v9079 = vrot.slane %v9077, 4
      %v9080 = vshll.u32 %v8988, 16
      %v9082 = vrot.slane %v9080, 5
      %v9083 = vor.u32 %v9079, %v9082
      %v9084 = vsel %vm1360, %v9075, %v9083
      %v9086 = vshrl.u32 %v8620, 16
      %v9088 = vrot.slane %v9086, 4
      %v9089 = vshll.u32 %v8620, 16
      %v9091 = vrot.slane %v9089, 5
      %v9092 = vor.u32 %v9088, %v9091
      %v9094 = vshrl.u32 %v8989, 16
      %v9096 = vrot.slane %v9094, 4
      %v9097 = vshll.u32 %v8989, 16
      %v9099 = vrot.slane %v9097, 5
      %v9100 = vor.u32 %v9096, %v9099
      %v9101 = vsel %vm1360, %v9092, %v9100
      %v9103 = vshrl.u32 %v8621, 16
      %v9105 = vrot.slane %v9103, 4
      %v9106 = vshll.u32 %v8621, 16
      %v9108 = vrot.slane %v9106, 5
      %v9109 = vor.u32 %v9105, %v9108
      %v9111 = vshrl.u32 %v8990, 16
      %v9113 = vrot.slane %v9111, 4
      %v9114 = vshll.u32 %v8990, 16
      %v9116 = vrot.slane %v9114, 5
      %v9117 = vor.u32 %v9113, %v9116
      %v9118 = vsel %vm1360, %v9109, %v9117
      %v9120 = vshrl.u32 %v8622, 16
      %v9122 = vrot.slane %v9120, 4
      %v9123 = vshll.u32 %v8622, 16
      %v9125 = vrot.slane %v9123, 5
      %v9126 = vor.u32 %v9122, %v9125
      %v9128 = vshrl.u32 %v8991, 16
      %v9130 = vrot.slane %v9128, 4
      %v9131 = vshll.u32 %v8991, 16
      %v9133 = vrot.slane %v9131, 5
      %v9134 = vor.u32 %v9130, %v9133
      %v9135 = vsel %vm1360, %v9126, %v9134
      %v9137 = vshrl.u32 %v8623, 16
      %v9139 = vrot.slane %v9137, 4
      %v9140 = vshll.u32 %v8623, 16
      %v9142 = vrot.slane %v9140, 5
      %v9143 = vor.u32 %v9139, %v9142
      %v9145 = vshrl.u32 %v8992, 16
      %v9147 = vrot.slane %v9145, 4
      %v9148 = vshll.u32 %v8992, 16
      %v9150 = vrot.slane %v9148, 5
      %v9151 = vor.u32 %v9147, %v9150
      %v9152 = vsel %vm1360, %v9143, %v9151
      %v9154 = vshrl.u32 %v8624, 16
      %v9156 = vrot.slane %v9154, 4
      %v9157 = vshll.u32 %v8624, 16
      %v9159 = vrot.slane %v9157, 5
      %v9160 = vor.u32 %v9156, %v9159
      %v9162 = vshrl.u32 %v8993, 16
      %v9164 = vrot.slane %v9162, 4
      %v9165 = vshll.u32 %v8993, 16
      %v9167 = vrot.slane %v9165, 5
      %v9168 = vor.u32 %v9164, %v9167
      %v9169 = vsel %vm1360, %v9160, %v9168
      %v9171 = vshrl.u32 %v8625, 16
      %v9173 = vrot.slane %v9171, 4
      %v9174 = vshll.u32 %v8625, 16
      %v9176 = vrot.slane %v9174, 5
      %v9177 = vor.u32 %v9173, %v9176
      %v9179 = vshrl.u32 %v8994, 16
      %v9181 = vrot.slane %v9179, 4
      %v9182 = vshll.u32 %v8994, 16
      %v9184 = vrot.slane %v9182, 5
      %v9185 = vor.u32 %v9181, %v9184
      %v9186 = vsel %vm1360, %v9177, %v9185
      %v9188 = vshrl.u32 %v8626, 16
      %v9190 = vrot.slane %v9188, 4
      %v9191 = vshll.u32 %v8626, 16
      %v9193 = vrot.slane %v9191, 5
      %v9194 = vor.u32 %v9190, %v9193
      %v9196 = vshrl.u32 %v8995, 16
      %v9198 = vrot.slane %v9196, 4
      %v9199 = vshll.u32 %v8995, 16
      %v9201 = vrot.slane %v9199, 5
      %v9202 = vor.u32 %v9198, %v9201
      %v9203 = vsel %vm1360, %v9194, %v9202
      %v9205 = vshrl.u32 %v8627, 16
      %v9207 = vrot.slane %v9205, 4
      %v9208 = vshll.u32 %v8627, 16
      %v9210 = vrot.slane %v9208, 5
      %v9211 = vor.u32 %v9207, %v9210
      %v9213 = vshrl.u32 %v8996, 16
      %v9215 = vrot.slane %v9213, 4
      %v9216 = vshll.u32 %v8996, 16
      %v9218 = vrot.slane %v9216, 5
      %v9219 = vor.u32 %v9215, %v9218
      %v9220 = vsel %vm1360, %v9211, %v9219
      %v9222 = vshrl.u32 %v8628, 16
      %v9224 = vrot.slane %v9222, 4
      %v9225 = vshll.u32 %v8628, 16
      %v9227 = vrot.slane %v9225, 5
      %v9228 = vor.u32 %v9224, %v9227
      %v9230 = vshrl.u32 %v8997, 16
      %v9232 = vrot.slane %v9230, 4
      %v9233 = vshll.u32 %v8997, 16
      %v9235 = vrot.slane %v9233, 5
      %v9236 = vor.u32 %v9232, %v9235
      %v9237 = vsel %vm1360, %v9228, %v9236
      %v9239 = vshrl.u32 %v8629, 16
      %v9241 = vrot.slane %v9239, 4
      %v9242 = vshll.u32 %v8629, 16
      %v9244 = vrot.slane %v9242, 5
      %v9245 = vor.u32 %v9241, %v9244
      %v9247 = vshrl.u32 %v8998, 16
      %v9249 = vrot.slane %v9247, 4
      %v9250 = vshll.u32 %v8998, 16
      %v9252 = vrot.slane %v9250, 5
      %v9253 = vor.u32 %v9249, %v9252
      %v9254 = vsel %vm1360, %v9245, %v9253
      %v9256 = vshrl.u32 %v8630, 16
      %v9258 = vrot.slane %v9256, 4
      %v9259 = vshll.u32 %v8630, 16
      %v9261 = vrot.slane %v9259, 5
      %v9262 = vor.u32 %v9258, %v9261
      %v9264 = vshrl.u32 %v8999, 16
      %v9266 = vrot.slane %v9264, 4
      %v9267 = vshll.u32 %v8999, 16
      %v9269 = vrot.slane %v9267, 5
      %v9270 = vor.u32 %v9266, %v9269
      %v9271 = vsel %vm1360, %v9262, %v9270
      %v9288 = vld [vmem:[%s2 + $0x200] sm:$0xf]
      %v9289 = vld [vmem:[%s2 + $0x204] sm:$0xf]
      %v9290 = vld [vmem:[%s2 + $0x208] sm:$0xf]
      %v9291 = vld [vmem:[%s2 + $0x20c] sm:$0xf]
      %v9292 = vld [vmem:[%s2 + $0x210] sm:$0xf]
      %v9293 = vld [vmem:[%s2 + $0x214] sm:$0xf]
      %v9294 = vld [vmem:[%s2 + $0x218] sm:$0xf]
      %v9295 = vld [vmem:[%s2 + $0x21c] sm:$0xf]
      %v9296 = vld [vmem:[%s2 + $0x220] sm:$0xf]
      %v9297 = vld [vmem:[%s2 + $0x224] sm:$0xf]
      %v9298 = vld [vmem:[%s2 + $0x228] sm:$0xf]
      %v9299 = vld [vmem:[%s2 + $0x22c] sm:$0xf]
      %v9300 = vld [vmem:[%s2 + $0x230] sm:$0xf]
      %v9301 = vld [vmem:[%s2 + $0x234] sm:$0xf]
      %v9302 = vld [vmem:[%s2 + $0x238] sm:$0xf]
      %v9303 = vld [vmem:[%s2 + $0x23c] sm:$0xf]
      %v9320 = vunpack.c.l.b16 %v9288
      %v9321 = vunpack.c.l.b16 %v9289
      %v9322 = vunpack.c.l.b16 %v9290
      %v9323 = vunpack.c.l.b16 %v9291
      %v9324 = vunpack.c.l.b16 %v9292
      %v9325 = vunpack.c.l.b16 %v9293
      %v9326 = vunpack.c.l.b16 %v9294
      %v9327 = vunpack.c.l.b16 %v9295
      %v9328 = vunpack.c.l.b16 %v9296
      %v9329 = vunpack.c.l.b16 %v9297
      %v9330 = vunpack.c.l.b16 %v9298
      %v9331 = vunpack.c.l.b16 %v9299
      %v9332 = vunpack.c.l.b16 %v9300
      %v9333 = vunpack.c.l.b16 %v9301
      %v9334 = vunpack.c.l.b16 %v9302
      %v9335 = vunpack.c.l.b16 %v9303
      %v9336 = vpack.c.b16 %v9321, %v9320
      %v9337 = vpack.c.b16 %v9323, %v9322
      %v9338 = vpack.c.b16 %v9325, %v9324
      %v9339 = vpack.c.b16 %v9327, %v9326
      %v9340 = vpack.c.b16 %v9329, %v9328
      %v9341 = vpack.c.b16 %v9331, %v9330
      %v9342 = vpack.c.b16 %v9333, %v9332
      %v9343 = vpack.c.b16 %v9335, %v9334
      %9352 = vmatprep.subr.bf16.mxu0 0
      %9353 = vmatpush1.bf16.msra.mxu0 %v9336
      %9354 = vmatprep.subr.bf16.mxu0 0
      %9355 = vmatpush1.bf16.msra.mxu0 %v9337
      %9356 = vmatprep.subr.bf16.mxu0 0
      %9357 = vmatpush1.bf16.msra.mxu0 %v9338
      %9358 = vmatprep.subr.bf16.mxu0 0
      %9359 = vmatpush1.bf16.msra.mxu0 %v9339
      %9360 = vmatprep.subr.bf16.mxu0 0
      %9361 = vmatpush1.bf16.msra.mxu0 %v9340
      %9362 = vmatprep.subr.bf16.mxu0 0
      %9363 = vmatpush1.bf16.msra.mxu0 %v9341
      %9364 = vmatprep.subr.bf16.mxu0 0
      %9365 = vmatpush1.bf16.msra.mxu0 %v9342
      %9366 = vmatprep.subr.bf16.mxu0 0
      %9367 = vmatpush1.bf16.msra.mxu0 %v9343
      %9368 = vmatprep.subr.bf16.mxu0 0
      %9369 = vmatpush1.bf16.msra.mxu0 0
      %9370 = vmatprep.subr.bf16.mxu0 0
      %9371 = vmatpush1.bf16.msra.mxu0 0
      %9372 = vmatprep.subr.bf16.mxu0 0
      %9373 = vmatpush1.bf16.msra.mxu0 0
      %9374 = vmatprep.subr.bf16.mxu0 0
      %9375 = vmatpush1.bf16.msra.mxu0 0
      %9376 = vmatprep.subr.bf16.mxu0 0
      %9377 = vmatpush1.bf16.msra.mxu0 0
      %9378 = vmatprep.subr.bf16.mxu0 0
      %9379 = vmatpush1.bf16.msra.mxu0 0
      %9380 = vmatprep.subr.bf16.mxu0 0
      %9381 = vmatpush1.bf16.msra.mxu0 0
      %9382 = vmatprep.subr.bf16.mxu0 0
      %9383 = vmatpush1.bf16.msra.mxu0 0
      %9384 = vmatprep.mubr.bf16.mxu0 0
      %9385 = vmatmul.mubr.bf16.gmra.mrb[0].mxu0 %v9016
      %v9386 = vpop.f32.mrb[0].mxu0
      %v9387 = vadd.f32 0.0, %v9386
      %v9388 = vpop.f32.mrb[0].mxu0
      %v9389 = vpop.f32.mrb[0].mxu0
      %v9390 = vadd.f32 0.0, %v9389
      %v9391 = vpop.f32.mrb[0].mxu0
      %9392 = vmatprep.mubr.bf16.mxu0 0
      %9393 = vmatmul.mubr.bf16.gmra.mrb[0].mxu0 %v9033
      %v9394 = vpop.f32.mrb[0].mxu0
      %v9395 = vadd.f32 0.0, %v9394
      %v9396 = vpop.f32.mrb[0].mxu0
      %v9397 = vpop.f32.mrb[0].mxu0
      %v9398 = vadd.f32 0.0, %v9397
      %v9399 = vpop.f32.mrb[0].mxu0
      %9400 = vmatprep.mubr.bf16.mxu0 0
      %9401 = vmatmul.mubr.bf16.gmra.mrb[0].mxu0 %v9050
      %v9402 = vpop.f32.mrb[0].mxu0
      %v9403 = vadd.f32 0.0, %v9402
      %v9404 = vpop.f32.mrb[0].mxu0
      %v9405 = vpop.f32.mrb[0].mxu0
      %v9406 = vadd.f32 0.0, %v9405
      %v9407 = vpop.f32.mrb[0].mxu0
      %9408 = vmatprep.mubr.bf16.mxu0 0
      %9409 = vmatmul.mubr.bf16.gmra.mrb[0].mxu0 %v9067
      %v9410 = vpop.f32.mrb[0].mxu0
      %v9411 = vadd.f32 0.0, %v9410
      %v9412 = vpop.f32.mrb[0].mxu0
      %v9413 = vpop.f32.mrb[0].mxu0
      %v9414 = vadd.f32 0.0, %v9413
      %v9415 = vpop.f32.mrb[0].mxu0
      %9416 = vmatprep.mubr.bf16.mxu0 0
      %9417 = vmatmul.mubr.bf16.gmra.mrb[0].mxu0 %v9084
      %v9418 = vpop.f32.mrb[0].mxu0
      %v9419 = vadd.f32 0.0, %v9418
      %v9420 = vpop.f32.mrb[0].mxu0
      %v9421 = vpop.f32.mrb[0].mxu0
      %v9422 = vadd.f32 0.0, %v9421
      %v9423 = vpop.f32.mrb[0].mxu0
      %9424 = vmatprep.mubr.bf16.mxu0 0
      %9425 = vmatmul.mubr.bf16.gmra.mrb[0].mxu0 %v9101
      %v9426 = vpop.f32.mrb[0].mxu0
      %v9427 = vadd.f32 0.0, %v9426
      %v9428 = vpop.f32.mrb[0].mxu0
      %v9429 = vpop.f32.mrb[0].mxu0
      %v9430 = vadd.f32 0.0, %v9429
      %v9431 = vpop.f32.mrb[0].mxu0
      %9432 = vmatprep.mubr.bf16.mxu0 0
      %9433 = vmatmul.mubr.bf16.gmra.mrb[0].mxu0 %v9118
      %v9434 = vpop.f32.mrb[0].mxu0
      %v9435 = vadd.f32 0.0, %v9434
      %v9436 = vpop.f32.mrb[0].mxu0
      %v9437 = vpop.f32.mrb[0].mxu0
      %v9438 = vadd.f32 0.0, %v9437
      %v9439 = vpop.f32.mrb[0].mxu0
      %9440 = vmatprep.mubr.bf16.mxu0 0
      %9441 = vmatmul.mubr.bf16.gmra.mrb[0].mxu0 %v9135
      %v9442 = vpop.f32.mrb[0].mxu0
      %v9443 = vadd.f32 0.0, %v9442
      %v9444 = vpop.f32.mrb[0].mxu0
      %v9445 = vpop.f32.mrb[0].mxu0
      %v9446 = vadd.f32 0.0, %v9445
      %v9447 = vpop.f32.mrb[0].mxu0
      %9448 = vmatprep.mubr.bf16.mxu0 0
      %9449 = vmatmul.mubr.bf16.gmra.mrb[0].mxu0 %v9152
      %v9450 = vpop.f32.mrb[0].mxu0
      %v9451 = vadd.f32 0.0, %v9450
      %v9452 = vpop.f32.mrb[0].mxu0
      %v9453 = vpop.f32.mrb[0].mxu0
      %v9454 = vadd.f32 0.0, %v9453
      %v9455 = vpop.f32.mrb[0].mxu0
      %9456 = vmatprep.mubr.bf16.mxu0 0
      %9457 = vmatmul.mubr.bf16.gmra.mrb[0].mxu0 %v9169
      %v9458 = vpop.f32.mrb[0].mxu0
      %v9459 = vadd.f32 0.0, %v9458
      %v9460 = vpop.f32.mrb[0].mxu0
      %v9461 = vpop.f32.mrb[0].mxu0
      %v9462 = vadd.f32 0.0, %v9461
      %v9463 = vpop.f32.mrb[0].mxu0
      %9464 = vmatprep.mubr.bf16.mxu0 0
      %9465 = vmatmul.mubr.bf16.gmra.mrb[0].mxu0 %v9186
      %v9466 = vpop.f32.mrb[0].mxu0
      %v9467 = vadd.f32 0.0, %v9466
      %v9468 = vpop.f32.mrb[0].mxu0
      %v9469 = vpop.f32.mrb[0].mxu0
      %v9470 = vadd.f32 0.0, %v9469
      %v9471 = vpop.f32.mrb[0].mxu0
      %9472 = vmatprep.mubr.bf16.mxu0 0
      %9473 = vmatmul.mubr.bf16.gmra.mrb[0].mxu0 %v9203
      %v9474 = vpop.f32.mrb[0].mxu0
      %v9475 = vadd.f32 0.0, %v9474
      %v9476 = vpop.f32.mrb[0].mxu0
      %v9477 = vpop.f32.mrb[0].mxu0
      %v9478 = vadd.f32 0.0, %v9477
      %v9479 = vpop.f32.mrb[0].mxu0
      %9480 = vmatprep.mubr.bf16.mxu0 0
      %9481 = vmatmul.mubr.bf16.gmra.mrb[0].mxu0 %v9220
      %v9482 = vpop.f32.mrb[0].mxu0
      %v9483 = vadd.f32 0.0, %v9482
      %v9484 = vpop.f32.mrb[0].mxu0
      %v9485 = vpop.f32.mrb[0].mxu0
      %v9486 = vadd.f32 0.0, %v9485
      %v9487 = vpop.f32.mrb[0].mxu0
      %9488 = vmatprep.mubr.bf16.mxu0 0
      %9489 = vmatmul.mubr.bf16.gmra.mrb[0].mxu0 %v9237
      %v9490 = vpop.f32.mrb[0].mxu0
      %v9491 = vadd.f32 0.0, %v9490
      %v9492 = vpop.f32.mrb[0].mxu0
      %v9493 = vpop.f32.mrb[0].mxu0
      %v9494 = vadd.f32 0.0, %v9493
      %v9495 = vpop.f32.mrb[0].mxu0
      %9496 = vmatprep.mubr.bf16.mxu0 0
      %9497 = vmatmul.mubr.bf16.gmra.mrb[0].mxu0 %v9254
      %v9498 = vpop.f32.mrb[0].mxu0
      %v9499 = vadd.f32 0.0, %v9498
      %v9500 = vpop.f32.mrb[0].mxu0
      %v9501 = vpop.f32.mrb[0].mxu0
      %v9502 = vadd.f32 0.0, %v9501
      %v9503 = vpop.f32.mrb[0].mxu0
      %9504 = vmatprep.mubr.bf16.mxu0 0
      %9505 = vmatmul.mubr.bf16.gmra.mrb[0].mxu0 %v9271
      %v9506 = vpop.f32.mrb[0].mxu0
      %v9507 = vadd.f32 0.0, %v9506
      %v9508 = vpop.f32.mrb[0].mxu0
      %v9509 = vpop.f32.mrb[0].mxu0
      %v9510 = vadd.f32 0.0, %v9509
      %v9511 = vpop.f32.mrb[0].mxu0
      %9512 = vdwg.mxu0
      %v9513 = vadd.f32 %v8952, %v9387
      %v9514 = vadd.f32 %v8953, %v9390
      %v9515 = vadd.f32 %v8954, %v9395
      %v9516 = vadd.f32 %v8955, %v9398
      %v9517 = vadd.f32 %v8956, %v9403
      %v9518 = vadd.f32 %v8957, %v9406
      %v9519 = vadd.f32 %v8958, %v9411
      %v9520 = vadd.f32 %v8959, %v9414
      %v9521 = vadd.f32 %v8960, %v9419
      %v9522 = vadd.f32 %v8961, %v9422
      %v9523 = vadd.f32 %v8962, %v9427
      %v9524 = vadd.f32 %v8963, %v9430
      %v9525 = vadd.f32 %v8964, %v9435
      %v9526 = vadd.f32 %v8965, %v9438
      %v9527 = vadd.f32 %v8966, %v9443
      %v9528 = vadd.f32 %v8967, %v9446
      %v9529 = vadd.f32 %v8968, %v9451
      %v9530 = vadd.f32 %v8969, %v9454
      %v9531 = vadd.f32 %v8970, %v9459
      %v9532 = vadd.f32 %v8971, %v9462
      %v9533 = vadd.f32 %v8972, %v9467
      %v9534 = vadd.f32 %v8973, %v9470
      %v9535 = vadd.f32 %v8974, %v9475
      %v9536 = vadd.f32 %v8975, %v9478
      %v9537 = vadd.f32 %v8976, %v9483
      %v9538 = vadd.f32 %v8977, %v9486
      %v9539 = vadd.f32 %v8978, %v9491
      %v9540 = vadd.f32 %v8979, %v9494
      %v9541 = vadd.f32 %v8980, %v9499
      %v9542 = vadd.f32 %v8981, %v9502
      %v9543 = vadd.f32 %v8982, %v9507
      %v9544 = vadd.f32 %v8983, %v9510
      %v9545 = vld [vmem:[%s4] sm:$0x1]
      %v9547 = vlaneseq
      %v9548 = vshrl.u32 %v9547, 7
      %v9549 = vsub.s32 0, %v9548
      %v9550 = vrot.slane %v9545, %v9549
      %v9552 = vadd.f32 %v9513, %v9550
      %v9553 = vadd.f32 %v9514, %v9550
      %v9554 = vadd.f32 %v9515, %v9550
      %v9555 = vadd.f32 %v9516, %v9550
      %v9556 = vadd.f32 %v9517, %v9550
      %v9557 = vadd.f32 %v9518, %v9550
      %v9558 = vadd.f32 %v9519, %v9550
      %v9559 = vadd.f32 %v9520, %v9550
      %v9560 = vadd.f32 %v9521, %v9550
      %v9561 = vadd.f32 %v9522, %v9550
      %v9562 = vadd.f32 %v9523, %v9550
      %v9563 = vadd.f32 %v9524, %v9550
      %v9564 = vadd.f32 %v9525, %v9550
      %v9565 = vadd.f32 %v9526, %v9550
      %v9566 = vadd.f32 %v9527, %v9550
      %v9567 = vadd.f32 %v9528, %v9550
      %v9568 = vadd.f32 %v9529, %v9550
      %v9569 = vadd.f32 %v9530, %v9550
      %v9570 = vadd.f32 %v9531, %v9550
      %v9571 = vadd.f32 %v9532, %v9550
      %v9572 = vadd.f32 %v9533, %v9550
      %v9573 = vadd.f32 %v9534, %v9550
      %v9574 = vadd.f32 %v9535, %v9550
      %v9575 = vadd.f32 %v9536, %v9550
      %v9576 = vadd.f32 %v9537, %v9550
      %v9577 = vadd.f32 %v9538, %v9550
      %v9578 = vadd.f32 %v9539, %v9550
      %v9579 = vadd.f32 %v9540, %v9550
      %v9580 = vadd.f32 %v9541, %v9550
      %v9581 = vadd.f32 %v9542, %v9550
      %v9582 = vadd.f32 %v9543, %v9550
      %v9583 = vadd.f32 %v9544, %v9550
      %v9584 = vld [vmem:[%s219] sm:$0xf]
      %v9585 = vld [vmem:[%s219 + $0x4] sm:$0xf]
      %v9586 = vld [vmem:[%s219 + $0x8] sm:$0xf]
      %v9587 = vld [vmem:[%s219 + $0xc] sm:$0xf]
      %v9588 = vld [vmem:[%s219 + $0x10] sm:$0xf]
      %v9589 = vld [vmem:[%s219 + $0x14] sm:$0xf]
      %v9590 = vld [vmem:[%s219 + $0x18] sm:$0xf]
      %v9591 = vld [vmem:[%s219 + $0x1c] sm:$0xf]
      %v9592 = vld [vmem:[%s219 + $0x20] sm:$0xf]
      %v9593 = vld [vmem:[%s219 + $0x24] sm:$0xf]
      %v9594 = vld [vmem:[%s219 + $0x28] sm:$0xf]
      %v9595 = vld [vmem:[%s219 + $0x2c] sm:$0xf]
      %v9596 = vld [vmem:[%s219 + $0x30] sm:$0xf]
      %v9597 = vld [vmem:[%s219 + $0x34] sm:$0xf]
      %v9598 = vld [vmem:[%s219 + $0x38] sm:$0xf]
      %v9599 = vld [vmem:[%s219 + $0x3c] sm:$0xf]
      %v9600 = vld [vmem:[%s219 + $0x40] sm:$0xf]
      %v9601 = vld [vmem:[%s219 + $0x44] sm:$0xf]
      %v9602 = vld [vmem:[%s219 + $0x48] sm:$0xf]
      %v9603 = vld [vmem:[%s219 + $0x4c] sm:$0xf]
      %v9604 = vld [vmem:[%s219 + $0x50] sm:$0xf]
      %v9605 = vld [vmem:[%s219 + $0x54] sm:$0xf]
      %v9606 = vld [vmem:[%s219 + $0x58] sm:$0xf]
      %v9607 = vld [vmem:[%s219 + $0x5c] sm:$0xf]
      %v9608 = vld [vmem:[%s219 + $0x60] sm:$0xf]
      %v9609 = vld [vmem:[%s219 + $0x64] sm:$0xf]
      %v9610 = vld [vmem:[%s219 + $0x68] sm:$0xf]
      %v9611 = vld [vmem:[%s219 + $0x6c] sm:$0xf]
      %v9612 = vld [vmem:[%s219 + $0x70] sm:$0xf]
      %v9613 = vld [vmem:[%s219 + $0x74] sm:$0xf]
      %v9614 = vld [vmem:[%s219 + $0x78] sm:$0xf]
      %v9615 = vld [vmem:[%s219 + $0x7c] sm:$0xf]
      %v9616 = vunpack.c.l.bf16 %v9584
      %v9617 = vunpack.c.l.bf16 %v9585
      %v9618 = vunpack.c.l.bf16 %v9586
      %v9619 = vunpack.c.l.bf16 %v9587
      %v9620 = vunpack.c.l.bf16 %v9588
      %v9621 = vunpack.c.l.bf16 %v9589
      %v9622 = vunpack.c.l.bf16 %v9590
      %v9623 = vunpack.c.l.bf16 %v9591
      %v9624 = vunpack.c.l.bf16 %v9592
      %v9625 = vunpack.c.l.bf16 %v9593
      %v9626 = vunpack.c.l.bf16 %v9594
      %v9627 = vunpack.c.l.bf16 %v9595
      %v9628 = vunpack.c.l.bf16 %v9596
      %v9629 = vunpack.c.l.bf16 %v9597
      %v9630 = vunpack.c.l.bf16 %v9598
      %v9631 = vunpack.c.l.bf16 %v9599
      %v9632 = vunpack.c.l.bf16 %v9600
      %v9633 = vunpack.c.l.bf16 %v9601
      %v9634 = vunpack.c.l.bf16 %v9602
      %v9635 = vunpack.c.l.bf16 %v9603
      %v9636 = vunpack.c.l.bf16 %v9604
      %v9637 = vunpack.c.l.bf16 %v9605
      %v9638 = vunpack.c.l.bf16 %v9606
      %v9639 = vunpack.c.l.bf16 %v9607
      %v9640 = vunpack.c.l.bf16 %v9608
      %v9641 = vunpack.c.l.bf16 %v9609
      %v9642 = vunpack.c.l.bf16 %v9610
      %v9643 = vunpack.c.l.bf16 %v9611
      %v9644 = vunpack.c.l.bf16 %v9612
      %v9645 = vunpack.c.l.bf16 %v9613
      %v9646 = vunpack.c.l.bf16 %v9614
      %v9647 = vunpack.c.l.bf16 %v9615
      %v9648 = vadd.f32 %v9552, %v9616
      %v9649 = vadd.f32 %v9553, %v9617
      %v9650 = vadd.f32 %v9554, %v9618
      %v9651 = vadd.f32 %v9555, %v9619
      %v9652 = vadd.f32 %v9556, %v9620
      %v9653 = vadd.f32 %v9557, %v9621
      %v9654 = vadd.f32 %v9558, %v9622
      %v9655 = vadd.f32 %v9559, %v9623
      %v9656 = vadd.f32 %v9560, %v9624
      %v9657 = vadd.f32 %v9561, %v9625
      %v9658 = vadd.f32 %v9562, %v9626
      %v9659 = vadd.f32 %v9563, %v9627
      %v9660 = vadd.f32 %v9564, %v9628
      %v9661 = vadd.f32 %v9565, %v9629
      %v9662 = vadd.f32 %v9566, %v9630
      %v9663 = vadd.f32 %v9567, %v9631
      %v9664 = vadd.f32 %v9568, %v9632
      %v9665 = vadd.f32 %v9569, %v9633
      %v9666 = vadd.f32 %v9570, %v9634
      %v9667 = vadd.f32 %v9571, %v9635
      %v9668 = vadd.f32 %v9572, %v9636
      %v9669 = vadd.f32 %v9573, %v9637
      %v9670 = vadd.f32 %v9574, %v9638
      %v9671 = vadd.f32 %v9575, %v9639
      %v9672 = vadd.f32 %v9576, %v9640
      %v9673 = vadd.f32 %v9577, %v9641
      %v9674 = vadd.f32 %v9578, %v9642
      %v9675 = vadd.f32 %v9579, %v9643
      %v9676 = vadd.f32 %v9580, %v9644
      %v9677 = vadd.f32 %v9581, %v9645
      %v9678 = vadd.f32 %v9582, %v9646
      %v9679 = vadd.f32 %v9583, %v9647
      %v9680 = vmax.f32 %v9648, 0.0
      %v9681 = vmax.f32 %v9649, 0.0
      %v9682 = vmax.f32 %v9650, 0.0
      %v9683 = vmax.f32 %v9651, 0.0
      %v9684 = vmax.f32 %v9652, 0.0
      %v9685 = vmax.f32 %v9653, 0.0
      %v9686 = vmax.f32 %v9654, 0.0
      %v9687 = vmax.f32 %v9655, 0.0
      %v9688 = vmax.f32 %v9656, 0.0
      %v9689 = vmax.f32 %v9657, 0.0
      %v9690 = vmax.f32 %v9658, 0.0
      %v9691 = vmax.f32 %v9659, 0.0
      %v9692 = vmax.f32 %v9660, 0.0
      %v9693 = vmax.f32 %v9661, 0.0
      %v9694 = vmax.f32 %v9662, 0.0
      %v9695 = vmax.f32 %v9663, 0.0
      %v9696 = vmax.f32 %v9664, 0.0
      %v9697 = vmax.f32 %v9665, 0.0
      %v9698 = vmax.f32 %v9666, 0.0
      %v9699 = vmax.f32 %v9667, 0.0
      %v9700 = vmax.f32 %v9668, 0.0
      %v9701 = vmax.f32 %v9669, 0.0
      %v9702 = vmax.f32 %v9670, 0.0
      %v9703 = vmax.f32 %v9671, 0.0
      %v9704 = vmax.f32 %v9672, 0.0
      %v9705 = vmax.f32 %v9673, 0.0
      %v9706 = vmax.f32 %v9674, 0.0
      %v9707 = vmax.f32 %v9675, 0.0
      %v9708 = vmax.f32 %v9676, 0.0
      %v9709 = vmax.f32 %v9677, 0.0
      %v9710 = vmax.f32 %v9678, 0.0
      %v9711 = vmax.f32 %v9679, 0.0
      %v9712 = vpack.c.bf16 %v9681, %v9680
      %v9713 = vpack.c.bf16 %v9683, %v9682
      %v9714 = vpack.c.bf16 %v9685, %v9684
      %v9715 = vpack.c.bf16 %v9687, %v9686
      %v9716 = vpack.c.bf16 %v9689, %v9688
      %v9717 = vpack.c.bf16 %v9691, %v9690
      %v9718 = vpack.c.bf16 %v9693, %v9692
      %v9719 = vpack.c.bf16 %v9695, %v9694
      %v9720 = vpack.c.bf16 %v9697, %v9696
      %v9721 = vpack.c.bf16 %v9699, %v9698
      %v9722 = vpack.c.bf16 %v9701, %v9700
      %v9723 = vpack.c.bf16 %v9703, %v9702
      %v9724 = vpack.c.bf16 %v9705, %v9704
      %v9725 = vpack.c.bf16 %v9707, %v9706
      %v9726 = vpack.c.bf16 %v9709, %v9708
      %v9727 = vpack.c.bf16 %v9711, %v9710
      %v9744 = vunpack.c.l.b16 %v9712
      %v9745 = vunpack.c.h.b16 %v9712
      %v9746 = vunpack.c.l.b16 %v9713
      %v9747 = vunpack.c.h.b16 %v9713
      %v9748 = vunpack.c.l.b16 %v9714
      %v9749 = vunpack.c.h.b16 %v9714
      %v9750 = vunpack.c.l.b16 %v9715
      %v9751 = vunpack.c.h.b16 %v9715
      %v9752 = vunpack.c.l.b16 %v9716
      %v9753 = vunpack.c.h.b16 %v9716
      %v9754 = vunpack.c.l.b16 %v9717
      %v9755 = vunpack.c.h.b16 %v9717
      %v9756 = vunpack.c.l.b16 %v9718
      %v9757 = vunpack.c.h.b16 %v9718
      %v9758 = vunpack.c.l.b16 %v9719
      %v9759 = vunpack.c.h.b16 %v9719
      %v9760 = vunpack.c.l.b16 %v9720
      %v9761 = vunpack.c.h.b16 %v9720
      %v9762 = vunpack.c.l.b16 %v9721
      %v9763 = vunpack.c.h.b16 %v9721
      %v9764 = vunpack.c.l.b16 %v9722
      %v9765 = vunpack.c.h.b16 %v9722
      %v9766 = vunpack.c.l.b16 %v9723
      %v9767 = vunpack.c.h.b16 %v9723
      %v9768 = vunpack.c.l.b16 %v9724
      %v9769 = vunpack.c.h.b16 %v9724
      %v9770 = vunpack.c.l.b16 %v9725
      %v9771 = vunpack.c.h.b16 %v9725
      %v9772 = vunpack.c.l.b16 %v9726
      %v9773 = vunpack.c.h.b16 %v9726
      %v9774 = vunpack.c.l.b16 %v9727
      %v9775 = vunpack.c.h.b16 %v9727
      %v9776 = vpack.c.b16 %v9744, %v9744
      %v9777 = vpack.c.b16 %v9745, %v9745
      %v9778 = vpack.c.b16 %v9746, %v9746
      %v9779 = vpack.c.b16 %v9747, %v9747
      %v9780 = vpack.c.b16 %v9748, %v9748
      %v9781 = vpack.c.b16 %v9749, %v9749
      %v9782 = vpack.c.b16 %v9750, %v9750
      %v9783 = vpack.c.b16 %v9751, %v9751
      %v9784 = vpack.c.b16 %v9752, %v9752
      %v9785 = vpack.c.b16 %v9753, %v9753
      %v9786 = vpack.c.b16 %v9754, %v9754
      %v9787 = vpack.c.b16 %v9755, %v9755
      %v9788 = vpack.c.b16 %v9756, %v9756
      %v9789 = vpack.c.b16 %v9757, %v9757
      %v9790 = vpack.c.b16 %v9758, %v9758
      %v9791 = vpack.c.b16 %v9759, %v9759
      %v9792 = vpack.c.b16 %v9760, %v9760
      %v9793 = vpack.c.b16 %v9761, %v9761
      %v9794 = vpack.c.b16 %v9762, %v9762
      %v9795 = vpack.c.b16 %v9763, %v9763
      %v9796 = vpack.c.b16 %v9764, %v9764
      %v9797 = vpack.c.b16 %v9765, %v9765
      %v9798 = vpack.c.b16 %v9766, %v9766
      %v9799 = vpack.c.b16 %v9767, %v9767
      %v9800 = vpack.c.b16 %v9768, %v9768
      %v9801 = vpack.c.b16 %v9769, %v9769
      %v9802 = vpack.c.b16 %v9770, %v9770
      %v9803 = vpack.c.b16 %v9771, %v9771
      %v9804 = vpack.c.b16 %v9772, %v9772
      %v9805 = vpack.c.b16 %v9773, %v9773
      %v9806 = vpack.c.b16 %v9774, %v9774
      %v9807 = vpack.c.b16 %v9775, %v9775
      %9840 = vst [vmem:[%s224] sm:$0xf] %v9776
      %9841 = vst [vmem:[%s224 + $0x4] sm:$0xf] %v9777
      %9842 = vst [vmem:[%s224 + $0x8] sm:$0xf] %v9778
      %9843 = vst [vmem:[%s224 + $0xc] sm:$0xf] %v9779
      %9844 = vst [vmem:[%s224 + $0x10] sm:$0xf] %v9780
      %9845 = vst [vmem:[%s224 + $0x14] sm:$0xf] %v9781
      %9846 = vst [vmem:[%s224 + $0x18] sm:$0xf] %v9782
      %9847 = vst [vmem:[%s224 + $0x1c] sm:$0xf] %v9783
      %9848 = vst [vmem:[%s224 + $0x20] sm:$0xf] %v9784
      %9849 = vst [vmem:[%s224 + $0x24] sm:$0xf] %v9785
      %9850 = vst [vmem:[%s224 + $0x28] sm:$0xf] %v9786
      %9851 = vst [vmem:[%s224 + $0x2c] sm:$0xf] %v9787
      %9852 = vst [vmem:[%s224 + $0x30] sm:$0xf] %v9788
      %9853 = vst [vmem:[%s224 + $0x34] sm:$0xf] %v9789
      %9854 = vst [vmem:[%s224 + $0x38] sm:$0xf] %v9790
      %9855 = vst [vmem:[%s224 + $0x3c] sm:$0xf] %v9791
      %9856 = vst [vmem:[%s224 + $0x40] sm:$0xf] %v9792
      %9857 = vst [vmem:[%s224 + $0x44] sm:$0xf] %v9793
      %9858 = vst [vmem:[%s224 + $0x48] sm:$0xf] %v9794
      %9859 = vst [vmem:[%s224 + $0x4c] sm:$0xf] %v9795
      %9860 = vst [vmem:[%s224 + $0x50] sm:$0xf] %v9796
      %9861 = vst [vmem:[%s224 + $0x54] sm:$0xf] %v9797
      %9862 = vst [vmem:[%s224 + $0x58] sm:$0xf] %v9798
      %9863 = vst [vmem:[%s224 + $0x5c] sm:$0xf] %v9799
      %9864 = vst [vmem:[%s224 + $0x60] sm:$0xf] %v9800
      %9865 = vst [vmem:[%s224 + $0x64] sm:$0xf] %v9801
      %9866 = vst [vmem:[%s224 + $0x68] sm:$0xf] %v9802
      %9867 = vst [vmem:[%s224 + $0x6c] sm:$0xf] %v9803
      %9868 = vst [vmem:[%s224 + $0x70] sm:$0xf] %v9804
      %9869 = vst [vmem:[%s224 + $0x74] sm:$0xf] %v9805
      %9870 = vst [vmem:[%s224 + $0x78] sm:$0xf] %v9806
      %9871 = vst [vmem:[%s224 + $0x7c] sm:$0xf] %v9807
      %p9872 = scmp.lt.s32.totalorder %s16, 1
      %s9873 = scalar_select %p9872, %s16, 1
      %s9874 = smul.addr %s9873, 32
      %s9875 = smul.addr %s9874, 4
      %s9876 = scalar_lea.vmem %s5, %s9875
      // Predicated region
      $region41: #{basic_block.1} parent=39 // pred_check
        %p9877 = pneg %p144
      $region42: #{basic_block.1} parent=39 // pred_check_branch
        %9879 = sbr.rel (%p9877) target = $region44
      $region43: #{basic_block.1} parent=39 // pred_region
        _
      $region44: #{basic_block.1} parent=39 // pred_fallthru
        _
    $region40: #{basic_block.1} parent=5 // pred_fallthru
      _
    %p9880 = scmp.le.s32.totalorder 2, %s11
    // Predicated region
    $region45: #{basic_block.1} parent=5 // pred_check
      %p9881 = pneg %p9880
    $region46: #{basic_block.1} parent=5 // pred_check_branch
      %9883 = sbr.rel (%p9881) target = $region48
    $region47: #{basic_block.1} parent=5 // pred_region
      %s9884 = ssub.s32 %s11, 2
      // Predicated region
      $region49: #{basic_block.1} parent=47 // pred_check
        %p9885 = pneg %p150
      $region50: #{basic_block.1} parent=47 // pred_check_branch
        %9887 = sbr.rel (%p9885) target = $region52
      $region51: #{basic_block.1} parent=47 // pred_region
        %p9888 = scmp.lt.s32.totalorder %s17, 1
        %s9889 = scalar_select %p9888, %s17, 1
        %s9890 = smul.addr %s9889, 32
        %s9891 = smul.addr %s9890, 4
        %s9892 = scalar_lea.vmem %s5, %s9891
      $region52: #{basic_block.1} parent=47 // pred_fallthru
        _
    $region48: #{basic_block.1} parent=5 // pred_fallthru
      _
  $region6: #{basic_block.1} parent=0 // loop_footer
    %s15 = sadd.s32 1, %s11
  $region7: #{basic_block.1} parent=0 // loop_footer_branch
    %10 = sbr.rel target = $region3
  $region8: #{basic_block.1} parent=0 // loop_exit
    _

</llo_original>
